<compile_context>
chip_gen: v7x
topology: tpu7x:2x2x1
jax: 0.10.0
libtpu: 0.0.40
codegen_flags: <defaults>
</compile_context>

<pallas_src>
import math

import jax
import jax.numpy as jnp
from jax import lax
from jax.experimental import pallas as pl
from jax.experimental.pallas import tpu as pltpu

# ---------------- configuration (small-shape version of the module) ---------
B = 2              # batch
C_IN = 4           # input channels (mel L/R, ipd cos/sin)
H = 32             # mel bins          (module: 128)
W = 32             # time steps        (small example)
C1 = 16            # conv1 out channels (module: 64)
PATCH = 16
D_MODEL = 128      # transformer width  (module: 768)
N_HEADS = 4        # attention heads    (module: 12)
D_FF = 256         # feed-forward width (module: 2048)
N_LAYERS = 12      # encoder layers     (module: 12)
N_ANGLE_BINS = 4   # ['front','back','left','right']
HEAD_DIM = D_MODEL // N_HEADS
NUM_PATCHES = (H // PATCH) * (W // PATCH)
SEQ = NUM_PATCHES + 1          # 5 real tokens (cls + patches)
SEQ_PAD = 8                    # padded to a sublane multiple
LN_EPS = 1e-5
BN_EPS = 1e-5


def _erf(x):
    # Abramowitz & Stegun 7.1.26 rational approximation (max abs err 1.5e-7,
    # below f32 round-off here).  Keeps nn.GELU()'s exact-erf semantics while
    # only using exp / abs / select, which always lower in Mosaic.
    p = 0.3275911
    a1, a2, a3, a4, a5 = (0.254829592, -0.284496736, 1.421413741,
                          -1.453152027, 1.061405429)
    ax = jnp.abs(x)
    t = 1.0 / (1.0 + p * ax)
    poly = ((((a5 * t + a4) * t + a3) * t + a2) * t + a1) * t
    y = 1.0 - poly * jnp.exp(-(ax * ax))
    return jnp.where(x < 0.0, -y, y)


# ---------------------------------------------------------------------------
# Kernel 1: conv1 (im2col matmul, transposed) + BatchNorm (eval) + exact GELU
#   output is [C1, B*H*W]  -> last dim 2048 (multiple of 128) => lane-dense
# ---------------------------------------------------------------------------
def _conv_bn_gelu_kernel(a_ref, w_ref, b_ref, scale_ref, shift_ref, o_ref):
    # a: [9*C_IN, B*H*W]   w: [C1, 9*C_IN]   b/scale/shift: [C1, 1]
    y = jnp.dot(w_ref[...], a_ref[...], preferred_element_type=jnp.float32)
    y = y + b_ref[...]
    y = y * scale_ref[...] + shift_ref[...]          # eval-mode BatchNorm2d
    # exact (erf) GELU, matching nn.GELU() default
    o_ref[...] = 0.5 * y * (1.0 + _erf(y * (1.0 / math.sqrt(2.0))))


def conv1_bn_gelu(x_nchw, conv_wT, conv_b, bn_scale, bn_shift):
    x = jnp.transpose(x_nchw, (0, 2, 3, 1))                      # NCHW -> NHWC
    xp = jnp.pad(x, ((0, 0), (1, 1), (1, 1), (0, 0)))            # padding=1
    cols = [xp[:, dy:dy + H, dx:dx + W, :] for dy in range(3) for dx in range(3)]
    im2col_t = jnp.concatenate(cols, axis=-1).reshape(B * H * W, 9 * C_IN).T

    out = pl.pallas_call(
        _conv_bn_gelu_kernel,
        out_shape=jax.ShapeDtypeStruct((C1, B * H * W), jnp.float32),
        in_specs=[pl.BlockSpec(memory_space=pltpu.MemorySpace.VMEM)] * 5,
        out_specs=pl.BlockSpec(memory_space=pltpu.MemorySpace.VMEM),
    )(im2col_t, conv_wT, conv_b, bn_scale, bn_shift)
    # TODO(synk): at module scale (H=128, long time axis) add a grid over the
    # pixel dimension (~512-1024 cols per block) instead of whole-array VMEM.
    return out.reshape(C1, B, H, W).transpose(1, 2, 3, 0)        # -> NHWC


# ---------------------------------------------------------------------------
# Kernel 2: patch_embed = Conv2d(C1, D, 16, stride=16) as one bf16 matmul
# ---------------------------------------------------------------------------
def _patch_embed_kernel(a_ref, w_ref, b_ref, o_ref):
    # a: [B*P, 16*16*C1] bf16   w: [16*16*C1, D] bf16   b: [1, D] f32
    o_ref[...] = jnp.dot(a_ref[...], w_ref[...],
                         preferred_element_type=jnp.float32) + b_ref[...]


def patch_embed(feat_nhwc, patch_w_bf16, patch_b):
    nh, nw = H // PATCH, W // PATCH
    p = feat_nhwc.reshape(B, nh, PATCH, nw, PATCH, C1)
    p = p.transpose(0, 1, 3, 2, 4, 5).reshape(B * NUM_PATCHES, PATCH * PATCH * C1)
    return pl.pallas_call(
        _patch_embed_kernel,
        out_shape=jax.ShapeDtypeStruct((B * NUM_PATCHES, D_MODEL), jnp.float32),
        in_specs=[pl.BlockSpec(memory_space=pltpu.MemorySpace.VMEM)] * 3,
        out_specs=pl.BlockSpec(memory_space=pltpu.MemorySpace.VMEM),
    )(p.astype(jnp.bfloat16), patch_w_bf16, patch_b)


# ---------------------------------------------------------------------------
# Kernel 3: 12 post-norm TransformerEncoder layers on [B*SEQ_PAD, D] state
#   The token state lives in the resident output block (constant index_map),
#   so no carry scratch is needed.
# ---------------------------------------------------------------------------
def _layer_norm(x, g, b):
    mu = jnp.mean(x, axis=-1, keepdims=True)
    var = jnp.mean((x - mu) ** 2, axis=-1, keepdims=True)
    return (x - mu) * lax.rsqrt(var + LN_EPS) * g + b


def _transformer_kernel(x0_ref,
                        wqkv_ref, bqkv_ref, wo_ref, bo_ref,
                        g1_ref, be1_ref, g2_ref, be2_ref,
                        wff1_ref, bff1_ref, wff2_ref, bff2_ref,
                        out_ref):
    layer = pl.program_id(0)

    # layer 0: seed the resident output block with the padded token state
    @pl.when(layer == 0)
    def _():
        out_ref[...] = x0_ref[...]

    x = out_ref[...]                                 # [B*SP, D] f32
    xb = x.astype(jnp.bfloat16)
    scale = 1.0 / math.sqrt(HEAD_DIM)

    # ---- multi-head self-attention (dropout == identity, eval mode) --------
    qkv = jnp.dot(xb, wqkv_ref[...],
                  preferred_element_type=jnp.float32) + bqkv_ref[...]  # [B*SP,3D]
    q = (qkv[:, 0:D_MODEL] * scale).reshape(B, SEQ_PAD, D_MODEL)
    k = qkv[:, D_MODEL:2 * D_MODEL].reshape(B, SEQ_PAD, D_MODEL)
    v = qkv[:, 2 * D_MODEL:3 * D_MODEL].reshape(B, SEQ_PAD, D_MODEL)

    # mask the SEQ_PAD-SEQ padded key positions
    kpos = lax.broadcasted_iota(jnp.int32, (1, 1, SEQ_PAD), 2)
    kbias = jnp.where(kpos < SEQ, 0.0, -1e9)

    heads = []
    for h in range(N_HEADS):                         # 4 heads, batched over B
        lo, hi = h * HEAD_DIM, (h + 1) * HEAD_DIM
        qh, kh, vh = q[:, :, lo:hi], k[:, :, lo:hi], v[:, :, lo:hi]
        s = jnp.einsum('bqd,bkd->bqk', qh, kh,
                       preferred_element_type=jnp.float32)         # [B,SP,SP]
        s = s + kbias
        m = jnp.max(s, axis=-1, keepdims=True)
        p = jnp.exp(s - m)
        denom = jnp.sum(p, axis=-1, keepdims=True)
        p = p * pl.reciprocal(denom, approx=True)                  # EUP divide
        oh = jnp.einsum('bqk,bkd->bqd', p, vh,
                        preferred_element_type=jnp.float32)        # [B,SP,Hd]
        heads.append(oh)

    # concatenate head outputs in registers (no partial-lane VMEM stores)
    attn = jnp.concatenate(heads, axis=-1).reshape(B * SEQ_PAD, D_MODEL)
    attn = jnp.dot(attn.astype(jnp.bfloat16), wo_ref[...],
                   preferred_element_type=jnp.float32) + bo_ref[...]

    # post-norm: x = norm1(x + sa(x))
    x = _layer_norm(x + attn, g1_ref[...], be1_ref[...])

    # ---- feed-forward (ReLU) ------------------------------------------------
    hid = jnp.dot(x.astype(jnp.bfloat16), wff1_ref[...],
                  preferred_element_type=jnp.float32) + bff1_ref[...]
    hid = jnp.maximum(hid, 0.0)
    ff = jnp.dot(hid.astype(jnp.bfloat16), wff2_ref[...],
                 preferred_element_type=jnp.float32) + bff2_ref[...]
    x = _layer_norm(x + ff, g2_ref[...], be2_ref[...])

    out_ref[...] = x


def transformer_stack(x0, params):
    in_specs = [
        pl.BlockSpec((B * SEQ_PAD, D_MODEL), lambda l: (0, 0)),           # x0
        pl.BlockSpec((None, D_MODEL, 3 * D_MODEL), lambda l: (l, 0, 0)),  # wqkv
        pl.BlockSpec((None, 1, 3 * D_MODEL), lambda l: (l, 0, 0)),        # bqkv
        pl.BlockSpec((None, D_MODEL, D_MODEL), lambda l: (l, 0, 0)),      # wo
        pl.BlockSpec((None, 1, D_MODEL), lambda l: (l, 0, 0)),            # bo
        pl.BlockSpec((None, 1, D_MODEL), lambda l: (l, 0, 0)),            # ln1 g
        pl.BlockSpec((None, 1, D_MODEL), lambda l: (l, 0, 0)),            # ln1 b
        pl.BlockSpec((None, 1, D_MODEL), lambda l: (l, 0, 0)),            # ln2 g
        pl.BlockSpec((None, 1, D_MODEL), lambda l: (l, 0, 0)),            # ln2 b
        pl.BlockSpec((None, D_MODEL, D_FF), lambda l: (l, 0, 0)),         # ff1 w
        pl.BlockSpec((None, 1, D_FF), lambda l: (l, 0, 0)),               # ff1 b
        pl.BlockSpec((None, D_FF, D_MODEL), lambda l: (l, 0, 0)),         # ff2 w
        pl.BlockSpec((None, 1, D_MODEL), lambda l: (l, 0, 0)),            # ff2 b
    ]
    return pl.pallas_call(
        _transformer_kernel,
        out_shape=jax.ShapeDtypeStruct((B * SEQ_PAD, D_MODEL), jnp.float32),
        grid=(N_LAYERS,),
        in_specs=in_specs,
        out_specs=pl.BlockSpec((B * SEQ_PAD, D_MODEL), lambda l: (0, 0)),
        compiler_params=pltpu.CompilerParams(dimension_semantics=("arbitrary",)),
    )(x0, params["wqkv"], params["bqkv"], params["wo"], params["bo"],
      params["ln1_g"], params["ln1_b"], params["ln2_g"], params["ln2_b"],
      params["wff1"], params["bff1"], params["wff2"], params["bff2"])


# ---------------------------------------------------------------------------
# Full forward pass
# ---------------------------------------------------------------------------
@jax.jit
def angle_classifier_forward(x_nchw, params):
    feat = conv1_bn_gelu(x_nchw, params["conv_wT"], params["conv_b"],
                         params["bn_scale"], params["bn_shift"])   # [B,H,W,C1]
    tok = patch_embed(feat, params["patch_w"], params["patch_b"])  # [B*NP, D]

    # Build padded initial token state [B*SEQ_PAD, D]:
    #   row 0: cls + pos[0], rows 1..4: patch tokens + pos[1..4], rows 5..7: 0
    tok = tok.reshape(B, NUM_PATCHES, D_MODEL)
    cls_row = jnp.broadcast_to(params["cls"] + params["pos"][:, 0:1, :],
                               (B, 1, D_MODEL))
    body = tok + params["pos"][:, 1:SEQ, :]
    pad = jnp.zeros((B, SEQ_PAD - SEQ, D_MODEL), jnp.float32)
    x0 = jnp.concatenate([cls_row, body, pad], axis=1).reshape(B * SEQ_PAD, D_MODEL)

    xf = transformer_stack(x0, params)                             # [B*SP, D]
    cls_out = xf.reshape(B, SEQ_PAD, D_MODEL)[:, 0, :]             # [B, D]
    # tiny [B,128]x[128,4] head in XLA (no wasted MXU pass / 4-lane store)
    return cls_out @ params["fc_w"] + params["fc_b"]


# ---------------------------------------------------------------------------
# Deterministic parameter initialization (synthetic; shapes follow __init__)
# ---------------------------------------------------------------------------
def init_params(key):
    keys = iter(jax.random.split(key, 32))

    def nrm(shape, s=0.02):
        return s * jax.random.normal(next(keys), shape, jnp.float32)

    # BatchNorm2d(C1) eval-mode affine from (gamma, beta, running stats).
    # TODO(synk): train-mode batch-statistics BN / active dropout not modeled.
    gamma = 1.0 + 0.1 * jax.random.normal(next(keys), (C1, 1), jnp.float32)
    beta = 0.1 * jax.random.normal(next(keys), (C1, 1), jnp.float32)
    run_mean = 0.1 * jax.random.normal(next(keys), (C1, 1), jnp.float32)
    run_var = 1.0 + 0.1 * jnp.abs(jax.random.normal(next(keys), (C1, 1), jnp.float32))
    bn_scale = gamma / jnp.sqrt(run_var + BN_EPS)
    bn_shift = beta - run_mean * bn_scale

    bf16 = jnp.bfloat16
    return dict(
        conv_wT=nrm((C1, 9 * C_IN), 0.1),          # 3x3 conv taps, [out_c, taps]
        conv_b=nrm((C1, 1), 0.1),
        bn_scale=bn_scale,
        bn_shift=bn_shift,
        patch_w=nrm((PATCH * PATCH * C1, D_MODEL), 0.02).astype(bf16),
        patch_b=nrm((1, D_MODEL), 0.02),
        cls=nrm((1, 1, D_MODEL), 1.0),
        pos=nrm((1, SEQ, D_MODEL), 1.0),
        # transformer matmul weights in bf16 (f32 MXU accumulation in-kernel)
        wqkv=nrm((N_LAYERS, D_MODEL, 3 * D_MODEL), 0.02).astype(bf16),
        bqkv=nrm((N_LAYERS, 1, 3 * D_MODEL), 0.02),
        wo=nrm((N_LAYERS, D_MODEL, D_MODEL), 0.02).astype(bf16),
        bo=nrm((N_LAYERS, 1, D_MODEL), 0.02),
        ln1_g=jnp.ones((N_LAYERS, 1, D_MODEL), jnp.float32),
        ln1_b=jnp.zeros((N_LAYERS, 1, D_MODEL), jnp.float32),
        ln2_g=jnp.ones((N_LAYERS, 1, D_MODEL), jnp.float32),
        ln2_b=jnp.zeros((N_LAYERS, 1, D_MODEL), jnp.float32),
        wff1=nrm((N_LAYERS, D_MODEL, D_FF), 0.02).astype(bf16),
        bff1=nrm((N_LAYERS, 1, D_FF), 0.02),
        wff2=nrm((N_LAYERS, D_FF, D_MODEL), 0.02).astype(bf16),
        bff2=nrm((N_LAYERS, 1, D_MODEL), 0.02),
        fc_w=nrm((D_MODEL, N_ANGLE_BINS), 0.02),
        fc_b=nrm((1, N_ANGLE_BINS), 0.02),
    )


if __name__ == "__main__":
    key = jax.random.PRNGKey(0)
    k_in, k_par = jax.random.split(key)
    # PyTorch-style NCHW input: [batch, 4 channels, mel_bins, time_steps]
    x = jax.random.normal(k_in, (B, C_IN, H, W), jnp.float32)
    params = init_params(k_par)

    logits = angle_classifier_forward(x, params)
    logits = jax.block_until_ready(logits)

    assert logits.shape == (B, N_ANGLE_BINS), logits.shape
    assert bool(jnp.all(jnp.isfinite(logits)))
    print("KERNEL_OK")
</pallas_src>

<mosaic_0001>
module attributes {stable_mosaic.version = 11 : i64} {
  func.func @_conv_bn_gelu_kernel(%arg0: memref<36x2048xf32, #tpu.memory_space<vmem>>, %arg1: memref<16x36xf32, #tpu.memory_space<vmem>>, %arg2: memref<16x1xf32, #tpu.memory_space<vmem>>, %arg3: memref<16x1xf32, #tpu.memory_space<vmem>>, %arg4: memref<16x1xf32, #tpu.memory_space<vmem>>, %arg5: memref<16x2048xf32, #tpu.memory_space<vmem>>) attributes {dimension_semantics = [], scalar_prefetch = 0 : i64, scratch_operands = 0 : i64, tpu.core_type = #tpu.core_type<tc>} {
    %c0 = arith.constant 0 : index
    %c0_0 = arith.constant 0 : index
    %0 = vector.load %arg1[%c0, %c0_0] : memref<16x36xf32, #tpu.memory_space<vmem>>, vector<16x36xf32>
    %c0_1 = arith.constant 0 : index
    %c0_2 = arith.constant 0 : index
    %1 = vector.load %arg0[%c0_1, %c0_2] : memref<36x2048xf32, #tpu.memory_space<vmem>>, vector<36x2048xf32>
    %cst = arith.constant dense<0.000000e+00> : vector<16x2048xf32>
    %2 = tpu.matmul %0, %1, %cst {dimension_numbers = #tpu.dot_dimension_numbers<[1], [0], [0], [1], [0, 0, 1, 1], [], []>} : vector<16x36xf32>, vector<36x2048xf32>, vector<16x2048xf32> -> vector<16x2048xf32>
    %c0_3 = arith.constant 0 : index
    %c0_4 = arith.constant 0 : index
    %3 = vector.load %arg2[%c0_3, %c0_4] : memref<16x1xf32, #tpu.memory_space<vmem>>, vector<16x1xf32>
    %4 = vector.broadcast %3 : vector<16x1xf32> to vector<16x2048xf32>
    %5 = arith.addf %2, %4 : vector<16x2048xf32>
    %c0_5 = arith.constant 0 : index
    %c0_6 = arith.constant 0 : index
    %6 = vector.load %arg3[%c0_5, %c0_6] : memref<16x1xf32, #tpu.memory_space<vmem>>, vector<16x1xf32>
    %7 = vector.broadcast %6 : vector<16x1xf32> to vector<16x2048xf32>
    %8 = arith.mulf %5, %7 : vector<16x2048xf32>
    %c0_7 = arith.constant 0 : index
    %c0_8 = arith.constant 0 : index
    %9 = vector.load %arg4[%c0_7, %c0_8] : memref<16x1xf32, #tpu.memory_space<vmem>>, vector<16x1xf32>
    %10 = vector.broadcast %9 : vector<16x1xf32> to vector<16x2048xf32>
    %11 = arith.addf %8, %10 : vector<16x2048xf32>
    %cst_9 = arith.constant 5.000000e-01 : f32
    %12 = vector.broadcast %cst_9 : f32 to vector<16x2048xf32>
    %13 = arith.mulf %12, %11 : vector<16x2048xf32>
    %cst_10 = arith.constant 0.707106769 : f32
    %14 = vector.broadcast %cst_10 : f32 to vector<16x2048xf32>
    %15 = arith.mulf %11, %14 : vector<16x2048xf32>
    %16 = math.absf %15 : vector<16x2048xf32>
    %cst_11 = arith.constant 0.327591091 : f32
    %17 = vector.broadcast %cst_11 : f32 to vector<16x2048xf32>
    %18 = arith.mulf %17, %16 : vector<16x2048xf32>
    %cst_12 = arith.constant 1.000000e+00 : f32
    %19 = vector.broadcast %cst_12 : f32 to vector<16x2048xf32>
    %20 = arith.addf %19, %18 : vector<16x2048xf32>
    %cst_13 = arith.constant 1.000000e+00 : f32
    %21 = vector.broadcast %cst_13 : f32 to vector<16x2048xf32>
    %22 = arith.divf %21, %20 : vector<16x2048xf32>
    %cst_14 = arith.constant 1.06140542 : f32
    %23 = vector.broadcast %cst_14 : f32 to vector<16x2048xf32>
    %24 = arith.mulf %23, %22 : vector<16x2048xf32>
    %cst_15 = arith.constant -1.45315206 : f32
    %25 = vector.broadcast %cst_15 : f32 to vector<16x2048xf32>
    %26 = arith.addf %24, %25 : vector<16x2048xf32>
    %27 = arith.mulf %26, %22 : vector<16x2048xf32>
    %cst_16 = arith.constant 1.42141378 : f32
    %28 = vector.broadcast %cst_16 : f32 to vector<16x2048xf32>
    %29 = arith.addf %27, %28 : vector<16x2048xf32>
    %30 = arith.mulf %29, %22 : vector<16x2048xf32>
    %cst_17 = arith.constant -0.284496725 : f32
    %31 = vector.broadcast %cst_17 : f32 to vector<16x2048xf32>
    %32 = arith.addf %30, %31 : vector<16x2048xf32>
    %33 = arith.mulf %32, %22 : vector<16x2048xf32>
    %cst_18 = arith.constant 0.254829586 : f32
    %34 = vector.broadcast %cst_18 : f32 to vector<16x2048xf32>
    %35 = arith.addf %33, %34 : vector<16x2048xf32>
    %36 = arith.mulf %35, %22 : vector<16x2048xf32>
    %37 = arith.mulf %16, %16 : vector<16x2048xf32>
    %cst_19 = arith.constant 0.000000e+00 : f32
    %38 = vector.broadcast %cst_19 : f32 to vector<16x2048xf32>
    %39 = arith.subf %38, %37 : vector<16x2048xf32>
    %40 = math.exp %39 : vector<16x2048xf32>
    %41 = arith.mulf %36, %40 : vector<16x2048xf32>
    %cst_20 = arith.constant 1.000000e+00 : f32
    %42 = vector.broadcast %cst_20 : f32 to vector<16x2048xf32>
    %43 = arith.subf %42, %41 : vector<16x2048xf32>
    %cst_21 = arith.constant 0.000000e+00 : f32
    %44 = vector.broadcast %cst_21 : f32 to vector<16x2048xf32>
    %45 = arith.cmpf olt, %15, %44 : vector<16x2048xf32>
    %cst_22 = arith.constant 0.000000e+00 : f32
    %46 = vector.broadcast %cst_22 : f32 to vector<16x2048xf32>
    %47 = arith.subf %46, %43 : vector<16x2048xf32>
    %48 = arith.select %45, %47, %43 : vector<16x2048xi1>, vector<16x2048xf32>
    %cst_23 = arith.constant 1.000000e+00 : f32
    %49 = vector.broadcast %cst_23 : f32 to vector<16x2048xf32>
    %50 = arith.addf %49, %48 : vector<16x2048xf32>
    %51 = arith.mulf %13, %50 : vector<16x2048xf32>
    %c0_24 = arith.constant 0 : index
    %c0_25 = arith.constant 0 : index
    %52 = vector.load %arg5[%c0_24, %c0_25] : memref<16x2048xf32, #tpu.memory_space<vmem>>, vector<16x2048xf32>
    tpu.vector_store %arg5[%c0_24, %c0_25], %51 {strides = array<i32>} : memref<16x2048xf32, #tpu.memory_space<vmem>>, vector<16x2048xf32>,
    return
  }
}

module attributes {stable_mosaic.version = 11 : i64} {
  func.func @_patch_embed_kernel(%arg0: memref<8x4096xbf16, #tpu.memory_space<vmem>>, %arg1: memref<4096x128xbf16, #tpu.memory_space<vmem>>, %arg2: memref<1x128xf32, #tpu.memory_space<vmem>>, %arg3: memref<8x128xf32, #tpu.memory_space<vmem>>) attributes {dimension_semantics = [], scalar_prefetch = 0 : i64, scratch_operands = 0 : i64, tpu.core_type = #tpu.core_type<tc>} {
    %c0 = arith.constant 0 : index
    %c0_0 = arith.constant 0 : index
    %0 = vector.load %arg0[%c0, %c0_0] : memref<8x4096xbf16, #tpu.memory_space<vmem>>, vector<8x4096xbf16>
    %c0_1 = arith.constant 0 : index
    %c0_2 = arith.constant 0 : index
    %1 = vector.load %arg1[%c0_1, %c0_2] : memref<4096x128xbf16, #tpu.memory_space<vmem>>, vector<4096x128xbf16>
    %cst = arith.constant dense<0.000000e+00> : vector<8x128xf32>
    %2 = tpu.matmul %0, %1, %cst {dimension_numbers = #tpu.dot_dimension_numbers<[1], [0], [0], [1], [0, 0, 1, 1], [], []>} : vector<8x4096xbf16>, vector<4096x128xbf16>, vector<8x128xf32> -> vector<8x128xf32>
    %c0_3 = arith.constant 0 : index
    %c0_4 = arith.constant 0 : index
    %3 = vector.load %arg2[%c0_3, %c0_4] : memref<1x128xf32, #tpu.memory_space<vmem>>, vector<1x128xf32>
    %4 = vector.broadcast %3 : vector<1x128xf32> to vector<8x128xf32>
    %5 = arith.addf %2, %4 : vector<8x128xf32>
    %c0_5 = arith.constant 0 : index
    %c0_6 = arith.constant 0 : index
    %6 = vector.load %arg3[%c0_5, %c0_6] : memref<8x128xf32, #tpu.memory_space<vmem>>, vector<8x128xf32>
    tpu.vector_store %arg3[%c0_5, %c0_6], %5 {strides = array<i32>} : memref<8x128xf32, #tpu.memory_space<vmem>>, vector<8x128xf32>,
    return
  }
}

module attributes {stable_mosaic.version = 11 : i64} {
  func.func @_transformer_kernel(%arg0: i32, %arg1: memref<16x128xf32, #tpu.memory_space<vmem>>, %arg2: memref<1x128x384xbf16, #tpu.memory_space<vmem>>, %arg3: memref<1x1x384xf32, #tpu.memory_space<vmem>>, %arg4: memref<1x128x128xbf16, #tpu.memory_space<vmem>>, %arg5: memref<1x1x128xf32, #tpu.memory_space<vmem>>, %arg6: memref<1x1x128xf32, #tpu.memory_space<vmem>>, %arg7: memref<1x1x128xf32, #tpu.memory_space<vmem>>, %arg8: memref<1x1x128xf32, #tpu.memory_space<vmem>>, %arg9: memref<1x1x128xf32, #tpu.memory_space<vmem>>, %arg10: memref<1x128x256xbf16, #tpu.memory_space<vmem>>, %arg11: memref<1x1x256xf32, #tpu.memory_space<vmem>>, %arg12: memref<1x256x128xbf16, #tpu.memory_space<vmem>>, %arg13: memref<1x1x128xf32, #tpu.memory_space<vmem>>, %arg14: memref<16x128xf32, #tpu.memory_space<vmem>>) attributes {dimension_semantics = [#tpu.dimension_semantics<arbitrary>], iteration_bounds = array<i64: 12>, scalar_prefetch = 0 : i64, scratch_operands = 0 : i64, tpu.core_type = #tpu.core_type<tc>, window_params = [{pipeline_mode = #tpu.pipeline_mode<synchronous>, transform_indices = @transform_0, window_bounds = array<i64: 16, 128>}, {transform_indices = @transform_1, window_bounds = array<i64: 1, 128, 384>}, {transform_indices = @transform_2, window_bounds = array<i64: 1, 1, 384>}, {transform_indices = @transform_3, window_bounds = array<i64: 1, 128, 128>}, {transform_indices = @transform_4, window_bounds = array<i64: 1, 1, 128>}, {transform_indices = @transform_5, window_bounds = array<i64: 1, 1, 128>}, {transform_indices = @transform_6, window_bounds = array<i64: 1, 1, 128>}, {transform_indices = @transform_7, window_bounds = array<i64: 1, 1, 128>}, {transform_indices = @transform_8, window_bounds = array<i64: 1, 1, 128>}, {transform_indices = @transform_9, window_bounds = array<i64: 1, 128, 256>}, {transform_indices = @transform_10, window_bounds = array<i64: 1, 1, 256>}, {transform_indices = @transform_11, window_bounds = array<i64: 1, 256, 128>}, {transform_indices = @transform_12, window_bounds = array<i64: 1, 1, 128>}, {pipeline_mode = #tpu.pipeline_mode<synchronous>, transform_indices = @transform_13, window_bounds = array<i64: 16, 128>}]} {
    %c0_i32 = arith.constant 0 : i32
    %0 = arith.cmpi eq, %arg0, %c0_i32 : i32
    %1 = arith.extui %0 : i1 to i32
    %c0_i32_0 = arith.constant 0 : i32
    %2 = arith.cmpi ne, %1, %c0_i32_0 : i32
    scf.if %2 {
      %c0_73 = arith.constant 0 : index
      %c0_74 = arith.constant 0 : index
      %177 = vector.load %arg1[%c0_73, %c0_74] : memref<16x128xf32, #tpu.memory_space<vmem>>, vector<16x128xf32>
      %c0_75 = arith.constant 0 : index
      %c0_76 = arith.constant 0 : index
      %178 = vector.load %arg14[%c0_75, %c0_76] : memref<16x128xf32, #tpu.memory_space<vmem>>, vector<16x128xf32>
      tpu.vector_store %arg14[%c0_75, %c0_76], %177 {strides = array<i32>} : memref<16x128xf32, #tpu.memory_space<vmem>>, vector<16x128xf32>,
    } else {
    }
    %c0 = arith.constant 0 : index
    %c0_1 = arith.constant 0 : index
    %3 = vector.load %arg14[%c0, %c0_1] : memref<16x128xf32, #tpu.memory_space<vmem>>, vector<16x128xf32>
    %4 = arith.truncf %3 : vector<16x128xf32> to vector<16x128xbf16>
    %c0_2 = arith.constant 0 : index
    %c0_3 = arith.constant 0 : index
    %c0_4 = arith.constant 0 : index
    %5 = vector.load %arg2[%c0_2, %c0_3, %c0_4] : memref<1x128x384xbf16, #tpu.memory_space<vmem>>, vector<1x128x384xbf16>
    %6 = vector.shape_cast %5 : vector<1x128x384xbf16> to vector<128x384xbf16>
    %cst = arith.constant dense<0.000000e+00> : vector<16x384xf32>
    %7 = tpu.matmul %4, %6, %cst {dimension_numbers = #tpu.dot_dimension_numbers<[1], [0], [0], [1], [0, 0, 1, 1], [], []>} : vector<16x128xbf16>, vector<128x384xbf16>, vector<16x384xf32> -> vector<16x384xf32>
    %c0_5 = arith.constant 0 : index
    %c0_6 = arith.constant 0 : index
    %c0_7 = arith.constant 0 : index
    %8 = vector.load %arg3[%c0_5, %c0_6, %c0_7] : memref<1x1x384xf32, #tpu.memory_space<vmem>>, vector<1x1x384xf32>
    %9 = vector.shape_cast %8 : vector<1x1x384xf32> to vector<1x384xf32>
    %10 = vector.broadcast %9 : vector<1x384xf32> to vector<16x384xf32>
    %11 = arith.addf %7, %10 : vector<16x384xf32>
    %12 = vector.extract_strided_slice %11 {offsets = [0, 0], sizes = [16, 128], strides = [1, 1]} : vector<16x384xf32> to vector<16x128xf32>
    %cst_8 = arith.constant 0.176776692 : f32
    %13 = vector.broadcast %cst_8 : f32 to vector<16x128xf32>
    %14 = arith.mulf %12, %13 : vector<16x128xf32>
    %15 = vector.shape_cast %14 : vector<16x128xf32> to vector<2x8x128xf32>
    %16 = vector.extract_strided_slice %11 {offsets = [0, 128], sizes = [16, 128], strides = [1, 1]} : vector<16x384xf32> to vector<16x128xf32>
    %17 = vector.shape_cast %16 : vector<16x128xf32> to vector<2x8x128xf32>
    %18 = vector.extract_strided_slice %11 {offsets = [0, 256], sizes = [16, 128], strides = [1, 1]} : vector<16x384xf32> to vector<16x128xf32>
    %19 = vector.shape_cast %18 : vector<16x128xf32> to vector<2x8x128xf32>
    %20 = tpu.iota {dimensions = array<i32: 2>} : vector<1x1x8xi32>
    %c5_i32 = arith.constant 5 : i32
    %21 = vector.broadcast %c5_i32 : i32 to vector<1x1x8xi32>
    %22 = arith.cmpi slt, %20, %21 : vector<1x1x8xi32>
    %cst_9 = arith.constant 0.000000e+00 : f32
    %cst_10 = arith.constant -1.000000e+09 : f32
    %23 = vector.broadcast %cst_9 : f32 to vector<1x1x8xf32>
    %24 = vector.broadcast %cst_10 : f32 to vector<1x1x8xf32>
    %25 = arith.select %22, %23, %24 : vector<1x1x8xi1>, vector<1x1x8xf32>
    %26 = vector.extract_strided_slice %15 {offsets = [0, 0, 0], sizes = [2, 8, 32], strides = [1, 1, 1]} : vector<2x8x128xf32> to vector<2x8x32xf32>
    %27 = vector.extract_strided_slice %17 {offsets = [0, 0, 0], sizes = [2, 8, 32], strides = [1, 1, 1]} : vector<2x8x128xf32> to vector<2x8x32xf32>
    %28 = vector.extract_strided_slice %19 {offsets = [0, 0, 0], sizes = [2, 8, 32], strides = [1, 1, 1]} : vector<2x8x128xf32> to vector<2x8x32xf32>
    "tpu.trace_start"() <{level = 10 : i32, message = "bqd,bkd->bqk"}> : () -> ()
    %cst_11 = arith.constant dense<0.000000e+00> : vector<2x8x8xf32>
    %29 = tpu.matmul %26, %27, %cst_11 {dimension_numbers = #tpu.dot_dimension_numbers<[2], [2], [1], [1], [0, 0, 0, 1, 1, 1], [0], [0]>} : vector<2x8x32xf32>, vector<2x8x32xf32>, vector<2x8x8xf32> -> vector<2x8x8xf32>
    "tpu.trace_stop"() : () -> ()
    %30 = vector.broadcast %25 : vector<1x1x8xf32> to vector<2x8x8xf32>
    %31 = arith.addf %29, %30 : vector<2x8x8xf32>
    %cst_12 = arith.constant dense<0xFF800000> : vector<2x8xf32>
    %32 = vector.multi_reduction <maximumf>, %31, %cst_12 [2] : vector<2x8x8xf32> to vector<2x8xf32>
    %33 = vector.shape_cast %32 : vector<2x8xf32> to vector<2x8x1xf32>
    %34 = vector.broadcast %33 : vector<2x8x1xf32> to vector<2x8x8xf32>
    %35 = arith.subf %31, %34 : vector<2x8x8xf32>
    %36 = math.exp %35 : vector<2x8x8xf32>
    %cst_13 = arith.constant dense<0.000000e+00> : vector<2x8xf32>
    %37 = vector.multi_reduction <add>, %36, %cst_13 [2] : vector<2x8x8xf32> to vector<2x8xf32>
    %38 = vector.shape_cast %37 : vector<2x8xf32> to vector<2x8x1xf32>
    %39 = tpu.reciprocal %38 {approx = true} : vector<2x8x1xf32> -> vector<2x8x1xf32>
    %40 = vector.broadcast %39 : vector<2x8x1xf32> to vector<2x8x8xf32>
    %41 = arith.mulf %36, %40 : vector<2x8x8xf32>
    "tpu.trace_start"() <{level = 10 : i32, message = "bqk,bkd->bqd"}> : () -> ()
    %cst_14 = arith.constant dense<0.000000e+00> : vector<2x8x32xf32>
    %42 = tpu.matmul %41, %28, %cst_14 {dimension_numbers = #tpu.dot_dimension_numbers<[2], [1], [1], [2], [0, 0, 0, 1, 1, 2], [0], [0]>} : vector<2x8x8xf32>, vector<2x8x32xf32>, vector<2x8x32xf32> -> vector<2x8x32xf32>
    "tpu.trace_stop"() : () -> ()
    %43 = vector.extract_strided_slice %15 {offsets = [0, 0, 32], sizes = [2, 8, 32], strides = [1, 1, 1]} : vector<2x8x128xf32> to vector<2x8x32xf32>
    %44 = vector.extract_strided_slice %17 {offsets = [0, 0, 32], sizes = [2, 8, 32], strides = [1, 1, 1]} : vector<2x8x128xf32> to vector<2x8x32xf32>
    %45 = vector.extract_strided_slice %19 {offsets = [0, 0, 32], sizes = [2, 8, 32], strides = [1, 1, 1]} : vector<2x8x128xf32> to vector<2x8x32xf32>
    "tpu.trace_start"() <{level = 10 : i32, message = "bqd,bkd->bqk"}> : () -> ()
    %cst_15 = arith.constant dense<0.000000e+00> : vector<2x8x8xf32>
    %46 = tpu.matmul %43, %44, %cst_15 {dimension_numbers = #tpu.dot_dimension_numbers<[2], [2], [1], [1], [0, 0, 0, 1, 1, 1], [0], [0]>} : vector<2x8x32xf32>, vector<2x8x32xf32>, vector<2x8x8xf32> -> vector<2x8x8xf32>
    "tpu.trace_stop"() : () -> ()
    %47 = vector.broadcast %25 : vector<1x1x8xf32> to vector<2x8x8xf32>
    %48 = arith.addf %46, %47 : vector<2x8x8xf32>
    %cst_16 = arith.constant dense<0xFF800000> : vector<2x8xf32>
    %49 = vector.multi_reduction <maximumf>, %48, %cst_16 [2] : vector<2x8x8xf32> to vector<2x8xf32>
    %50 = vector.shape_cast %49 : vector<2x8xf32> to vector<2x8x1xf32>
    %51 = vector.broadcast %50 : vector<2x8x1xf32> to vector<2x8x8xf32>
    %52 = arith.subf %48, %51 : vector<2x8x8xf32>
    %53 = math.exp %52 : vector<2x8x8xf32>
    %cst_17 = arith.constant dense<0.000000e+00> : vector<2x8xf32>
    %54 = vector.multi_reduction <add>, %53, %cst_17 [2] : vector<2x8x8xf32> to vector<2x8xf32>
    %55 = vector.shape_cast %54 : vector<2x8xf32> to vector<2x8x1xf32>
    %56 = tpu.reciprocal %55 {approx = true} : vector<2x8x1xf32> -> vector<2x8x1xf32>
    %57 = vector.broadcast %56 : vector<2x8x1xf32> to vector<2x8x8xf32>
    %58 = arith.mulf %53, %57 : vector<2x8x8xf32>
    "tpu.trace_start"() <{level = 10 : i32, message = "bqk,bkd->bqd"}> : () -> ()
    %cst_18 = arith.constant dense<0.000000e+00> : vector<2x8x32xf32>
    %59 = tpu.matmul %58, %45, %cst_18 {dimension_numbers = #tpu.dot_dimension_numbers<[2], [1], [1], [2], [0, 0, 0, 1, 1, 2], [0], [0]>} : vector<2x8x8xf32>, vector<2x8x32xf32>, vector<2x8x32xf32> -> vector<2x8x32xf32>
    "tpu.trace_stop"() : () -> ()
    %60 = vector.extract_strided_slice %15 {offsets = [0, 0, 64], sizes = [2, 8, 32], strides = [1, 1, 1]} : vector<2x8x128xf32> to vector<2x8x32xf32>
    %61 = vector.extract_strided_slice %17 {offsets = [0, 0, 64], sizes = [2, 8, 32], strides = [1, 1, 1]} : vector<2x8x128xf32> to vector<2x8x32xf32>
    %62 = vector.extract_strided_slice %19 {offsets = [0, 0, 64], sizes = [2, 8, 32], strides = [1, 1, 1]} : vector<2x8x128xf32> to vector<2x8x32xf32>
    "tpu.trace_start"() <{level = 10 : i32, message = "bqd,bkd->bqk"}> : () -> ()
    %cst_19 = arith.constant dense<0.000000e+00> : vector<2x8x8xf32>
    %63 = tpu.matmul %60, %61, %cst_19 {dimension_numbers = #tpu.dot_dimension_numbers<[2], [2], [1], [1], [0, 0, 0, 1, 1, 1], [0], [0]>} : vector<2x8x32xf32>, vector<2x8x32xf32>, vector<2x8x8xf32> -> vector<2x8x8xf32>
    "tpu.trace_stop"() : () -> ()
    %64 = vector.broadcast %25 : vector<1x1x8xf32> to vector<2x8x8xf32>
    %65 = arith.addf %63, %64 : vector<2x8x8xf32>
    %cst_20 = arith.constant dense<0xFF800000> : vector<2x8xf32>
    %66 = vector.multi_reduction <maximumf>, %65, %cst_20 [2] : vector<2x8x8xf32> to vector<2x8xf32>
    %67 = vector.shape_cast %66 : vector<2x8xf32> to vector<2x8x1xf32>
    %68 = vector.broadcast %67 : vector<2x8x1xf32> to vector<2x8x8xf32>
    %69 = arith.subf %65, %68 : vector<2x8x8xf32>
    %70 = math.exp %69 : vector<2x8x8xf32>
    %cst_21 = arith.constant dense<0.000000e+00> : vector<2x8xf32>
    %71 = vector.multi_reduction <add>, %70, %cst_21 [2] : vector<2x8x8xf32> to vector<2x8xf32>
    %72 = vector.shape_cast %71 : vector<2x8xf32> to vector<2x8x1xf32>
    %73 = tpu.reciprocal %72 {approx = true} : vector<2x8x1xf32> -> vector<2x8x1xf32>
    %74 = vector.broadcast %73 : vector<2x8x1xf32> to vector<2x8x8xf32>
    %75 = arith.mulf %70, %74 : vector<2x8x8xf32>
    "tpu.trace_start"() <{level = 10 : i32, message = "bqk,bkd->bqd"}> : () -> ()
    %cst_22 = arith.constant dense<0.000000e+00> : vector<2x8x32xf32>
    %76 = tpu.matmul %75, %62, %cst_22 {dimension_numbers = #tpu.dot_dimension_numbers<[2], [1], [1], [2], [0, 0, 0, 1, 1, 2], [0], [0]>} : vector<2x8x8xf32>, vector<2x8x32xf32>, vector<2x8x32xf32> -> vector<2x8x32xf32>
    "tpu.trace_stop"() : () -> ()
    %77 = vector.extract_strided_slice %15 {offsets = [0, 0, 96], sizes = [2, 8, 32], strides = [1, 1, 1]} : vector<2x8x128xf32> to vector<2x8x32xf32>
    %78 = vector.extract_strided_slice %17 {offsets = [0, 0, 96], sizes = [2, 8, 32], strides = [1, 1, 1]} : vector<2x8x128xf32> to vector<2x8x32xf32>
    %79 = vector.extract_strided_slice %19 {offsets = [0, 0, 96], sizes = [2, 8, 32], strides = [1, 1, 1]} : vector<2x8x128xf32> to vector<2x8x32xf32>
    "tpu.trace_start"() <{level = 10 : i32, message = "bqd,bkd->bqk"}> : () -> ()
    %cst_23 = arith.constant dense<0.000000e+00> : vector<2x8x8xf32>
    %80 = tpu.matmul %77, %78, %cst_23 {dimension_numbers = #tpu.dot_dimension_numbers<[2], [2], [1], [1], [0, 0, 0, 1, 1, 1], [0], [0]>} : vector<2x8x32xf32>, vector<2x8x32xf32>, vector<2x8x8xf32> -> vector<2x8x8xf32>
    "tpu.trace_stop"() : () -> ()
    %81 = vector.broadcast %25 : vector<1x1x8xf32> to vector<2x8x8xf32>
    %82 = arith.addf %80, %81 : vector<2x8x8xf32>
    %cst_24 = arith.constant dense<0xFF800000> : vector<2x8xf32>
    %83 = vector.multi_reduction <maximumf>, %82, %cst_24 [2] : vector<2x8x8xf32> to vector<2x8xf32>
    %84 = vector.shape_cast %83 : vector<2x8xf32> to vector<2x8x1xf32>
    %85 = vector.broadcast %84 : vector<2x8x1xf32> to vector<2x8x8xf32>
    %86 = arith.subf %82, %85 : vector<2x8x8xf32>
    %87 = math.exp %86 : vector<2x8x8xf32>
    %cst_25 = arith.constant dense<0.000000e+00> : vector<2x8xf32>
    %88 = vector.multi_reduction <add>, %87, %cst_25 [2] : vector<2x8x8xf32> to vector<2x8xf32>
    %89 = vector.shape_cast %88 : vector<2x8xf32> to vector<2x8x1xf32>
    %90 = tpu.reciprocal %89 {approx = true} : vector<2x8x1xf32> -> vector<2x8x1xf32>
    %91 = vector.broadcast %90 : vector<2x8x1xf32> to vector<2x8x8xf32>
    %92 = arith.mulf %87, %91 : vector<2x8x8xf32>
    "tpu.trace_start"() <{level = 10 : i32, message = "bqk,bkd->bqd"}> : () -> ()
    %cst_26 = arith.constant dense<0.000000e+00> : vector<2x8x32xf32>
    %93 = tpu.matmul %92, %79, %cst_26 {dimension_numbers = #tpu.dot_dimension_numbers<[2], [1], [1], [2], [0, 0, 0, 1, 1, 2], [0], [0]>} : vector<2x8x8xf32>, vector<2x8x32xf32>, vector<2x8x32xf32> -> vector<2x8x32xf32>
    "tpu.trace_stop"() : () -> ()
    %94 = tpu.concatenate %42, %59, %76, %93 in 2 : vector<2x8x32xf32>, vector<2x8x32xf32>, vector<2x8x32xf32>, vector<2x8x32xf32> -> vector<2x8x128xf32>
    %95 = vector.shape_cast %94 : vector<2x8x128xf32> to vector<16x128xf32>
    %96 = arith.truncf %95 : vector<16x128xf32> to vector<16x128xbf16>
    %c0_27 = arith.constant 0 : index
    %c0_28 = arith.constant 0 : index
    %c0_29 = arith.constant 0 : index
    %97 = vector.load %arg4[%c0_27, %c0_28, %c0_29] : memref<1x128x128xbf16, #tpu.memory_space<vmem>>, vector<1x128x128xbf16>
    %98 = vector.shape_cast %97 : vector<1x128x128xbf16> to vector<128x128xbf16>
    %cst_30 = arith.constant dense<0.000000e+00> : vector<16x128xf32>
    %99 = tpu.matmul %96, %98, %cst_30 {dimension_numbers = #tpu.dot_dimension_numbers<[1], [0], [0], [1], [0, 0, 1, 1], [], []>} : vector<16x128xbf16>, vector<128x128xbf16>, vector<16x128xf32> -> vector<16x128xf32>
    %c0_31 = arith.constant 0 : index
    %c0_32 = arith.constant 0 : index
    %c0_33 = arith.constant 0 : index
    %100 = vector.load %arg5[%c0_31, %c0_32, %c0_33] : memref<1x1x128xf32, #tpu.memory_space<vmem>>, vector<1x1x128xf32>
    %101 = vector.shape_cast %100 : vector<1x1x128xf32> to vector<1x128xf32>
    %102 = vector.broadcast %101 : vector<1x128xf32> to vector<16x128xf32>
    %103 = arith.addf %99, %102 : vector<16x128xf32>
    %104 = arith.addf %3, %103 : vector<16x128xf32>
    %c0_34 = arith.constant 0 : index
    %c0_35 = arith.constant 0 : index
    %c0_36 = arith.constant 0 : index
    %105 = vector.load %arg6[%c0_34, %c0_35, %c0_36] : memref<1x1x128xf32, #tpu.memory_space<vmem>>, vector<1x1x128xf32>
    %106 = vector.shape_cast %105 : vector<1x1x128xf32> to vector<1x128xf32>
    %c0_37 = arith.constant 0 : index
    %c0_38 = arith.constant 0 : index
    %c0_39 = arith.constant 0 : index
    %107 = vector.load %arg7[%c0_37, %c0_38, %c0_39] : memref<1x1x128xf32, #tpu.memory_space<vmem>>, vector<1x1x128xf32>
    %108 = vector.shape_cast %107 : vector<1x1x128xf32> to vector<1x128xf32>
    %cst_40 = arith.constant dense<0.000000e+00> : vector<16xf32>
    %109 = vector.multi_reduction <add>, %104, %cst_40 [1] : vector<16x128xf32> to vector<16xf32>
    %110 = vector.shape_cast %109 : vector<16xf32> to vector<16x1xf32>
    %cst_41 = arith.constant 1.280000e+02 : f32
    %111 = vector.broadcast %cst_41 : f32 to vector<16x1xf32>
    %112 = arith.divf %110, %111 : vector<16x1xf32>
    %113 = vector.broadcast %112 : vector<16x1xf32> to vector<16x128xf32>
    %114 = arith.subf %104, %113 : vector<16x128xf32>
    %115 = arith.mulf %114, %114 : vector<16x128xf32>
    %cst_42 = arith.constant dense<0.000000e+00> : vector<16xf32>
    %116 = vector.multi_reduction <add>, %115, %cst_42 [1] : vector<16x128xf32> to vector<16xf32>
    %117 = vector.shape_cast %116 : vector<16xf32> to vector<16x1xf32>
    %cst_43 = arith.constant 1.280000e+02 : f32
    %118 = vector.broadcast %cst_43 : f32 to vector<16x1xf32>
    %119 = arith.divf %117, %118 : vector<16x1xf32>
    %120 = vector.broadcast %112 : vector<16x1xf32> to vector<16x128xf32>
    %121 = arith.subf %104, %120 : vector<16x128xf32>
    %cst_44 = arith.constant 9.99999974E-6 : f32
    %122 = vector.broadcast %cst_44 : f32 to vector<16x1xf32>
    %123 = arith.addf %119, %122 : vector<16x1xf32>
    %124 = math.rsqrt %123 : vector<16x1xf32>
    %125 = vector.broadcast %124 : vector<16x1xf32> to vector<16x128xf32>
    %126 = arith.mulf %121, %125 : vector<16x128xf32>
    %127 = vector.broadcast %106 : vector<1x128xf32> to vector<16x128xf32>
    %128 = arith.mulf %126, %127 : vector<16x128xf32>
    %129 = vector.broadcast %108 : vector<1x128xf32> to vector<16x128xf32>
    %130 = arith.addf %128, %129 : vector<16x128xf32>
    %131 = arith.truncf %130 : vector<16x128xf32> to vector<16x128xbf16>
    %c0_45 = arith.constant 0 : index
    %c0_46 = arith.constant 0 : index
    %c0_47 = arith.constant 0 : index
    %132 = vector.load %arg10[%c0_45, %c0_46, %c0_47] : memref<1x128x256xbf16, #tpu.memory_space<vmem>>, vector<1x128x256xbf16>
    %133 = vector.shape_cast %132 : vector<1x128x256xbf16> to vector<128x256xbf16>
    %cst_48 = arith.constant dense<0.000000e+00> : vector<16x256xf32>
    %134 = tpu.matmul %131, %133, %cst_48 {dimension_numbers = #tpu.dot_dimension_numbers<[1], [0], [0], [1], [0, 0, 1, 1], [], []>} : vector<16x128xbf16>, vector<128x256xbf16>, vector<16x256xf32> -> vector<16x256xf32>
    %c0_49 = arith.constant 0 : index
    %c0_50 = arith.constant 0 : index
    %c0_51 = arith.constant 0 : index
    %135 = vector.load %arg11[%c0_49, %c0_50, %c0_51] : memref<1x1x256xf32, #tpu.memory_space<vmem>>, vector<1x1x256xf32>
    %136 = vector.shape_cast %135 : vector<1x1x256xf32> to vector<1x256xf32>
    %137 = vector.broadcast %136 : vector<1x256xf32> to vector<16x256xf32>
    %138 = arith.addf %134, %137 : vector<16x256xf32>
    %cst_52 = arith.constant 0.000000e+00 : f32
    %139 = vector.broadcast %cst_52 : f32 to vector<16x256xf32>
    %140 = arith.maximumf %138, %139 : vector<16x256xf32>
    %141 = arith.truncf %140 : vector<16x256xf32> to vector<16x256xbf16>
    %c0_53 = arith.constant 0 : index
    %c0_54 = arith.constant 0 : index
    %c0_55 = arith.constant 0 : index
    %142 = vector.load %arg12[%c0_53, %c0_54, %c0_55] : memref<1x256x128xbf16, #tpu.memory_space<vmem>>, vector<1x256x128xbf16>
    %143 = vector.shape_cast %142 : vector<1x256x128xbf16> to vector<256x128xbf16>
    %cst_56 = arith.constant dense<0.000000e+00> : vector<16x128xf32>
    %144 = tpu.matmul %141, %143, %cst_56 {dimension_numbers = #tpu.dot_dimension_numbers<[1], [0], [0], [1], [0, 0, 1, 1], [], []>} : vector<16x256xbf16>, vector<256x128xbf16>, vector<16x128xf32> -> vector<16x128xf32>
    %c0_57 = arith.constant 0 : index
    %c0_58 = arith.constant 0 : index
    %c0_59 = arith.constant 0 : index
    %145 = vector.load %arg13[%c0_57, %c0_58, %c0_59] : memref<1x1x128xf32, #tpu.memory_space<vmem>>, vector<1x1x128xf32>
    %146 = vector.shape_cast %145 : vector<1x1x128xf32> to vector<1x128xf32>
    %147 = vector.broadcast %146 : vector<1x128xf32> to vector<16x128xf32>
    %148 = arith.addf %144, %147 : vector<16x128xf32>
    %149 = arith.addf %130, %148 : vector<16x128xf32>
    %c0_60 = arith.constant 0 : index
    %c0_61 = arith.constant 0 : index
    %c0_62 = arith.constant 0 : index
    %150 = vector.load %arg8[%c0_60, %c0_61, %c0_62] : memref<1x1x128xf32, #tpu.memory_space<vmem>>, vector<1x1x128xf32>
    %151 = vector.shape_cast %150 : vector<1x1x128xf32> to vector<1x128xf32>
    %c0_63 = arith.constant 0 : index
    %c0_64 = arith.constant 0 : index
    %c0_65 = arith.constant 0 : index
    %152 = vector.load %arg9[%c0_63, %c0_64, %c0_65] : memref<1x1x128xf32, #tpu.memory_space<vmem>>, vector<1x1x128xf32>
    %153 = vector.shape_cast %152 : vector<1x1x128xf32> to vector<1x128xf32>
    %cst_66 = arith.constant dense<0.000000e+00> : vector<16xf32>
    %154 = vector.multi_reduction <add>, %149, %cst_66 [1] : vector<16x128xf32> to vector<16xf32>
    %155 = vector.shape_cast %154 : vector<16xf32> to vector<16x1xf32>
    %cst_67 = arith.constant 1.280000e+02 : f32
    %156 = vector.broadcast %cst_67 : f32 to vector<16x1xf32>
    %157 = arith.divf %155, %156 : vector<16x1xf32>
    %158 = vector.broadcast %157 : vector<16x1xf32> to vector<16x128xf32>
    %159 = arith.subf %149, %158 : vector<16x128xf32>
    %160 = arith.mulf %159, %159 : vector<16x128xf32>
    %cst_68 = arith.constant dense<0.000000e+00> : vector<16xf32>
    %161 = vector.multi_reduction <add>, %160, %cst_68 [1] : vector<16x128xf32> to vector<16xf32>
    %162 = vector.shape_cast %161 : vector<16xf32> to vector<16x1xf32>
    %cst_69 = arith.constant 1.280000e+02 : f32
    %163 = vector.broadcast %cst_69 : f32 to vector<16x1xf32>
    %164 = arith.divf %162, %163 : vector<16x1xf32>
    %165 = vector.broadcast %157 : vector<16x1xf32> to vector<16x128xf32>
    %166 = arith.subf %149, %165 : vector<16x128xf32>
    %cst_70 = arith.constant 9.99999974E-6 : f32
    %167 = vector.broadcast %cst_70 : f32 to vector<16x1xf32>
    %168 = arith.addf %164, %167 : vector<16x1xf32>
    %169 = math.rsqrt %168 : vector<16x1xf32>
    %170 = vector.broadcast %169 : vector<16x1xf32> to vector<16x128xf32>
    %171 = arith.mulf %166, %170 : vector<16x128xf32>
    %172 = vector.broadcast %151 : vector<1x128xf32> to vector<16x128xf32>
    %173 = arith.mulf %171, %172 : vector<16x128xf32>
    %174 = vector.broadcast %153 : vector<1x128xf32> to vector<16x128xf32>
    %175 = arith.addf %173, %174 : vector<16x128xf32>
    %c0_71 = arith.constant 0 : index
    %c0_72 = arith.constant 0 : index
    %176 = vector.load %arg14[%c0_71, %c0_72] : memref<16x128xf32, #tpu.memory_space<vmem>>, vector<16x128xf32>
    tpu.vector_store %arg14[%c0_71, %c0_72], %175 {strides = array<i32>} : memref<16x128xf32, #tpu.memory_space<vmem>>, vector<16x128xf32>,
    return
  }
  func.func @transform_0(%arg0: i32) -> (i32, i32) {
    %c0_i32 = arith.constant 0 : i32
    %c0_i32_0 = arith.constant 0 : i32
    %c0_i32_1 = arith.constant 0 : i32
    return %c0_i32, %c0_i32_0 : i32, i32
  }
  func.func @transform_1(%arg0: i32) -> (i32, i32, i32) {
    %c0_i32 = arith.constant 0 : i32
    %c0_i32_0 = arith.constant 0 : i32
    %c0_i32_1 = arith.constant 0 : i32
    return %arg0, %c0_i32, %c0_i32_0 : i32, i32, i32
  }
  func.func @transform_2(%arg0: i32) -> (i32, i32, i32) {
    %c0_i32 = arith.constant 0 : i32
    %c0_i32_0 = arith.constant 0 : i32
    %c0_i32_1 = arith.constant 0 : i32
    return %arg0, %c0_i32, %c0_i32_0 : i32, i32, i32
  }
  func.func @transform_3(%arg0: i32) -> (i32, i32, i32) {
    %c0_i32 = arith.constant 0 : i32
    %c0_i32_0 = arith.constant 0 : i32
    %c0_i32_1 = arith.constant 0 : i32
    return %arg0, %c0_i32, %c0_i32_0 : i32, i32, i32
  }
  func.func @transform_4(%arg0: i32) -> (i32, i32, i32) {
    %c0_i32 = arith.constant 0 : i32
    %c0_i32_0 = arith.constant 0 : i32
    %c0_i32_1 = arith.constant 0 : i32
    return %arg0, %c0_i32, %c0_i32_0 : i32, i32, i32
  }
  func.func @transform_5(%arg0: i32) -> (i32, i32, i32) {
    %c0_i32 = arith.constant 0 : i32
    %c0_i32_0 = arith.constant 0 : i32
    %c0_i32_1 = arith.constant 0 : i32
    return %arg0, %c0_i32, %c0_i32_0 : i32, i32, i32
  }
  func.func @transform_6(%arg0: i32) -> (i32, i32, i32) {
    %c0_i32 = arith.constant 0 : i32
    %c0_i32_0 = arith.constant 0 : i32
    %c0_i32_1 = arith.constant 0 : i32
    return %arg0, %c0_i32, %c0_i32_0 : i32, i32, i32
  }
  func.func @transform_7(%arg0: i32) -> (i32, i32, i32) {
    %c0_i32 = arith.constant 0 : i32
    %c0_i32_0 = arith.constant 0 : i32
    %c0_i32_1 = arith.constant 0 : i32
    return %arg0, %c0_i32, %c0_i32_0 : i32, i32, i32
  }
  func.func @transform_8(%arg0: i32) -> (i32, i32, i32) {
    %c0_i32 = arith.constant 0 : i32
    %c0_i32_0 = arith.constant 0 : i32
    %c0_i32_1 = arith.constant 0 : i32
    return %arg0, %c0_i32, %c0_i32_0 : i32, i32, i32
  }
  func.func @transform_9(%arg0: i32) -> (i32, i32, i32) {
    %c0_i32 = arith.constant 0 : i32
    %c0_i32_0 = arith.constant 0 : i32
    %c0_i32_1 = arith.constant 0 : i32
    return %arg0, %c0_i32, %c0_i32_0 : i32, i32, i32
  }
  func.func @transform_10(%arg0: i32) -> (i32, i32, i32) {
    %c0_i32 = arith.constant 0 : i32
    %c0_i32_0 = arith.constant 0 : i32
    %c0_i32_1 = arith.constant 0 : i32
    return %arg0, %c0_i32, %c0_i32_0 : i32, i32, i32
  }
  func.func @transform_11(%arg0: i32) -> (i32, i32, i32) {
    %c0_i32 = arith.constant 0 : i32
    %c0_i32_0 = arith.constant 0 : i32
    %c0_i32_1 = arith.constant 0 : i32
    return %arg0, %c0_i32, %c0_i32_0 : i32, i32, i32
  }
  func.func @transform_12(%arg0: i32) -> (i32, i32, i32) {
    %c0_i32 = arith.constant 0 : i32
    %c0_i32_0 = arith.constant 0 : i32
    %c0_i32_1 = arith.constant 0 : i32
    return %arg0, %c0_i32, %c0_i32_0 : i32, i32, i32
  }
  func.func @transform_13(%arg0: i32) -> (i32, i32) {
    %c0_i32 = arith.constant 0 : i32
    %c0_i32_0 = arith.constant 0 : i32
    %c0_i32_1 = arith.constant 0 : i32
    return %c0_i32, %c0_i32_0 : i32, i32
  }
}

</mosaic_0001>

<llo_original>
// kernel: angle_classifier_forward.3
$region0: #{angle_classifier_forward.3}
  #allocation0 [shape = 'u32[]', space=smem, size = 0x4, offset = 0x4, fixed_abs, tag = 'smem constant byte address 0x4 - core index']
  #allocation1 [shape = 'u32[144,128]{1,0:T(1,128)}', space=vmem, size = 0x12000, scoped, tag = 'internal scratch']
  %s0 = inlined_call_operand.vmem [shape: f32[36,2048], index: 0, kind: input, shape index: {}]
  %s1 = inlined_call_operand.vmem [shape: f32[16,36], index: 1, kind: input, shape index: {}]
  %s2 = inlined_call_operand.vmem [shape: f32[16,1], index: 2, kind: input, shape index: {}]
  %s3 = inlined_call_operand.vmem [shape: f32[16,1], index: 3, kind: input, shape index: {}]
  %s4 = inlined_call_operand.vmem [shape: f32[16,1], index: 4, kind: input, shape index: {}]
  %s5 = inlined_call_operand.vmem [shape: f32[16,2048], index: 5, kind: output, shape index: {}]
  %s6 = sld [smem:[#allocation0]]
  $region30: #{angle_classifier_forward.3} parent=0
    _
  %s8 = ssub.s32 1, %s6
  %s9 = scalar_select 0, %s8, %s6
  // Predicated region
  $region2: #{angle_classifier_forward.3} parent=0 // pred_check
    _
  $region3: #{angle_classifier_forward.3} parent=0 // pred_check_branch
    %11 = sbr.rel (0) target = $region5
  $region4: #{angle_classifier_forward.3} parent=0 // pred_region
    _
  $region5: #{angle_classifier_forward.3} parent=0 // pred_fallthru
    _
  // Predicated region
  $region6: #{angle_classifier_forward.3} parent=0 // pred_check
    _
  $region7: #{angle_classifier_forward.3} parent=0 // pred_check_branch
    %13 = sbr.rel (0) target = $region9
  $region8: #{angle_classifier_forward.3} parent=0 // pred_region
    _
  $region9: #{angle_classifier_forward.3} parent=0 // pred_fallthru
    _
  // Predicated region
  $region10: #{angle_classifier_forward.3} parent=0 // pred_check
    _
  $region11: #{angle_classifier_forward.3} parent=0 // pred_check_branch
    %15 = sbr.rel (0) target = $region13
  $region12: #{angle_classifier_forward.3} parent=0 // pred_region
    _
  $region13: #{angle_classifier_forward.3} parent=0 // pred_fallthru
    _
  // Predicated region
  $region14: #{angle_classifier_forward.3} parent=0 // pred_check
    _
  $region15: #{angle_classifier_forward.3} parent=0 // pred_check_branch
    %17 = sbr.rel (0) target = $region17
  $region16: #{angle_classifier_forward.3} parent=0 // pred_region
    _
  $region17: #{angle_classifier_forward.3} parent=0 // pred_fallthru
    _
  // Predicated region
  $region18: #{angle_classifier_forward.3} parent=0 // pred_check
    _
  $region19: #{angle_classifier_forward.3} parent=0 // pred_check_branch
    %19 = sbr.rel (0) target = $region21
  $region20: #{angle_classifier_forward.3} parent=0 // pred_region
    _
  $region21: #{angle_classifier_forward.3} parent=0 // pred_fallthru
    _
  %v20 = vld [vmem:[%s1] sm:$0xff]
  %v21 = vld [vmem:[%s1 + $0x8] sm:$0xff]
  %v22 = vld [vmem:[%s0] sm:$0xff]
  %v23 = vld [vmem:[%s0 + $0x8] sm:$0xff]
  %v24 = vld [vmem:[%s0 + $0x10] sm:$0xff]
  %v25 = vld [vmem:[%s0 + $0x18] sm:$0xff]
  %v26 = vld [vmem:[%s0 + $0x20] sm:$0xff]
  %v27 = vld [vmem:[%s0 + $0x28] sm:$0xff]
  %v28 = vld [vmem:[%s0 + $0x30] sm:$0xff]
  %v29 = vld [vmem:[%s0 + $0x38] sm:$0xff]
  %v30 = vld [vmem:[%s0 + $0x40] sm:$0xff]
  %v31 = vld [vmem:[%s0 + $0x48] sm:$0xff]
  %v32 = vld [vmem:[%s0 + $0x50] sm:$0xff]
  %v33 = vld [vmem:[%s0 + $0x58] sm:$0xff]
  %v34 = vld [vmem:[%s0 + $0x60] sm:$0xff]
  %v35 = vld [vmem:[%s0 + $0x68] sm:$0xff]
  %v36 = vld [vmem:[%s0 + $0x70] sm:$0xff]
  %v37 = vld [vmem:[%s0 + $0x78] sm:$0xff]
  %v38 = vld [vmem:[%s0 + $0x80] sm:$0xff]
  %v39 = vld [vmem:[%s0 + $0x88] sm:$0xff]
  %v40 = vld [vmem:[%s0 + $0x90] sm:$0xff]
  %v41 = vld [vmem:[%s0 + $0x98] sm:$0xff]
  %v42 = vld [vmem:[%s0 + $0xa0] sm:$0xff]
  %v43 = vld [vmem:[%s0 + $0xa8] sm:$0xff]
  %v44 = vld [vmem:[%s0 + $0xb0] sm:$0xff]
  %v45 = vld [vmem:[%s0 + $0xb8] sm:$0xff]
  %v46 = vld [vmem:[%s0 + $0xc0] sm:$0xff]
  %v47 = vld [vmem:[%s0 + $0xc8] sm:$0xff]
  %v48 = vld [vmem:[%s0 + $0xd0] sm:$0xff]
  %v49 = vld [vmem:[%s0 + $0xd8] sm:$0xff]
  %v50 = vld [vmem:[%s0 + $0xe0] sm:$0xff]
  %v51 = vld [vmem:[%s0 + $0xe8] sm:$0xff]
  %v52 = vld [vmem:[%s0 + $0xf0] sm:$0xff]
  %v53 = vld [vmem:[%s0 + $0xf8] sm:$0xff]
  %v54 = vld [vmem:[%s0 + $0x100] sm:$0xff]
  %v55 = vld [vmem:[%s0 + $0x108] sm:$0xff]
  %v56 = vld [vmem:[%s0 + $0x110] sm:$0xff]
  %v57 = vld [vmem:[%s0 + $0x118] sm:$0xff]
  %v58 = vld [vmem:[%s0 + $0x120] sm:$0xff]
  %v59 = vld [vmem:[%s0 + $0x128] sm:$0xff]
  %v60 = vld [vmem:[%s0 + $0x130] sm:$0xff]
  %v61 = vld [vmem:[%s0 + $0x138] sm:$0xff]
  %v62 = vld [vmem:[%s0 + $0x140] sm:$0xff]
  %v63 = vld [vmem:[%s0 + $0x148] sm:$0xff]
  %v64 = vld [vmem:[%s0 + $0x150] sm:$0xff]
  %v65 = vld [vmem:[%s0 + $0x158] sm:$0xff]
  %v66 = vld [vmem:[%s0 + $0x160] sm:$0xff]
  %v67 = vld [vmem:[%s0 + $0x168] sm:$0xff]
  %v68 = vld [vmem:[%s0 + $0x170] sm:$0xff]
  %v69 = vld [vmem:[%s0 + $0x178] sm:$0xff]
  %v70 = vld [vmem:[%s0 + $0x180] sm:$0xff]
  %v71 = vld [vmem:[%s0 + $0x188] sm:$0xff]
  %v72 = vld [vmem:[%s0 + $0x190] sm:$0xff]
  %v73 = vld [vmem:[%s0 + $0x198] sm:$0xff]
  %v74 = vld [vmem:[%s0 + $0x1a0] sm:$0xff]
  %v75 = vld [vmem:[%s0 + $0x1a8] sm:$0xff]
  %v76 = vld [vmem:[%s0 + $0x1b0] sm:$0xff]
  %v77 = vld [vmem:[%s0 + $0x1b8] sm:$0xff]
  %v78 = vld [vmem:[%s0 + $0x1c0] sm:$0xff]
  %v79 = vld [vmem:[%s0 + $0x1c8] sm:$0xff]
  %v80 = vld [vmem:[%s0 + $0x1d0] sm:$0xff]
  %v81 = vld [vmem:[%s0 + $0x1d8] sm:$0xff]
  %v82 = vld [vmem:[%s0 + $0x1e0] sm:$0xff]
  %v83 = vld [vmem:[%s0 + $0x1e8] sm:$0xff]
  %v84 = vld [vmem:[%s0 + $0x1f0] sm:$0xff]
  %v85 = vld [vmem:[%s0 + $0x1f8] sm:$0xff]
  %v86 = vld [vmem:[%s0 + $0x200] sm:$0xf]
  %v87 = vld [vmem:[%s0 + $0x208] sm:$0xf]
  %v88 = vld [vmem:[%s0 + $0x210] sm:$0xf]
  %v89 = vld [vmem:[%s0 + $0x218] sm:$0xf]
  %v90 = vld [vmem:[%s0 + $0x220] sm:$0xf]
  %v91 = vld [vmem:[%s0 + $0x228] sm:$0xf]
  %v92 = vld [vmem:[%s0 + $0x230] sm:$0xf]
  %v93 = vld [vmem:[%s0 + $0x238] sm:$0xf]
  %v94 = vld [vmem:[%s0 + $0x240] sm:$0xf]
  %v95 = vld [vmem:[%s0 + $0x248] sm:$0xf]
  %v96 = vld [vmem:[%s0 + $0x250] sm:$0xf]
  %v97 = vld [vmem:[%s0 + $0x258] sm:$0xf]
  %v98 = vld [vmem:[%s0 + $0x260] sm:$0xf]
  %v99 = vld [vmem:[%s0 + $0x268] sm:$0xf]
  %v100 = vld [vmem:[%s0 + $0x270] sm:$0xf]
  %v101 = vld [vmem:[%s0 + $0x278] sm:$0xf]
  %v102 = vld [vmem:[%s2] sm:$0xff]
  %v103 = vld [vmem:[%s2 + $0x8] sm:$0xff]
  %105 = vset.pattern.permute.xlu0 0
  %106 = vperm.xlu0 %105, %v102
  %v107 = vpop.permute.xlu0 %106
  %110 = vset.pattern.permute.xlu0 0
  %111 = vperm.xlu0 %110, %v103
  %v112 = vpop.permute.xlu0 %111
  %vm114 = vcmask 293888
  %v116 = vsel %vm114, %v20, 0
  %v119 = vsel %vm114, %v21, 0
  %vm121 = vcmask 1043456
  %v123 = vsel %vm121, %v86, 0
  %v126 = vsel %vm121, %v87, 0
  %v129 = vsel %vm121, %v88, 0
  %v132 = vsel %vm121, %v89, 0
  %v135 = vsel %vm121, %v90, 0
  %v138 = vsel %vm121, %v91, 0
  %v141 = vsel %vm121, %v92, 0
  %v144 = vsel %vm121, %v93, 0
  %v147 = vsel %vm121, %v94, 0
  %v150 = vsel %vm121, %v95, 0
  %v153 = vsel %vm121, %v96, 0
  %v156 = vsel %vm121, %v97, 0
  %v159 = vsel %vm121, %v98, 0
  %v162 = vsel %vm121, %v99, 0
  %v165 = vsel %vm121, %v100, 0
  %v168 = vsel %vm121, %v101, 0
  %170 = vmatprep.subr.mxu0 %v23
  %171 = vmatpush1.msra.mxu0 %v22
  %172 = vmatprep.subr.mxu0 %v39
  %173 = vmatpush1.msra.mxu0 %v38
  %174 = vmatprep.subr.mxu0 %v55
  %175 = vmatpush1.msra.mxu0 %v54
  %176 = vmatprep.subr.mxu0 %v71
  %177 = vmatpush1.msra.mxu0 %v70
  %178 = vmatprep.subr.mxu0 %v126
  %179 = vmatpush1.msra.mxu0 %v123
  %180 = vmatprep.subr.mxu0 0.0
  %181 = vmatpush1.msra.mxu0 0.0
  %182 = vmatprep.subr.mxu0 0.0
  %183 = vmatpush1.msra.mxu0 0.0
  %184 = vmatprep.subr.mxu0 0.0
  %185 = vmatpush1.msra.mxu0 0.0
  %186 = vmatprep.subr.mxu0 0.0
  %187 = vmatpush1.msra.mxu0 0.0
  %188 = vmatprep.subr.mxu0 0.0
  %189 = vmatpush1.msra.mxu0 0.0
  %190 = vmatprep.subr.mxu0 0.0
  %191 = vmatpush1.msra.mxu0 0.0
  %192 = vmatprep.subr.mxu0 0.0
  %193 = vmatpush1.msra.mxu0 0.0
  %194 = vmatprep.subr.mxu0 0.0
  %195 = vmatpush1.msra.mxu0 0.0
  %196 = vmatprep.subr.mxu0 0.0
  %197 = vmatpush1.msra.mxu0 0.0
  %198 = vmatprep.subr.mxu0 0.0
  %199 = vmatpush1.msra.mxu0 0.0
  %200 = vmatprep.subr.mxu0 0.0
  %201 = vmatpush1.msra.mxu0 0.0
  %202 = vmatprep.subr.mxu0 0.0
  %203 = vmatpush1.msra.mxu0 0.0
  %204 = vmatprep.subr.mxu0 0.0
  %205 = vmatpush1.msra.mxu0 0.0
  %206 = vmatprep.subr.mxu0 0.0
  %207 = vmatpush1.msra.mxu0 0.0
  %208 = vmatprep.subr.mxu0 0.0
  %209 = vmatpush1.msra.mxu0 0.0
  %210 = vmatprep.subr.mxu0 0.0
  %211 = vmatpush1.msra.mxu0 0.0
  %212 = vmatprep.subr.mxu0 0.0
  %213 = vmatpush1.msra.mxu0 0.0
  %214 = vmatprep.subr.mxu0 0.0
  %215 = vmatpush1.msra.mxu0 0.0
  %216 = vmatprep.subr.mxu0 0.0
  %217 = vmatpush1.msra.mxu0 0.0
  %218 = vmatprep.subr.mxu0 0.0
  %219 = vmatpush1.msra.mxu0 0.0
  %220 = vmatprep.subr.mxu0 0.0
  %221 = vmatpush1.msra.mxu0 0.0
  %222 = vmatprep.subr.mxu0 0.0
  %223 = vmatpush1.msra.mxu0 0.0
  %224 = vmatprep.subr.mxu0 0.0
  %225 = vmatpush1.msra.mxu0 0.0
  %226 = vmatprep.subr.mxu0 0.0
  %227 = vmatpush1.msra.mxu0 0.0
  %228 = vmatprep.subr.mxu0 0.0
  %229 = vmatpush1.msra.mxu0 0.0
  %230 = vmatprep.subr.mxu0 0.0
  %231 = vmatpush1.msra.mxu0 0.0
  %232 = vmatprep.subr.mxu0 0.0
  %233 = vmatpush1.msra.mxu0 0.0
  %234 = vmatprep.mubr.f32.mxu0 0.0
  %235 = vmatmul.mubr.f32.gmra.mrb[0].mxu0 %v116
  %v236 = vpop.f32.mrb[0].mxu0
  %v237 = vadd.f32 %v107, %v236
  %v238 = vpop.f32.mrb[0].mxu0
  %v239 = vadd.f32 %v107, %v238
  %240 = vmatprep.mubr.f32.mxu0 0.0
  %241 = vmatmul.mubr.f32.gmra.mrb[0].mxu0 %v119
  %v242 = vpop.f32.mrb[0].mxu0
  %v243 = vadd.f32 %v112, %v242
  %v244 = vpop.f32.mrb[0].mxu0
  %v245 = vadd.f32 %v112, %v244
  %246 = vdwg.mxu0
  %247 = vmatprep.subr.mxu0 %v25
  %248 = vmatpush1.msra.mxu0 %v24
  %249 = vmatprep.subr.mxu0 %v41
  %250 = vmatpush1.msra.mxu0 %v40
  %251 = vmatprep.subr.mxu0 %v57
  %252 = vmatpush1.msra.mxu0 %v56
  %253 = vmatprep.subr.mxu0 %v73
  %254 = vmatpush1.msra.mxu0 %v72
  %255 = vmatprep.subr.mxu0 %v132
  %256 = vmatpush1.msra.mxu0 %v129
  %257 = vmatprep.subr.mxu0 0.0
  %258 = vmatpush1.msra.mxu0 0.0
  %259 = vmatprep.subr.mxu0 0.0
  %260 = vmatpush1.msra.mxu0 0.0
  %261 = vmatprep.subr.mxu0 0.0
  %262 = vmatpush1.msra.mxu0 0.0
  %263 = vmatprep.subr.mxu0 0.0
  %264 = vmatpush1.msra.mxu0 0.0
  %265 = vmatprep.subr.mxu0 0.0
  %266 = vmatpush1.msra.mxu0 0.0
  %267 = vmatprep.subr.mxu0 0.0
  %268 = vmatpush1.msra.mxu0 0.0
  %269 = vmatprep.subr.mxu0 0.0
  %270 = vmatpush1.msra.mxu0 0.0
  %271 = vmatprep.subr.mxu0 0.0
  %272 = vmatpush1.msra.mxu0 0.0
  %273 = vmatprep.subr.mxu0 0.0
  %274 = vmatpush1.msra.mxu0 0.0
  %275 = vmatprep.subr.mxu0 0.0
  %276 = vmatpush1.msra.mxu0 0.0
  %277 = vmatprep.subr.mxu0 0.0
  %278 = vmatpush1.msra.mxu0 0.0
  %279 = vmatprep.subr.mxu0 0.0
  %280 = vmatpush1.msra.mxu0 0.0
  %281 = vmatprep.subr.mxu0 0.0
  %282 = vmatpush1.msra.mxu0 0.0
  %283 = vmatprep.subr.mxu0 0.0
  %284 = vmatpush1.msra.mxu0 0.0
  %285 = vmatprep.subr.mxu0 0.0
  %286 = vmatpush1.msra.mxu0 0.0
  %287 = vmatprep.subr.mxu0 0.0
  %288 = vmatpush1.msra.mxu0 0.0
  %289 = vmatprep.subr.mxu0 0.0
  %290 = vmatpush1.msra.mxu0 0.0
  %291 = vmatprep.subr.mxu0 0.0
  %292 = vmatpush1.msra.mxu0 0.0
  %293 = vmatprep.subr.mxu0 0.0
  %294 = vmatpush1.msra.mxu0 0.0
  %295 = vmatprep.subr.mxu0 0.0
  %296 = vmatpush1.msra.mxu0 0.0
  %297 = vmatprep.subr.mxu0 0.0
  %298 = vmatpush1.msra.mxu0 0.0
  %299 = vmatprep.subr.mxu0 0.0
  %300 = vmatpush1.msra.mxu0 0.0
  %301 = vmatprep.subr.mxu0 0.0
  %302 = vmatpush1.msra.mxu0 0.0
  %303 = vmatprep.subr.mxu0 0.0
  %304 = vmatpush1.msra.mxu0 0.0
  %305 = vmatprep.subr.mxu0 0.0
  %306 = vmatpush1.msra.mxu0 0.0
  %307 = vmatprep.subr.mxu0 0.0
  %308 = vmatpush1.msra.mxu0 0.0
  %309 = vmatprep.subr.mxu0 0.0
  %310 = vmatpush1.msra.mxu0 0.0
  %311 = vmatprep.mubr.f32.mxu0 0.0
  %312 = vmatmul.mubr.f32.gmra.mrb[0].mxu0 %v116
  %v313 = vpop.f32.mrb[0].mxu0
  %v314 = vadd.f32 %v107, %v313
  %v315 = vpop.f32.mrb[0].mxu0
  %v316 = vadd.f32 %v107, %v315
  %317 = vmatprep.mubr.f32.mxu0 0.0
  %318 = vmatmul.mubr.f32.gmra.mrb[0].mxu0 %v119
  %v319 = vpop.f32.mrb[0].mxu0
  %v320 = vadd.f32 %v112, %v319
  %v321 = vpop.f32.mrb[0].mxu0
  %v322 = vadd.f32 %v112, %v321
  %323 = vdwg.mxu0
  %324 = vmatprep.subr.mxu0 %v27
  %325 = vmatpush1.msra.mxu0 %v26
  %326 = vmatprep.subr.mxu0 %v43
  %327 = vmatpush1.msra.mxu0 %v42
  %328 = vmatprep.subr.mxu0 %v59
  %329 = vmatpush1.msra.mxu0 %v58
  %330 = vmatprep.subr.mxu0 %v75
  %331 = vmatpush1.msra.mxu0 %v74
  %332 = vmatprep.subr.mxu0 %v138
  %333 = vmatpush1.msra.mxu0 %v135
  %334 = vmatprep.subr.mxu0 0.0
  %335 = vmatpush1.msra.mxu0 0.0
  %336 = vmatprep.subr.mxu0 0.0
  %337 = vmatpush1.msra.mxu0 0.0
  %338 = vmatprep.subr.mxu0 0.0
  %339 = vmatpush1.msra.mxu0 0.0
  %340 = vmatprep.subr.mxu0 0.0
  %341 = vmatpush1.msra.mxu0 0.0
  %342 = vmatprep.subr.mxu0 0.0
  %343 = vmatpush1.msra.mxu0 0.0
  %344 = vmatprep.subr.mxu0 0.0
  %345 = vmatpush1.msra.mxu0 0.0
  %346 = vmatprep.subr.mxu0 0.0
  %347 = vmatpush1.msra.mxu0 0.0
  %348 = vmatprep.subr.mxu0 0.0
  %349 = vmatpush1.msra.mxu0 0.0
  %350 = vmatprep.subr.mxu0 0.0
  %351 = vmatpush1.msra.mxu0 0.0
  %352 = vmatprep.subr.mxu0 0.0
  %353 = vmatpush1.msra.mxu0 0.0
  %354 = vmatprep.subr.mxu0 0.0
  %355 = vmatpush1.msra.mxu0 0.0
  %356 = vmatprep.subr.mxu0 0.0
  %357 = vmatpush1.msra.mxu0 0.0
  %358 = vmatprep.subr.mxu0 0.0
  %359 = vmatpush1.msra.mxu0 0.0
  %360 = vmatprep.subr.mxu0 0.0
  %361 = vmatpush1.msra.mxu0 0.0
  %362 = vmatprep.subr.mxu0 0.0
  %363 = vmatpush1.msra.mxu0 0.0
  %364 = vmatprep.subr.mxu0 0.0
  %365 = vmatpush1.msra.mxu0 0.0
  %366 = vmatprep.subr.mxu0 0.0
  %367 = vmatpush1.msra.mxu0 0.0
  %368 = vmatprep.subr.mxu0 0.0
  %369 = vmatpush1.msra.mxu0 0.0
  %370 = vmatprep.subr.mxu0 0.0
  %371 = vmatpush1.msra.mxu0 0.0
  %372 = vmatprep.subr.mxu0 0.0
  %373 = vmatpush1.msra.mxu0 0.0
  %374 = vmatprep.subr.mxu0 0.0
  %375 = vmatpush1.msra.mxu0 0.0
  %376 = vmatprep.subr.mxu0 0.0
  %377 = vmatpush1.msra.mxu0 0.0
  %378 = vmatprep.subr.mxu0 0.0
  %379 = vmatpush1.msra.mxu0 0.0
  %380 = vmatprep.subr.mxu0 0.0
  %381 = vmatpush1.msra.mxu0 0.0
  %382 = vmatprep.subr.mxu0 0.0
  %383 = vmatpush1.msra.mxu0 0.0
  %384 = vmatprep.subr.mxu0 0.0
  %385 = vmatpush1.msra.mxu0 0.0
  %386 = vmatprep.subr.mxu0 0.0
  %387 = vmatpush1.msra.mxu0 0.0
  %388 = vmatprep.mubr.f32.mxu0 0.0
  %389 = vmatmul.mubr.f32.gmra.mrb[0].mxu0 %v116
  %v390 = vpop.f32.mrb[0].mxu0
  %v391 = vadd.f32 %v107, %v390
  %v392 = vpop.f32.mrb[0].mxu0
  %v393 = vadd.f32 %v107, %v392
  %394 = vmatprep.mubr.f32.mxu0 0.0
  %395 = vmatmul.mubr.f32.gmra.mrb[0].mxu0 %v119
  %v396 = vpop.f32.mrb[0].mxu0
  %v397 = vadd.f32 %v112, %v396
  %v398 = vpop.f32.mrb[0].mxu0
  %v399 = vadd.f32 %v112, %v398
  %400 = vdwg.mxu0
  %401 = vmatprep.subr.mxu0 %v29
  %402 = vmatpush1.msra.mxu0 %v28
  %403 = vmatprep.subr.mxu0 %v45
  %404 = vmatpush1.msra.mxu0 %v44
  %405 = vmatprep.subr.mxu0 %v61
  %406 = vmatpush1.msra.mxu0 %v60
  %407 = vmatprep.subr.mxu0 %v77
  %408 = vmatpush1.msra.mxu0 %v76
  %409 = vmatprep.subr.mxu0 %v144
  %410 = vmatpush1.msra.mxu0 %v141
  %411 = vmatprep.subr.mxu0 0.0
  %412 = vmatpush1.msra.mxu0 0.0
  %413 = vmatprep.subr.mxu0 0.0
  %414 = vmatpush1.msra.mxu0 0.0
  %415 = vmatprep.subr.mxu0 0.0
  %416 = vmatpush1.msra.mxu0 0.0
  %417 = vmatprep.subr.mxu0 0.0
  %418 = vmatpush1.msra.mxu0 0.0
  %419 = vmatprep.subr.mxu0 0.0
  %420 = vmatpush1.msra.mxu0 0.0
  %421 = vmatprep.subr.mxu0 0.0
  %422 = vmatpush1.msra.mxu0 0.0
  %423 = vmatprep.subr.mxu0 0.0
  %424 = vmatpush1.msra.mxu0 0.0
  %425 = vmatprep.subr.mxu0 0.0
  %426 = vmatpush1.msra.mxu0 0.0
  %427 = vmatprep.subr.mxu0 0.0
  %428 = vmatpush1.msra.mxu0 0.0
  %429 = vmatprep.subr.mxu0 0.0
  %430 = vmatpush1.msra.mxu0 0.0
  %431 = vmatprep.subr.mxu0 0.0
  %432 = vmatpush1.msra.mxu0 0.0
  %433 = vmatprep.subr.mxu0 0.0
  %434 = vmatpush1.msra.mxu0 0.0
  %435 = vmatprep.subr.mxu0 0.0
  %436 = vmatpush1.msra.mxu0 0.0
  %437 = vmatprep.subr.mxu0 0.0
  %438 = vmatpush1.msra.mxu0 0.0
  %439 = vmatprep.subr.mxu0 0.0
  %440 = vmatpush1.msra.mxu0 0.0
  %441 = vmatprep.subr.mxu0 0.0
  %442 = vmatpush1.msra.mxu0 0.0
  %443 = vmatprep.subr.mxu0 0.0
  %444 = vmatpush1.msra.mxu0 0.0
  %445 = vmatprep.subr.mxu0 0.0
  %446 = vmatpush1.msra.mxu0 0.0
  %447 = vmatprep.subr.mxu0 0.0
  %448 = vmatpush1.msra.mxu0 0.0
  %449 = vmatprep.subr.mxu0 0.0
  %450 = vmatpush1.msra.mxu0 0.0
  %451 = vmatprep.subr.mxu0 0.0
  %452 = vmatpush1.msra.mxu0 0.0
  %453 = vmatprep.subr.mxu0 0.0
  %454 = vmatpush1.msra.mxu0 0.0
  %455 = vmatprep.subr.mxu0 0.0
  %456 = vmatpush1.msra.mxu0 0.0
  %457 = vmatprep.subr.mxu0 0.0
  %458 = vmatpush1.msra.mxu0 0.0
  %459 = vmatprep.subr.mxu0 0.0
  %460 = vmatpush1.msra.mxu0 0.0
  %461 = vmatprep.subr.mxu0 0.0
  %462 = vmatpush1.msra.mxu0 0.0
  %463 = vmatprep.subr.mxu0 0.0
  %464 = vmatpush1.msra.mxu0 0.0
  %465 = vmatprep.mubr.f32.mxu0 0.0
  %466 = vmatmul.mubr.f32.gmra.mrb[0].mxu0 %v116
  %v467 = vpop.f32.mrb[0].mxu0
  %v468 = vadd.f32 %v107, %v467
  %v469 = vpop.f32.mrb[0].mxu0
  %v470 = vadd.f32 %v107, %v469
  %471 = vmatprep.mubr.f32.mxu0 0.0
  %472 = vmatmul.mubr.f32.gmra.mrb[0].mxu0 %v119
  %v473 = vpop.f32.mrb[0].mxu0
  %v474 = vadd.f32 %v112, %v473
  %v475 = vpop.f32.mrb[0].mxu0
  %v476 = vadd.f32 %v112, %v475
  %477 = vdwg.mxu0
  %478 = vmatprep.subr.mxu0 %v31
  %479 = vmatpush1.msra.mxu0 %v30
  %480 = vmatprep.subr.mxu0 %v47
  %481 = vmatpush1.msra.mxu0 %v46
  %482 = vmatprep.subr.mxu0 %v63
  %483 = vmatpush1.msra.mxu0 %v62
  %484 = vmatprep.subr.mxu0 %v79
  %485 = vmatpush1.msra.mxu0 %v78
  %486 = vmatprep.subr.mxu0 %v150
  %487 = vmatpush1.msra.mxu0 %v147
  %488 = vmatprep.subr.mxu0 0.0
  %489 = vmatpush1.msra.mxu0 0.0
  %490 = vmatprep.subr.mxu0 0.0
  %491 = vmatpush1.msra.mxu0 0.0
  %492 = vmatprep.subr.mxu0 0.0
  %493 = vmatpush1.msra.mxu0 0.0
  %494 = vmatprep.subr.mxu0 0.0
  %495 = vmatpush1.msra.mxu0 0.0
  %496 = vmatprep.subr.mxu0 0.0
  %497 = vmatpush1.msra.mxu0 0.0
  %498 = vmatprep.subr.mxu0 0.0
  %499 = vmatpush1.msra.mxu0 0.0
  %500 = vmatprep.subr.mxu0 0.0
  %501 = vmatpush1.msra.mxu0 0.0
  %502 = vmatprep.subr.mxu0 0.0
  %503 = vmatpush1.msra.mxu0 0.0
  %504 = vmatprep.subr.mxu0 0.0
  %505 = vmatpush1.msra.mxu0 0.0
  %506 = vmatprep.subr.mxu0 0.0
  %507 = vmatpush1.msra.mxu0 0.0
  %508 = vmatprep.subr.mxu0 0.0
  %509 = vmatpush1.msra.mxu0 0.0
  %510 = vmatprep.subr.mxu0 0.0
  %511 = vmatpush1.msra.mxu0 0.0
  %512 = vmatprep.subr.mxu0 0.0
  %513 = vmatpush1.msra.mxu0 0.0
  %514 = vmatprep.subr.mxu0 0.0
  %515 = vmatpush1.msra.mxu0 0.0
  %516 = vmatprep.subr.mxu0 0.0
  %517 = vmatpush1.msra.mxu0 0.0
  %518 = vmatprep.subr.mxu0 0.0
  %519 = vmatpush1.msra.mxu0 0.0
  %520 = vmatprep.subr.mxu0 0.0
  %521 = vmatpush1.msra.mxu0 0.0
  %522 = vmatprep.subr.mxu0 0.0
  %523 = vmatpush1.msra.mxu0 0.0
  %524 = vmatprep.subr.mxu0 0.0
  %525 = vmatpush1.msra.mxu0 0.0
  %526 = vmatprep.subr.mxu0 0.0
  %527 = vmatpush1.msra.mxu0 0.0
  %528 = vmatprep.subr.mxu0 0.0
  %529 = vmatpush1.msra.mxu0 0.0
  %530 = vmatprep.subr.mxu0 0.0
  %531 = vmatpush1.msra.mxu0 0.0
  %532 = vmatprep.subr.mxu0 0.0
  %533 = vmatpush1.msra.mxu0 0.0
  %534 = vmatprep.subr.mxu0 0.0
  %535 = vmatpush1.msra.mxu0 0.0
  %536 = vmatprep.subr.mxu0 0.0
  %537 = vmatpush1.msra.mxu0 0.0
  %538 = vmatprep.subr.mxu0 0.0
  %539 = vmatpush1.msra.mxu0 0.0
  %540 = vmatprep.subr.mxu0 0.0
  %541 = vmatpush1.msra.mxu0 0.0
  %542 = vmatprep.mubr.f32.mxu0 0.0
  %543 = vmatmul.mubr.f32.gmra.mrb[0].mxu0 %v116
  %v544 = vpop.f32.mrb[0].mxu0
  %v545 = vadd.f32 %v107, %v544
  %v546 = vpop.f32.mrb[0].mxu0
  %v547 = vadd.f32 %v107, %v546
  %548 = vmatprep.mubr.f32.mxu0 0.0
  %549 = vmatmul.mubr.f32.gmra.mrb[0].mxu0 %v119
  %v550 = vpop.f32.mrb[0].mxu0
  %v551 = vadd.f32 %v112, %v550
  %v552 = vpop.f32.mrb[0].mxu0
  %v553 = vadd.f32 %v112, %v552
  %554 = vdwg.mxu0
  %555 = vmatprep.subr.mxu0 %v33
  %556 = vmatpush1.msra.mxu0 %v32
  %557 = vmatprep.subr.mxu0 %v49
  %558 = vmatpush1.msra.mxu0 %v48
  %559 = vmatprep.subr.mxu0 %v65
  %560 = vmatpush1.msra.mxu0 %v64
  %561 = vmatprep.subr.mxu0 %v81
  %562 = vmatpush1.msra.mxu0 %v80
  %563 = vmatprep.subr.mxu0 %v156
  %564 = vmatpush1.msra.mxu0 %v153
  %565 = vmatprep.subr.mxu0 0.0
  %566 = vmatpush1.msra.mxu0 0.0
  %567 = vmatprep.subr.mxu0 0.0
  %568 = vmatpush1.msra.mxu0 0.0
  %569 = vmatprep.subr.mxu0 0.0
  %570 = vmatpush1.msra.mxu0 0.0
  %571 = vmatprep.subr.mxu0 0.0
  %572 = vmatpush1.msra.mxu0 0.0
  %573 = vmatprep.subr.mxu0 0.0
  %574 = vmatpush1.msra.mxu0 0.0
  %575 = vmatprep.subr.mxu0 0.0
  %576 = vmatpush1.msra.mxu0 0.0
  %577 = vmatprep.subr.mxu0 0.0
  %578 = vmatpush1.msra.mxu0 0.0
  %579 = vmatprep.subr.mxu0 0.0
  %580 = vmatpush1.msra.mxu0 0.0
  %581 = vmatprep.subr.mxu0 0.0
  %582 = vmatpush1.msra.mxu0 0.0
  %583 = vmatprep.subr.mxu0 0.0
  %584 = vmatpush1.msra.mxu0 0.0
  %585 = vmatprep.subr.mxu0 0.0
  %586 = vmatpush1.msra.mxu0 0.0
  %587 = vmatprep.subr.mxu0 0.0
  %588 = vmatpush1.msra.mxu0 0.0
  %589 = vmatprep.subr.mxu0 0.0
  %590 = vmatpush1.msra.mxu0 0.0
  %591 = vmatprep.subr.mxu0 0.0
  %592 = vmatpush1.msra.mxu0 0.0
  %593 = vmatprep.subr.mxu0 0.0
  %594 = vmatpush1.msra.mxu0 0.0
  %595 = vmatprep.subr.mxu0 0.0
  %596 = vmatpush1.msra.mxu0 0.0
  %597 = vmatprep.subr.mxu0 0.0
  %598 = vmatpush1.msra.mxu0 0.0
  %599 = vmatprep.subr.mxu0 0.0
  %600 = vmatpush1.msra.mxu0 0.0
  %601 = vmatprep.subr.mxu0 0.0
  %602 = vmatpush1.msra.mxu0 0.0
  %603 = vmatprep.subr.mxu0 0.0
  %604 = vmatpush1.msra.mxu0 0.0
  %605 = vmatprep.subr.mxu0 0.0
  %606 = vmatpush1.msra.mxu0 0.0
  %607 = vmatprep.subr.mxu0 0.0
  %608 = vmatpush1.msra.mxu0 0.0
  %609 = vmatprep.subr.mxu0 0.0
  %610 = vmatpush1.msra.mxu0 0.0
  %611 = vmatprep.subr.mxu0 0.0
  %612 = vmatpush1.msra.mxu0 0.0
  %613 = vmatprep.subr.mxu0 0.0
  %614 = vmatpush1.msra.mxu0 0.0
  %615 = vmatprep.subr.mxu0 0.0
  %616 = vmatpush1.msra.mxu0 0.0
  %617 = vmatprep.subr.mxu0 0.0
  %618 = vmatpush1.msra.mxu0 0.0
  %619 = vmatprep.mubr.f32.mxu0 0.0
  %620 = vmatmul.mubr.f32.gmra.mrb[0].mxu0 %v116
  %v621 = vpop.f32.mrb[0].mxu0
  %v622 = vadd.f32 %v107, %v621
  %v623 = vpop.f32.mrb[0].mxu0
  %v624 = vadd.f32 %v107, %v623
  %625 = vmatprep.mubr.f32.mxu0 0.0
  %626 = vmatmul.mubr.f32.gmra.mrb[0].mxu0 %v119
  %v627 = vpop.f32.mrb[0].mxu0
  %v628 = vadd.f32 %v112, %v627
  %v629 = vpop.f32.mrb[0].mxu0
  %v630 = vadd.f32 %v112, %v629
  %631 = vdwg.mxu0
  %632 = vmatprep.subr.mxu0 %v35
  %633 = vmatpush1.msra.mxu0 %v34
  %634 = vmatprep.subr.mxu0 %v51
  %635 = vmatpush1.msra.mxu0 %v50
  %636 = vmatprep.subr.mxu0 %v67
  %637 = vmatpush1.msra.mxu0 %v66
  %638 = vmatprep.subr.mxu0 %v83
  %639 = vmatpush1.msra.mxu0 %v82
  %640 = vmatprep.subr.mxu0 %v162
  %641 = vmatpush1.msra.mxu0 %v159
  %642 = vmatprep.subr.mxu0 0.0
  %643 = vmatpush1.msra.mxu0 0.0
  %644 = vmatprep.subr.mxu0 0.0
  %645 = vmatpush1.msra.mxu0 0.0
  %646 = vmatprep.subr.mxu0 0.0
  %647 = vmatpush1.msra.mxu0 0.0
  %648 = vmatprep.subr.mxu0 0.0
  %649 = vmatpush1.msra.mxu0 0.0
  %650 = vmatprep.subr.mxu0 0.0
  %651 = vmatpush1.msra.mxu0 0.0
  %652 = vmatprep.subr.mxu0 0.0
  %653 = vmatpush1.msra.mxu0 0.0
  %654 = vmatprep.subr.mxu0 0.0
  %655 = vmatpush1.msra.mxu0 0.0
  %656 = vmatprep.subr.mxu0 0.0
  %657 = vmatpush1.msra.mxu0 0.0
  %658 = vmatprep.subr.mxu0 0.0
  %659 = vmatpush1.msra.mxu0 0.0
  %660 = vmatprep.subr.mxu0 0.0
  %661 = vmatpush1.msra.mxu0 0.0
  %662 = vmatprep.subr.mxu0 0.0
  %663 = vmatpush1.msra.mxu0 0.0
  %664 = vmatprep.subr.mxu0 0.0
  %665 = vmatpush1.msra.mxu0 0.0
  %666 = vmatprep.subr.mxu0 0.0
  %667 = vmatpush1.msra.mxu0 0.0
  %668 = vmatprep.subr.mxu0 0.0
  %669 = vmatpush1.msra.mxu0 0.0
  %670 = vmatprep.subr.mxu0 0.0
  %671 = vmatpush1.msra.mxu0 0.0
  %672 = vmatprep.subr.mxu0 0.0
  %673 = vmatpush1.msra.mxu0 0.0
  %674 = vmatprep.subr.mxu0 0.0
  %675 = vmatpush1.msra.mxu0 0.0
  %676 = vmatprep.subr.mxu0 0.0
  %677 = vmatpush1.msra.mxu0 0.0
  %678 = vmatprep.subr.mxu0 0.0
  %679 = vmatpush1.msra.mxu0 0.0
  %680 = vmatprep.subr.mxu0 0.0
  %681 = vmatpush1.msra.mxu0 0.0
  %682 = vmatprep.subr.mxu0 0.0
  %683 = vmatpush1.msra.mxu0 0.0
  %684 = vmatprep.subr.mxu0 0.0
  %685 = vmatpush1.msra.mxu0 0.0
  %686 = vmatprep.subr.mxu0 0.0
  %687 = vmatpush1.msra.mxu0 0.0
  %688 = vmatprep.subr.mxu0 0.0
  %689 = vmatpush1.msra.mxu0 0.0
  %690 = vmatprep.subr.mxu0 0.0
  %691 = vmatpush1.msra.mxu0 0.0
  %692 = vmatprep.subr.mxu0 0.0
  %693 = vmatpush1.msra.mxu0 0.0
  %694 = vmatprep.subr.mxu0 0.0
  %695 = vmatpush1.msra.mxu0 0.0
  %696 = vmatprep.mubr.f32.mxu0 0.0
  %697 = vmatmul.mubr.f32.gmra.mrb[0].mxu0 %v116
  %v698 = vpop.f32.mrb[0].mxu0
  %v699 = vadd.f32 %v107, %v698
  %v700 = vpop.f32.mrb[0].mxu0
  %v701 = vadd.f32 %v107, %v700
  %702 = vmatprep.mubr.f32.mxu0 0.0
  %703 = vmatmul.mubr.f32.gmra.mrb[0].mxu0 %v119
  %v704 = vpop.f32.mrb[0].mxu0
  %v705 = vadd.f32 %v112, %v704
  %v706 = vpop.f32.mrb[0].mxu0
  %v707 = vadd.f32 %v112, %v706
  %708 = vdwg.mxu0
  %709 = vmatprep.subr.mxu0 %v37
  %710 = vmatpush1.msra.mxu0 %v36
  %711 = vmatprep.subr.mxu0 %v53
  %712 = vmatpush1.msra.mxu0 %v52
  %713 = vmatprep.subr.mxu0 %v69
  %714 = vmatpush1.msra.mxu0 %v68
  %715 = vmatprep.subr.mxu0 %v85
  %716 = vmatpush1.msra.mxu0 %v84
  %717 = vmatprep.subr.mxu0 %v168
  %718 = vmatpush1.msra.mxu0 %v165
  %719 = vmatprep.subr.mxu0 0.0
  %720 = vmatpush1.msra.mxu0 0.0
  %721 = vmatprep.subr.mxu0 0.0
  %722 = vmatpush1.msra.mxu0 0.0
  %723 = vmatprep.subr.mxu0 0.0
  %724 = vmatpush1.msra.mxu0 0.0
  %725 = vmatprep.subr.mxu0 0.0
  %726 = vmatpush1.msra.mxu0 0.0
  %727 = vmatprep.subr.mxu0 0.0
  %728 = vmatpush1.msra.mxu0 0.0
  %729 = vmatprep.subr.mxu0 0.0
  %730 = vmatpush1.msra.mxu0 0.0
  %731 = vmatprep.subr.mxu0 0.0
  %732 = vmatpush1.msra.mxu0 0.0
  %733 = vmatprep.subr.mxu0 0.0
  %734 = vmatpush1.msra.mxu0 0.0
  %735 = vmatprep.subr.mxu0 0.0
  %736 = vmatpush1.msra.mxu0 0.0
  %737 = vmatprep.subr.mxu0 0.0
  %738 = vmatpush1.msra.mxu0 0.0
  %739 = vmatprep.subr.mxu0 0.0
  %740 = vmatpush1.msra.mxu0 0.0
  %741 = vmatprep.subr.mxu0 0.0
  %742 = vmatpush1.msra.mxu0 0.0
  %743 = vmatprep.subr.mxu0 0.0
  %744 = vmatpush1.msra.mxu0 0.0
  %745 = vmatprep.subr.mxu0 0.0
  %746 = vmatpush1.msra.mxu0 0.0
  %747 = vmatprep.subr.mxu0 0.0
  %748 = vmatpush1.msra.mxu0 0.0
  %749 = vmatprep.subr.mxu0 0.0
  %750 = vmatpush1.msra.mxu0 0.0
  %751 = vmatprep.subr.mxu0 0.0
  %752 = vmatpush1.msra.mxu0 0.0
  %753 = vmatprep.subr.mxu0 0.0
  %754 = vmatpush1.msra.mxu0 0.0
  %755 = vmatprep.subr.mxu0 0.0
  %756 = vmatpush1.msra.mxu0 0.0
  %757 = vmatprep.subr.mxu0 0.0
  %758 = vmatpush1.msra.mxu0 0.0
  %759 = vmatprep.subr.mxu0 0.0
  %760 = vmatpush1.msra.mxu0 0.0
  %761 = vmatprep.subr.mxu0 0.0
  %762 = vmatpush1.msra.mxu0 0.0
  %763 = vmatprep.subr.mxu0 0.0
  %764 = vmatpush1.msra.mxu0 0.0
  %765 = vmatprep.subr.mxu0 0.0
  %766 = vmatpush1.msra.mxu0 0.0
  %767 = vmatprep.subr.mxu0 0.0
  %768 = vmatpush1.msra.mxu0 0.0
  %769 = vmatprep.subr.mxu0 0.0
  %770 = vmatpush1.msra.mxu0 0.0
  %771 = vmatprep.subr.mxu0 0.0
  %772 = vmatpush1.msra.mxu0 0.0
  %773 = vmatprep.mubr.f32.mxu0 0.0
  %774 = vmatmul.mubr.f32.gmra.mrb[0].mxu0 %v116
  %v775 = vpop.f32.mrb[0].mxu0
  %v776 = vadd.f32 %v107, %v775
  %v777 = vpop.f32.mrb[0].mxu0
  %v778 = vadd.f32 %v107, %v777
  %779 = vmatprep.mubr.f32.mxu0 0.0
  %780 = vmatmul.mubr.f32.gmra.mrb[0].mxu0 %v119
  %v781 = vpop.f32.mrb[0].mxu0
  %v782 = vadd.f32 %v112, %v781
  %v783 = vpop.f32.mrb[0].mxu0
  %v784 = vadd.f32 %v112, %v783
  %785 = vdwg.mxu0
  %v786 = vld [vmem:[%s3] sm:$0xff]
  %v787 = vld [vmem:[%s3 + $0x8] sm:$0xff]
  %789 = vset.pattern.permute.xlu0 0
  %790 = vperm.xlu0 %789, %v786
  %v791 = vpop.permute.xlu0 %790
  %794 = vset.pattern.permute.xlu0 0
  %795 = vperm.xlu0 %794, %v787
  %v796 = vpop.permute.xlu0 %795
  %v798 = vmul.f32 %v237, %v791
  %v799 = vmul.f32 %v239, %v791
  %v800 = vmul.f32 %v314, %v791
  %v801 = vmul.f32 %v316, %v791
  %v802 = vmul.f32 %v391, %v791
  %v803 = vmul.f32 %v393, %v791
  %v804 = vmul.f32 %v468, %v791
  %v805 = vmul.f32 %v470, %v791
  %v806 = vmul.f32 %v545, %v791
  %v807 = vmul.f32 %v547, %v791
  %v808 = vmul.f32 %v622, %v791
  %v809 = vmul.f32 %v624, %v791
  %v810 = vmul.f32 %v699, %v791
  %v811 = vmul.f32 %v701, %v791
  %v812 = vmul.f32 %v776, %v791
  %v813 = vmul.f32 %v778, %v791
  %v814 = vmul.f32 %v243, %v796
  %v815 = vmul.f32 %v245, %v796
  %v816 = vmul.f32 %v320, %v796
  %v817 = vmul.f32 %v322, %v796
  %v818 = vmul.f32 %v397, %v796
  %v819 = vmul.f32 %v399, %v796
  %v820 = vmul.f32 %v474, %v796
  %v821 = vmul.f32 %v476, %v796
  %v822 = vmul.f32 %v551, %v796
  %v823 = vmul.f32 %v553, %v796
  %v824 = vmul.f32 %v628, %v796
  %v825 = vmul.f32 %v630, %v796
  %v826 = vmul.f32 %v705, %v796
  %v827 = vmul.f32 %v707, %v796
  %v828 = vmul.f32 %v782, %v796
  %v829 = vmul.f32 %v784, %v796
  %v830 = vld [vmem:[%s4] sm:$0xff]
  %v831 = vld [vmem:[%s4 + $0x8] sm:$0xff]
  %833 = vset.pattern.permute.xlu0 0
  %834 = vperm.xlu0 %833, %v830
  %v835 = vpop.permute.xlu0 %834
  %838 = vset.pattern.permute.xlu0 0
  %839 = vperm.xlu0 %838, %v831
  %v840 = vpop.permute.xlu0 %839
  %v842 = vadd.f32 %v798, %v835
  %v843 = vadd.f32 %v799, %v835
  %v844 = vadd.f32 %v800, %v835
  %v845 = vadd.f32 %v801, %v835
  %v846 = vadd.f32 %v802, %v835
  %v847 = vadd.f32 %v803, %v835
  %v848 = vadd.f32 %v804, %v835
  %v849 = vadd.f32 %v805, %v835
  %v850 = vadd.f32 %v806, %v835
  %v851 = vadd.f32 %v807, %v835
  %v852 = vadd.f32 %v808, %v835
  %v853 = vadd.f32 %v809, %v835
  %v854 = vadd.f32 %v810, %v835
  %v855 = vadd.f32 %v811, %v835
  %v856 = vadd.f32 %v812, %v835
  %v857 = vadd.f32 %v813, %v835
  %v858 = vadd.f32 %v814, %v840
  %v859 = vadd.f32 %v815, %v840
  %v860 = vadd.f32 %v816, %v840
  %v861 = vadd.f32 %v817, %v840
  %v862 = vadd.f32 %v818, %v840
  %v863 = vadd.f32 %v819, %v840
  %v864 = vadd.f32 %v820, %v840
  %v865 = vadd.f32 %v821, %v840
  %v866 = vadd.f32 %v822, %v840
  %v867 = vadd.f32 %v823, %v840
  %v868 = vadd.f32 %v824, %v840
  %v869 = vadd.f32 %v825, %v840
  %v870 = vadd.f32 %v826, %v840
  %v871 = vadd.f32 %v827, %v840
  %v872 = vadd.f32 %v828, %v840
  %v873 = vadd.f32 %v829, %v840
  %v874 = vmul.f32 %v842, 0.5
  %v875 = vmul.f32 %v843, 0.5
  %v876 = vmul.f32 %v844, 0.5
  %v877 = vmul.f32 %v845, 0.5
  %v878 = vmul.f32 %v846, 0.5
  %v879 = vmul.f32 %v847, 0.5
  %v880 = vmul.f32 %v848, 0.5
  %v881 = vmul.f32 %v849, 0.5
  %v882 = vmul.f32 %v850, 0.5
  %v883 = vmul.f32 %v851, 0.5
  %v884 = vmul.f32 %v852, 0.5
  %v885 = vmul.f32 %v853, 0.5
  %v886 = vmul.f32 %v854, 0.5
  %v887 = vmul.f32 %v855, 0.5
  %v888 = vmul.f32 %v856, 0.5
  %v889 = vmul.f32 %v857, 0.5
  %v890 = vmul.f32 %v858, 0.5
  %v891 = vmul.f32 %v859, 0.5
  %v892 = vmul.f32 %v860, 0.5
  %v893 = vmul.f32 %v861, 0.5
  %v894 = vmul.f32 %v862, 0.5
  %v895 = vmul.f32 %v863, 0.5
  %v896 = vmul.f32 %v864, 0.5
  %v897 = vmul.f32 %v865, 0.5
  %v898 = vmul.f32 %v866, 0.5
  %v899 = vmul.f32 %v867, 0.5
  %v900 = vmul.f32 %v868, 0.5
  %v901 = vmul.f32 %v869, 0.5
  %v902 = vmul.f32 %v870, 0.5
  %v903 = vmul.f32 %v871, 0.5
  %v904 = vmul.f32 %v872, 0.5
  %v905 = vmul.f32 %v873, 0.5
  %v906 = vmul.f32 %v842, 0.70710677
  %v907 = vmul.f32 %v843, 0.70710677
  %v908 = vmul.f32 %v844, 0.70710677
  %v909 = vmul.f32 %v845, 0.70710677
  %v910 = vmul.f32 %v846, 0.70710677
  %v911 = vmul.f32 %v847, 0.70710677
  %v912 = vmul.f32 %v848, 0.70710677
  %v913 = vmul.f32 %v849, 0.70710677
  %v914 = vmul.f32 %v850, 0.70710677
  %v915 = vmul.f32 %v851, 0.70710677
  %v916 = vmul.f32 %v852, 0.70710677
  %v917 = vmul.f32 %v853, 0.70710677
  %v918 = vmul.f32 %v854, 0.70710677
  %v919 = vmul.f32 %v855, 0.70710677
  %v920 = vmul.f32 %v856, 0.70710677
  %v921 = vmul.f32 %v857, 0.70710677
  %v922 = vmul.f32 %v858, 0.70710677
  %v923 = vmul.f32 %v859, 0.70710677
  %v924 = vmul.f32 %v860, 0.70710677
  %v925 = vmul.f32 %v861, 0.70710677
  %v926 = vmul.f32 %v862, 0.70710677
  %v927 = vmul.f32 %v863, 0.70710677
  %v928 = vmul.f32 %v864, 0.70710677
  %v929 = vmul.f32 %v865, 0.70710677
  %v930 = vmul.f32 %v866, 0.70710677
  %v931 = vmul.f32 %v867, 0.70710677
  %v932 = vmul.f32 %v868, 0.70710677
  %v933 = vmul.f32 %v869, 0.70710677
  %v934 = vmul.f32 %v870, 0.70710677
  %v935 = vmul.f32 %v871, 0.70710677
  %v936 = vmul.f32 %v872, 0.70710677
  %v937 = vmul.f32 %v873, 0.70710677
  %v938 = vand.u32 2147483647, %v906
  %v939 = vand.u32 2147483647, %v907
  %v940 = vand.u32 2147483647, %v908
  %v941 = vand.u32 2147483647, %v909
  %v942 = vand.u32 2147483647, %v910
  %v943 = vand.u32 2147483647, %v911
  %v944 = vand.u32 2147483647, %v912
  %v945 = vand.u32 2147483647, %v913
  %v946 = vand.u32 2147483647, %v914
  %v947 = vand.u32 2147483647, %v915
  %v948 = vand.u32 2147483647, %v916
  %v949 = vand.u32 2147483647, %v917
  %v950 = vand.u32 2147483647, %v918
  %v951 = vand.u32 2147483647, %v919
  %v952 = vand.u32 2147483647, %v920
  %v953 = vand.u32 2147483647, %v921
  %v954 = vand.u32 2147483647, %v922
  %v955 = vand.u32 2147483647, %v923
  %v956 = vand.u32 2147483647, %v924
  %v957 = vand.u32 2147483647, %v925
  %v958 = vand.u32 2147483647, %v926
  %v959 = vand.u32 2147483647, %v927
  %v960 = vand.u32 2147483647, %v928
  %v961 = vand.u32 2147483647, %v929
  %v962 = vand.u32 2147483647, %v930
  %v963 = vand.u32 2147483647, %v931
  %v964 = vand.u32 2147483647, %v932
  %v965 = vand.u32 2147483647, %v933
  %v966 = vand.u32 2147483647, %v934
  %v967 = vand.u32 2147483647, %v935
  %v968 = vand.u32 2147483647, %v936
  %v969 = vand.u32 2147483647, %v937
  %v970 = vmul.f32 %v938, 0.3275911
  %v971 = vmul.f32 %v939, 0.3275911
  %v972 = vmul.f32 %v940, 0.3275911
  %v973 = vmul.f32 %v941, 0.3275911
  %v974 = vmul.f32 %v942, 0.3275911
  %v975 = vmul.f32 %v943, 0.3275911
  %v976 = vmul.f32 %v944, 0.3275911
  %v977 = vmul.f32 %v945, 0.3275911
  %v978 = vmul.f32 %v946, 0.3275911
  %v979 = vmul.f32 %v947, 0.3275911
  %v980 = vmul.f32 %v948, 0.3275911
  %v981 = vmul.f32 %v949, 0.3275911
  %v982 = vmul.f32 %v950, 0.3275911
  %v983 = vmul.f32 %v951, 0.3275911
  %v984 = vmul.f32 %v952, 0.3275911
  %v985 = vmul.f32 %v953, 0.3275911
  %v986 = vmul.f32 %v954, 0.3275911
  %v987 = vmul.f32 %v955, 0.3275911
  %v988 = vmul.f32 %v956, 0.3275911
  %v989 = vmul.f32 %v957, 0.3275911
  %v990 = vmul.f32 %v958, 0.3275911
  %v991 = vmul.f32 %v959, 0.3275911
  %v992 = vmul.f32 %v960, 0.3275911
  %v993 = vmul.f32 %v961, 0.3275911
  %v994 = vmul.f32 %v962, 0.3275911
  %v995 = vmul.f32 %v963, 0.3275911
  %v996 = vmul.f32 %v964, 0.3275911
  %v997 = vmul.f32 %v965, 0.3275911
  %v998 = vmul.f32 %v966, 0.3275911
  %v999 = vmul.f32 %v967, 0.3275911
  %v1000 = vmul.f32 %v968, 0.3275911
  %v1001 = vmul.f32 %v969, 0.3275911
  %v1002 = vadd.f32 %v970, 1.0
  %v1003 = vadd.f32 %v971, 1.0
  %v1004 = vadd.f32 %v972, 1.0
  %v1005 = vadd.f32 %v973, 1.0
  %v1006 = vadd.f32 %v974, 1.0
  %v1007 = vadd.f32 %v975, 1.0
  %v1008 = vadd.f32 %v976, 1.0
  %v1009 = vadd.f32 %v977, 1.0
  %v1010 = vadd.f32 %v978, 1.0
  %v1011 = vadd.f32 %v979, 1.0
  %v1012 = vadd.f32 %v980, 1.0
  %v1013 = vadd.f32 %v981, 1.0
  %v1014 = vadd.f32 %v982, 1.0
  %v1015 = vadd.f32 %v983, 1.0
  %v1016 = vadd.f32 %v984, 1.0
  %v1017 = vadd.f32 %v985, 1.0
  %v1018 = vadd.f32 %v986, 1.0
  %v1019 = vadd.f32 %v987, 1.0
  %v1020 = vadd.f32 %v988, 1.0
  %v1021 = vadd.f32 %v989, 1.0
  %v1022 = vadd.f32 %v990, 1.0
  %v1023 = vadd.f32 %v991, 1.0
  %v1024 = vadd.f32 %v992, 1.0
  %v1025 = vadd.f32 %v993, 1.0
  %v1026 = vadd.f32 %v994, 1.0
  %v1027 = vadd.f32 %v995, 1.0
  %v1028 = vadd.f32 %v996, 1.0
  %v1029 = vadd.f32 %v997, 1.0
  %v1030 = vadd.f32 %v998, 1.0
  %v1031 = vadd.f32 %v999, 1.0
  %v1032 = vadd.f32 %v1000, 1.0
  %v1033 = vadd.f32 %v1001, 1.0
  %v1034 = vrcp.pop %v1002
  %v1035 = vmul.f32 1.0, %v1034
  %v1036 = vrcp.pop %v1003
  %v1037 = vmul.f32 1.0, %v1036
  %v1038 = vrcp.pop %v1004
  %v1039 = vmul.f32 1.0, %v1038
  %v1040 = vrcp.pop %v1005
  %v1041 = vmul.f32 1.0, %v1040
  %v1042 = vrcp.pop %v1006
  %v1043 = vmul.f32 1.0, %v1042
  %v1044 = vrcp.pop %v1007
  %v1045 = vmul.f32 1.0, %v1044
  %v1046 = vrcp.pop %v1008
  %v1047 = vmul.f32 1.0, %v1046
  %v1048 = vrcp.pop %v1009
  %v1049 = vmul.f32 1.0, %v1048
  %v1050 = vrcp.pop %v1010
  %v1051 = vmul.f32 1.0, %v1050
  %v1052 = vrcp.pop %v1011
  %v1053 = vmul.f32 1.0, %v1052
  %v1054 = vrcp.pop %v1012
  %v1055 = vmul.f32 1.0, %v1054
  %v1056 = vrcp.pop %v1013
  %v1057 = vmul.f32 1.0, %v1056
  %v1058 = vrcp.pop %v1014
  %v1059 = vmul.f32 1.0, %v1058
  %v1060 = vrcp.pop %v1015
  %v1061 = vmul.f32 1.0, %v1060
  %v1062 = vrcp.pop %v1016
  %v1063 = vmul.f32 1.0, %v1062
  %v1064 = vrcp.pop %v1017
  %v1065 = vmul.f32 1.0, %v1064
  %v1066 = vrcp.pop %v1018
  %v1067 = vmul.f32 1.0, %v1066
  %v1068 = vrcp.pop %v1019
  %v1069 = vmul.f32 1.0, %v1068
  %v1070 = vrcp.pop %v1020
  %v1071 = vmul.f32 1.0, %v1070
  %v1072 = vrcp.pop %v1021
  %v1073 = vmul.f32 1.0, %v1072
  %v1074 = vrcp.pop %v1022
  %v1075 = vmul.f32 1.0, %v1074
  %v1076 = vrcp.pop %v1023
  %v1077 = vmul.f32 1.0, %v1076
  %v1078 = vrcp.pop %v1024
  %v1079 = vmul.f32 1.0, %v1078
  %v1080 = vrcp.pop %v1025
  %v1081 = vmul.f32 1.0, %v1080
  %v1082 = vrcp.pop %v1026
  %v1083 = vmul.f32 1.0, %v1082
  %v1084 = vrcp.pop %v1027
  %v1085 = vmul.f32 1.0, %v1084
  %v1086 = vrcp.pop %v1028
  %v1087 = vmul.f32 1.0, %v1086
  %v1088 = vrcp.pop %v1029
  %v1089 = vmul.f32 1.0, %v1088
  %v1090 = vrcp.pop %v1030
  %v1091 = vmul.f32 1.0, %v1090
  %v1092 = vrcp.pop %v1031
  %v1093 = vmul.f32 1.0, %v1092
  %v1094 = vrcp.pop %v1032
  %v1095 = vmul.f32 1.0, %v1094
  %v1096 = vrcp.pop %v1033
  %v1097 = vmul.f32 1.0, %v1096
  %v1098 = vmul.f32 %v1035, 1.0614054
  %v1099 = vmul.f32 %v1037, 1.0614054
  %v1100 = vmul.f32 %v1039, 1.0614054
  %v1101 = vmul.f32 %v1041, 1.0614054
  %v1102 = vmul.f32 %v1043, 1.0614054
  %v1103 = vmul.f32 %v1045, 1.0614054
  %v1104 = vmul.f32 %v1047, 1.0614054
  %v1105 = vmul.f32 %v1049, 1.0614054
  %v1106 = vmul.f32 %v1051, 1.0614054
  %v1107 = vmul.f32 %v1053, 1.0614054
  %v1108 = vmul.f32 %v1055, 1.0614054
  %v1109 = vmul.f32 %v1057, 1.0614054
  %v1110 = vmul.f32 %v1059, 1.0614054
  %v1111 = vmul.f32 %v1061, 1.0614054
  %v1112 = vmul.f32 %v1063, 1.0614054
  %v1113 = vmul.f32 %v1065, 1.0614054
  %v1114 = vmul.f32 %v1067, 1.0614054
  %v1115 = vmul.f32 %v1069, 1.0614054
  %v1116 = vmul.f32 %v1071, 1.0614054
  %v1117 = vmul.f32 %v1073, 1.0614054
  %v1118 = vmul.f32 %v1075, 1.0614054
  %v1119 = vmul.f32 %v1077, 1.0614054
  %v1120 = vmul.f32 %v1079, 1.0614054
  %v1121 = vmul.f32 %v1081, 1.0614054
  %v1122 = vmul.f32 %v1083, 1.0614054
  %v1123 = vmul.f32 %v1085, 1.0614054
  %v1124 = vmul.f32 %v1087, 1.0614054
  %v1125 = vmul.f32 %v1089, 1.0614054
  %v1126 = vmul.f32 %v1091, 1.0614054
  %v1127 = vmul.f32 %v1093, 1.0614054
  %v1128 = vmul.f32 %v1095, 1.0614054
  %v1129 = vmul.f32 %v1097, 1.0614054
  %v1130 = vadd.f32 %v1098, -1.4531521
  %v1131 = vadd.f32 %v1099, -1.4531521
  %v1132 = vadd.f32 %v1100, -1.4531521
  %v1133 = vadd.f32 %v1101, -1.4531521
  %v1134 = vadd.f32 %v1102, -1.4531521
  %v1135 = vadd.f32 %v1103, -1.4531521
  %v1136 = vadd.f32 %v1104, -1.4531521
  %v1137 = vadd.f32 %v1105, -1.4531521
  %v1138 = vadd.f32 %v1106, -1.4531521
  %v1139 = vadd.f32 %v1107, -1.4531521
  %v1140 = vadd.f32 %v1108, -1.4531521
  %v1141 = vadd.f32 %v1109, -1.4531521
  %v1142 = vadd.f32 %v1110, -1.4531521
  %v1143 = vadd.f32 %v1111, -1.4531521
  %v1144 = vadd.f32 %v1112, -1.4531521
  %v1145 = vadd.f32 %v1113, -1.4531521
  %v1146 = vadd.f32 %v1114, -1.4531521
  %v1147 = vadd.f32 %v1115, -1.4531521
  %v1148 = vadd.f32 %v1116, -1.4531521
  %v1149 = vadd.f32 %v1117, -1.4531521
  %v1150 = vadd.f32 %v1118, -1.4531521
  %v1151 = vadd.f32 %v1119, -1.4531521
  %v1152 = vadd.f32 %v1120, -1.4531521
  %v1153 = vadd.f32 %v1121, -1.4531521
  %v1154 = vadd.f32 %v1122, -1.4531521
  %v1155 = vadd.f32 %v1123, -1.4531521
  %v1156 = vadd.f32 %v1124, -1.4531521
  %v1157 = vadd.f32 %v1125, -1.4531521
  %v1158 = vadd.f32 %v1126, -1.4531521
  %v1159 = vadd.f32 %v1127, -1.4531521
  %v1160 = vadd.f32 %v1128, -1.4531521
  %v1161 = vadd.f32 %v1129, -1.4531521
  %v1162 = vmul.f32 %v1130, %v1035
  %v1163 = vmul.f32 %v1131, %v1037
  %v1164 = vmul.f32 %v1132, %v1039
  %v1165 = vmul.f32 %v1133, %v1041
  %v1166 = vmul.f32 %v1134, %v1043
  %v1167 = vmul.f32 %v1135, %v1045
  %v1168 = vmul.f32 %v1136, %v1047
  %v1169 = vmul.f32 %v1137, %v1049
  %v1170 = vmul.f32 %v1138, %v1051
  %v1171 = vmul.f32 %v1139, %v1053
  %v1172 = vmul.f32 %v1140, %v1055
  %v1173 = vmul.f32 %v1141, %v1057
  %v1174 = vmul.f32 %v1142, %v1059
  %v1175 = vmul.f32 %v1143, %v1061
  %v1176 = vmul.f32 %v1144, %v1063
  %v1177 = vmul.f32 %v1145, %v1065
  %v1178 = vmul.f32 %v1146, %v1067
  %v1179 = vmul.f32 %v1147, %v1069
  %v1180 = vmul.f32 %v1148, %v1071
  %v1181 = vmul.f32 %v1149, %v1073
  %v1182 = vmul.f32 %v1150, %v1075
  %v1183 = vmul.f32 %v1151, %v1077
  %v1184 = vmul.f32 %v1152, %v1079
  %v1185 = vmul.f32 %v1153, %v1081
  %v1186 = vmul.f32 %v1154, %v1083
  %v1187 = vmul.f32 %v1155, %v1085
  %v1188 = vmul.f32 %v1156, %v1087
  %v1189 = vmul.f32 %v1157, %v1089
  %v1190 = vmul.f32 %v1158, %v1091
  %v1191 = vmul.f32 %v1159, %v1093
  %v1192 = vmul.f32 %v1160, %v1095
  %v1193 = vmul.f32 %v1161, %v1097
  %v1194 = vadd.f32 %v1162, 1.4214138
  %v1195 = vadd.f32 %v1163, 1.4214138
  %v1196 = vadd.f32 %v1164, 1.4214138
  %v1197 = vadd.f32 %v1165, 1.4214138
  %v1198 = vadd.f32 %v1166, 1.4214138
  %v1199 = vadd.f32 %v1167, 1.4214138
  %v1200 = vadd.f32 %v1168, 1.4214138
  %v1201 = vadd.f32 %v1169, 1.4214138
  %v1202 = vadd.f32 %v1170, 1.4214138
  %v1203 = vadd.f32 %v1171, 1.4214138
  %v1204 = vadd.f32 %v1172, 1.4214138
  %v1205 = vadd.f32 %v1173, 1.4214138
  %v1206 = vadd.f32 %v1174, 1.4214138
  %v1207 = vadd.f32 %v1175, 1.4214138
  %v1208 = vadd.f32 %v1176, 1.4214138
  %v1209 = vadd.f32 %v1177, 1.4214138
  %v1210 = vadd.f32 %v1178, 1.4214138
  %v1211 = vadd.f32 %v1179, 1.4214138
  %v1212 = vadd.f32 %v1180, 1.4214138
  %v1213 = vadd.f32 %v1181, 1.4214138
  %v1214 = vadd.f32 %v1182, 1.4214138
  %v1215 = vadd.f32 %v1183, 1.4214138
  %v1216 = vadd.f32 %v1184, 1.4214138
  %v1217 = vadd.f32 %v1185, 1.4214138
  %v1218 = vadd.f32 %v1186, 1.4214138
  %v1219 = vadd.f32 %v1187, 1.4214138
  %v1220 = vadd.f32 %v1188, 1.4214138
  %v1221 = vadd.f32 %v1189, 1.4214138
  %v1222 = vadd.f32 %v1190, 1.4214138
  %v1223 = vadd.f32 %v1191, 1.4214138
  %v1224 = vadd.f32 %v1192, 1.4214138
  %v1225 = vadd.f32 %v1193, 1.4214138
  %v1226 = vmul.f32 %v1194, %v1035
  %v1227 = vmul.f32 %v1195, %v1037
  %v1228 = vmul.f32 %v1196, %v1039
  %v1229 = vmul.f32 %v1197, %v1041
  %v1230 = vmul.f32 %v1198, %v1043
  %v1231 = vmul.f32 %v1199, %v1045
  %v1232 = vmul.f32 %v1200, %v1047
  %v1233 = vmul.f32 %v1201, %v1049
  %v1234 = vmul.f32 %v1202, %v1051
  %v1235 = vmul.f32 %v1203, %v1053
  %v1236 = vmul.f32 %v1204, %v1055
  %v1237 = vmul.f32 %v1205, %v1057
  %v1238 = vmul.f32 %v1206, %v1059
  %v1239 = vmul.f32 %v1207, %v1061
  %v1240 = vmul.f32 %v1208, %v1063
  %v1241 = vmul.f32 %v1209, %v1065
  %v1242 = vmul.f32 %v1210, %v1067
  %v1243 = vmul.f32 %v1211, %v1069
  %v1244 = vmul.f32 %v1212, %v1071
  %v1245 = vmul.f32 %v1213, %v1073
  %v1246 = vmul.f32 %v1214, %v1075
  %v1247 = vmul.f32 %v1215, %v1077
  %v1248 = vmul.f32 %v1216, %v1079
  %v1249 = vmul.f32 %v1217, %v1081
  %v1250 = vmul.f32 %v1218, %v1083
  %v1251 = vmul.f32 %v1219, %v1085
  %v1252 = vmul.f32 %v1220, %v1087
  %v1253 = vmul.f32 %v1221, %v1089
  %v1254 = vmul.f32 %v1222, %v1091
  %v1255 = vmul.f32 %v1223, %v1093
  %v1256 = vmul.f32 %v1224, %v1095
  %v1257 = vmul.f32 %v1225, %v1097
  %v1258 = vadd.f32 %v1226, -0.28449672
  %v1259 = vadd.f32 %v1227, -0.28449672
  %v1260 = vadd.f32 %v1228, -0.28449672
  %v1261 = vadd.f32 %v1229, -0.28449672
  %v1262 = vadd.f32 %v1230, -0.28449672
  %v1263 = vadd.f32 %v1231, -0.28449672
  %v1264 = vadd.f32 %v1232, -0.28449672
  %v1265 = vadd.f32 %v1233, -0.28449672
  %v1266 = vadd.f32 %v1234, -0.28449672
  %v1267 = vadd.f32 %v1235, -0.28449672
  %v1268 = vadd.f32 %v1236, -0.28449672
  %v1269 = vadd.f32 %v1237, -0.28449672
  %v1270 = vadd.f32 %v1238, -0.28449672
  %v1271 = vadd.f32 %v1239, -0.28449672
  %v1272 = vadd.f32 %v1240, -0.28449672
  %v1273 = vadd.f32 %v1241, -0.28449672
  %v1274 = vadd.f32 %v1242, -0.28449672
  %v1275 = vadd.f32 %v1243, -0.28449672
  %v1276 = vadd.f32 %v1244, -0.28449672
  %v1277 = vadd.f32 %v1245, -0.28449672
  %v1278 = vadd.f32 %v1246, -0.28449672
  %v1279 = vadd.f32 %v1247, -0.28449672
  %v1280 = vadd.f32 %v1248, -0.28449672
  %v1281 = vadd.f32 %v1249, -0.28449672
  %v1282 = vadd.f32 %v1250, -0.28449672
  %v1283 = vadd.f32 %v1251, -0.28449672
  %v1284 = vadd.f32 %v1252, -0.28449672
  %v1285 = vadd.f32 %v1253, -0.28449672
  %v1286 = vadd.f32 %v1254, -0.28449672
  %v1287 = vadd.f32 %v1255, -0.28449672
  %v1288 = vadd.f32 %v1256, -0.28449672
  %v1289 = vadd.f32 %v1257, -0.28449672
  %v1290 = vmul.f32 %v1258, %v1035
  %v1291 = vmul.f32 %v1259, %v1037
  %v1292 = vmul.f32 %v1260, %v1039
  %v1293 = vmul.f32 %v1261, %v1041
  %v1294 = vmul.f32 %v1262, %v1043
  %v1295 = vmul.f32 %v1263, %v1045
  %v1296 = vmul.f32 %v1264, %v1047
  %v1297 = vmul.f32 %v1265, %v1049
  %v1298 = vmul.f32 %v1266, %v1051
  %v1299 = vmul.f32 %v1267, %v1053
  %v1300 = vmul.f32 %v1268, %v1055
  %v1301 = vmul.f32 %v1269, %v1057
  %v1302 = vmul.f32 %v1270, %v1059
  %v1303 = vmul.f32 %v1271, %v1061
  %v1304 = vmul.f32 %v1272, %v1063
  %v1305 = vmul.f32 %v1273, %v1065
  %v1306 = vmul.f32 %v1274, %v1067
  %v1307 = vmul.f32 %v1275, %v1069
  %v1308 = vmul.f32 %v1276, %v1071
  %v1309 = vmul.f32 %v1277, %v1073
  %v1310 = vmul.f32 %v1278, %v1075
  %v1311 = vmul.f32 %v1279, %v1077
  %v1312 = vmul.f32 %v1280, %v1079
  %v1313 = vmul.f32 %v1281, %v1081
  %v1314 = vmul.f32 %v1282, %v1083
  %v1315 = vmul.f32 %v1283, %v1085
  %v1316 = vmul.f32 %v1284, %v1087
  %v1317 = vmul.f32 %v1285, %v1089
  %v1318 = vmul.f32 %v1286, %v1091
  %v1319 = vmul.f32 %v1287, %v1093
  %v1320 = vmul.f32 %v1288, %v1095
  %v1321 = vmul.f32 %v1289, %v1097
  %v1322 = vadd.f32 %v1290, 0.2548296
  %v1323 = vadd.f32 %v1291, 0.2548296
  %v1324 = vadd.f32 %v1292, 0.2548296
  %v1325 = vadd.f32 %v1293, 0.2548296
  %v1326 = vadd.f32 %v1294, 0.2548296
  %v1327 = vadd.f32 %v1295, 0.2548296
  %v1328 = vadd.f32 %v1296, 0.2548296
  %v1329 = vadd.f32 %v1297, 0.2548296
  %v1330 = vadd.f32 %v1298, 0.2548296
  %v1331 = vadd.f32 %v1299, 0.2548296
  %v1332 = vadd.f32 %v1300, 0.2548296
  %v1333 = vadd.f32 %v1301, 0.2548296
  %v1334 = vadd.f32 %v1302, 0.2548296
  %v1335 = vadd.f32 %v1303, 0.2548296
  %v1336 = vadd.f32 %v1304, 0.2548296
  %v1337 = vadd.f32 %v1305, 0.2548296
  %v1338 = vadd.f32 %v1306, 0.2548296
  %v1339 = vadd.f32 %v1307, 0.2548296
  %v1340 = vadd.f32 %v1308, 0.2548296
  %v1341 = vadd.f32 %v1309, 0.2548296
  %v1342 = vadd.f32 %v1310, 0.2548296
  %v1343 = vadd.f32 %v1311, 0.2548296
  %v1344 = vadd.f32 %v1312, 0.2548296
  %v1345 = vadd.f32 %v1313, 0.2548296
  %v1346 = vadd.f32 %v1314, 0.2548296
  %v1347 = vadd.f32 %v1315, 0.2548296
  %v1348 = vadd.f32 %v1316, 0.2548296
  %v1349 = vadd.f32 %v1317, 0.2548296
  %v1350 = vadd.f32 %v1318, 0.2548296
  %v1351 = vadd.f32 %v1319, 0.2548296
  %v1352 = vadd.f32 %v1320, 0.2548296
  %v1353 = vadd.f32 %v1321, 0.2548296
  %v1354 = vmul.f32 %v1322, %v1035
  %v1355 = vmul.f32 %v1323, %v1037
  %v1356 = vmul.f32 %v1324, %v1039
  %v1357 = vmul.f32 %v1325, %v1041
  %v1358 = vmul.f32 %v1326, %v1043
  %v1359 = vmul.f32 %v1327, %v1045
  %v1360 = vmul.f32 %v1328, %v1047
  %v1361 = vmul.f32 %v1329, %v1049
  %v1362 = vmul.f32 %v1330, %v1051
  %v1363 = vmul.f32 %v1331, %v1053
  %v1364 = vmul.f32 %v1332, %v1055
  %v1365 = vmul.f32 %v1333, %v1057
  %v1366 = vmul.f32 %v1334, %v1059
  %v1367 = vmul.f32 %v1335, %v1061
  %v1368 = vmul.f32 %v1336, %v1063
  %v1369 = vmul.f32 %v1337, %v1065
  %v1370 = vmul.f32 %v1338, %v1067
  %v1371 = vmul.f32 %v1339, %v1069
  %v1372 = vmul.f32 %v1340, %v1071
  %v1373 = vmul.f32 %v1341, %v1073
  %v1374 = vmul.f32 %v1342, %v1075
  %v1375 = vmul.f32 %v1343, %v1077
  %v1376 = vmul.f32 %v1344, %v1079
  %v1377 = vmul.f32 %v1345, %v1081
  %v1378 = vmul.f32 %v1346, %v1083
  %v1379 = vmul.f32 %v1347, %v1085
  %v1380 = vmul.f32 %v1348, %v1087
  %v1381 = vmul.f32 %v1349, %v1089
  %v1382 = vmul.f32 %v1350, %v1091
  %v1383 = vmul.f32 %v1351, %v1093
  %v1384 = vmul.f32 %v1352, %v1095
  %v1385 = vmul.f32 %v1353, %v1097
  %v1386 = vmul.f32 %v938, %v938
  %v1387 = vmul.f32 %v939, %v939
  %v1388 = vmul.f32 %v940, %v940
  %v1389 = vmul.f32 %v941, %v941
  %v1390 = vmul.f32 %v942, %v942
  %v1391 = vmul.f32 %v943, %v943
  %v1392 = vmul.f32 %v944, %v944
  %v1393 = vmul.f32 %v945, %v945
  %v1394 = vmul.f32 %v946, %v946
  %v1395 = vmul.f32 %v947, %v947
  %v1396 = vmul.f32 %v948, %v948
  %v1397 = vmul.f32 %v949, %v949
  %v1398 = vmul.f32 %v950, %v950
  %v1399 = vmul.f32 %v951, %v951
  %v1400 = vmul.f32 %v952, %v952
  %v1401 = vmul.f32 %v953, %v953
  %v1402 = vmul.f32 %v954, %v954
  %v1403 = vmul.f32 %v955, %v955
  %v1404 = vmul.f32 %v956, %v956
  %v1405 = vmul.f32 %v957, %v957
  %v1406 = vmul.f32 %v958, %v958
  %v1407 = vmul.f32 %v959, %v959
  %v1408 = vmul.f32 %v960, %v960
  %v1409 = vmul.f32 %v961, %v961
  %v1410 = vmul.f32 %v962, %v962
  %v1411 = vmul.f32 %v963, %v963
  %v1412 = vmul.f32 %v964, %v964
  %v1413 = vmul.f32 %v965, %v965
  %v1414 = vmul.f32 %v966, %v966
  %v1415 = vmul.f32 %v967, %v967
  %v1416 = vmul.f32 %v968, %v968
  %v1417 = vmul.f32 %v969, %v969
  %v1418 = vsub.f32 0.0, %v1386
  %v1419 = vsub.f32 0.0, %v1387
  %v1420 = vsub.f32 0.0, %v1388
  %v1421 = vsub.f32 0.0, %v1389
  %v1422 = vsub.f32 0.0, %v1390
  %v1423 = vsub.f32 0.0, %v1391
  %v1424 = vsub.f32 0.0, %v1392
  %v1425 = vsub.f32 0.0, %v1393
  %v1426 = vsub.f32 0.0, %v1394
  %v1427 = vsub.f32 0.0, %v1395
  %v1428 = vsub.f32 0.0, %v1396
  %v1429 = vsub.f32 0.0, %v1397
  %v1430 = vsub.f32 0.0, %v1398
  %v1431 = vsub.f32 0.0, %v1399
  %v1432 = vsub.f32 0.0, %v1400
  %v1433 = vsub.f32 0.0, %v1401
  %v1434 = vsub.f32 0.0, %v1402
  %v1435 = vsub.f32 0.0, %v1403
  %v1436 = vsub.f32 0.0, %v1404
  %v1437 = vsub.f32 0.0, %v1405
  %v1438 = vsub.f32 0.0, %v1406
  %v1439 = vsub.f32 0.0, %v1407
  %v1440 = vsub.f32 0.0, %v1408
  %v1441 = vsub.f32 0.0, %v1409
  %v1442 = vsub.f32 0.0, %v1410
  %v1443 = vsub.f32 0.0, %v1411
  %v1444 = vsub.f32 0.0, %v1412
  %v1445 = vsub.f32 0.0, %v1413
  %v1446 = vsub.f32 0.0, %v1414
  %v1447 = vsub.f32 0.0, %v1415
  %v1448 = vsub.f32 0.0, %v1416
  %v1449 = vsub.f32 0.0, %v1417
  %v1450 = vmul.f32 %v1418, 1.442695
  %v1451 = vpow.pop %v1450
  %v1452 = vmul.f32 %v1419, 1.442695
  %v1453 = vpow.pop %v1452
  %v1454 = vmul.f32 %v1420, 1.442695
  %v1455 = vpow.pop %v1454
  %v1456 = vmul.f32 %v1421, 1.442695
  %v1457 = vpow.pop %v1456
  %v1458 = vmul.f32 %v1422, 1.442695
  %v1459 = vpow.pop %v1458
  %v1460 = vmul.f32 %v1423, 1.442695
  %v1461 = vpow.pop %v1460
  %v1462 = vmul.f32 %v1424, 1.442695
  %v1463 = vpow.pop %v1462
  %v1464 = vmul.f32 %v1425, 1.442695
  %v1465 = vpow.pop %v1464
  %v1466 = vmul.f32 %v1426, 1.442695
  %v1467 = vpow.pop %v1466
  %v1468 = vmul.f32 %v1427, 1.442695
  %v1469 = vpow.pop %v1468
  %v1470 = vmul.f32 %v1428, 1.442695
  %v1471 = vpow.pop %v1470
  %v1472 = vmul.f32 %v1429, 1.442695
  %v1473 = vpow.pop %v1472
  %v1474 = vmul.f32 %v1430, 1.442695
  %v1475 = vpow.pop %v1474
  %v1476 = vmul.f32 %v1431, 1.442695
  %v1477 = vpow.pop %v1476
  %v1478 = vmul.f32 %v1432, 1.442695
  %v1479 = vpow.pop %v1478
  %v1480 = vmul.f32 %v1433, 1.442695
  %v1481 = vpow.pop %v1480
  %v1482 = vmul.f32 %v1434, 1.442695
  %v1483 = vpow.pop %v1482
  %v1484 = vmul.f32 %v1435, 1.442695
  %v1485 = vpow.pop %v1484
  %v1486 = vmul.f32 %v1436, 1.442695
  %v1487 = vpow.pop %v1486
  %v1488 = vmul.f32 %v1437, 1.442695
  %v1489 = vpow.pop %v1488
  %v1490 = vmul.f32 %v1438, 1.442695
  %v1491 = vpow.pop %v1490
  %v1492 = vmul.f32 %v1439, 1.442695
  %v1493 = vpow.pop %v1492
  %v1494 = vmul.f32 %v1440, 1.442695
  %v1495 = vpow.pop %v1494
  %v1496 = vmul.f32 %v1441, 1.442695
  %v1497 = vpow.pop %v1496
  %v1498 = vmul.f32 %v1442, 1.442695
  %v1499 = vpow.pop %v1498
  %v1500 = vmul.f32 %v1443, 1.442695
  %v1501 = vpow.pop %v1500
  %v1502 = vmul.f32 %v1444, 1.442695
  %v1503 = vpow.pop %v1502
  %v1504 = vmul.f32 %v1445, 1.442695
  %v1505 = vpow.pop %v1504
  %v1506 = vmul.f32 %v1446, 1.442695
  %v1507 = vpow.pop %v1506
  %v1508 = vmul.f32 %v1447, 1.442695
  %v1509 = vpow.pop %v1508
  %v1510 = vmul.f32 %v1448, 1.442695
  %v1511 = vpow.pop %v1510
  %v1512 = vmul.f32 %v1449, 1.442695
  %v1513 = vpow.pop %v1512
  %v1514 = vmul.f32 %v1354, %v1451
  %v1515 = vmul.f32 %v1355, %v1453
  %v1516 = vmul.f32 %v1356, %v1455
  %v1517 = vmul.f32 %v1357, %v1457
  %v1518 = vmul.f32 %v1358, %v1459
  %v1519 = vmul.f32 %v1359, %v1461
  %v1520 = vmul.f32 %v1360, %v1463
  %v1521 = vmul.f32 %v1361, %v1465
  %v1522 = vmul.f32 %v1362, %v1467
  %v1523 = vmul.f32 %v1363, %v1469
  %v1524 = vmul.f32 %v1364, %v1471
  %v1525 = vmul.f32 %v1365, %v1473
  %v1526 = vmul.f32 %v1366, %v1475
  %v1527 = vmul.f32 %v1367, %v1477
  %v1528 = vmul.f32 %v1368, %v1479
  %v1529 = vmul.f32 %v1369, %v1481
  %v1530 = vmul.f32 %v1370, %v1483
  %v1531 = vmul.f32 %v1371, %v1485
  %v1532 = vmul.f32 %v1372, %v1487
  %v1533 = vmul.f32 %v1373, %v1489
  %v1534 = vmul.f32 %v1374, %v1491
  %v1535 = vmul.f32 %v1375, %v1493
  %v1536 = vmul.f32 %v1376, %v1495
  %v1537 = vmul.f32 %v1377, %v1497
  %v1538 = vmul.f32 %v1378, %v1499
  %v1539 = vmul.f32 %v1379, %v1501
  %v1540 = vmul.f32 %v1380, %v1503
  %v1541 = vmul.f32 %v1381, %v1505
  %v1542 = vmul.f32 %v1382, %v1507
  %v1543 = vmul.f32 %v1383, %v1509
  %v1544 = vmul.f32 %v1384, %v1511
  %v1545 = vmul.f32 %v1385, %v1513
  %v1546 = vsub.f32 1.0, %v1514
  %v1547 = vsub.f32 1.0, %v1515
  %v1548 = vsub.f32 1.0, %v1516
  %v1549 = vsub.f32 1.0, %v1517
  %v1550 = vsub.f32 1.0, %v1518
  %v1551 = vsub.f32 1.0, %v1519
  %v1552 = vsub.f32 1.0, %v1520
  %v1553 = vsub.f32 1.0, %v1521
  %v1554 = vsub.f32 1.0, %v1522
  %v1555 = vsub.f32 1.0, %v1523
  %v1556 = vsub.f32 1.0, %v1524
  %v1557 = vsub.f32 1.0, %v1525
  %v1558 = vsub.f32 1.0, %v1526
  %v1559 = vsub.f32 1.0, %v1527
  %v1560 = vsub.f32 1.0, %v1528
  %v1561 = vsub.f32 1.0, %v1529
  %v1562 = vsub.f32 1.0, %v1530
  %v1563 = vsub.f32 1.0, %v1531
  %v1564 = vsub.f32 1.0, %v1532
  %v1565 = vsub.f32 1.0, %v1533
  %v1566 = vsub.f32 1.0, %v1534
  %v1567 = vsub.f32 1.0, %v1535
  %v1568 = vsub.f32 1.0, %v1536
  %v1569 = vsub.f32 1.0, %v1537
  %v1570 = vsub.f32 1.0, %v1538
  %v1571 = vsub.f32 1.0, %v1539
  %v1572 = vsub.f32 1.0, %v1540
  %v1573 = vsub.f32 1.0, %v1541
  %v1574 = vsub.f32 1.0, %v1542
  %v1575 = vsub.f32 1.0, %v1543
  %v1576 = vsub.f32 1.0, %v1544
  %v1577 = vsub.f32 1.0, %v1545
  %vm1578 = vcmp.lt.f32.partialorder %v906, 0.0
  %vm1579 = vcmp.lt.f32.partialorder %v907, 0.0
  %vm1580 = vcmp.lt.f32.partialorder %v908, 0.0
  %vm1581 = vcmp.lt.f32.partialorder %v909, 0.0
  %vm1582 = vcmp.lt.f32.partialorder %v910, 0.0
  %vm1583 = vcmp.lt.f32.partialorder %v911, 0.0
  %vm1584 = vcmp.lt.f32.partialorder %v912, 0.0
  %vm1585 = vcmp.lt.f32.partialorder %v913, 0.0
  %vm1586 = vcmp.lt.f32.partialorder %v914, 0.0
  %vm1587 = vcmp.lt.f32.partialorder %v915, 0.0
  %vm1588 = vcmp.lt.f32.partialorder %v916, 0.0
  %vm1589 = vcmp.lt.f32.partialorder %v917, 0.0
  %vm1590 = vcmp.lt.f32.partialorder %v918, 0.0
  %vm1591 = vcmp.lt.f32.partialorder %v919, 0.0
  %vm1592 = vcmp.lt.f32.partialorder %v920, 0.0
  %vm1593 = vcmp.lt.f32.partialorder %v921, 0.0
  %vm1594 = vcmp.lt.f32.partialorder %v922, 0.0
  %vm1595 = vcmp.lt.f32.partialorder %v923, 0.0
  %vm1596 = vcmp.lt.f32.partialorder %v924, 0.0
  %vm1597 = vcmp.lt.f32.partialorder %v925, 0.0
  %vm1598 = vcmp.lt.f32.partialorder %v926, 0.0
  %vm1599 = vcmp.lt.f32.partialorder %v927, 0.0
  %vm1600 = vcmp.lt.f32.partialorder %v928, 0.0
  %vm1601 = vcmp.lt.f32.partialorder %v929, 0.0
  %vm1602 = vcmp.lt.f32.partialorder %v930, 0.0
  %vm1603 = vcmp.lt.f32.partialorder %v931, 0.0
  %vm1604 = vcmp.lt.f32.partialorder %v932, 0.0
  %vm1605 = vcmp.lt.f32.partialorder %v933, 0.0
  %vm1606 = vcmp.lt.f32.partialorder %v934, 0.0
  %vm1607 = vcmp.lt.f32.partialorder %v935, 0.0
  %vm1608 = vcmp.lt.f32.partialorder %v936, 0.0
  %vm1609 = vcmp.lt.f32.partialorder %v937, 0.0
  %v1610 = vsub.f32 0.0, %v1546
  %v1611 = vsub.f32 0.0, %v1547
  %v1612 = vsub.f32 0.0, %v1548
  %v1613 = vsub.f32 0.0, %v1549
  %v1614 = vsub.f32 0.0, %v1550
  %v1615 = vsub.f32 0.0, %v1551
  %v1616 = vsub.f32 0.0, %v1552
  %v1617 = vsub.f32 0.0, %v1553
  %v1618 = vsub.f32 0.0, %v1554
  %v1619 = vsub.f32 0.0, %v1555
  %v1620 = vsub.f32 0.0, %v1556
  %v1621 = vsub.f32 0.0, %v1557
  %v1622 = vsub.f32 0.0, %v1558
  %v1623 = vsub.f32 0.0, %v1559
  %v1624 = vsub.f32 0.0, %v1560
  %v1625 = vsub.f32 0.0, %v1561
  %v1626 = vsub.f32 0.0, %v1562
  %v1627 = vsub.f32 0.0, %v1563
  %v1628 = vsub.f32 0.0, %v1564
  %v1629 = vsub.f32 0.0, %v1565
  %v1630 = vsub.f32 0.0, %v1566
  %v1631 = vsub.f32 0.0, %v1567
  %v1632 = vsub.f32 0.0, %v1568
  %v1633 = vsub.f32 0.0, %v1569
  %v1634 = vsub.f32 0.0, %v1570
  %v1635 = vsub.f32 0.0, %v1571
  %v1636 = vsub.f32 0.0, %v1572
  %v1637 = vsub.f32 0.0, %v1573
  %v1638 = vsub.f32 0.0, %v1574
  %v1639 = vsub.f32 0.0, %v1575
  %v1640 = vsub.f32 0.0, %v1576
  %v1641 = vsub.f32 0.0, %v1577
  %v1642 = vsel %vm1578, %v1610, %v1546
  %v1643 = vsel %vm1579, %v1611, %v1547
  %v1644 = vsel %vm1580, %v1612, %v1548
  %v1645 = vsel %vm1581, %v1613, %v1549
  %v1646 = vsel %vm1582, %v1614, %v1550
  %v1647 = vsel %vm1583, %v1615, %v1551
  %v1648 = vsel %vm1584, %v1616, %v1552
  %v1649 = vsel %vm1585, %v1617, %v1553
  %v1650 = vsel %vm1586, %v1618, %v1554
  %v1651 = vsel %vm1587, %v1619, %v1555
  %v1652 = vsel %vm1588, %v1620, %v1556
  %v1653 = vsel %vm1589, %v1621, %v1557
  %v1654 = vsel %vm1590, %v1622, %v1558
  %v1655 = vsel %vm1591, %v1623, %v1559
  %v1656 = vsel %vm1592, %v1624, %v1560
  %v1657 = vsel %vm1593, %v1625, %v1561
  %v1658 = vsel %vm1594, %v1626, %v1562
  %v1659 = vsel %vm1595, %v1627, %v1563
  %v1660 = vsel %vm1596, %v1628, %v1564
  %v1661 = vsel %vm1597, %v1629, %v1565
  %v1662 = vsel %vm1598, %v1630, %v1566
  %v1663 = vsel %vm1599, %v1631, %v1567
  %v1664 = vsel %vm1600, %v1632, %v1568
  %v1665 = vsel %vm1601, %v1633, %v1569
  %v1666 = vsel %vm1602, %v1634, %v1570
  %v1667 = vsel %vm1603, %v1635, %v1571
  %v1668 = vsel %vm1604, %v1636, %v1572
  %v1669 = vsel %vm1605, %v1637, %v1573
  %v1670 = vsel %vm1606, %v1638, %v1574
  %v1671 = vsel %vm1607, %v1639, %v1575
  %v1672 = vsel %vm1608, %v1640, %v1576
  %v1673 = vsel %vm1609, %v1641, %v1577
  %v1674 = vadd.f32 %v1642, 1.0
  %v1675 = vadd.f32 %v1643, 1.0
  %v1676 = vadd.f32 %v1644, 1.0
  %v1677 = vadd.f32 %v1645, 1.0
  %v1678 = vadd.f32 %v1646, 1.0
  %v1679 = vadd.f32 %v1647, 1.0
  %v1680 = vadd.f32 %v1648, 1.0
  %v1681 = vadd.f32 %v1649, 1.0
  %v1682 = vadd.f32 %v1650, 1.0
  %v1683 = vadd.f32 %v1651, 1.0
  %v1684 = vadd.f32 %v1652, 1.0
  %v1685 = vadd.f32 %v1653, 1.0
  %v1686 = vadd.f32 %v1654, 1.0
  %v1687 = vadd.f32 %v1655, 1.0
  %v1688 = vadd.f32 %v1656, 1.0
  %v1689 = vadd.f32 %v1657, 1.0
  %v1690 = vadd.f32 %v1658, 1.0
  %v1691 = vadd.f32 %v1659, 1.0
  %v1692 = vadd.f32 %v1660, 1.0
  %v1693 = vadd.f32 %v1661, 1.0
  %v1694 = vadd.f32 %v1662, 1.0
  %v1695 = vadd.f32 %v1663, 1.0
  %v1696 = vadd.f32 %v1664, 1.0
  %v1697 = vadd.f32 %v1665, 1.0
  %v1698 = vadd.f32 %v1666, 1.0
  %v1699 = vadd.f32 %v1667, 1.0
  %v1700 = vadd.f32 %v1668, 1.0
  %v1701 = vadd.f32 %v1669, 1.0
  %v1702 = vadd.f32 %v1670, 1.0
  %v1703 = vadd.f32 %v1671, 1.0
  %v1704 = vadd.f32 %v1672, 1.0
  %v1705 = vadd.f32 %v1673, 1.0
  %v1706 = vmul.f32 %v874, %v1674
  %v1707 = vmul.f32 %v875, %v1675
  %v1708 = vmul.f32 %v876, %v1676
  %v1709 = vmul.f32 %v877, %v1677
  %v1710 = vmul.f32 %v878, %v1678
  %v1711 = vmul.f32 %v879, %v1679
  %v1712 = vmul.f32 %v880, %v1680
  %v1713 = vmul.f32 %v881, %v1681
  %v1714 = vmul.f32 %v882, %v1682
  %v1715 = vmul.f32 %v883, %v1683
  %v1716 = vmul.f32 %v884, %v1684
  %v1717 = vmul.f32 %v885, %v1685
  %v1718 = vmul.f32 %v886, %v1686
  %v1719 = vmul.f32 %v887, %v1687
  %v1720 = vmul.f32 %v888, %v1688
  %v1721 = vmul.f32 %v889, %v1689
  %v1722 = vmul.f32 %v890, %v1690
  %v1723 = vmul.f32 %v891, %v1691
  %v1724 = vmul.f32 %v892, %v1692
  %v1725 = vmul.f32 %v893, %v1693
  %v1726 = vmul.f32 %v894, %v1694
  %v1727 = vmul.f32 %v895, %v1695
  %v1728 = vmul.f32 %v896, %v1696
  %v1729 = vmul.f32 %v897, %v1697
  %v1730 = vmul.f32 %v898, %v1698
  %v1731 = vmul.f32 %v899, %v1699
  %v1732 = vmul.f32 %v900, %v1700
  %v1733 = vmul.f32 %v901, %v1701
  %v1734 = vmul.f32 %v902, %v1702
  %v1735 = vmul.f32 %v903, %v1703
  %v1736 = vmul.f32 %v904, %v1704
  %v1737 = vmul.f32 %v905, %v1705
  %1738 = vst [vmem:[%s5] sm:$0xff] %v1706
  %1739 = vst [vmem:[%s5 + $0x8] sm:$0xff] %v1707
  %1740 = vst [vmem:[%s5 + $0x10] sm:$0xff] %v1708
  %1741 = vst [vmem:[%s5 + $0x18] sm:$0xff] %v1709
  %1742 = vst [vmem:[%s5 + $0x20] sm:$0xff] %v1710
  %1743 = vst [vmem:[%s5 + $0x28] sm:$0xff] %v1711
  %1744 = vst [vmem:[%s5 + $0x30] sm:$0xff] %v1712
  %1745 = vst [vmem:[%s5 + $0x38] sm:$0xff] %v1713
  %1746 = vst [vmem:[%s5 + $0x40] sm:$0xff] %v1714
  %1747 = vst [vmem:[%s5 + $0x48] sm:$0xff] %v1715
  %1748 = vst [vmem:[%s5 + $0x50] sm:$0xff] %v1716
  %1749 = vst [vmem:[%s5 + $0x58] sm:$0xff] %v1717
  %1750 = vst [vmem:[%s5 + $0x60] sm:$0xff] %v1718
  %1751 = vst [vmem:[%s5 + $0x68] sm:$0xff] %v1719
  %1752 = vst [vmem:[%s5 + $0x70] sm:$0xff] %v1720
  %1753 = vst [vmem:[%s5 + $0x78] sm:$0xff] %v1721
  %1754 = vst [vmem:[%s5 + $0x80] sm:$0xff] %v1722
  %1755 = vst [vmem:[%s5 + $0x88] sm:$0xff] %v1723
  %1756 = vst [vmem:[%s5 + $0x90] sm:$0xff] %v1724
  %1757 = vst [vmem:[%s5 + $0x98] sm:$0xff] %v1725
  %1758 = vst [vmem:[%s5 + $0xa0] sm:$0xff] %v1726
  %1759 = vst [vmem:[%s5 + $0xa8] sm:$0xff] %v1727
  %1760 = vst [vmem:[%s5 + $0xb0] sm:$0xff] %v1728
  %1761 = vst [vmem:[%s5 + $0xb8] sm:$0xff] %v1729
  %1762 = vst [vmem:[%s5 + $0xc0] sm:$0xff] %v1730
  %1763 = vst [vmem:[%s5 + $0xc8] sm:$0xff] %v1731
  %1764 = vst [vmem:[%s5 + $0xd0] sm:$0xff] %v1732
  %1765 = vst [vmem:[%s5 + $0xd8] sm:$0xff] %v1733
  %1766 = vst [vmem:[%s5 + $0xe0] sm:$0xff] %v1734
  %1767 = vst [vmem:[%s5 + $0xe8] sm:$0xff] %v1735
  %1768 = vst [vmem:[%s5 + $0xf0] sm:$0xff] %v1736
  %1769 = vst [vmem:[%s5 + $0xf8] sm:$0xff] %v1737
  // Predicated region
  $region22: #{angle_classifier_forward.3} parent=0 // pred_check
    _
  $region23: #{angle_classifier_forward.3} parent=0 // pred_check_branch
    %1771 = sbr.rel (0) target = $region25
  $region24: #{angle_classifier_forward.3} parent=0 // pred_region
    _
  $region25: #{angle_classifier_forward.3} parent=0 // pred_fallthru
    _
  // Predicated region
  $region26: #{angle_classifier_forward.3} parent=0 // pred_check
    _
  $region27: #{angle_classifier_forward.3} parent=0 // pred_check_branch
    %1773 = sbr.rel (0) target = $region29
  $region28: #{angle_classifier_forward.3} parent=0 // pred_region
    _
  $region29: #{angle_classifier_forward.3} parent=0 // pred_fallthru
    _

// kernel: angle_classifier_forward.4
$region0: #{angle_classifier_forward.4}
  #allocation0 [shape = 'u32[]', space=smem, size = 0x4, offset = 0x4, fixed_abs, tag = 'smem constant byte address 0x4 - core index']
  #allocation1 [shape = 'u32[144,128]{1,0:T(1,128)}', space=vmem, size = 0x12000, scoped, tag = 'internal scratch']
  %s0 = inlined_call_operand.vmem [shape: bf16[8,4096], index: 0, kind: input, shape index: {}]
  %s1 = inlined_call_operand.vmem [shape: bf16[4096,128], index: 1, kind: input, shape index: {}]
  %s2 = inlined_call_operand.vmem [shape: f32[1,128], index: 2, kind: input, shape index: {}]
  %s3 = inlined_call_operand.vmem [shape: f32[8,128], index: 3, kind: output, shape index: {}]
  %s4 = sld [smem:[#allocation0]]
  $region22: #{angle_classifier_forward.4} parent=0
    _
  %s6 = ssub.s32 1, %s4
  %s7 = scalar_select 0, %s6, %s4
  // Predicated region
  $region2: #{angle_classifier_forward.4} parent=0 // pred_check
    _
  $region3: #{angle_classifier_forward.4} parent=0 // pred_check_branch
    %9 = sbr.rel (0) target = $region5
  $region4: #{angle_classifier_forward.4} parent=0 // pred_region
    _
  $region5: #{angle_classifier_forward.4} parent=0 // pred_fallthru
    _
  // Predicated region
  $region6: #{angle_classifier_forward.4} parent=0 // pred_check
    _
  $region7: #{angle_classifier_forward.4} parent=0 // pred_check_branch
    %11 = sbr.rel (0) target = $region9
  $region8: #{angle_classifier_forward.4} parent=0 // pred_region
    _
  $region9: #{angle_classifier_forward.4} parent=0 // pred_fallthru
    _
  // Predicated region
  $region10: #{angle_classifier_forward.4} parent=0 // pred_check
    _
  $region11: #{angle_classifier_forward.4} parent=0 // pred_check_branch
    %13 = sbr.rel (0) target = $region13
  $region12: #{angle_classifier_forward.4} parent=0 // pred_region
    _
  $region13: #{angle_classifier_forward.4} parent=0 // pred_fallthru
    _
  %v15 = vld [vmem:[%s0] sm:$0xff]
  %v16 = vld [vmem:[%s0 + $0x8] sm:$0xff]
  %v17 = vld [vmem:[%s0 + $0x10] sm:$0xff]
  %v18 = vld [vmem:[%s0 + $0x18] sm:$0xff]
  %v19 = vld [vmem:[%s0 + $0x20] sm:$0xff]
  %v20 = vld [vmem:[%s0 + $0x28] sm:$0xff]
  %v21 = vld [vmem:[%s0 + $0x30] sm:$0xff]
  %v22 = vld [vmem:[%s0 + $0x38] sm:$0xff]
  %v23 = vld [vmem:[%s0 + $0x40] sm:$0xff]
  %v24 = vld [vmem:[%s0 + $0x48] sm:$0xff]
  %v25 = vld [vmem:[%s0 + $0x50] sm:$0xff]
  %v26 = vld [vmem:[%s0 + $0x58] sm:$0xff]
  %v27 = vld [vmem:[%s0 + $0x60] sm:$0xff]
  %v28 = vld [vmem:[%s0 + $0x68] sm:$0xff]
  %v29 = vld [vmem:[%s0 + $0x70] sm:$0xff]
  %v30 = vld [vmem:[%s0 + $0x78] sm:$0xff]
  %v31 = vld [vmem:[%s1] sm:$0xf]
  %v32 = vld [vmem:[%s1 + $0x4] sm:$0xf]
  %v33 = vld [vmem:[%s1 + $0x8] sm:$0xf]
  %v34 = vld [vmem:[%s1 + $0xc] sm:$0xf]
  %v35 = vld [vmem:[%s1 + $0x10] sm:$0xf]
  %v36 = vld [vmem:[%s1 + $0x14] sm:$0xf]
  %v37 = vld [vmem:[%s1 + $0x18] sm:$0xf]
  %v38 = vld [vmem:[%s1 + $0x1c] sm:$0xf]
  %v39 = vld [vmem:[%s1 + $0x20] sm:$0xf]
  %v40 = vld [vmem:[%s1 + $0x24] sm:$0xf]
  %v41 = vld [vmem:[%s1 + $0x28] sm:$0xf]
  %v42 = vld [vmem:[%s1 + $0x2c] sm:$0xf]
  %v43 = vld [vmem:[%s1 + $0x30] sm:$0xf]
  %v44 = vld [vmem:[%s1 + $0x34] sm:$0xf]
  %v45 = vld [vmem:[%s1 + $0x38] sm:$0xf]
  %v46 = vld [vmem:[%s1 + $0x3c] sm:$0xf]
  %v47 = vld [vmem:[%s1 + $0x40] sm:$0xf]
  %v48 = vld [vmem:[%s1 + $0x44] sm:$0xf]
  %v49 = vld [vmem:[%s1 + $0x48] sm:$0xf]
  %v50 = vld [vmem:[%s1 + $0x4c] sm:$0xf]
  %v51 = vld [vmem:[%s1 + $0x50] sm:$0xf]
  %v52 = vld [vmem:[%s1 + $0x54] sm:$0xf]
  %v53 = vld [vmem:[%s1 + $0x58] sm:$0xf]
  %v54 = vld [vmem:[%s1 + $0x5c] sm:$0xf]
  %v55 = vld [vmem:[%s1 + $0x60] sm:$0xf]
  %v56 = vld [vmem:[%s1 + $0x64] sm:$0xf]
  %v57 = vld [vmem:[%s1 + $0x68] sm:$0xf]
  %v58 = vld [vmem:[%s1 + $0x6c] sm:$0xf]
  %v59 = vld [vmem:[%s1 + $0x70] sm:$0xf]
  %v60 = vld [vmem:[%s1 + $0x74] sm:$0xf]
  %v61 = vld [vmem:[%s1 + $0x78] sm:$0xf]
  %v62 = vld [vmem:[%s1 + $0x7c] sm:$0xf]
  %v63 = vld [vmem:[%s1 + $0x80] sm:$0xf]
  %v64 = vld [vmem:[%s1 + $0x84] sm:$0xf]
  %v65 = vld [vmem:[%s1 + $0x88] sm:$0xf]
  %v66 = vld [vmem:[%s1 + $0x8c] sm:$0xf]
  %v67 = vld [vmem:[%s1 + $0x90] sm:$0xf]
  %v68 = vld [vmem:[%s1 + $0x94] sm:$0xf]
  %v69 = vld [vmem:[%s1 + $0x98] sm:$0xf]
  %v70 = vld [vmem:[%s1 + $0x9c] sm:$0xf]
  %v71 = vld [vmem:[%s1 + $0xa0] sm:$0xf]
  %v72 = vld [vmem:[%s1 + $0xa4] sm:$0xf]
  %v73 = vld [vmem:[%s1 + $0xa8] sm:$0xf]
  %v74 = vld [vmem:[%s1 + $0xac] sm:$0xf]
  %v75 = vld [vmem:[%s1 + $0xb0] sm:$0xf]
  %v76 = vld [vmem:[%s1 + $0xb4] sm:$0xf]
  %v77 = vld [vmem:[%s1 + $0xb8] sm:$0xf]
  %v78 = vld [vmem:[%s1 + $0xbc] sm:$0xf]
  %v79 = vld [vmem:[%s1 + $0xc0] sm:$0xf]
  %v80 = vld [vmem:[%s1 + $0xc4] sm:$0xf]
  %v81 = vld [vmem:[%s1 + $0xc8] sm:$0xf]
  %v82 = vld [vmem:[%s1 + $0xcc] sm:$0xf]
  %v83 = vld [vmem:[%s1 + $0xd0] sm:$0xf]
  %v84 = vld [vmem:[%s1 + $0xd4] sm:$0xf]
  %v85 = vld [vmem:[%s1 + $0xd8] sm:$0xf]
  %v86 = vld [vmem:[%s1 + $0xdc] sm:$0xf]
  %v87 = vld [vmem:[%s1 + $0xe0] sm:$0xf]
  %v88 = vld [vmem:[%s1 + $0xe4] sm:$0xf]
  %v89 = vld [vmem:[%s1 + $0xe8] sm:$0xf]
  %v90 = vld [vmem:[%s1 + $0xec] sm:$0xf]
  %v91 = vld [vmem:[%s1 + $0xf0] sm:$0xf]
  %v92 = vld [vmem:[%s1 + $0xf4] sm:$0xf]
  %v93 = vld [vmem:[%s1 + $0xf8] sm:$0xf]
  %v94 = vld [vmem:[%s1 + $0xfc] sm:$0xf]
  %v95 = vld [vmem:[%s1 + $0x100] sm:$0xf]
  %v96 = vld [vmem:[%s1 + $0x104] sm:$0xf]
  %v97 = vld [vmem:[%s1 + $0x108] sm:$0xf]
  %v98 = vld [vmem:[%s1 + $0x10c] sm:$0xf]
  %v99 = vld [vmem:[%s1 + $0x110] sm:$0xf]
  %v100 = vld [vmem:[%s1 + $0x114] sm:$0xf]
  %v101 = vld [vmem:[%s1 + $0x118] sm:$0xf]
  %v102 = vld [vmem:[%s1 + $0x11c] sm:$0xf]
  %v103 = vld [vmem:[%s1 + $0x120] sm:$0xf]
  %v104 = vld [vmem:[%s1 + $0x124] sm:$0xf]
  %v105 = vld [vmem:[%s1 + $0x128] sm:$0xf]
  %v106 = vld [vmem:[%s1 + $0x12c] sm:$0xf]
  %v107 = vld [vmem:[%s1 + $0x130] sm:$0xf]
  %v108 = vld [vmem:[%s1 + $0x134] sm:$0xf]
  %v109 = vld [vmem:[%s1 + $0x138] sm:$0xf]
  %v110 = vld [vmem:[%s1 + $0x13c] sm:$0xf]
  %v111 = vld [vmem:[%s1 + $0x140] sm:$0xf]
  %v112 = vld [vmem:[%s1 + $0x144] sm:$0xf]
  %v113 = vld [vmem:[%s1 + $0x148] sm:$0xf]
  %v114 = vld [vmem:[%s1 + $0x14c] sm:$0xf]
  %v115 = vld [vmem:[%s1 + $0x150] sm:$0xf]
  %v116 = vld [vmem:[%s1 + $0x154] sm:$0xf]
  %v117 = vld [vmem:[%s1 + $0x158] sm:$0xf]
  %v118 = vld [vmem:[%s1 + $0x15c] sm:$0xf]
  %v119 = vld [vmem:[%s1 + $0x160] sm:$0xf]
  %v120 = vld [vmem:[%s1 + $0x164] sm:$0xf]
  %v121 = vld [vmem:[%s1 + $0x168] sm:$0xf]
  %v122 = vld [vmem:[%s1 + $0x16c] sm:$0xf]
  %v123 = vld [vmem:[%s1 + $0x170] sm:$0xf]
  %v124 = vld [vmem:[%s1 + $0x174] sm:$0xf]
  %v125 = vld [vmem:[%s1 + $0x178] sm:$0xf]
  %v126 = vld [vmem:[%s1 + $0x17c] sm:$0xf]
  %v127 = vld [vmem:[%s1 + $0x180] sm:$0xf]
  %v128 = vld [vmem:[%s1 + $0x184] sm:$0xf]
  %v129 = vld [vmem:[%s1 + $0x188] sm:$0xf]
  %v130 = vld [vmem:[%s1 + $0x18c] sm:$0xf]
  %v131 = vld [vmem:[%s1 + $0x190] sm:$0xf]
  %v132 = vld [vmem:[%s1 + $0x194] sm:$0xf]
  %v133 = vld [vmem:[%s1 + $0x198] sm:$0xf]
  %v134 = vld [vmem:[%s1 + $0x19c] sm:$0xf]
  %v135 = vld [vmem:[%s1 + $0x1a0] sm:$0xf]
  %v136 = vld [vmem:[%s1 + $0x1a4] sm:$0xf]
  %v137 = vld [vmem:[%s1 + $0x1a8] sm:$0xf]
  %v138 = vld [vmem:[%s1 + $0x1ac] sm:$0xf]
  %v139 = vld [vmem:[%s1 + $0x1b0] sm:$0xf]
  %v140 = vld [vmem:[%s1 + $0x1b4] sm:$0xf]
  %v141 = vld [vmem:[%s1 + $0x1b8] sm:$0xf]
  %v142 = vld [vmem:[%s1 + $0x1bc] sm:$0xf]
  %v143 = vld [vmem:[%s1 + $0x1c0] sm:$0xf]
  %v144 = vld [vmem:[%s1 + $0x1c4] sm:$0xf]
  %v145 = vld [vmem:[%s1 + $0x1c8] sm:$0xf]
  %v146 = vld [vmem:[%s1 + $0x1cc] sm:$0xf]
  %v147 = vld [vmem:[%s1 + $0x1d0] sm:$0xf]
  %v148 = vld [vmem:[%s1 + $0x1d4] sm:$0xf]
  %v149 = vld [vmem:[%s1 + $0x1d8] sm:$0xf]
  %v150 = vld [vmem:[%s1 + $0x1dc] sm:$0xf]
  %v151 = vld [vmem:[%s1 + $0x1e0] sm:$0xf]
  %v152 = vld [vmem:[%s1 + $0x1e4] sm:$0xf]
  %v153 = vld [vmem:[%s1 + $0x1e8] sm:$0xf]
  %v154 = vld [vmem:[%s1 + $0x1ec] sm:$0xf]
  %v155 = vld [vmem:[%s1 + $0x1f0] sm:$0xf]
  %v156 = vld [vmem:[%s1 + $0x1f4] sm:$0xf]
  %v157 = vld [vmem:[%s1 + $0x1f8] sm:$0xf]
  %v158 = vld [vmem:[%s1 + $0x1fc] sm:$0xf]
  %v159 = vld [vmem:[%s1 + $0x200] sm:$0xf]
  %v160 = vld [vmem:[%s1 + $0x204] sm:$0xf]
  %v161 = vld [vmem:[%s1 + $0x208] sm:$0xf]
  %v162 = vld [vmem:[%s1 + $0x20c] sm:$0xf]
  %v163 = vld [vmem:[%s1 + $0x210] sm:$0xf]
  %v164 = vld [vmem:[%s1 + $0x214] sm:$0xf]
  %v165 = vld [vmem:[%s1 + $0x218] sm:$0xf]
  %v166 = vld [vmem:[%s1 + $0x21c] sm:$0xf]
  %v167 = vld [vmem:[%s1 + $0x220] sm:$0xf]
  %v168 = vld [vmem:[%s1 + $0x224] sm:$0xf]
  %v169 = vld [vmem:[%s1 + $0x228] sm:$0xf]
  %v170 = vld [vmem:[%s1 + $0x22c] sm:$0xf]
  %v171 = vld [vmem:[%s1 + $0x230] sm:$0xf]
  %v172 = vld [vmem:[%s1 + $0x234] sm:$0xf]
  %v173 = vld [vmem:[%s1 + $0x238] sm:$0xf]
  %v174 = vld [vmem:[%s1 + $0x23c] sm:$0xf]
  %v175 = vld [vmem:[%s1 + $0x240] sm:$0xf]
  %v176 = vld [vmem:[%s1 + $0x244] sm:$0xf]
  %v177 = vld [vmem:[%s1 + $0x248] sm:$0xf]
  %v178 = vld [vmem:[%s1 + $0x24c] sm:$0xf]
  %v179 = vld [vmem:[%s1 + $0x250] sm:$0xf]
  %v180 = vld [vmem:[%s1 + $0x254] sm:$0xf]
  %v181 = vld [vmem:[%s1 + $0x258] sm:$0xf]
  %v182 = vld [vmem:[%s1 + $0x25c] sm:$0xf]
  %v183 = vld [vmem:[%s1 + $0x260] sm:$0xf]
  %v184 = vld [vmem:[%s1 + $0x264] sm:$0xf]
  %v185 = vld [vmem:[%s1 + $0x268] sm:$0xf]
  %v186 = vld [vmem:[%s1 + $0x26c] sm:$0xf]
  %v187 = vld [vmem:[%s1 + $0x270] sm:$0xf]
  %v188 = vld [vmem:[%s1 + $0x274] sm:$0xf]
  %v189 = vld [vmem:[%s1 + $0x278] sm:$0xf]
  %v190 = vld [vmem:[%s1 + $0x27c] sm:$0xf]
  %v191 = vld [vmem:[%s1 + $0x280] sm:$0xf]
  %v192 = vld [vmem:[%s1 + $0x284] sm:$0xf]
  %v193 = vld [vmem:[%s1 + $0x288] sm:$0xf]
  %v194 = vld [vmem:[%s1 + $0x28c] sm:$0xf]
  %v195 = vld [vmem:[%s1 + $0x290] sm:$0xf]
  %v196 = vld [vmem:[%s1 + $0x294] sm:$0xf]
  %v197 = vld [vmem:[%s1 + $0x298] sm:$0xf]
  %v198 = vld [vmem:[%s1 + $0x29c] sm:$0xf]
  %v199 = vld [vmem:[%s1 + $0x2a0] sm:$0xf]
  %v200 = vld [vmem:[%s1 + $0x2a4] sm:$0xf]
  %v201 = vld [vmem:[%s1 + $0x2a8] sm:$0xf]
  %v202 = vld [vmem:[%s1 + $0x2ac] sm:$0xf]
  %v203 = vld [vmem:[%s1 + $0x2b0] sm:$0xf]
  %v204 = vld [vmem:[%s1 + $0x2b4] sm:$0xf]
  %v205 = vld [vmem:[%s1 + $0x2b8] sm:$0xf]
  %v206 = vld [vmem:[%s1 + $0x2bc] sm:$0xf]
  %v207 = vld [vmem:[%s1 + $0x2c0] sm:$0xf]
  %v208 = vld [vmem:[%s1 + $0x2c4] sm:$0xf]
  %v209 = vld [vmem:[%s1 + $0x2c8] sm:$0xf]
  %v210 = vld [vmem:[%s1 + $0x2cc] sm:$0xf]
  %v211 = vld [vmem:[%s1 + $0x2d0] sm:$0xf]
  %v212 = vld [vmem:[%s1 + $0x2d4] sm:$0xf]
  %v213 = vld [vmem:[%s1 + $0x2d8] sm:$0xf]
  %v214 = vld [vmem:[%s1 + $0x2dc] sm:$0xf]
  %v215 = vld [vmem:[%s1 + $0x2e0] sm:$0xf]
  %v216 = vld [vmem:[%s1 + $0x2e4] sm:$0xf]
  %v217 = vld [vmem:[%s1 + $0x2e8] sm:$0xf]
  %v218 = vld [vmem:[%s1 + $0x2ec] sm:$0xf]
  %v219 = vld [vmem:[%s1 + $0x2f0] sm:$0xf]
  %v220 = vld [vmem:[%s1 + $0x2f4] sm:$0xf]
  %v221 = vld [vmem:[%s1 + $0x2f8] sm:$0xf]
  %v222 = vld [vmem:[%s1 + $0x2fc] sm:$0xf]
  %v223 = vld [vmem:[%s1 + $0x300] sm:$0xf]
  %v224 = vld [vmem:[%s1 + $0x304] sm:$0xf]
  %v225 = vld [vmem:[%s1 + $0x308] sm:$0xf]
  %v226 = vld [vmem:[%s1 + $0x30c] sm:$0xf]
  %v227 = vld [vmem:[%s1 + $0x310] sm:$0xf]
  %v228 = vld [vmem:[%s1 + $0x314] sm:$0xf]
  %v229 = vld [vmem:[%s1 + $0x318] sm:$0xf]
  %v230 = vld [vmem:[%s1 + $0x31c] sm:$0xf]
  %v231 = vld [vmem:[%s1 + $0x320] sm:$0xf]
  %v232 = vld [vmem:[%s1 + $0x324] sm:$0xf]
  %v233 = vld [vmem:[%s1 + $0x328] sm:$0xf]
  %v234 = vld [vmem:[%s1 + $0x32c] sm:$0xf]
  %v235 = vld [vmem:[%s1 + $0x330] sm:$0xf]
  %v236 = vld [vmem:[%s1 + $0x334] sm:$0xf]
  %v237 = vld [vmem:[%s1 + $0x338] sm:$0xf]
  %v238 = vld [vmem:[%s1 + $0x33c] sm:$0xf]
  %v239 = vld [vmem:[%s1 + $0x340] sm:$0xf]
  %v240 = vld [vmem:[%s1 + $0x344] sm:$0xf]
  %v241 = vld [vmem:[%s1 + $0x348] sm:$0xf]
  %v242 = vld [vmem:[%s1 + $0x34c] sm:$0xf]
  %v243 = vld [vmem:[%s1 + $0x350] sm:$0xf]
  %v244 = vld [vmem:[%s1 + $0x354] sm:$0xf]
  %v245 = vld [vmem:[%s1 + $0x358] sm:$0xf]
  %v246 = vld [vmem:[%s1 + $0x35c] sm:$0xf]
  %v247 = vld [vmem:[%s1 + $0x360] sm:$0xf]
  %v248 = vld [vmem:[%s1 + $0x364] sm:$0xf]
  %v249 = vld [vmem:[%s1 + $0x368] sm:$0xf]
  %v250 = vld [vmem:[%s1 + $0x36c] sm:$0xf]
  %v251 = vld [vmem:[%s1 + $0x370] sm:$0xf]
  %v252 = vld [vmem:[%s1 + $0x374] sm:$0xf]
  %v253 = vld [vmem:[%s1 + $0x378] sm:$0xf]
  %v254 = vld [vmem:[%s1 + $0x37c] sm:$0xf]
  %v255 = vld [vmem:[%s1 + $0x380] sm:$0xf]
  %v256 = vld [vmem:[%s1 + $0x384] sm:$0xf]
  %v257 = vld [vmem:[%s1 + $0x388] sm:$0xf]
  %v258 = vld [vmem:[%s1 + $0x38c] sm:$0xf]
  %v259 = vld [vmem:[%s1 + $0x390] sm:$0xf]
  %v260 = vld [vmem:[%s1 + $0x394] sm:$0xf]
  %v261 = vld [vmem:[%s1 + $0x398] sm:$0xf]
  %v262 = vld [vmem:[%s1 + $0x39c] sm:$0xf]
  %v263 = vld [vmem:[%s1 + $0x3a0] sm:$0xf]
  %v264 = vld [vmem:[%s1 + $0x3a4] sm:$0xf]
  %v265 = vld [vmem:[%s1 + $0x3a8] sm:$0xf]
  %v266 = vld [vmem:[%s1 + $0x3ac] sm:$0xf]
  %v267 = vld [vmem:[%s1 + $0x3b0] sm:$0xf]
  %v268 = vld [vmem:[%s1 + $0x3b4] sm:$0xf]
  %v269 = vld [vmem:[%s1 + $0x3b8] sm:$0xf]
  %v270 = vld [vmem:[%s1 + $0x3bc] sm:$0xf]
  %v271 = vld [vmem:[%s1 + $0x3c0] sm:$0xf]
  %v272 = vld [vmem:[%s1 + $0x3c4] sm:$0xf]
  %v273 = vld [vmem:[%s1 + $0x3c8] sm:$0xf]
  %v274 = vld [vmem:[%s1 + $0x3cc] sm:$0xf]
  %v275 = vld [vmem:[%s1 + $0x3d0] sm:$0xf]
  %v276 = vld [vmem:[%s1 + $0x3d4] sm:$0xf]
  %v277 = vld [vmem:[%s1 + $0x3d8] sm:$0xf]
  %v278 = vld [vmem:[%s1 + $0x3dc] sm:$0xf]
  %v279 = vld [vmem:[%s1 + $0x3e0] sm:$0xf]
  %v280 = vld [vmem:[%s1 + $0x3e4] sm:$0xf]
  %v281 = vld [vmem:[%s1 + $0x3e8] sm:$0xf]
  %v282 = vld [vmem:[%s1 + $0x3ec] sm:$0xf]
  %v283 = vld [vmem:[%s1 + $0x3f0] sm:$0xf]
  %v284 = vld [vmem:[%s1 + $0x3f4] sm:$0xf]
  %v285 = vld [vmem:[%s1 + $0x3f8] sm:$0xf]
  %v286 = vld [vmem:[%s1 + $0x3fc] sm:$0xf]
  %v287 = vld [vmem:[%s1 + $0x400] sm:$0xf]
  %v288 = vld [vmem:[%s1 + $0x404] sm:$0xf]
  %v289 = vld [vmem:[%s1 + $0x408] sm:$0xf]
  %v290 = vld [vmem:[%s1 + $0x40c] sm:$0xf]
  %v291 = vld [vmem:[%s1 + $0x410] sm:$0xf]
  %v292 = vld [vmem:[%s1 + $0x414] sm:$0xf]
  %v293 = vld [vmem:[%s1 + $0x418] sm:$0xf]
  %v294 = vld [vmem:[%s1 + $0x41c] sm:$0xf]
  %v295 = vld [vmem:[%s1 + $0x420] sm:$0xf]
  %v296 = vld [vmem:[%s1 + $0x424] sm:$0xf]
  %v297 = vld [vmem:[%s1 + $0x428] sm:$0xf]
  %v298 = vld [vmem:[%s1 + $0x42c] sm:$0xf]
  %v299 = vld [vmem:[%s1 + $0x430] sm:$0xf]
  %v300 = vld [vmem:[%s1 + $0x434] sm:$0xf]
  %v301 = vld [vmem:[%s1 + $0x438] sm:$0xf]
  %v302 = vld [vmem:[%s1 + $0x43c] sm:$0xf]
  %v303 = vld [vmem:[%s1 + $0x440] sm:$0xf]
  %v304 = vld [vmem:[%s1 + $0x444] sm:$0xf]
  %v305 = vld [vmem:[%s1 + $0x448] sm:$0xf]
  %v306 = vld [vmem:[%s1 + $0x44c] sm:$0xf]
  %v307 = vld [vmem:[%s1 + $0x450] sm:$0xf]
  %v308 = vld [vmem:[%s1 + $0x454] sm:$0xf]
  %v309 = vld [vmem:[%s1 + $0x458] sm:$0xf]
  %v310 = vld [vmem:[%s1 + $0x45c] sm:$0xf]
  %v311 = vld [vmem:[%s1 + $0x460] sm:$0xf]
  %v312 = vld [vmem:[%s1 + $0x464] sm:$0xf]
  %v313 = vld [vmem:[%s1 + $0x468] sm:$0xf]
  %v314 = vld [vmem:[%s1 + $0x46c] sm:$0xf]
  %v315 = vld [vmem:[%s1 + $0x470] sm:$0xf]
  %v316 = vld [vmem:[%s1 + $0x474] sm:$0xf]
  %v317 = vld [vmem:[%s1 + $0x478] sm:$0xf]
  %v318 = vld [vmem:[%s1 + $0x47c] sm:$0xf]
  %v319 = vld [vmem:[%s1 + $0x480] sm:$0xf]
  %v320 = vld [vmem:[%s1 + $0x484] sm:$0xf]
  %v321 = vld [vmem:[%s1 + $0x488] sm:$0xf]
  %v322 = vld [vmem:[%s1 + $0x48c] sm:$0xf]
  %v323 = vld [vmem:[%s1 + $0x490] sm:$0xf]
  %v324 = vld [vmem:[%s1 + $0x494] sm:$0xf]
  %v325 = vld [vmem:[%s1 + $0x498] sm:$0xf]
  %v326 = vld [vmem:[%s1 + $0x49c] sm:$0xf]
  %v327 = vld [vmem:[%s1 + $0x4a0] sm:$0xf]
  %v328 = vld [vmem:[%s1 + $0x4a4] sm:$0xf]
  %v329 = vld [vmem:[%s1 + $0x4a8] sm:$0xf]
  %v330 = vld [vmem:[%s1 + $0x4ac] sm:$0xf]
  %v331 = vld [vmem:[%s1 + $0x4b0] sm:$0xf]
  %v332 = vld [vmem:[%s1 + $0x4b4] sm:$0xf]
  %v333 = vld [vmem:[%s1 + $0x4b8] sm:$0xf]
  %v334 = vld [vmem:[%s1 + $0x4bc] sm:$0xf]
  %v335 = vld [vmem:[%s1 + $0x4c0] sm:$0xf]
  %v336 = vld [vmem:[%s1 + $0x4c4] sm:$0xf]
  %v337 = vld [vmem:[%s1 + $0x4c8] sm:$0xf]
  %v338 = vld [vmem:[%s1 + $0x4cc] sm:$0xf]
  %v339 = vld [vmem:[%s1 + $0x4d0] sm:$0xf]
  %v340 = vld [vmem:[%s1 + $0x4d4] sm:$0xf]
  %v341 = vld [vmem:[%s1 + $0x4d8] sm:$0xf]
  %v342 = vld [vmem:[%s1 + $0x4dc] sm:$0xf]
  %v343 = vld [vmem:[%s1 + $0x4e0] sm:$0xf]
  %v344 = vld [vmem:[%s1 + $0x4e4] sm:$0xf]
  %v345 = vld [vmem:[%s1 + $0x4e8] sm:$0xf]
  %v346 = vld [vmem:[%s1 + $0x4ec] sm:$0xf]
  %v347 = vld [vmem:[%s1 + $0x4f0] sm:$0xf]
  %v348 = vld [vmem:[%s1 + $0x4f4] sm:$0xf]
  %v349 = vld [vmem:[%s1 + $0x4f8] sm:$0xf]
  %v350 = vld [vmem:[%s1 + $0x4fc] sm:$0xf]
  %v351 = vld [vmem:[%s1 + $0x500] sm:$0xf]
  %v352 = vld [vmem:[%s1 + $0x504] sm:$0xf]
  %v353 = vld [vmem:[%s1 + $0x508] sm:$0xf]
  %v354 = vld [vmem:[%s1 + $0x50c] sm:$0xf]
  %v355 = vld [vmem:[%s1 + $0x510] sm:$0xf]
  %v356 = vld [vmem:[%s1 + $0x514] sm:$0xf]
  %v357 = vld [vmem:[%s1 + $0x518] sm:$0xf]
  %v358 = vld [vmem:[%s1 + $0x51c] sm:$0xf]
  %v359 = vld [vmem:[%s1 + $0x520] sm:$0xf]
  %v360 = vld [vmem:[%s1 + $0x524] sm:$0xf]
  %v361 = vld [vmem:[%s1 + $0x528] sm:$0xf]
  %v362 = vld [vmem:[%s1 + $0x52c] sm:$0xf]
  %v363 = vld [vmem:[%s1 + $0x530] sm:$0xf]
  %v364 = vld [vmem:[%s1 + $0x534] sm:$0xf]
  %v365 = vld [vmem:[%s1 + $0x538] sm:$0xf]
  %v366 = vld [vmem:[%s1 + $0x53c] sm:$0xf]
  %v367 = vld [vmem:[%s1 + $0x540] sm:$0xf]
  %v368 = vld [vmem:[%s1 + $0x544] sm:$0xf]
  %v369 = vld [vmem:[%s1 + $0x548] sm:$0xf]
  %v370 = vld [vmem:[%s1 + $0x54c] sm:$0xf]
  %v371 = vld [vmem:[%s1 + $0x550] sm:$0xf]
  %v372 = vld [vmem:[%s1 + $0x554] sm:$0xf]
  %v373 = vld [vmem:[%s1 + $0x558] sm:$0xf]
  %v374 = vld [vmem:[%s1 + $0x55c] sm:$0xf]
  %v375 = vld [vmem:[%s1 + $0x560] sm:$0xf]
  %v376 = vld [vmem:[%s1 + $0x564] sm:$0xf]
  %v377 = vld [vmem:[%s1 + $0x568] sm:$0xf]
  %v378 = vld [vmem:[%s1 + $0x56c] sm:$0xf]
  %v379 = vld [vmem:[%s1 + $0x570] sm:$0xf]
  %v380 = vld [vmem:[%s1 + $0x574] sm:$0xf]
  %v381 = vld [vmem:[%s1 + $0x578] sm:$0xf]
  %v382 = vld [vmem:[%s1 + $0x57c] sm:$0xf]
  %v383 = vld [vmem:[%s1 + $0x580] sm:$0xf]
  %v384 = vld [vmem:[%s1 + $0x584] sm:$0xf]
  %v385 = vld [vmem:[%s1 + $0x588] sm:$0xf]
  %v386 = vld [vmem:[%s1 + $0x58c] sm:$0xf]
  %v387 = vld [vmem:[%s1 + $0x590] sm:$0xf]
  %v388 = vld [vmem:[%s1 + $0x594] sm:$0xf]
  %v389 = vld [vmem:[%s1 + $0x598] sm:$0xf]
  %v390 = vld [vmem:[%s1 + $0x59c] sm:$0xf]
  %v391 = vld [vmem:[%s1 + $0x5a0] sm:$0xf]
  %v392 = vld [vmem:[%s1 + $0x5a4] sm:$0xf]
  %v393 = vld [vmem:[%s1 + $0x5a8] sm:$0xf]
  %v394 = vld [vmem:[%s1 + $0x5ac] sm:$0xf]
  %v395 = vld [vmem:[%s1 + $0x5b0] sm:$0xf]
  %v396 = vld [vmem:[%s1 + $0x5b4] sm:$0xf]
  %v397 = vld [vmem:[%s1 + $0x5b8] sm:$0xf]
  %v398 = vld [vmem:[%s1 + $0x5bc] sm:$0xf]
  %v399 = vld [vmem:[%s1 + $0x5c0] sm:$0xf]
  %v400 = vld [vmem:[%s1 + $0x5c4] sm:$0xf]
  %v401 = vld [vmem:[%s1 + $0x5c8] sm:$0xf]
  %v402 = vld [vmem:[%s1 + $0x5cc] sm:$0xf]
  %v403 = vld [vmem:[%s1 + $0x5d0] sm:$0xf]
  %v404 = vld [vmem:[%s1 + $0x5d4] sm:$0xf]
  %v405 = vld [vmem:[%s1 + $0x5d8] sm:$0xf]
  %v406 = vld [vmem:[%s1 + $0x5dc] sm:$0xf]
  %v407 = vld [vmem:[%s1 + $0x5e0] sm:$0xf]
  %v408 = vld [vmem:[%s1 + $0x5e4] sm:$0xf]
  %v409 = vld [vmem:[%s1 + $0x5e8] sm:$0xf]
  %v410 = vld [vmem:[%s1 + $0x5ec] sm:$0xf]
  %v411 = vld [vmem:[%s1 + $0x5f0] sm:$0xf]
  %v412 = vld [vmem:[%s1 + $0x5f4] sm:$0xf]
  %v413 = vld [vmem:[%s1 + $0x5f8] sm:$0xf]
  %v414 = vld [vmem:[%s1 + $0x5fc] sm:$0xf]
  %v415 = vld [vmem:[%s1 + $0x600] sm:$0xf]
  %v416 = vld [vmem:[%s1 + $0x604] sm:$0xf]
  %v417 = vld [vmem:[%s1 + $0x608] sm:$0xf]
  %v418 = vld [vmem:[%s1 + $0x60c] sm:$0xf]
  %v419 = vld [vmem:[%s1 + $0x610] sm:$0xf]
  %v420 = vld [vmem:[%s1 + $0x614] sm:$0xf]
  %v421 = vld [vmem:[%s1 + $0x618] sm:$0xf]
  %v422 = vld [vmem:[%s1 + $0x61c] sm:$0xf]
  %v423 = vld [vmem:[%s1 + $0x620] sm:$0xf]
  %v424 = vld [vmem:[%s1 + $0x624] sm:$0xf]
  %v425 = vld [vmem:[%s1 + $0x628] sm:$0xf]
  %v426 = vld [vmem:[%s1 + $0x62c] sm:$0xf]
  %v427 = vld [vmem:[%s1 + $0x630] sm:$0xf]
  %v428 = vld [vmem:[%s1 + $0x634] sm:$0xf]
  %v429 = vld [vmem:[%s1 + $0x638] sm:$0xf]
  %v430 = vld [vmem:[%s1 + $0x63c] sm:$0xf]
  %v431 = vld [vmem:[%s1 + $0x640] sm:$0xf]
  %v432 = vld [vmem:[%s1 + $0x644] sm:$0xf]
  %v433 = vld [vmem:[%s1 + $0x648] sm:$0xf]
  %v434 = vld [vmem:[%s1 + $0x64c] sm:$0xf]
  %v435 = vld [vmem:[%s1 + $0x650] sm:$0xf]
  %v436 = vld [vmem:[%s1 + $0x654] sm:$0xf]
  %v437 = vld [vmem:[%s1 + $0x658] sm:$0xf]
  %v438 = vld [vmem:[%s1 + $0x65c] sm:$0xf]
  %v439 = vld [vmem:[%s1 + $0x660] sm:$0xf]
  %v440 = vld [vmem:[%s1 + $0x664] sm:$0xf]
  %v441 = vld [vmem:[%s1 + $0x668] sm:$0xf]
  %v442 = vld [vmem:[%s1 + $0x66c] sm:$0xf]
  %v443 = vld [vmem:[%s1 + $0x670] sm:$0xf]
  %v444 = vld [vmem:[%s1 + $0x674] sm:$0xf]
  %v445 = vld [vmem:[%s1 + $0x678] sm:$0xf]
  %v446 = vld [vmem:[%s1 + $0x67c] sm:$0xf]
  %v447 = vld [vmem:[%s1 + $0x680] sm:$0xf]
  %v448 = vld [vmem:[%s1 + $0x684] sm:$0xf]
  %v449 = vld [vmem:[%s1 + $0x688] sm:$0xf]
  %v450 = vld [vmem:[%s1 + $0x68c] sm:$0xf]
  %v451 = vld [vmem:[%s1 + $0x690] sm:$0xf]
  %v452 = vld [vmem:[%s1 + $0x694] sm:$0xf]
  %v453 = vld [vmem:[%s1 + $0x698] sm:$0xf]
  %v454 = vld [vmem:[%s1 + $0x69c] sm:$0xf]
  %v455 = vld [vmem:[%s1 + $0x6a0] sm:$0xf]
  %v456 = vld [vmem:[%s1 + $0x6a4] sm:$0xf]
  %v457 = vld [vmem:[%s1 + $0x6a8] sm:$0xf]
  %v458 = vld [vmem:[%s1 + $0x6ac] sm:$0xf]
  %v459 = vld [vmem:[%s1 + $0x6b0] sm:$0xf]
  %v460 = vld [vmem:[%s1 + $0x6b4] sm:$0xf]
  %v461 = vld [vmem:[%s1 + $0x6b8] sm:$0xf]
  %v462 = vld [vmem:[%s1 + $0x6bc] sm:$0xf]
  %v463 = vld [vmem:[%s1 + $0x6c0] sm:$0xf]
  %v464 = vld [vmem:[%s1 + $0x6c4] sm:$0xf]
  %v465 = vld [vmem:[%s1 + $0x6c8] sm:$0xf]
  %v466 = vld [vmem:[%s1 + $0x6cc] sm:$0xf]
  %v467 = vld [vmem:[%s1 + $0x6d0] sm:$0xf]
  %v468 = vld [vmem:[%s1 + $0x6d4] sm:$0xf]
  %v469 = vld [vmem:[%s1 + $0x6d8] sm:$0xf]
  %v470 = vld [vmem:[%s1 + $0x6dc] sm:$0xf]
  %v471 = vld [vmem:[%s1 + $0x6e0] sm:$0xf]
  %v472 = vld [vmem:[%s1 + $0x6e4] sm:$0xf]
  %v473 = vld [vmem:[%s1 + $0x6e8] sm:$0xf]
  %v474 = vld [vmem:[%s1 + $0x6ec] sm:$0xf]
  %v475 = vld [vmem:[%s1 + $0x6f0] sm:$0xf]
  %v476 = vld [vmem:[%s1 + $0x6f4] sm:$0xf]
  %v477 = vld [vmem:[%s1 + $0x6f8] sm:$0xf]
  %v478 = vld [vmem:[%s1 + $0x6fc] sm:$0xf]
  %v479 = vld [vmem:[%s1 + $0x700] sm:$0xf]
  %v480 = vld [vmem:[%s1 + $0x704] sm:$0xf]
  %v481 = vld [vmem:[%s1 + $0x708] sm:$0xf]
  %v482 = vld [vmem:[%s1 + $0x70c] sm:$0xf]
  %v483 = vld [vmem:[%s1 + $0x710] sm:$0xf]
  %v484 = vld [vmem:[%s1 + $0x714] sm:$0xf]
  %v485 = vld [vmem:[%s1 + $0x718] sm:$0xf]
  %v486 = vld [vmem:[%s1 + $0x71c] sm:$0xf]
  %v487 = vld [vmem:[%s1 + $0x720] sm:$0xf]
  %v488 = vld [vmem:[%s1 + $0x724] sm:$0xf]
  %v489 = vld [vmem:[%s1 + $0x728] sm:$0xf]
  %v490 = vld [vmem:[%s1 + $0x72c] sm:$0xf]
  %v491 = vld [vmem:[%s1 + $0x730] sm:$0xf]
  %v492 = vld [vmem:[%s1 + $0x734] sm:$0xf]
  %v493 = vld [vmem:[%s1 + $0x738] sm:$0xf]
  %v494 = vld [vmem:[%s1 + $0x73c] sm:$0xf]
  %v495 = vld [vmem:[%s1 + $0x740] sm:$0xf]
  %v496 = vld [vmem:[%s1 + $0x744] sm:$0xf]
  %v497 = vld [vmem:[%s1 + $0x748] sm:$0xf]
  %v498 = vld [vmem:[%s1 + $0x74c] sm:$0xf]
  %v499 = vld [vmem:[%s1 + $0x750] sm:$0xf]
  %v500 = vld [vmem:[%s1 + $0x754] sm:$0xf]
  %v501 = vld [vmem:[%s1 + $0x758] sm:$0xf]
  %v502 = vld [vmem:[%s1 + $0x75c] sm:$0xf]
  %v503 = vld [vmem:[%s1 + $0x760] sm:$0xf]
  %v504 = vld [vmem:[%s1 + $0x764] sm:$0xf]
  %v505 = vld [vmem:[%s1 + $0x768] sm:$0xf]
  %v506 = vld [vmem:[%s1 + $0x76c] sm:$0xf]
  %v507 = vld [vmem:[%s1 + $0x770] sm:$0xf]
  %v508 = vld [vmem:[%s1 + $0x774] sm:$0xf]
  %v509 = vld [vmem:[%s1 + $0x778] sm:$0xf]
  %v510 = vld [vmem:[%s1 + $0x77c] sm:$0xf]
  %v511 = vld [vmem:[%s1 + $0x780] sm:$0xf]
  %v512 = vld [vmem:[%s1 + $0x784] sm:$0xf]
  %v513 = vld [vmem:[%s1 + $0x788] sm:$0xf]
  %v514 = vld [vmem:[%s1 + $0x78c] sm:$0xf]
  %v515 = vld [vmem:[%s1 + $0x790] sm:$0xf]
  %v516 = vld [vmem:[%s1 + $0x794] sm:$0xf]
  %v517 = vld [vmem:[%s1 + $0x798] sm:$0xf]
  %v518 = vld [vmem:[%s1 + $0x79c] sm:$0xf]
  %v519 = vld [vmem:[%s1 + $0x7a0] sm:$0xf]
  %v520 = vld [vmem:[%s1 + $0x7a4] sm:$0xf]
  %v521 = vld [vmem:[%s1 + $0x7a8] sm:$0xf]
  %v522 = vld [vmem:[%s1 + $0x7ac] sm:$0xf]
  %v523 = vld [vmem:[%s1 + $0x7b0] sm:$0xf]
  %v524 = vld [vmem:[%s1 + $0x7b4] sm:$0xf]
  %v525 = vld [vmem:[%s1 + $0x7b8] sm:$0xf]
  %v526 = vld [vmem:[%s1 + $0x7bc] sm:$0xf]
  %v527 = vld [vmem:[%s1 + $0x7c0] sm:$0xf]
  %v528 = vld [vmem:[%s1 + $0x7c4] sm:$0xf]
  %v529 = vld [vmem:[%s1 + $0x7c8] sm:$0xf]
  %v530 = vld [vmem:[%s1 + $0x7cc] sm:$0xf]
  %v531 = vld [vmem:[%s1 + $0x7d0] sm:$0xf]
  %v532 = vld [vmem:[%s1 + $0x7d4] sm:$0xf]
  %v533 = vld [vmem:[%s1 + $0x7d8] sm:$0xf]
  %v534 = vld [vmem:[%s1 + $0x7dc] sm:$0xf]
  %v535 = vld [vmem:[%s1 + $0x7e0] sm:$0xf]
  %v536 = vld [vmem:[%s1 + $0x7e4] sm:$0xf]
  %v537 = vld [vmem:[%s1 + $0x7e8] sm:$0xf]
  %v538 = vld [vmem:[%s1 + $0x7ec] sm:$0xf]
  %v539 = vld [vmem:[%s1 + $0x7f0] sm:$0xf]
  %v540 = vld [vmem:[%s1 + $0x7f4] sm:$0xf]
  %v541 = vld [vmem:[%s1 + $0x7f8] sm:$0xf]
  %v542 = vld [vmem:[%s1 + $0x7fc] sm:$0xf]
  %v543 = vld [vmem:[%s2] sm:$0x1]
  %v545 = vlaneseq
  %v546 = vshrl.u32 %v545, 7
  %v547 = vsub.s32 0, %v546
  %v548 = vrot.slane %v543, %v547
  %v566 = vunpack.c.l.b16 %v15
  %v567 = vunpack.c.h.b16 %v15
  %v568 = vunpack.c.l.b16 %v16
  %v569 = vunpack.c.h.b16 %v16
  %v570 = vunpack.c.l.b16 %v17
  %v571 = vunpack.c.h.b16 %v17
  %v572 = vunpack.c.l.b16 %v18
  %v573 = vunpack.c.h.b16 %v18
  %v574 = vunpack.c.l.b16 %v19
  %v575 = vunpack.c.h.b16 %v19
  %v576 = vunpack.c.l.b16 %v20
  %v577 = vunpack.c.h.b16 %v20
  %v578 = vunpack.c.l.b16 %v21
  %v579 = vunpack.c.h.b16 %v21
  %v580 = vunpack.c.l.b16 %v22
  %v581 = vunpack.c.h.b16 %v22
  %v582 = vunpack.c.l.b16 %v23
  %v583 = vunpack.c.h.b16 %v23
  %v584 = vunpack.c.l.b16 %v24
  %v585 = vunpack.c.h.b16 %v24
  %v586 = vunpack.c.l.b16 %v25
  %v587 = vunpack.c.h.b16 %v25
  %v588 = vunpack.c.l.b16 %v26
  %v589 = vunpack.c.h.b16 %v26
  %v590 = vunpack.c.l.b16 %v27
  %v591 = vunpack.c.h.b16 %v27
  %v592 = vunpack.c.l.b16 %v28
  %v593 = vunpack.c.h.b16 %v28
  %v594 = vunpack.c.l.b16 %v29
  %v595 = vunpack.c.h.b16 %v29
  %v596 = vunpack.c.l.b16 %v30
  %v597 = vunpack.c.h.b16 %v30
  %v598 = vpack.c.b16 %v566, %v566
  %v599 = vpack.c.b16 %v567, %v567
  %v600 = vpack.c.b16 %v568, %v568
  %v601 = vpack.c.b16 %v569, %v569
  %v602 = vpack.c.b16 %v570, %v570
  %v603 = vpack.c.b16 %v571, %v571
  %v604 = vpack.c.b16 %v572, %v572
  %v605 = vpack.c.b16 %v573, %v573
  %v606 = vpack.c.b16 %v574, %v574
  %v607 = vpack.c.b16 %v575, %v575
  %v608 = vpack.c.b16 %v576, %v576
  %v609 = vpack.c.b16 %v577, %v577
  %v610 = vpack.c.b16 %v578, %v578
  %v611 = vpack.c.b16 %v579, %v579
  %v612 = vpack.c.b16 %v580, %v580
  %v613 = vpack.c.b16 %v581, %v581
  %v614 = vpack.c.b16 %v582, %v582
  %v615 = vpack.c.b16 %v583, %v583
  %v616 = vpack.c.b16 %v584, %v584
  %v617 = vpack.c.b16 %v585, %v585
  %v618 = vpack.c.b16 %v586, %v586
  %v619 = vpack.c.b16 %v587, %v587
  %v620 = vpack.c.b16 %v588, %v588
  %v621 = vpack.c.b16 %v589, %v589
  %v622 = vpack.c.b16 %v590, %v590
  %v623 = vpack.c.b16 %v591, %v591
  %v624 = vpack.c.b16 %v592, %v592
  %v625 = vpack.c.b16 %v593, %v593
  %v626 = vpack.c.b16 %v594, %v594
  %v627 = vpack.c.b16 %v595, %v595
  %v628 = vpack.c.b16 %v596, %v596
  %v629 = vpack.c.b16 %v597, %v597
  %v1174 = vunpack.c.l.b16 %v31
  %v1175 = vunpack.c.l.b16 %v32
  %v1176 = vunpack.c.l.b16 %v33
  %v1177 = vunpack.c.l.b16 %v34
  %v1178 = vunpack.c.l.b16 %v35
  %v1179 = vunpack.c.l.b16 %v36
  %v1180 = vunpack.c.l.b16 %v37
  %v1181 = vunpack.c.l.b16 %v38
  %v1182 = vunpack.c.l.b16 %v39
  %v1183 = vunpack.c.l.b16 %v40
  %v1184 = vunpack.c.l.b16 %v41
  %v1185 = vunpack.c.l.b16 %v42
  %v1186 = vunpack.c.l.b16 %v43
  %v1187 = vunpack.c.l.b16 %v44
  %v1188 = vunpack.c.l.b16 %v45
  %v1189 = vunpack.c.l.b16 %v46
  %v1190 = vunpack.c.l.b16 %v47
  %v1191 = vunpack.c.l.b16 %v48
  %v1192 = vunpack.c.l.b16 %v49
  %v1193 = vunpack.c.l.b16 %v50
  %v1194 = vunpack.c.l.b16 %v51
  %v1195 = vunpack.c.l.b16 %v52
  %v1196 = vunpack.c.l.b16 %v53
  %v1197 = vunpack.c.l.b16 %v54
  %v1198 = vunpack.c.l.b16 %v55
  %v1199 = vunpack.c.l.b16 %v56
  %v1200 = vunpack.c.l.b16 %v57
  %v1201 = vunpack.c.l.b16 %v58
  %v1202 = vunpack.c.l.b16 %v59
  %v1203 = vunpack.c.l.b16 %v60
  %v1204 = vunpack.c.l.b16 %v61
  %v1205 = vunpack.c.l.b16 %v62
  %v1206 = vunpack.c.l.b16 %v63
  %v1207 = vunpack.c.l.b16 %v64
  %v1208 = vunpack.c.l.b16 %v65
  %v1209 = vunpack.c.l.b16 %v66
  %v1210 = vunpack.c.l.b16 %v67
  %v1211 = vunpack.c.l.b16 %v68
  %v1212 = vunpack.c.l.b16 %v69
  %v1213 = vunpack.c.l.b16 %v70
  %v1214 = vunpack.c.l.b16 %v71
  %v1215 = vunpack.c.l.b16 %v72
  %v1216 = vunpack.c.l.b16 %v73
  %v1217 = vunpack.c.l.b16 %v74
  %v1218 = vunpack.c.l.b16 %v75
  %v1219 = vunpack.c.l.b16 %v76
  %v1220 = vunpack.c.l.b16 %v77
  %v1221 = vunpack.c.l.b16 %v78
  %v1222 = vunpack.c.l.b16 %v79
  %v1223 = vunpack.c.l.b16 %v80
  %v1224 = vunpack.c.l.b16 %v81
  %v1225 = vunpack.c.l.b16 %v82
  %v1226 = vunpack.c.l.b16 %v83
  %v1227 = vunpack.c.l.b16 %v84
  %v1228 = vunpack.c.l.b16 %v85
  %v1229 = vunpack.c.l.b16 %v86
  %v1230 = vunpack.c.l.b16 %v87
  %v1231 = vunpack.c.l.b16 %v88
  %v1232 = vunpack.c.l.b16 %v89
  %v1233 = vunpack.c.l.b16 %v90
  %v1234 = vunpack.c.l.b16 %v91
  %v1235 = vunpack.c.l.b16 %v92
  %v1236 = vunpack.c.l.b16 %v93
  %v1237 = vunpack.c.l.b16 %v94
  %v1238 = vunpack.c.l.b16 %v95
  %v1239 = vunpack.c.l.b16 %v96
  %v1240 = vunpack.c.l.b16 %v97
  %v1241 = vunpack.c.l.b16 %v98
  %v1242 = vunpack.c.l.b16 %v99
  %v1243 = vunpack.c.l.b16 %v100
  %v1244 = vunpack.c.l.b16 %v101
  %v1245 = vunpack.c.l.b16 %v102
  %v1246 = vunpack.c.l.b16 %v103
  %v1247 = vunpack.c.l.b16 %v104
  %v1248 = vunpack.c.l.b16 %v105
  %v1249 = vunpack.c.l.b16 %v106
  %v1250 = vunpack.c.l.b16 %v107
  %v1251 = vunpack.c.l.b16 %v108
  %v1252 = vunpack.c.l.b16 %v109
  %v1253 = vunpack.c.l.b16 %v110
  %v1254 = vunpack.c.l.b16 %v111
  %v1255 = vunpack.c.l.b16 %v112
  %v1256 = vunpack.c.l.b16 %v113
  %v1257 = vunpack.c.l.b16 %v114
  %v1258 = vunpack.c.l.b16 %v115
  %v1259 = vunpack.c.l.b16 %v116
  %v1260 = vunpack.c.l.b16 %v117
  %v1261 = vunpack.c.l.b16 %v118
  %v1262 = vunpack.c.l.b16 %v119
  %v1263 = vunpack.c.l.b16 %v120
  %v1264 = vunpack.c.l.b16 %v121
  %v1265 = vunpack.c.l.b16 %v122
  %v1266 = vunpack.c.l.b16 %v123
  %v1267 = vunpack.c.l.b16 %v124
  %v1268 = vunpack.c.l.b16 %v125
  %v1269 = vunpack.c.l.b16 %v126
  %v1270 = vunpack.c.l.b16 %v127
  %v1271 = vunpack.c.l.b16 %v128
  %v1272 = vunpack.c.l.b16 %v129
  %v1273 = vunpack.c.l.b16 %v130
  %v1274 = vunpack.c.l.b16 %v131
  %v1275 = vunpack.c.l.b16 %v132
  %v1276 = vunpack.c.l.b16 %v133
  %v1277 = vunpack.c.l.b16 %v134
  %v1278 = vunpack.c.l.b16 %v135
  %v1279 = vunpack.c.l.b16 %v136
  %v1280 = vunpack.c.l.b16 %v137
  %v1281 = vunpack.c.l.b16 %v138
  %v1282 = vunpack.c.l.b16 %v139
  %v1283 = vunpack.c.l.b16 %v140
  %v1284 = vunpack.c.l.b16 %v141
  %v1285 = vunpack.c.l.b16 %v142
  %v1286 = vunpack.c.l.b16 %v143
  %v1287 = vunpack.c.l.b16 %v144
  %v1288 = vunpack.c.l.b16 %v145
  %v1289 = vunpack.c.l.b16 %v146
  %v1290 = vunpack.c.l.b16 %v147
  %v1291 = vunpack.c.l.b16 %v148
  %v1292 = vunpack.c.l.b16 %v149
  %v1293 = vunpack.c.l.b16 %v150
  %v1294 = vunpack.c.l.b16 %v151
  %v1295 = vunpack.c.l.b16 %v152
  %v1296 = vunpack.c.l.b16 %v153
  %v1297 = vunpack.c.l.b16 %v154
  %v1298 = vunpack.c.l.b16 %v155
  %v1299 = vunpack.c.l.b16 %v156
  %v1300 = vunpack.c.l.b16 %v157
  %v1301 = vunpack.c.l.b16 %v158
  %v1302 = vunpack.c.l.b16 %v159
  %v1303 = vunpack.c.l.b16 %v160
  %v1304 = vunpack.c.l.b16 %v161
  %v1305 = vunpack.c.l.b16 %v162
  %v1306 = vunpack.c.l.b16 %v163
  %v1307 = vunpack.c.l.b16 %v164
  %v1308 = vunpack.c.l.b16 %v165
  %v1309 = vunpack.c.l.b16 %v166
  %v1310 = vunpack.c.l.b16 %v167
  %v1311 = vunpack.c.l.b16 %v168
  %v1312 = vunpack.c.l.b16 %v169
  %v1313 = vunpack.c.l.b16 %v170
  %v1314 = vunpack.c.l.b16 %v171
  %v1315 = vunpack.c.l.b16 %v172
  %v1316 = vunpack.c.l.b16 %v173
  %v1317 = vunpack.c.l.b16 %v174
  %v1318 = vunpack.c.l.b16 %v175
  %v1319 = vunpack.c.l.b16 %v176
  %v1320 = vunpack.c.l.b16 %v177
  %v1321 = vunpack.c.l.b16 %v178
  %v1322 = vunpack.c.l.b16 %v179
  %v1323 = vunpack.c.l.b16 %v180
  %v1324 = vunpack.c.l.b16 %v181
  %v1325 = vunpack.c.l.b16 %v182
  %v1326 = vunpack.c.l.b16 %v183
  %v1327 = vunpack.c.l.b16 %v184
  %v1328 = vunpack.c.l.b16 %v185
  %v1329 = vunpack.c.l.b16 %v186
  %v1330 = vunpack.c.l.b16 %v187
  %v1331 = vunpack.c.l.b16 %v188
  %v1332 = vunpack.c.l.b16 %v189
  %v1333 = vunpack.c.l.b16 %v190
  %v1334 = vunpack.c.l.b16 %v191
  %v1335 = vunpack.c.l.b16 %v192
  %v1336 = vunpack.c.l.b16 %v193
  %v1337 = vunpack.c.l.b16 %v194
  %v1338 = vunpack.c.l.b16 %v195
  %v1339 = vunpack.c.l.b16 %v196
  %v1340 = vunpack.c.l.b16 %v197
  %v1341 = vunpack.c.l.b16 %v198
  %v1342 = vunpack.c.l.b16 %v199
  %v1343 = vunpack.c.l.b16 %v200
  %v1344 = vunpack.c.l.b16 %v201
  %v1345 = vunpack.c.l.b16 %v202
  %v1346 = vunpack.c.l.b16 %v203
  %v1347 = vunpack.c.l.b16 %v204
  %v1348 = vunpack.c.l.b16 %v205
  %v1349 = vunpack.c.l.b16 %v206
  %v1350 = vunpack.c.l.b16 %v207
  %v1351 = vunpack.c.l.b16 %v208
  %v1352 = vunpack.c.l.b16 %v209
  %v1353 = vunpack.c.l.b16 %v210
  %v1354 = vunpack.c.l.b16 %v211
  %v1355 = vunpack.c.l.b16 %v212
  %v1356 = vunpack.c.l.b16 %v213
  %v1357 = vunpack.c.l.b16 %v214
  %v1358 = vunpack.c.l.b16 %v215
  %v1359 = vunpack.c.l.b16 %v216
  %v1360 = vunpack.c.l.b16 %v217
  %v1361 = vunpack.c.l.b16 %v218
  %v1362 = vunpack.c.l.b16 %v219
  %v1363 = vunpack.c.l.b16 %v220
  %v1364 = vunpack.c.l.b16 %v221
  %v1365 = vunpack.c.l.b16 %v222
  %v1366 = vunpack.c.l.b16 %v223
  %v1367 = vunpack.c.l.b16 %v224
  %v1368 = vunpack.c.l.b16 %v225
  %v1369 = vunpack.c.l.b16 %v226
  %v1370 = vunpack.c.l.b16 %v227
  %v1371 = vunpack.c.l.b16 %v228
  %v1372 = vunpack.c.l.b16 %v229
  %v1373 = vunpack.c.l.b16 %v230
  %v1374 = vunpack.c.l.b16 %v231
  %v1375 = vunpack.c.l.b16 %v232
  %v1376 = vunpack.c.l.b16 %v233
  %v1377 = vunpack.c.l.b16 %v234
  %v1378 = vunpack.c.l.b16 %v235
  %v1379 = vunpack.c.l.b16 %v236
  %v1380 = vunpack.c.l.b16 %v237
  %v1381 = vunpack.c.l.b16 %v238
  %v1382 = vunpack.c.l.b16 %v239
  %v1383 = vunpack.c.l.b16 %v240
  %v1384 = vunpack.c.l.b16 %v241
  %v1385 = vunpack.c.l.b16 %v242
  %v1386 = vunpack.c.l.b16 %v243
  %v1387 = vunpack.c.l.b16 %v244
  %v1388 = vunpack.c.l.b16 %v245
  %v1389 = vunpack.c.l.b16 %v246
  %v1390 = vunpack.c.l.b16 %v247
  %v1391 = vunpack.c.l.b16 %v248
  %v1392 = vunpack.c.l.b16 %v249
  %v1393 = vunpack.c.l.b16 %v250
  %v1394 = vunpack.c.l.b16 %v251
  %v1395 = vunpack.c.l.b16 %v252
  %v1396 = vunpack.c.l.b16 %v253
  %v1397 = vunpack.c.l.b16 %v254
  %v1398 = vunpack.c.l.b16 %v255
  %v1399 = vunpack.c.l.b16 %v256
  %v1400 = vunpack.c.l.b16 %v257
  %v1401 = vunpack.c.l.b16 %v258
  %v1402 = vunpack.c.l.b16 %v259
  %v1403 = vunpack.c.l.b16 %v260
  %v1404 = vunpack.c.l.b16 %v261
  %v1405 = vunpack.c.l.b16 %v262
  %v1406 = vunpack.c.l.b16 %v263
  %v1407 = vunpack.c.l.b16 %v264
  %v1408 = vunpack.c.l.b16 %v265
  %v1409 = vunpack.c.l.b16 %v266
  %v1410 = vunpack.c.l.b16 %v267
  %v1411 = vunpack.c.l.b16 %v268
  %v1412 = vunpack.c.l.b16 %v269
  %v1413 = vunpack.c.l.b16 %v270
  %v1414 = vunpack.c.l.b16 %v271
  %v1415 = vunpack.c.l.b16 %v272
  %v1416 = vunpack.c.l.b16 %v273
  %v1417 = vunpack.c.l.b16 %v274
  %v1418 = vunpack.c.l.b16 %v275
  %v1419 = vunpack.c.l.b16 %v276
  %v1420 = vunpack.c.l.b16 %v277
  %v1421 = vunpack.c.l.b16 %v278
  %v1422 = vunpack.c.l.b16 %v279
  %v1423 = vunpack.c.l.b16 %v280
  %v1424 = vunpack.c.l.b16 %v281
  %v1425 = vunpack.c.l.b16 %v282
  %v1426 = vunpack.c.l.b16 %v283
  %v1427 = vunpack.c.l.b16 %v284
  %v1428 = vunpack.c.l.b16 %v285
  %v1429 = vunpack.c.l.b16 %v286
  %v1430 = vunpack.c.l.b16 %v287
  %v1431 = vunpack.c.l.b16 %v288
  %v1432 = vunpack.c.l.b16 %v289
  %v1433 = vunpack.c.l.b16 %v290
  %v1434 = vunpack.c.l.b16 %v291
  %v1435 = vunpack.c.l.b16 %v292
  %v1436 = vunpack.c.l.b16 %v293
  %v1437 = vunpack.c.l.b16 %v294
  %v1438 = vunpack.c.l.b16 %v295
  %v1439 = vunpack.c.l.b16 %v296
  %v1440 = vunpack.c.l.b16 %v297
  %v1441 = vunpack.c.l.b16 %v298
  %v1442 = vunpack.c.l.b16 %v299
  %v1443 = vunpack.c.l.b16 %v300
  %v1444 = vunpack.c.l.b16 %v301
  %v1445 = vunpack.c.l.b16 %v302
  %v1446 = vunpack.c.l.b16 %v303
  %v1447 = vunpack.c.l.b16 %v304
  %v1448 = vunpack.c.l.b16 %v305
  %v1449 = vunpack.c.l.b16 %v306
  %v1450 = vunpack.c.l.b16 %v307
  %v1451 = vunpack.c.l.b16 %v308
  %v1452 = vunpack.c.l.b16 %v309
  %v1453 = vunpack.c.l.b16 %v310
  %v1454 = vunpack.c.l.b16 %v311
  %v1455 = vunpack.c.l.b16 %v312
  %v1456 = vunpack.c.l.b16 %v313
  %v1457 = vunpack.c.l.b16 %v314
  %v1458 = vunpack.c.l.b16 %v315
  %v1459 = vunpack.c.l.b16 %v316
  %v1460 = vunpack.c.l.b16 %v317
  %v1461 = vunpack.c.l.b16 %v318
  %v1462 = vunpack.c.l.b16 %v319
  %v1463 = vunpack.c.l.b16 %v320
  %v1464 = vunpack.c.l.b16 %v321
  %v1465 = vunpack.c.l.b16 %v322
  %v1466 = vunpack.c.l.b16 %v323
  %v1467 = vunpack.c.l.b16 %v324
  %v1468 = vunpack.c.l.b16 %v325
  %v1469 = vunpack.c.l.b16 %v326
  %v1470 = vunpack.c.l.b16 %v327
  %v1471 = vunpack.c.l.b16 %v328
  %v1472 = vunpack.c.l.b16 %v329
  %v1473 = vunpack.c.l.b16 %v330
  %v1474 = vunpack.c.l.b16 %v331
  %v1475 = vunpack.c.l.b16 %v332
  %v1476 = vunpack.c.l.b16 %v333
  %v1477 = vunpack.c.l.b16 %v334
  %v1478 = vunpack.c.l.b16 %v335
  %v1479 = vunpack.c.l.b16 %v336
  %v1480 = vunpack.c.l.b16 %v337
  %v1481 = vunpack.c.l.b16 %v338
  %v1482 = vunpack.c.l.b16 %v339
  %v1483 = vunpack.c.l.b16 %v340
  %v1484 = vunpack.c.l.b16 %v341
  %v1485 = vunpack.c.l.b16 %v342
  %v1486 = vunpack.c.l.b16 %v343
  %v1487 = vunpack.c.l.b16 %v344
  %v1488 = vunpack.c.l.b16 %v345
  %v1489 = vunpack.c.l.b16 %v346
  %v1490 = vunpack.c.l.b16 %v347
  %v1491 = vunpack.c.l.b16 %v348
  %v1492 = vunpack.c.l.b16 %v349
  %v1493 = vunpack.c.l.b16 %v350
  %v1494 = vunpack.c.l.b16 %v351
  %v1495 = vunpack.c.l.b16 %v352
  %v1496 = vunpack.c.l.b16 %v353
  %v1497 = vunpack.c.l.b16 %v354
  %v1498 = vunpack.c.l.b16 %v355
  %v1499 = vunpack.c.l.b16 %v356
  %v1500 = vunpack.c.l.b16 %v357
  %v1501 = vunpack.c.l.b16 %v358
  %v1502 = vunpack.c.l.b16 %v359
  %v1503 = vunpack.c.l.b16 %v360
  %v1504 = vunpack.c.l.b16 %v361
  %v1505 = vunpack.c.l.b16 %v362
  %v1506 = vunpack.c.l.b16 %v363
  %v1507 = vunpack.c.l.b16 %v364
  %v1508 = vunpack.c.l.b16 %v365
  %v1509 = vunpack.c.l.b16 %v366
  %v1510 = vunpack.c.l.b16 %v367
  %v1511 = vunpack.c.l.b16 %v368
  %v1512 = vunpack.c.l.b16 %v369
  %v1513 = vunpack.c.l.b16 %v370
  %v1514 = vunpack.c.l.b16 %v371
  %v1515 = vunpack.c.l.b16 %v372
  %v1516 = vunpack.c.l.b16 %v373
  %v1517 = vunpack.c.l.b16 %v374
  %v1518 = vunpack.c.l.b16 %v375
  %v1519 = vunpack.c.l.b16 %v376
  %v1520 = vunpack.c.l.b16 %v377
  %v1521 = vunpack.c.l.b16 %v378
  %v1522 = vunpack.c.l.b16 %v379
  %v1523 = vunpack.c.l.b16 %v380
  %v1524 = vunpack.c.l.b16 %v381
  %v1525 = vunpack.c.l.b16 %v382
  %v1526 = vunpack.c.l.b16 %v383
  %v1527 = vunpack.c.l.b16 %v384
  %v1528 = vunpack.c.l.b16 %v385
  %v1529 = vunpack.c.l.b16 %v386
  %v1530 = vunpack.c.l.b16 %v387
  %v1531 = vunpack.c.l.b16 %v388
  %v1532 = vunpack.c.l.b16 %v389
  %v1533 = vunpack.c.l.b16 %v390
  %v1534 = vunpack.c.l.b16 %v391
  %v1535 = vunpack.c.l.b16 %v392
  %v1536 = vunpack.c.l.b16 %v393
  %v1537 = vunpack.c.l.b16 %v394
  %v1538 = vunpack.c.l.b16 %v395
  %v1539 = vunpack.c.l.b16 %v396
  %v1540 = vunpack.c.l.b16 %v397
  %v1541 = vunpack.c.l.b16 %v398
  %v1542 = vunpack.c.l.b16 %v399
  %v1543 = vunpack.c.l.b16 %v400
  %v1544 = vunpack.c.l.b16 %v401
  %v1545 = vunpack.c.l.b16 %v402
  %v1546 = vunpack.c.l.b16 %v403
  %v1547 = vunpack.c.l.b16 %v404
  %v1548 = vunpack.c.l.b16 %v405
  %v1549 = vunpack.c.l.b16 %v406
  %v1550 = vunpack.c.l.b16 %v407
  %v1551 = vunpack.c.l.b16 %v408
  %v1552 = vunpack.c.l.b16 %v409
  %v1553 = vunpack.c.l.b16 %v410
  %v1554 = vunpack.c.l.b16 %v411
  %v1555 = vunpack.c.l.b16 %v412
  %v1556 = vunpack.c.l.b16 %v413
  %v1557 = vunpack.c.l.b16 %v414
  %v1558 = vunpack.c.l.b16 %v415
  %v1559 = vunpack.c.l.b16 %v416
  %v1560 = vunpack.c.l.b16 %v417
  %v1561 = vunpack.c.l.b16 %v418
  %v1562 = vunpack.c.l.b16 %v419
  %v1563 = vunpack.c.l.b16 %v420
  %v1564 = vunpack.c.l.b16 %v421
  %v1565 = vunpack.c.l.b16 %v422
  %v1566 = vunpack.c.l.b16 %v423
  %v1567 = vunpack.c.l.b16 %v424
  %v1568 = vunpack.c.l.b16 %v425
  %v1569 = vunpack.c.l.b16 %v426
  %v1570 = vunpack.c.l.b16 %v427
  %v1571 = vunpack.c.l.b16 %v428
  %v1572 = vunpack.c.l.b16 %v429
  %v1573 = vunpack.c.l.b16 %v430
  %v1574 = vunpack.c.l.b16 %v431
  %v1575 = vunpack.c.l.b16 %v432
  %v1576 = vunpack.c.l.b16 %v433
  %v1577 = vunpack.c.l.b16 %v434
  %v1578 = vunpack.c.l.b16 %v435
  %v1579 = vunpack.c.l.b16 %v436
  %v1580 = vunpack.c.l.b16 %v437
  %v1581 = vunpack.c.l.b16 %v438
  %v1582 = vunpack.c.l.b16 %v439
  %v1583 = vunpack.c.l.b16 %v440
  %v1584 = vunpack.c.l.b16 %v441
  %v1585 = vunpack.c.l.b16 %v442
  %v1586 = vunpack.c.l.b16 %v443
  %v1587 = vunpack.c.l.b16 %v444
  %v1588 = vunpack.c.l.b16 %v445
  %v1589 = vunpack.c.l.b16 %v446
  %v1590 = vunpack.c.l.b16 %v447
  %v1591 = vunpack.c.l.b16 %v448
  %v1592 = vunpack.c.l.b16 %v449
  %v1593 = vunpack.c.l.b16 %v450
  %v1594 = vunpack.c.l.b16 %v451
  %v1595 = vunpack.c.l.b16 %v452
  %v1596 = vunpack.c.l.b16 %v453
  %v1597 = vunpack.c.l.b16 %v454
  %v1598 = vunpack.c.l.b16 %v455
  %v1599 = vunpack.c.l.b16 %v456
  %v1600 = vunpack.c.l.b16 %v457
  %v1601 = vunpack.c.l.b16 %v458
  %v1602 = vunpack.c.l.b16 %v459
  %v1603 = vunpack.c.l.b16 %v460
  %v1604 = vunpack.c.l.b16 %v461
  %v1605 = vunpack.c.l.b16 %v462
  %v1606 = vunpack.c.l.b16 %v463
  %v1607 = vunpack.c.l.b16 %v464
  %v1608 = vunpack.c.l.b16 %v465
  %v1609 = vunpack.c.l.b16 %v466
  %v1610 = vunpack.c.l.b16 %v467
  %v1611 = vunpack.c.l.b16 %v468
  %v1612 = vunpack.c.l.b16 %v469
  %v1613 = vunpack.c.l.b16 %v470
  %v1614 = vunpack.c.l.b16 %v471
  %v1615 = vunpack.c.l.b16 %v472
  %v1616 = vunpack.c.l.b16 %v473
  %v1617 = vunpack.c.l.b16 %v474
  %v1618 = vunpack.c.l.b16 %v475
  %v1619 = vunpack.c.l.b16 %v476
  %v1620 = vunpack.c.l.b16 %v477
  %v1621 = vunpack.c.l.b16 %v478
  %v1622 = vunpack.c.l.b16 %v479
  %v1623 = vunpack.c.l.b16 %v480
  %v1624 = vunpack.c.l.b16 %v481
  %v1625 = vunpack.c.l.b16 %v482
  %v1626 = vunpack.c.l.b16 %v483
  %v1627 = vunpack.c.l.b16 %v484
  %v1628 = vunpack.c.l.b16 %v485
  %v1629 = vunpack.c.l.b16 %v486
  %v1630 = vunpack.c.l.b16 %v487
  %v1631 = vunpack.c.l.b16 %v488
  %v1632 = vunpack.c.l.b16 %v489
  %v1633 = vunpack.c.l.b16 %v490
  %v1634 = vunpack.c.l.b16 %v491
  %v1635 = vunpack.c.l.b16 %v492
  %v1636 = vunpack.c.l.b16 %v493
  %v1637 = vunpack.c.l.b16 %v494
  %v1638 = vunpack.c.l.b16 %v495
  %v1639 = vunpack.c.l.b16 %v496
  %v1640 = vunpack.c.l.b16 %v497
  %v1641 = vunpack.c.l.b16 %v498
  %v1642 = vunpack.c.l.b16 %v499
  %v1643 = vunpack.c.l.b16 %v500
  %v1644 = vunpack.c.l.b16 %v501
  %v1645 = vunpack.c.l.b16 %v502
  %v1646 = vunpack.c.l.b16 %v503
  %v1647 = vunpack.c.l.b16 %v504
  %v1648 = vunpack.c.l.b16 %v505
  %v1649 = vunpack.c.l.b16 %v506
  %v1650 = vunpack.c.l.b16 %v507
  %v1651 = vunpack.c.l.b16 %v508
  %v1652 = vunpack.c.l.b16 %v509
  %v1653 = vunpack.c.l.b16 %v510
  %v1654 = vunpack.c.l.b16 %v511
  %v1655 = vunpack.c.l.b16 %v512
  %v1656 = vunpack.c.l.b16 %v513
  %v1657 = vunpack.c.l.b16 %v514
  %v1658 = vunpack.c.l.b16 %v515
  %v1659 = vunpack.c.l.b16 %v516
  %v1660 = vunpack.c.l.b16 %v517
  %v1661 = vunpack.c.l.b16 %v518
  %v1662 = vunpack.c.l.b16 %v519
  %v1663 = vunpack.c.l.b16 %v520
  %v1664 = vunpack.c.l.b16 %v521
  %v1665 = vunpack.c.l.b16 %v522
  %v1666 = vunpack.c.l.b16 %v523
  %v1667 = vunpack.c.l.b16 %v524
  %v1668 = vunpack.c.l.b16 %v525
  %v1669 = vunpack.c.l.b16 %v526
  %v1670 = vunpack.c.l.b16 %v527
  %v1671 = vunpack.c.l.b16 %v528
  %v1672 = vunpack.c.l.b16 %v529
  %v1673 = vunpack.c.l.b16 %v530
  %v1674 = vunpack.c.l.b16 %v531
  %v1675 = vunpack.c.l.b16 %v532
  %v1676 = vunpack.c.l.b16 %v533
  %v1677 = vunpack.c.l.b16 %v534
  %v1678 = vunpack.c.l.b16 %v535
  %v1679 = vunpack.c.l.b16 %v536
  %v1680 = vunpack.c.l.b16 %v537
  %v1681 = vunpack.c.l.b16 %v538
  %v1682 = vunpack.c.l.b16 %v539
  %v1683 = vunpack.c.l.b16 %v540
  %v1684 = vunpack.c.l.b16 %v541
  %v1685 = vunpack.c.l.b16 %v542
  %v1686 = vpack.c.b16 %v1175, %v1174
  %v1687 = vpack.c.b16 %v1177, %v1176
  %v1688 = vpack.c.b16 %v1179, %v1178
  %v1689 = vpack.c.b16 %v1181, %v1180
  %v1690 = vpack.c.b16 %v1183, %v1182
  %v1691 = vpack.c.b16 %v1185, %v1184
  %v1692 = vpack.c.b16 %v1187, %v1186
  %v1693 = vpack.c.b16 %v1189, %v1188
  %v1694 = vpack.c.b16 %v1191, %v1190
  %v1695 = vpack.c.b16 %v1193, %v1192
  %v1696 = vpack.c.b16 %v1195, %v1194
  %v1697 = vpack.c.b16 %v1197, %v1196
  %v1698 = vpack.c.b16 %v1199, %v1198
  %v1699 = vpack.c.b16 %v1201, %v1200
  %v1700 = vpack.c.b16 %v1203, %v1202
  %v1701 = vpack.c.b16 %v1205, %v1204
  %v1702 = vpack.c.b16 %v1207, %v1206
  %v1703 = vpack.c.b16 %v1209, %v1208
  %v1704 = vpack.c.b16 %v1211, %v1210
  %v1705 = vpack.c.b16 %v1213, %v1212
  %v1706 = vpack.c.b16 %v1215, %v1214
  %v1707 = vpack.c.b16 %v1217, %v1216
  %v1708 = vpack.c.b16 %v1219, %v1218
  %v1709 = vpack.c.b16 %v1221, %v1220
  %v1710 = vpack.c.b16 %v1223, %v1222
  %v1711 = vpack.c.b16 %v1225, %v1224
  %v1712 = vpack.c.b16 %v1227, %v1226
  %v1713 = vpack.c.b16 %v1229, %v1228
  %v1714 = vpack.c.b16 %v1231, %v1230
  %v1715 = vpack.c.b16 %v1233, %v1232
  %v1716 = vpack.c.b16 %v1235, %v1234
  %v1717 = vpack.c.b16 %v1237, %v1236
  %v1718 = vpack.c.b16 %v1239, %v1238
  %v1719 = vpack.c.b16 %v1241, %v1240
  %v1720 = vpack.c.b16 %v1243, %v1242
  %v1721 = vpack.c.b16 %v1245, %v1244
  %v1722 = vpack.c.b16 %v1247, %v1246
  %v1723 = vpack.c.b16 %v1249, %v1248
  %v1724 = vpack.c.b16 %v1251, %v1250
  %v1725 = vpack.c.b16 %v1253, %v1252
  %v1726 = vpack.c.b16 %v1255, %v1254
  %v1727 = vpack.c.b16 %v1257, %v1256
  %v1728 = vpack.c.b16 %v1259, %v1258
  %v1729 = vpack.c.b16 %v1261, %v1260
  %v1730 = vpack.c.b16 %v1263, %v1262
  %v1731 = vpack.c.b16 %v1265, %v1264
  %v1732 = vpack.c.b16 %v1267, %v1266
  %v1733 = vpack.c.b16 %v1269, %v1268
  %v1734 = vpack.c.b16 %v1271, %v1270
  %v1735 = vpack.c.b16 %v1273, %v1272
  %v1736 = vpack.c.b16 %v1275, %v1274
  %v1737 = vpack.c.b16 %v1277, %v1276
  %v1738 = vpack.c.b16 %v1279, %v1278
  %v1739 = vpack.c.b16 %v1281, %v1280
  %v1740 = vpack.c.b16 %v1283, %v1282
  %v1741 = vpack.c.b16 %v1285, %v1284
  %v1742 = vpack.c.b16 %v1287, %v1286
  %v1743 = vpack.c.b16 %v1289, %v1288
  %v1744 = vpack.c.b16 %v1291, %v1290
  %v1745 = vpack.c.b16 %v1293, %v1292
  %v1746 = vpack.c.b16 %v1295, %v1294
  %v1747 = vpack.c.b16 %v1297, %v1296
  %v1748 = vpack.c.b16 %v1299, %v1298
  %v1749 = vpack.c.b16 %v1301, %v1300
  %v1750 = vpack.c.b16 %v1303, %v1302
  %v1751 = vpack.c.b16 %v1305, %v1304
  %v1752 = vpack.c.b16 %v1307, %v1306
  %v1753 = vpack.c.b16 %v1309, %v1308
  %v1754 = vpack.c.b16 %v1311, %v1310
  %v1755 = vpack.c.b16 %v1313, %v1312
  %v1756 = vpack.c.b16 %v1315, %v1314
  %v1757 = vpack.c.b16 %v1317, %v1316
  %v1758 = vpack.c.b16 %v1319, %v1318
  %v1759 = vpack.c.b16 %v1321, %v1320
  %v1760 = vpack.c.b16 %v1323, %v1322
  %v1761 = vpack.c.b16 %v1325, %v1324
  %v1762 = vpack.c.b16 %v1327, %v1326
  %v1763 = vpack.c.b16 %v1329, %v1328
  %v1764 = vpack.c.b16 %v1331, %v1330
  %v1765 = vpack.c.b16 %v1333, %v1332
  %v1766 = vpack.c.b16 %v1335, %v1334
  %v1767 = vpack.c.b16 %v1337, %v1336
  %v1768 = vpack.c.b16 %v1339, %v1338
  %v1769 = vpack.c.b16 %v1341, %v1340
  %v1770 = vpack.c.b16 %v1343, %v1342
  %v1771 = vpack.c.b16 %v1345, %v1344
  %v1772 = vpack.c.b16 %v1347, %v1346
  %v1773 = vpack.c.b16 %v1349, %v1348
  %v1774 = vpack.c.b16 %v1351, %v1350
  %v1775 = vpack.c.b16 %v1353, %v1352
  %v1776 = vpack.c.b16 %v1355, %v1354
  %v1777 = vpack.c.b16 %v1357, %v1356
  %v1778 = vpack.c.b16 %v1359, %v1358
  %v1779 = vpack.c.b16 %v1361, %v1360
  %v1780 = vpack.c.b16 %v1363, %v1362
  %v1781 = vpack.c.b16 %v1365, %v1364
  %v1782 = vpack.c.b16 %v1367, %v1366
  %v1783 = vpack.c.b16 %v1369, %v1368
  %v1784 = vpack.c.b16 %v1371, %v1370
  %v1785 = vpack.c.b16 %v1373, %v1372
  %v1786 = vpack.c.b16 %v1375, %v1374
  %v1787 = vpack.c.b16 %v1377, %v1376
  %v1788 = vpack.c.b16 %v1379, %v1378
  %v1789 = vpack.c.b16 %v1381, %v1380
  %v1790 = vpack.c.b16 %v1383, %v1382
  %v1791 = vpack.c.b16 %v1385, %v1384
  %v1792 = vpack.c.b16 %v1387, %v1386
  %v1793 = vpack.c.b16 %v1389, %v1388
  %v1794 = vpack.c.b16 %v1391, %v1390
  %v1795 = vpack.c.b16 %v1393, %v1392
  %v1796 = vpack.c.b16 %v1395, %v1394
  %v1797 = vpack.c.b16 %v1397, %v1396
  %v1798 = vpack.c.b16 %v1399, %v1398
  %v1799 = vpack.c.b16 %v1401, %v1400
  %v1800 = vpack.c.b16 %v1403, %v1402
  %v1801 = vpack.c.b16 %v1405, %v1404
  %v1802 = vpack.c.b16 %v1407, %v1406
  %v1803 = vpack.c.b16 %v1409, %v1408
  %v1804 = vpack.c.b16 %v1411, %v1410
  %v1805 = vpack.c.b16 %v1413, %v1412
  %v1806 = vpack.c.b16 %v1415, %v1414
  %v1807 = vpack.c.b16 %v1417, %v1416
  %v1808 = vpack.c.b16 %v1419, %v1418
  %v1809 = vpack.c.b16 %v1421, %v1420
  %v1810 = vpack.c.b16 %v1423, %v1422
  %v1811 = vpack.c.b16 %v1425, %v1424
  %v1812 = vpack.c.b16 %v1427, %v1426
  %v1813 = vpack.c.b16 %v1429, %v1428
  %v1814 = vpack.c.b16 %v1431, %v1430
  %v1815 = vpack.c.b16 %v1433, %v1432
  %v1816 = vpack.c.b16 %v1435, %v1434
  %v1817 = vpack.c.b16 %v1437, %v1436
  %v1818 = vpack.c.b16 %v1439, %v1438
  %v1819 = vpack.c.b16 %v1441, %v1440
  %v1820 = vpack.c.b16 %v1443, %v1442
  %v1821 = vpack.c.b16 %v1445, %v1444
  %v1822 = vpack.c.b16 %v1447, %v1446
  %v1823 = vpack.c.b16 %v1449, %v1448
  %v1824 = vpack.c.b16 %v1451, %v1450
  %v1825 = vpack.c.b16 %v1453, %v1452
  %v1826 = vpack.c.b16 %v1455, %v1454
  %v1827 = vpack.c.b16 %v1457, %v1456
  %v1828 = vpack.c.b16 %v1459, %v1458
  %v1829 = vpack.c.b16 %v1461, %v1460
  %v1830 = vpack.c.b16 %v1463, %v1462
  %v1831 = vpack.c.b16 %v1465, %v1464
  %v1832 = vpack.c.b16 %v1467, %v1466
  %v1833 = vpack.c.b16 %v1469, %v1468
  %v1834 = vpack.c.b16 %v1471, %v1470
  %v1835 = vpack.c.b16 %v1473, %v1472
  %v1836 = vpack.c.b16 %v1475, %v1474
  %v1837 = vpack.c.b16 %v1477, %v1476
  %v1838 = vpack.c.b16 %v1479, %v1478
  %v1839 = vpack.c.b16 %v1481, %v1480
  %v1840 = vpack.c.b16 %v1483, %v1482
  %v1841 = vpack.c.b16 %v1485, %v1484
  %v1842 = vpack.c.b16 %v1487, %v1486
  %v1843 = vpack.c.b16 %v1489, %v1488
  %v1844 = vpack.c.b16 %v1491, %v1490
  %v1845 = vpack.c.b16 %v1493, %v1492
  %v1846 = vpack.c.b16 %v1495, %v1494
  %v1847 = vpack.c.b16 %v1497, %v1496
  %v1848 = vpack.c.b16 %v1499, %v1498
  %v1849 = vpack.c.b16 %v1501, %v1500
  %v1850 = vpack.c.b16 %v1503, %v1502
  %v1851 = vpack.c.b16 %v1505, %v1504
  %v1852 = vpack.c.b16 %v1507, %v1506
  %v1853 = vpack.c.b16 %v1509, %v1508
  %v1854 = vpack.c.b16 %v1511, %v1510
  %v1855 = vpack.c.b16 %v1513, %v1512
  %v1856 = vpack.c.b16 %v1515, %v1514
  %v1857 = vpack.c.b16 %v1517, %v1516
  %v1858 = vpack.c.b16 %v1519, %v1518
  %v1859 = vpack.c.b16 %v1521, %v1520
  %v1860 = vpack.c.b16 %v1523, %v1522
  %v1861 = vpack.c.b16 %v1525, %v1524
  %v1862 = vpack.c.b16 %v1527, %v1526
  %v1863 = vpack.c.b16 %v1529, %v1528
  %v1864 = vpack.c.b16 %v1531, %v1530
  %v1865 = vpack.c.b16 %v1533, %v1532
  %v1866 = vpack.c.b16 %v1535, %v1534
  %v1867 = vpack.c.b16 %v1537, %v1536
  %v1868 = vpack.c.b16 %v1539, %v1538
  %v1869 = vpack.c.b16 %v1541, %v1540
  %v1870 = vpack.c.b16 %v1543, %v1542
  %v1871 = vpack.c.b16 %v1545, %v1544
  %v1872 = vpack.c.b16 %v1547, %v1546
  %v1873 = vpack.c.b16 %v1549, %v1548
  %v1874 = vpack.c.b16 %v1551, %v1550
  %v1875 = vpack.c.b16 %v1553, %v1552
  %v1876 = vpack.c.b16 %v1555, %v1554
  %v1877 = vpack.c.b16 %v1557, %v1556
  %v1878 = vpack.c.b16 %v1559, %v1558
  %v1879 = vpack.c.b16 %v1561, %v1560
  %v1880 = vpack.c.b16 %v1563, %v1562
  %v1881 = vpack.c.b16 %v1565, %v1564
  %v1882 = vpack.c.b16 %v1567, %v1566
  %v1883 = vpack.c.b16 %v1569, %v1568
  %v1884 = vpack.c.b16 %v1571, %v1570
  %v1885 = vpack.c.b16 %v1573, %v1572
  %v1886 = vpack.c.b16 %v1575, %v1574
  %v1887 = vpack.c.b16 %v1577, %v1576
  %v1888 = vpack.c.b16 %v1579, %v1578
  %v1889 = vpack.c.b16 %v1581, %v1580
  %v1890 = vpack.c.b16 %v1583, %v1582
  %v1891 = vpack.c.b16 %v1585, %v1584
  %v1892 = vpack.c.b16 %v1587, %v1586
  %v1893 = vpack.c.b16 %v1589, %v1588
  %v1894 = vpack.c.b16 %v1591, %v1590
  %v1895 = vpack.c.b16 %v1593, %v1592
  %v1896 = vpack.c.b16 %v1595, %v1594
  %v1897 = vpack.c.b16 %v1597, %v1596
  %v1898 = vpack.c.b16 %v1599, %v1598
  %v1899 = vpack.c.b16 %v1601, %v1600
  %v1900 = vpack.c.b16 %v1603, %v1602
  %v1901 = vpack.c.b16 %v1605, %v1604
  %v1902 = vpack.c.b16 %v1607, %v1606
  %v1903 = vpack.c.b16 %v1609, %v1608
  %v1904 = vpack.c.b16 %v1611, %v1610
  %v1905 = vpack.c.b16 %v1613, %v1612
  %v1906 = vpack.c.b16 %v1615, %v1614
  %v1907 = vpack.c.b16 %v1617, %v1616
  %v1908 = vpack.c.b16 %v1619, %v1618
  %v1909 = vpack.c.b16 %v1621, %v1620
  %v1910 = vpack.c.b16 %v1623, %v1622
  %v1911 = vpack.c.b16 %v1625, %v1624
  %v1912 = vpack.c.b16 %v1627, %v1626
  %v1913 = vpack.c.b16 %v1629, %v1628
  %v1914 = vpack.c.b16 %v1631, %v1630
  %v1915 = vpack.c.b16 %v1633, %v1632
  %v1916 = vpack.c.b16 %v1635, %v1634
  %v1917 = vpack.c.b16 %v1637, %v1636
  %v1918 = vpack.c.b16 %v1639, %v1638
  %v1919 = vpack.c.b16 %v1641, %v1640
  %v1920 = vpack.c.b16 %v1643, %v1642
  %v1921 = vpack.c.b16 %v1645, %v1644
  %v1922 = vpack.c.b16 %v1647, %v1646
  %v1923 = vpack.c.b16 %v1649, %v1648
  %v1924 = vpack.c.b16 %v1651, %v1650
  %v1925 = vpack.c.b16 %v1653, %v1652
  %v1926 = vpack.c.b16 %v1655, %v1654
  %v1927 = vpack.c.b16 %v1657, %v1656
  %v1928 = vpack.c.b16 %v1659, %v1658
  %v1929 = vpack.c.b16 %v1661, %v1660
  %v1930 = vpack.c.b16 %v1663, %v1662
  %v1931 = vpack.c.b16 %v1665, %v1664
  %v1932 = vpack.c.b16 %v1667, %v1666
  %v1933 = vpack.c.b16 %v1669, %v1668
  %v1934 = vpack.c.b16 %v1671, %v1670
  %v1935 = vpack.c.b16 %v1673, %v1672
  %v1936 = vpack.c.b16 %v1675, %v1674
  %v1937 = vpack.c.b16 %v1677, %v1676
  %v1938 = vpack.c.b16 %v1679, %v1678
  %v1939 = vpack.c.b16 %v1681, %v1680
  %v1940 = vpack.c.b16 %v1683, %v1682
  %v1941 = vpack.c.b16 %v1685, %v1684
  %2198 = vmatprep.subr.bf16.mxu0 0
  %2199 = vmatpush1.bf16.msra.mxu0 %v1686
  %2200 = vmatprep.subr.bf16.mxu0 0
  %2201 = vmatpush1.bf16.msra.mxu0 %v1687
  %2202 = vmatprep.subr.bf16.mxu0 0
  %2203 = vmatpush1.bf16.msra.mxu0 %v1688
  %2204 = vmatprep.subr.bf16.mxu0 0
  %2205 = vmatpush1.bf16.msra.mxu0 %v1689
  %2206 = vmatprep.subr.bf16.mxu0 0
  %2207 = vmatpush1.bf16.msra.mxu0 %v1690
  %2208 = vmatprep.subr.bf16.mxu0 0
  %2209 = vmatpush1.bf16.msra.mxu0 %v1691
  %2210 = vmatprep.subr.bf16.mxu0 0
  %2211 = vmatpush1.bf16.msra.mxu0 %v1692
  %2212 = vmatprep.subr.bf16.mxu0 0
  %2213 = vmatpush1.bf16.msra.mxu0 %v1693
  %2214 = vmatprep.subr.bf16.mxu0 0
  %2215 = vmatpush1.bf16.msra.mxu0 %v1694
  %2216 = vmatprep.subr.bf16.mxu0 0
  %2217 = vmatpush1.bf16.msra.mxu0 %v1695
  %2218 = vmatprep.subr.bf16.mxu0 0
  %2219 = vmatpush1.bf16.msra.mxu0 %v1696
  %2220 = vmatprep.subr.bf16.mxu0 0
  %2221 = vmatpush1.bf16.msra.mxu0 %v1697
  %2222 = vmatprep.subr.bf16.mxu0 0
  %2223 = vmatpush1.bf16.msra.mxu0 %v1698
  %2224 = vmatprep.subr.bf16.mxu0 0
  %2225 = vmatpush1.bf16.msra.mxu0 %v1699
  %2226 = vmatprep.subr.bf16.mxu0 0
  %2227 = vmatpush1.bf16.msra.mxu0 %v1700
  %2228 = vmatprep.subr.bf16.mxu0 0
  %2229 = vmatpush1.bf16.msra.mxu0 %v1701
  %2230 = vmatprep.mubr.bf16.mxu0 %v599
  %2231 = vmatmul.mubr.bf16.gmra.mrb[0].mxu0 %v598
  %v2232 = vpop.f32.mrb[0].mxu0
  %v2233 = vadd.f32 %v548, %v2232
  %v2234 = vpop.f32.mrb[0].mxu0
  %v2235 = vpop.f32.mrb[0].mxu0
  %v2236 = vpop.f32.mrb[0].mxu0
  %2237 = vdwg.mxu0
  %2238 = vmatprep.subr.bf16.mxu0 0
  %2239 = vmatpush1.bf16.msra.mxu0 %v1702
  %2240 = vmatprep.subr.bf16.mxu0 0
  %2241 = vmatpush1.bf16.msra.mxu0 %v1703
  %2242 = vmatprep.subr.bf16.mxu0 0
  %2243 = vmatpush1.bf16.msra.mxu0 %v1704
  %2244 = vmatprep.subr.bf16.mxu0 0
  %2245 = vmatpush1.bf16.msra.mxu0 %v1705
  %2246 = vmatprep.subr.bf16.mxu0 0
  %2247 = vmatpush1.bf16.msra.mxu0 %v1706
  %2248 = vmatprep.subr.bf16.mxu0 0
  %2249 = vmatpush1.bf16.msra.mxu0 %v1707
  %2250 = vmatprep.subr.bf16.mxu0 0
  %2251 = vmatpush1.bf16.msra.mxu0 %v1708
  %2252 = vmatprep.subr.bf16.mxu0 0
  %2253 = vmatpush1.bf16.msra.mxu0 %v1709
  %2254 = vmatprep.subr.bf16.mxu0 0
  %2255 = vmatpush1.bf16.msra.mxu0 %v1710
  %2256 = vmatprep.subr.bf16.mxu0 0
  %2257 = vmatpush1.bf16.msra.mxu0 %v1711
  %2258 = vmatprep.subr.bf16.mxu0 0
  %2259 = vmatpush1.bf16.msra.mxu0 %v1712
  %2260 = vmatprep.subr.bf16.mxu0 0
  %2261 = vmatpush1.bf16.msra.mxu0 %v1713
  %2262 = vmatprep.subr.bf16.mxu0 0
  %2263 = vmatpush1.bf16.msra.mxu0 %v1714
  %2264 = vmatprep.subr.bf16.mxu0 0
  %2265 = vmatpush1.bf16.msra.mxu0 %v1715
  %2266 = vmatprep.subr.bf16.mxu0 0
  %2267 = vmatpush1.bf16.msra.mxu0 %v1716
  %2268 = vmatprep.subr.bf16.mxu0 0
  %2269 = vmatpush1.bf16.msra.mxu0 %v1717
  %2270 = vmatprep.mubr.bf16.mxu0 %v601
  %2271 = vmatmul.mubr.bf16.gmra.mrb[0].mxu0 %v600
  %v2272 = vpop.f32.mrb[0].mxu0
  %v2273 = vadd.f32 %v2233, %v2272
  %v2274 = vpop.f32.mrb[0].mxu0
  %v2275 = vpop.f32.mrb[0].mxu0
  %v2276 = vpop.f32.mrb[0].mxu0
  %2277 = vdwg.mxu0
  %2278 = vmatprep.subr.bf16.mxu0 0
  %2279 = vmatpush1.bf16.msra.mxu0 %v1718
  %2280 = vmatprep.subr.bf16.mxu0 0
  %2281 = vmatpush1.bf16.msra.mxu0 %v1719
  %2282 = vmatprep.subr.bf16.mxu0 0
  %2283 = vmatpush1.bf16.msra.mxu0 %v1720
  %2284 = vmatprep.subr.bf16.mxu0 0
  %2285 = vmatpush1.bf16.msra.mxu0 %v1721
  %2286 = vmatprep.subr.bf16.mxu0 0
  %2287 = vmatpush1.bf16.msra.mxu0 %v1722
  %2288 = vmatprep.subr.bf16.mxu0 0
  %2289 = vmatpush1.bf16.msra.mxu0 %v1723
  %2290 = vmatprep.subr.bf16.mxu0 0
  %2291 = vmatpush1.bf16.msra.mxu0 %v1724
  %2292 = vmatprep.subr.bf16.mxu0 0
  %2293 = vmatpush1.bf16.msra.mxu0 %v1725
  %2294 = vmatprep.subr.bf16.mxu0 0
  %2295 = vmatpush1.bf16.msra.mxu0 %v1726
  %2296 = vmatprep.subr.bf16.mxu0 0
  %2297 = vmatpush1.bf16.msra.mxu0 %v1727
  %2298 = vmatprep.subr.bf16.mxu0 0
  %2299 = vmatpush1.bf16.msra.mxu0 %v1728
  %2300 = vmatprep.subr.bf16.mxu0 0
  %2301 = vmatpush1.bf16.msra.mxu0 %v1729
  %2302 = vmatprep.subr.bf16.mxu0 0
  %2303 = vmatpush1.bf16.msra.mxu0 %v1730
  %2304 = vmatprep.subr.bf16.mxu0 0
  %2305 = vmatpush1.bf16.msra.mxu0 %v1731
  %2306 = vmatprep.subr.bf16.mxu0 0
  %2307 = vmatpush1.bf16.msra.mxu0 %v1732
  %2308 = vmatprep.subr.bf16.mxu0 0
  %2309 = vmatpush1.bf16.msra.mxu0 %v1733
  %2310 = vmatprep.mubr.bf16.mxu0 %v603
  %2311 = vmatmul.mubr.bf16.gmra.mrb[0].mxu0 %v602
  %v2312 = vpop.f32.mrb[0].mxu0
  %v2313 = vadd.f32 %v2273, %v2312
  %v2314 = vpop.f32.mrb[0].mxu0
  %v2315 = vpop.f32.mrb[0].mxu0
  %v2316 = vpop.f32.mrb[0].mxu0
  %2317 = vdwg.mxu0
  %2318 = vmatprep.subr.bf16.mxu0 0
  %2319 = vmatpush1.bf16.msra.mxu0 %v1734
  %2320 = vmatprep.subr.bf16.mxu0 0
  %2321 = vmatpush1.bf16.msra.mxu0 %v1735
  %2322 = vmatprep.subr.bf16.mxu0 0
  %2323 = vmatpush1.bf16.msra.mxu0 %v1736
  %2324 = vmatprep.subr.bf16.mxu0 0
  %2325 = vmatpush1.bf16.msra.mxu0 %v1737
  %2326 = vmatprep.subr.bf16.mxu0 0
  %2327 = vmatpush1.bf16.msra.mxu0 %v1738
  %2328 = vmatprep.subr.bf16.mxu0 0
  %2329 = vmatpush1.bf16.msra.mxu0 %v1739
  %2330 = vmatprep.subr.bf16.mxu0 0
  %2331 = vmatpush1.bf16.msra.mxu0 %v1740
  %2332 = vmatprep.subr.bf16.mxu0 0
  %2333 = vmatpush1.bf16.msra.mxu0 %v1741
  %2334 = vmatprep.subr.bf16.mxu0 0
  %2335 = vmatpush1.bf16.msra.mxu0 %v1742
  %2336 = vmatprep.subr.bf16.mxu0 0
  %2337 = vmatpush1.bf16.msra.mxu0 %v1743
  %2338 = vmatprep.subr.bf16.mxu0 0
  %2339 = vmatpush1.bf16.msra.mxu0 %v1744
  %2340 = vmatprep.subr.bf16.mxu0 0
  %2341 = vmatpush1.bf16.msra.mxu0 %v1745
  %2342 = vmatprep.subr.bf16.mxu0 0
  %2343 = vmatpush1.bf16.msra.mxu0 %v1746
  %2344 = vmatprep.subr.bf16.mxu0 0
  %2345 = vmatpush1.bf16.msra.mxu0 %v1747
  %2346 = vmatprep.subr.bf16.mxu0 0
  %2347 = vmatpush1.bf16.msra.mxu0 %v1748
  %2348 = vmatprep.subr.bf16.mxu0 0
  %2349 = vmatpush1.bf16.msra.mxu0 %v1749
  %2350 = vmatprep.mubr.bf16.mxu0 %v605
  %2351 = vmatmul.mubr.bf16.gmra.mrb[0].mxu0 %v604
  %v2352 = vpop.f32.mrb[0].mxu0
  %v2353 = vadd.f32 %v2313, %v2352
  %v2354 = vpop.f32.mrb[0].mxu0
  %v2355 = vpop.f32.mrb[0].mxu0
  %v2356 = vpop.f32.mrb[0].mxu0
  %2357 = vdwg.mxu0
  %2358 = vmatprep.subr.bf16.mxu0 0
  %2359 = vmatpush1.bf16.msra.mxu0 %v1750
  %2360 = vmatprep.subr.bf16.mxu0 0
  %2361 = vmatpush1.bf16.msra.mxu0 %v1751
  %2362 = vmatprep.subr.bf16.mxu0 0
  %2363 = vmatpush1.bf16.msra.mxu0 %v1752
  %2364 = vmatprep.subr.bf16.mxu0 0
  %2365 = vmatpush1.bf16.msra.mxu0 %v1753
  %2366 = vmatprep.subr.bf16.mxu0 0
  %2367 = vmatpush1.bf16.msra.mxu0 %v1754
  %2368 = vmatprep.subr.bf16.mxu0 0
  %2369 = vmatpush1.bf16.msra.mxu0 %v1755
  %2370 = vmatprep.subr.bf16.mxu0 0
  %2371 = vmatpush1.bf16.msra.mxu0 %v1756
  %2372 = vmatprep.subr.bf16.mxu0 0
  %2373 = vmatpush1.bf16.msra.mxu0 %v1757
  %2374 = vmatprep.subr.bf16.mxu0 0
  %2375 = vmatpush1.bf16.msra.mxu0 %v1758
  %2376 = vmatprep.subr.bf16.mxu0 0
  %2377 = vmatpush1.bf16.msra.mxu0 %v1759
  %2378 = vmatprep.subr.bf16.mxu0 0
  %2379 = vmatpush1.bf16.msra.mxu0 %v1760
  %2380 = vmatprep.subr.bf16.mxu0 0
  %2381 = vmatpush1.bf16.msra.mxu0 %v1761
  %2382 = vmatprep.subr.bf16.mxu0 0
  %2383 = vmatpush1.bf16.msra.mxu0 %v1762
  %2384 = vmatprep.subr.bf16.mxu0 0
  %2385 = vmatpush1.bf16.msra.mxu0 %v1763
  %2386 = vmatprep.subr.bf16.mxu0 0
  %2387 = vmatpush1.bf16.msra.mxu0 %v1764
  %2388 = vmatprep.subr.bf16.mxu0 0
  %2389 = vmatpush1.bf16.msra.mxu0 %v1765
  %2390 = vmatprep.mubr.bf16.mxu0 %v607
  %2391 = vmatmul.mubr.bf16.gmra.mrb[0].mxu0 %v606
  %v2392 = vpop.f32.mrb[0].mxu0
  %v2393 = vadd.f32 %v2353, %v2392
  %v2394 = vpop.f32.mrb[0].mxu0
  %v2395 = vpop.f32.mrb[0].mxu0
  %v2396 = vpop.f32.mrb[0].mxu0
  %2397 = vdwg.mxu0
  %2398 = vmatprep.subr.bf16.mxu0 0
  %2399 = vmatpush1.bf16.msra.mxu0 %v1766
  %2400 = vmatprep.subr.bf16.mxu0 0
  %2401 = vmatpush1.bf16.msra.mxu0 %v1767
  %2402 = vmatprep.subr.bf16.mxu0 0
  %2403 = vmatpush1.bf16.msra.mxu0 %v1768
  %2404 = vmatprep.subr.bf16.mxu0 0
  %2405 = vmatpush1.bf16.msra.mxu0 %v1769
  %2406 = vmatprep.subr.bf16.mxu0 0
  %2407 = vmatpush1.bf16.msra.mxu0 %v1770
  %2408 = vmatprep.subr.bf16.mxu0 0
  %2409 = vmatpush1.bf16.msra.mxu0 %v1771
  %2410 = vmatprep.subr.bf16.mxu0 0
  %2411 = vmatpush1.bf16.msra.mxu0 %v1772
  %2412 = vmatprep.subr.bf16.mxu0 0
  %2413 = vmatpush1.bf16.msra.mxu0 %v1773
  %2414 = vmatprep.subr.bf16.mxu0 0
  %2415 = vmatpush1.bf16.msra.mxu0 %v1774
  %2416 = vmatprep.subr.bf16.mxu0 0
  %2417 = vmatpush1.bf16.msra.mxu0 %v1775
  %2418 = vmatprep.subr.bf16.mxu0 0
  %2419 = vmatpush1.bf16.msra.mxu0 %v1776
  %2420 = vmatprep.subr.bf16.mxu0 0
  %2421 = vmatpush1.bf16.msra.mxu0 %v1777
  %2422 = vmatprep.subr.bf16.mxu0 0
  %2423 = vmatpush1.bf16.msra.mxu0 %v1778
  %2424 = vmatprep.subr.bf16.mxu0 0
  %2425 = vmatpush1.bf16.msra.mxu0 %v1779
  %2426 = vmatprep.subr.bf16.mxu0 0
  %2427 = vmatpush1.bf16.msra.mxu0 %v1780
  %2428 = vmatprep.subr.bf16.mxu0 0
  %2429 = vmatpush1.bf16.msra.mxu0 %v1781
  %2430 = vmatprep.mubr.bf16.mxu0 %v609
  %2431 = vmatmul.mubr.bf16.gmra.mrb[0].mxu0 %v608
  %v2432 = vpop.f32.mrb[0].mxu0
  %v2433 = vadd.f32 %v2393, %v2432
  %v2434 = vpop.f32.mrb[0].mxu0
  %v2435 = vpop.f32.mrb[0].mxu0
  %v2436 = vpop.f32.mrb[0].mxu0
  %2437 = vdwg.mxu0
  %2438 = vmatprep.subr.bf16.mxu0 0
  %2439 = vmatpush1.bf16.msra.mxu0 %v1782
  %2440 = vmatprep.subr.bf16.mxu0 0
  %2441 = vmatpush1.bf16.msra.mxu0 %v1783
  %2442 = vmatprep.subr.bf16.mxu0 0
  %2443 = vmatpush1.bf16.msra.mxu0 %v1784
  %2444 = vmatprep.subr.bf16.mxu0 0
  %2445 = vmatpush1.bf16.msra.mxu0 %v1785
  %2446 = vmatprep.subr.bf16.mxu0 0
  %2447 = vmatpush1.bf16.msra.mxu0 %v1786
  %2448 = vmatprep.subr.bf16.mxu0 0
  %2449 = vmatpush1.bf16.msra.mxu0 %v1787
  %2450 = vmatprep.subr.bf16.mxu0 0
  %2451 = vmatpush1.bf16.msra.mxu0 %v1788
  %2452 = vmatprep.subr.bf16.mxu0 0
  %2453 = vmatpush1.bf16.msra.mxu0 %v1789
  %2454 = vmatprep.subr.bf16.mxu0 0
  %2455 = vmatpush1.bf16.msra.mxu0 %v1790
  %2456 = vmatprep.subr.bf16.mxu0 0
  %2457 = vmatpush1.bf16.msra.mxu0 %v1791
  %2458 = vmatprep.subr.bf16.mxu0 0
  %2459 = vmatpush1.bf16.msra.mxu0 %v1792
  %2460 = vmatprep.subr.bf16.mxu0 0
  %2461 = vmatpush1.bf16.msra.mxu0 %v1793
  %2462 = vmatprep.subr.bf16.mxu0 0
  %2463 = vmatpush1.bf16.msra.mxu0 %v1794
  %2464 = vmatprep.subr.bf16.mxu0 0
  %2465 = vmatpush1.bf16.msra.mxu0 %v1795
  %2466 = vmatprep.subr.bf16.mxu0 0
  %2467 = vmatpush1.bf16.msra.mxu0 %v1796
  %2468 = vmatprep.subr.bf16.mxu0 0
  %2469 = vmatpush1.bf16.msra.mxu0 %v1797
  %2470 = vmatprep.mubr.bf16.mxu0 %v611
  %2471 = vmatmul.mubr.bf16.gmra.mrb[0].mxu0 %v610
  %v2472 = vpop.f32.mrb[0].mxu0
  %v2473 = vadd.f32 %v2433, %v2472
  %v2474 = vpop.f32.mrb[0].mxu0
  %v2475 = vpop.f32.mrb[0].mxu0
  %v2476 = vpop.f32.mrb[0].mxu0
  %2477 = vdwg.mxu0
  %2478 = vmatprep.subr.bf16.mxu0 0
  %2479 = vmatpush1.bf16.msra.mxu0 %v1798
  %2480 = vmatprep.subr.bf16.mxu0 0
  %2481 = vmatpush1.bf16.msra.mxu0 %v1799
  %2482 = vmatprep.subr.bf16.mxu0 0
  %2483 = vmatpush1.bf16.msra.mxu0 %v1800
  %2484 = vmatprep.subr.bf16.mxu0 0
  %2485 = vmatpush1.bf16.msra.mxu0 %v1801
  %2486 = vmatprep.subr.bf16.mxu0 0
  %2487 = vmatpush1.bf16.msra.mxu0 %v1802
  %2488 = vmatprep.subr.bf16.mxu0 0
  %2489 = vmatpush1.bf16.msra.mxu0 %v1803
  %2490 = vmatprep.subr.bf16.mxu0 0
  %2491 = vmatpush1.bf16.msra.mxu0 %v1804
  %2492 = vmatprep.subr.bf16.mxu0 0
  %2493 = vmatpush1.bf16.msra.mxu0 %v1805
  %2494 = vmatprep.subr.bf16.mxu0 0
  %2495 = vmatpush1.bf16.msra.mxu0 %v1806
  %2496 = vmatprep.subr.bf16.mxu0 0
  %2497 = vmatpush1.bf16.msra.mxu0 %v1807
  %2498 = vmatprep.subr.bf16.mxu0 0
  %2499 = vmatpush1.bf16.msra.mxu0 %v1808
  %2500 = vmatprep.subr.bf16.mxu0 0
  %2501 = vmatpush1.bf16.msra.mxu0 %v1809
  %2502 = vmatprep.subr.bf16.mxu0 0
  %2503 = vmatpush1.bf16.msra.mxu0 %v1810
  %2504 = vmatprep.subr.bf16.mxu0 0
  %2505 = vmatpush1.bf16.msra.mxu0 %v1811
  %2506 = vmatprep.subr.bf16.mxu0 0
  %2507 = vmatpush1.bf16.msra.mxu0 %v1812
  %2508 = vmatprep.subr.bf16.mxu0 0
  %2509 = vmatpush1.bf16.msra.mxu0 %v1813
  %2510 = vmatprep.mubr.bf16.mxu0 %v613
  %2511 = vmatmul.mubr.bf16.gmra.mrb[0].mxu0 %v612
  %v2512 = vpop.f32.mrb[0].mxu0
  %v2513 = vadd.f32 %v2473, %v2512
  %v2514 = vpop.f32.mrb[0].mxu0
  %v2515 = vpop.f32.mrb[0].mxu0
  %v2516 = vpop.f32.mrb[0].mxu0
  %2517 = vdwg.mxu0
  %2518 = vmatprep.subr.bf16.mxu0 0
  %2519 = vmatpush1.bf16.msra.mxu0 %v1814
  %2520 = vmatprep.subr.bf16.mxu0 0
  %2521 = vmatpush1.bf16.msra.mxu0 %v1815
  %2522 = vmatprep.subr.bf16.mxu0 0
  %2523 = vmatpush1.bf16.msra.mxu0 %v1816
  %2524 = vmatprep.subr.bf16.mxu0 0
  %2525 = vmatpush1.bf16.msra.mxu0 %v1817
  %2526 = vmatprep.subr.bf16.mxu0 0
  %2527 = vmatpush1.bf16.msra.mxu0 %v1818
  %2528 = vmatprep.subr.bf16.mxu0 0
  %2529 = vmatpush1.bf16.msra.mxu0 %v1819
  %2530 = vmatprep.subr.bf16.mxu0 0
  %2531 = vmatpush1.bf16.msra.mxu0 %v1820
  %2532 = vmatprep.subr.bf16.mxu0 0
  %2533 = vmatpush1.bf16.msra.mxu0 %v1821
  %2534 = vmatprep.subr.bf16.mxu0 0
  %2535 = vmatpush1.bf16.msra.mxu0 %v1822
  %2536 = vmatprep.subr.bf16.mxu0 0
  %2537 = vmatpush1.bf16.msra.mxu0 %v1823
  %2538 = vmatprep.subr.bf16.mxu0 0
  %2539 = vmatpush1.bf16.msra.mxu0 %v1824
  %2540 = vmatprep.subr.bf16.mxu0 0
  %2541 = vmatpush1.bf16.msra.mxu0 %v1825
  %2542 = vmatprep.subr.bf16.mxu0 0
  %2543 = vmatpush1.bf16.msra.mxu0 %v1826
  %2544 = vmatprep.subr.bf16.mxu0 0
  %2545 = vmatpush1.bf16.msra.mxu0 %v1827
  %2546 = vmatprep.subr.bf16.mxu0 0
  %2547 = vmatpush1.bf16.msra.mxu0 %v1828
  %2548 = vmatprep.subr.bf16.mxu0 0
  %2549 = vmatpush1.bf16.msra.mxu0 %v1829
  %2550 = vmatprep.mubr.bf16.mxu0 %v615
  %2551 = vmatmul.mubr.bf16.gmra.mrb[0].mxu0 %v614
  %v2552 = vpop.f32.mrb[0].mxu0
  %v2553 = vadd.f32 %v2513, %v2552
  %v2554 = vpop.f32.mrb[0].mxu0
  %v2555 = vpop.f32.mrb[0].mxu0
  %v2556 = vpop.f32.mrb[0].mxu0
  %2557 = vdwg.mxu0
  %2558 = vmatprep.subr.bf16.mxu0 0
  %2559 = vmatpush1.bf16.msra.mxu0 %v1830
  %2560 = vmatprep.subr.bf16.mxu0 0
  %2561 = vmatpush1.bf16.msra.mxu0 %v1831
  %2562 = vmatprep.subr.bf16.mxu0 0
  %2563 = vmatpush1.bf16.msra.mxu0 %v1832
  %2564 = vmatprep.subr.bf16.mxu0 0
  %2565 = vmatpush1.bf16.msra.mxu0 %v1833
  %2566 = vmatprep.subr.bf16.mxu0 0
  %2567 = vmatpush1.bf16.msra.mxu0 %v1834
  %2568 = vmatprep.subr.bf16.mxu0 0
  %2569 = vmatpush1.bf16.msra.mxu0 %v1835
  %2570 = vmatprep.subr.bf16.mxu0 0
  %2571 = vmatpush1.bf16.msra.mxu0 %v1836
  %2572 = vmatprep.subr.bf16.mxu0 0
  %2573 = vmatpush1.bf16.msra.mxu0 %v1837
  %2574 = vmatprep.subr.bf16.mxu0 0
  %2575 = vmatpush1.bf16.msra.mxu0 %v1838
  %2576 = vmatprep.subr.bf16.mxu0 0
  %2577 = vmatpush1.bf16.msra.mxu0 %v1839
  %2578 = vmatprep.subr.bf16.mxu0 0
  %2579 = vmatpush1.bf16.msra.mxu0 %v1840
  %2580 = vmatprep.subr.bf16.mxu0 0
  %2581 = vmatpush1.bf16.msra.mxu0 %v1841
  %2582 = vmatprep.subr.bf16.mxu0 0
  %2583 = vmatpush1.bf16.msra.mxu0 %v1842
  %2584 = vmatprep.subr.bf16.mxu0 0
  %2585 = vmatpush1.bf16.msra.mxu0 %v1843
  %2586 = vmatprep.subr.bf16.mxu0 0
  %2587 = vmatpush1.bf16.msra.mxu0 %v1844
  %2588 = vmatprep.subr.bf16.mxu0 0
  %2589 = vmatpush1.bf16.msra.mxu0 %v1845
  %2590 = vmatprep.mubr.bf16.mxu0 %v617
  %2591 = vmatmul.mubr.bf16.gmra.mrb[0].mxu0 %v616
  %v2592 = vpop.f32.mrb[0].mxu0
  %v2593 = vadd.f32 %v2553, %v2592
  %v2594 = vpop.f32.mrb[0].mxu0
  %v2595 = vpop.f32.mrb[0].mxu0
  %v2596 = vpop.f32.mrb[0].mxu0
  %2597 = vdwg.mxu0
  %2598 = vmatprep.subr.bf16.mxu0 0
  %2599 = vmatpush1.bf16.msra.mxu0 %v1846
  %2600 = vmatprep.subr.bf16.mxu0 0
  %2601 = vmatpush1.bf16.msra.mxu0 %v1847
  %2602 = vmatprep.subr.bf16.mxu0 0
  %2603 = vmatpush1.bf16.msra.mxu0 %v1848
  %2604 = vmatprep.subr.bf16.mxu0 0
  %2605 = vmatpush1.bf16.msra.mxu0 %v1849
  %2606 = vmatprep.subr.bf16.mxu0 0
  %2607 = vmatpush1.bf16.msra.mxu0 %v1850
  %2608 = vmatprep.subr.bf16.mxu0 0
  %2609 = vmatpush1.bf16.msra.mxu0 %v1851
  %2610 = vmatprep.subr.bf16.mxu0 0
  %2611 = vmatpush1.bf16.msra.mxu0 %v1852
  %2612 = vmatprep.subr.bf16.mxu0 0
  %2613 = vmatpush1.bf16.msra.mxu0 %v1853
  %2614 = vmatprep.subr.bf16.mxu0 0
  %2615 = vmatpush1.bf16.msra.mxu0 %v1854
  %2616 = vmatprep.subr.bf16.mxu0 0
  %2617 = vmatpush1.bf16.msra.mxu0 %v1855
  %2618 = vmatprep.subr.bf16.mxu0 0
  %2619 = vmatpush1.bf16.msra.mxu0 %v1856
  %2620 = vmatprep.subr.bf16.mxu0 0
  %2621 = vmatpush1.bf16.msra.mxu0 %v1857
  %2622 = vmatprep.subr.bf16.mxu0 0
  %2623 = vmatpush1.bf16.msra.mxu0 %v1858
  %2624 = vmatprep.subr.bf16.mxu0 0
  %2625 = vmatpush1.bf16.msra.mxu0 %v1859
  %2626 = vmatprep.subr.bf16.mxu0 0
  %2627 = vmatpush1.bf16.msra.mxu0 %v1860
  %2628 = vmatprep.subr.bf16.mxu0 0
  %2629 = vmatpush1.bf16.msra.mxu0 %v1861
  %2630 = vmatprep.mubr.bf16.mxu0 %v619
  %2631 = vmatmul.mubr.bf16.gmra.mrb[0].mxu0 %v618
  %v2632 = vpop.f32.mrb[0].mxu0
  %v2633 = vadd.f32 %v2593, %v2632
  %v2634 = vpop.f32.mrb[0].mxu0
  %v2635 = vpop.f32.mrb[0].mxu0
  %v2636 = vpop.f32.mrb[0].mxu0
  %2637 = vdwg.mxu0
  %2638 = vmatprep.subr.bf16.mxu0 0
  %2639 = vmatpush1.bf16.msra.mxu0 %v1862
  %2640 = vmatprep.subr.bf16.mxu0 0
  %2641 = vmatpush1.bf16.msra.mxu0 %v1863
  %2642 = vmatprep.subr.bf16.mxu0 0
  %2643 = vmatpush1.bf16.msra.mxu0 %v1864
  %2644 = vmatprep.subr.bf16.mxu0 0
  %2645 = vmatpush1.bf16.msra.mxu0 %v1865
  %2646 = vmatprep.subr.bf16.mxu0 0
  %2647 = vmatpush1.bf16.msra.mxu0 %v1866
  %2648 = vmatprep.subr.bf16.mxu0 0
  %2649 = vmatpush1.bf16.msra.mxu0 %v1867
  %2650 = vmatprep.subr.bf16.mxu0 0
  %2651 = vmatpush1.bf16.msra.mxu0 %v1868
  %2652 = vmatprep.subr.bf16.mxu0 0
  %2653 = vmatpush1.bf16.msra.mxu0 %v1869
  %2654 = vmatprep.subr.bf16.mxu0 0
  %2655 = vmatpush1.bf16.msra.mxu0 %v1870
  %2656 = vmatprep.subr.bf16.mxu0 0
  %2657 = vmatpush1.bf16.msra.mxu0 %v1871
  %2658 = vmatprep.subr.bf16.mxu0 0
  %2659 = vmatpush1.bf16.msra.mxu0 %v1872
  %2660 = vmatprep.subr.bf16.mxu0 0
  %2661 = vmatpush1.bf16.msra.mxu0 %v1873
  %2662 = vmatprep.subr.bf16.mxu0 0
  %2663 = vmatpush1.bf16.msra.mxu0 %v1874
  %2664 = vmatprep.subr.bf16.mxu0 0
  %2665 = vmatpush1.bf16.msra.mxu0 %v1875
  %2666 = vmatprep.subr.bf16.mxu0 0
  %2667 = vmatpush1.bf16.msra.mxu0 %v1876
  %2668 = vmatprep.subr.bf16.mxu0 0
  %2669 = vmatpush1.bf16.msra.mxu0 %v1877
  %2670 = vmatprep.mubr.bf16.mxu0 %v621
  %2671 = vmatmul.mubr.bf16.gmra.mrb[0].mxu0 %v620
  %v2672 = vpop.f32.mrb[0].mxu0
  %v2673 = vadd.f32 %v2633, %v2672
  %v2674 = vpop.f32.mrb[0].mxu0
  %v2675 = vpop.f32.mrb[0].mxu0
  %v2676 = vpop.f32.mrb[0].mxu0
  %2677 = vdwg.mxu0
  %2678 = vmatprep.subr.bf16.mxu0 0
  %2679 = vmatpush1.bf16.msra.mxu0 %v1878
  %2680 = vmatprep.subr.bf16.mxu0 0
  %2681 = vmatpush1.bf16.msra.mxu0 %v1879
  %2682 = vmatprep.subr.bf16.mxu0 0
  %2683 = vmatpush1.bf16.msra.mxu0 %v1880
  %2684 = vmatprep.subr.bf16.mxu0 0
  %2685 = vmatpush1.bf16.msra.mxu0 %v1881
  %2686 = vmatprep.subr.bf16.mxu0 0
  %2687 = vmatpush1.bf16.msra.mxu0 %v1882
  %2688 = vmatprep.subr.bf16.mxu0 0
  %2689 = vmatpush1.bf16.msra.mxu0 %v1883
  %2690 = vmatprep.subr.bf16.mxu0 0
  %2691 = vmatpush1.bf16.msra.mxu0 %v1884
  %2692 = vmatprep.subr.bf16.mxu0 0
  %2693 = vmatpush1.bf16.msra.mxu0 %v1885
  %2694 = vmatprep.subr.bf16.mxu0 0
  %2695 = vmatpush1.bf16.msra.mxu0 %v1886
  %2696 = vmatprep.subr.bf16.mxu0 0
  %2697 = vmatpush1.bf16.msra.mxu0 %v1887
  %2698 = vmatprep.subr.bf16.mxu0 0
  %2699 = vmatpush1.bf16.msra.mxu0 %v1888
  %2700 = vmatprep.subr.bf16.mxu0 0
  %2701 = vmatpush1.bf16.msra.mxu0 %v1889
  %2702 = vmatprep.subr.bf16.mxu0 0
  %2703 = vmatpush1.bf16.msra.mxu0 %v1890
  %2704 = vmatprep.subr.bf16.mxu0 0
  %2705 = vmatpush1.bf16.msra.mxu0 %v1891
  %2706 = vmatprep.subr.bf16.mxu0 0
  %2707 = vmatpush1.bf16.msra.mxu0 %v1892
  %2708 = vmatprep.subr.bf16.mxu0 0
  %2709 = vmatpush1.bf16.msra.mxu0 %v1893
  %2710 = vmatprep.mubr.bf16.mxu0 %v623
  %2711 = vmatmul.mubr.bf16.gmra.mrb[0].mxu0 %v622
  %v2712 = vpop.f32.mrb[0].mxu0
  %v2713 = vadd.f32 %v2673, %v2712
  %v2714 = vpop.f32.mrb[0].mxu0
  %v2715 = vpop.f32.mrb[0].mxu0
  %v2716 = vpop.f32.mrb[0].mxu0
  %2717 = vdwg.mxu0
  %2718 = vmatprep.subr.bf16.mxu0 0
  %2719 = vmatpush1.bf16.msra.mxu0 %v1894
  %2720 = vmatprep.subr.bf16.mxu0 0
  %2721 = vmatpush1.bf16.msra.mxu0 %v1895
  %2722 = vmatprep.subr.bf16.mxu0 0
  %2723 = vmatpush1.bf16.msra.mxu0 %v1896
  %2724 = vmatprep.subr.bf16.mxu0 0
  %2725 = vmatpush1.bf16.msra.mxu0 %v1897
  %2726 = vmatprep.subr.bf16.mxu0 0
  %2727 = vmatpush1.bf16.msra.mxu0 %v1898
  %2728 = vmatprep.subr.bf16.mxu0 0
  %2729 = vmatpush1.bf16.msra.mxu0 %v1899
  %2730 = vmatprep.subr.bf16.mxu0 0
  %2731 = vmatpush1.bf16.msra.mxu0 %v1900
  %2732 = vmatprep.subr.bf16.mxu0 0
  %2733 = vmatpush1.bf16.msra.mxu0 %v1901
  %2734 = vmatprep.subr.bf16.mxu0 0
  %2735 = vmatpush1.bf16.msra.mxu0 %v1902
  %2736 = vmatprep.subr.bf16.mxu0 0
  %2737 = vmatpush1.bf16.msra.mxu0 %v1903
  %2738 = vmatprep.subr.bf16.mxu0 0
  %2739 = vmatpush1.bf16.msra.mxu0 %v1904
  %2740 = vmatprep.subr.bf16.mxu0 0
  %2741 = vmatpush1.bf16.msra.mxu0 %v1905
  %2742 = vmatprep.subr.bf16.mxu0 0
  %2743 = vmatpush1.bf16.msra.mxu0 %v1906
  %2744 = vmatprep.subr.bf16.mxu0 0
  %2745 = vmatpush1.bf16.msra.mxu0 %v1907
  %2746 = vmatprep.subr.bf16.mxu0 0
  %2747 = vmatpush1.bf16.msra.mxu0 %v1908
  %2748 = vmatprep.subr.bf16.mxu0 0
  %2749 = vmatpush1.bf16.msra.mxu0 %v1909
  %2750 = vmatprep.mubr.bf16.mxu0 %v625
  %2751 = vmatmul.mubr.bf16.gmra.mrb[0].mxu0 %v624
  %v2752 = vpop.f32.mrb[0].mxu0
  %v2753 = vadd.f32 %v2713, %v2752
  %v2754 = vpop.f32.mrb[0].mxu0
  %v2755 = vpop.f32.mrb[0].mxu0
  %v2756 = vpop.f32.mrb[0].mxu0
  %2757 = vdwg.mxu0
  %2758 = vmatprep.subr.bf16.mxu0 0
  %2759 = vmatpush1.bf16.msra.mxu0 %v1910
  %2760 = vmatprep.subr.bf16.mxu0 0
  %2761 = vmatpush1.bf16.msra.mxu0 %v1911
  %2762 = vmatprep.subr.bf16.mxu0 0
  %2763 = vmatpush1.bf16.msra.mxu0 %v1912
  %2764 = vmatprep.subr.bf16.mxu0 0
  %2765 = vmatpush1.bf16.msra.mxu0 %v1913
  %2766 = vmatprep.subr.bf16.mxu0 0
  %2767 = vmatpush1.bf16.msra.mxu0 %v1914
  %2768 = vmatprep.subr.bf16.mxu0 0
  %2769 = vmatpush1.bf16.msra.mxu0 %v1915
  %2770 = vmatprep.subr.bf16.mxu0 0
  %2771 = vmatpush1.bf16.msra.mxu0 %v1916
  %2772 = vmatprep.subr.bf16.mxu0 0
  %2773 = vmatpush1.bf16.msra.mxu0 %v1917
  %2774 = vmatprep.subr.bf16.mxu0 0
  %2775 = vmatpush1.bf16.msra.mxu0 %v1918
  %2776 = vmatprep.subr.bf16.mxu0 0
  %2777 = vmatpush1.bf16.msra.mxu0 %v1919
  %2778 = vmatprep.subr.bf16.mxu0 0
  %2779 = vmatpush1.bf16.msra.mxu0 %v1920
  %2780 = vmatprep.subr.bf16.mxu0 0
  %2781 = vmatpush1.bf16.msra.mxu0 %v1921
  %2782 = vmatprep.subr.bf16.mxu0 0
  %2783 = vmatpush1.bf16.msra.mxu0 %v1922
  %2784 = vmatprep.subr.bf16.mxu0 0
  %2785 = vmatpush1.bf16.msra.mxu0 %v1923
  %2786 = vmatprep.subr.bf16.mxu0 0
  %2787 = vmatpush1.bf16.msra.mxu0 %v1924
  %2788 = vmatprep.subr.bf16.mxu0 0
  %2789 = vmatpush1.bf16.msra.mxu0 %v1925
  %2790 = vmatprep.mubr.bf16.mxu0 %v627
  %2791 = vmatmul.mubr.bf16.gmra.mrb[0].mxu0 %v626
  %v2792 = vpop.f32.mrb[0].mxu0
  %v2793 = vadd.f32 %v2753, %v2792
  %v2794 = vpop.f32.mrb[0].mxu0
  %v2795 = vpop.f32.mrb[0].mxu0
  %v2796 = vpop.f32.mrb[0].mxu0
  %2797 = vdwg.mxu0
  %2798 = vmatprep.subr.bf16.mxu0 0
  %2799 = vmatpush1.bf16.msra.mxu0 %v1926
  %2800 = vmatprep.subr.bf16.mxu0 0
  %2801 = vmatpush1.bf16.msra.mxu0 %v1927
  %2802 = vmatprep.subr.bf16.mxu0 0
  %2803 = vmatpush1.bf16.msra.mxu0 %v1928
  %2804 = vmatprep.subr.bf16.mxu0 0
  %2805 = vmatpush1.bf16.msra.mxu0 %v1929
  %2806 = vmatprep.subr.bf16.mxu0 0
  %2807 = vmatpush1.bf16.msra.mxu0 %v1930
  %2808 = vmatprep.subr.bf16.mxu0 0
  %2809 = vmatpush1.bf16.msra.mxu0 %v1931
  %2810 = vmatprep.subr.bf16.mxu0 0
  %2811 = vmatpush1.bf16.msra.mxu0 %v1932
  %2812 = vmatprep.subr.bf16.mxu0 0
  %2813 = vmatpush1.bf16.msra.mxu0 %v1933
  %2814 = vmatprep.subr.bf16.mxu0 0
  %2815 = vmatpush1.bf16.msra.mxu0 %v1934
  %2816 = vmatprep.subr.bf16.mxu0 0
  %2817 = vmatpush1.bf16.msra.mxu0 %v1935
  %2818 = vmatprep.subr.bf16.mxu0 0
  %2819 = vmatpush1.bf16.msra.mxu0 %v1936
  %2820 = vmatprep.subr.bf16.mxu0 0
  %2821 = vmatpush1.bf16.msra.mxu0 %v1937
  %2822 = vmatprep.subr.bf16.mxu0 0
  %2823 = vmatpush1.bf16.msra.mxu0 %v1938
  %2824 = vmatprep.subr.bf16.mxu0 0
  %2825 = vmatpush1.bf16.msra.mxu0 %v1939
  %2826 = vmatprep.subr.bf16.mxu0 0
  %2827 = vmatpush1.bf16.msra.mxu0 %v1940
  %2828 = vmatprep.subr.bf16.mxu0 0
  %2829 = vmatpush1.bf16.msra.mxu0 %v1941
  %2830 = vmatprep.mubr.bf16.mxu0 %v629
  %2831 = vmatmul.mubr.bf16.gmra.mrb[0].mxu0 %v628
  %v2832 = vpop.f32.mrb[0].mxu0
  %v2833 = vadd.f32 %v2793, %v2832
  %v2834 = vpop.f32.mrb[0].mxu0
  %v2835 = vpop.f32.mrb[0].mxu0
  %v2836 = vpop.f32.mrb[0].mxu0
  %2837 = vdwg.mxu0
  %2838 = vst [vmem:[%s3] sm:$0xff] %v2833
  // Predicated region
  $region14: #{angle_classifier_forward.4} parent=0 // pred_check
    _
  $region15: #{angle_classifier_forward.4} parent=0 // pred_check_branch
    %2840 = sbr.rel (0) target = $region17
  $region16: #{angle_classifier_forward.4} parent=0 // pred_region
    _
  $region17: #{angle_classifier_forward.4} parent=0 // pred_fallthru
    _
  // Predicated region
  $region18: #{angle_classifier_forward.4} parent=0 // pred_check
    _
  $region19: #{angle_classifier_forward.4} parent=0 // pred_check_branch
    %2842 = sbr.rel (0) target = $region21
  $region20: #{angle_classifier_forward.4} parent=0 // pred_region
    _
  $region21: #{angle_classifier_forward.4} parent=0 // pred_fallthru
    _

// kernel: angle_classifier_forward.5
$region0: #{angle_classifier_forward.5}
  #allocation0 [shape = 'u32[]', space=smem, size = 0x4, offset = 0x4, fixed_abs, tag = 'smem constant byte address 0x4 - core index']
  #allocation1 [shape = 'u32[144,128]{1,0:T(1,128)}', space=vmem, size = 0x12000, scoped, tag = 'internal scratch']
  %s0 = inlined_call_operand.vmem [shape: f32[16,128], index: 0, kind: input, shape index: {}]
  %s1 = inlined_call_operand.vmem [shape: bf16[12,128,384], index: 1, kind: input, shape index: {}]
  %s2 = inlined_call_operand.vmem [shape: f32[12,1,384], index: 2, kind: input, shape index: {}]
  %s3 = inlined_call_operand.vmem [shape: bf16[12,128,128], index: 3, kind: input, shape index: {}]
  %s4 = inlined_call_operand.vmem [shape: f32[12,1,128], index: 4, kind: input, shape index: {}]
  %s5 = inlined_call_operand.vmem [shape: f32[12,1,128], index: 5, kind: input, shape index: {}]
  %s6 = inlined_call_operand.vmem [shape: f32[12,1,128], index: 6, kind: input, shape index: {}]
  %s7 = inlined_call_operand.vmem [shape: f32[12,1,128], index: 7, kind: input, shape index: {}]
  %s8 = inlined_call_operand.vmem [shape: f32[12,1,128], index: 8, kind: input, shape index: {}]
  %s9 = inlined_call_operand.vmem [shape: bf16[12,128,256], index: 9, kind: input, shape index: {}]
  %s10 = inlined_call_operand.vmem [shape: f32[12,1,256], index: 10, kind: input, shape index: {}]
  %s11 = inlined_call_operand.vmem [shape: bf16[12,256,128], index: 11, kind: input, shape index: {}]
  %s12 = inlined_call_operand.vmem [shape: f32[12,1,128], index: 12, kind: input, shape index: {}]
  %s13 = inlined_call_operand.vmem [shape: f32[16,128], index: 13, kind: output, shape index: {}]
  %s14 = sld [smem:[#allocation0]]
  $region89: #{angle_classifier_forward.5} parent=0
    _
  %s16 = ssub.s32 1, %s14
  %s17 = scalar_select 0, %s16, %s14
  loop: start=0, step=1, limit=14
  $region2: #{angle_classifier_forward.5} parent=0 // loop_pre_header
    _
  $region3: #{angle_classifier_forward.5} parent=0 // loop_header
    %s19 = sphi 0, %s23
    %p20 = scmp.ge.s32.totalorder %s19, 14
    %s27 = sphi 0, %s27
    %s29 = sphi 0, %s27
    %s30 = sphi 0, %s29
    %s44 = sphi 0, %s30
    %s50 = sphi 0, %s52
    %s53 = sphi 0, %s50
    %s54 = sphi 0, %s53
    %s70 = sphi 0, %s54
    %s76 = sphi 0, %s78
    %s79 = sphi 0, %s76
    %s80 = sphi 0, %s79
    %s96 = sphi 0, %s80
    %s102 = sphi 0, %s104
    %s105 = sphi 0, %s102
    %s106 = sphi 0, %s105
    %s122 = sphi 0, %s106
    %s128 = sphi 0, %s130
    %s131 = sphi 0, %s128
    %s132 = sphi 0, %s131
    %s148 = sphi 0, %s132
    %s154 = sphi 0, %s156
    %s157 = sphi 0, %s154
    %s158 = sphi 0, %s157
    %s174 = sphi 0, %s158
    %s180 = sphi 0, %s182
    %s183 = sphi 0, %s180
    %s184 = sphi 0, %s183
    %s200 = sphi 0, %s184
    %s206 = sphi 0, %s208
    %s209 = sphi 0, %s206
    %s210 = sphi 0, %s209
    %s226 = sphi 0, %s210
    %s232 = sphi 0, %s234
    %s235 = sphi 0, %s232
    %s236 = sphi 0, %s235
    %s252 = sphi 0, %s236
    %s258 = sphi 0, %s260
    %s261 = sphi 0, %s258
    %s262 = sphi 0, %s261
    %s278 = sphi 0, %s262
    %s284 = sphi 0, %s286
    %s287 = sphi 0, %s284
    %s288 = sphi 0, %s287
    %s304 = sphi 0, %s288
    %s310 = sphi 0, %s312
    %s313 = sphi 0, %s310
    %s314 = sphi 0, %s313
    %s330 = sphi 0, %s314
    %s336 = sphi 0, %s338
    %s339 = sphi 0, %s336
    %s340 = sphi 0, %s339
    %s356 = sphi 0, %s340
    %s360 = sphi 0, %s360
    %s362 = sphi 0, %s360
    %s363 = sphi 0, %s362
    %s377 = sphi 0, %s363
  $region4: #{angle_classifier_forward.5} parent=0 // loop_header_branch
    %22 = sbr.rel (%p20) target = $region8
  $region5: #{angle_classifier_forward.5} parent=0 // loop_body
    %s24 = ssub.s32 %s19, 1
    %s25 = ssub.s32 %s19, 2
    %s26 = sadd.s32 %s19, 1
    %s28 = sadd.s32 %s27, 1
    %p31 = scmp.eq.s32.totalorder %s19, 11
    %p32 = scmp.ne.s32.totalorder %s27, %s29
    %p33 = scmp.eq.s32.totalorder %s19, 0
    %p34 = por %p32, %p33
    %p35 = scmp.ne.s32.totalorder %s27, %s29
    %p36 = scmp.eq.s32.totalorder %s24, 11
    %p37 = por %p35, %p36
    %p38 = scmp.ne.s32.totalorder %s29, %s30
    %p39 = scmp.eq.s32.totalorder %s24, 0
    %p40 = por %p38, %p39
    %p41 = scmp.ne.s32.totalorder %s29, %s30
    %p42 = scmp.eq.s32.totalorder %s25, 11
    %p43 = por %p41, %p42
    %p45 = scmp.ne.s32.totalorder %s30, %s44
    %p46 = scmp.eq.s32.totalorder %s25, 0
    %p47 = por %p45, %p46
    %s48 = ssub.s32 %s19, %s26
    %p49 = scmp.eq.s32.totalorder %s48, 0
    %s51 = sadd.s32 %s50, 1
    %s52 = scalar_select %p49, %s50, %s51
    %p55 = pneg %p49
    %p56 = scmp.eq.s32.totalorder %s19, 11
    %p57 = por %p55, %p56
    %p58 = scmp.ne.s32.totalorder %s50, %s53
    %p59 = scmp.eq.s32.totalorder %s19, 0
    %p60 = por %p58, %p59
    %p61 = scmp.ne.s32.totalorder %s50, %s53
    %p62 = scmp.eq.s32.totalorder %s24, 11
    %p63 = por %p61, %p62
    %p64 = scmp.ne.s32.totalorder %s53, %s54
    %p65 = scmp.eq.s32.totalorder %s24, 0
    %p66 = por %p64, %p65
    %p67 = scmp.ne.s32.totalorder %s53, %s54
    %p68 = scmp.eq.s32.totalorder %s25, 11
    %p69 = por %p67, %p68
    %p71 = scmp.ne.s32.totalorder %s54, %s70
    %p72 = scmp.eq.s32.totalorder %s25, 0
    %p73 = por %p71, %p72
    %s74 = ssub.s32 %s19, %s26
    %p75 = scmp.eq.s32.totalorder %s74, 0
    %s77 = sadd.s32 %s76, 1
    %s78 = scalar_select %p75, %s76, %s77
    %p81 = pneg %p75
    %p82 = scmp.eq.s32.totalorder %s19, 11
    %p83 = por %p81, %p82
    %p84 = scmp.ne.s32.totalorder %s76, %s79
    %p85 = scmp.eq.s32.totalorder %s19, 0
    %p86 = por %p84, %p85
    %p87 = scmp.ne.s32.totalorder %s76, %s79
    %p88 = scmp.eq.s32.totalorder %s24, 11
    %p89 = por %p87, %p88
    %p90 = scmp.ne.s32.totalorder %s79, %s80
    %p91 = scmp.eq.s32.totalorder %s24, 0
    %p92 = por %p90, %p91
    %p93 = scmp.ne.s32.totalorder %s79, %s80
    %p94 = scmp.eq.s32.totalorder %s25, 11
    %p95 = por %p93, %p94
    %p97 = scmp.ne.s32.totalorder %s80, %s96
    %p98 = scmp.eq.s32.totalorder %s25, 0
    %p99 = por %p97, %p98
    %s100 = ssub.s32 %s19, %s26
    %p101 = scmp.eq.s32.totalorder %s100, 0
    %s103 = sadd.s32 %s102, 1
    %s104 = scalar_select %p101, %s102, %s103
    %p107 = pneg %p101
    %p108 = scmp.eq.s32.totalorder %s19, 11
    %p109 = por %p107, %p108
    %p110 = scmp.ne.s32.totalorder %s102, %s105
    %p111 = scmp.eq.s32.totalorder %s19, 0
    %p112 = por %p110, %p111
    %p113 = scmp.ne.s32.totalorder %s102, %s105
    %p114 = scmp.eq.s32.totalorder %s24, 11
    %p115 = por %p113, %p114
    %p116 = scmp.ne.s32.totalorder %s105, %s106
    %p117 = scmp.eq.s32.totalorder %s24, 0
    %p118 = por %p116, %p117
    %p119 = scmp.ne.s32.totalorder %s105, %s106
    %p120 = scmp.eq.s32.totalorder %s25, 11
    %p121 = por %p119, %p120
    %p123 = scmp.ne.s32.totalorder %s106, %s122
    %p124 = scmp.eq.s32.totalorder %s25, 0
    %p125 = por %p123, %p124
    %s126 = ssub.s32 %s19, %s26
    %p127 = scmp.eq.s32.totalorder %s126, 0
    %s129 = sadd.s32 %s128, 1
    %s130 = scalar_select %p127, %s128, %s129
    %p133 = pneg %p127
    %p134 = scmp.eq.s32.totalorder %s19, 11
    %p135 = por %p133, %p134
    %p136 = scmp.ne.s32.totalorder %s128, %s131
    %p137 = scmp.eq.s32.totalorder %s19, 0
    %p138 = por %p136, %p137
    %p139 = scmp.ne.s32.totalorder %s128, %s131
    %p140 = scmp.eq.s32.totalorder %s24, 11
    %p141 = por %p139, %p140
    %p142 = scmp.ne.s32.totalorder %s131, %s132
    %p143 = scmp.eq.s32.totalorder %s24, 0
    %p144 = por %p142, %p143
    %p145 = scmp.ne.s32.totalorder %s131, %s132
    %p146 = scmp.eq.s32.totalorder %s25, 11
    %p147 = por %p145, %p146
    %p149 = scmp.ne.s32.totalorder %s132, %s148
    %p150 = scmp.eq.s32.totalorder %s25, 0
    %p151 = por %p149, %p150
    %s152 = ssub.s32 %s19, %s26
    %p153 = scmp.eq.s32.totalorder %s152, 0
    %s155 = sadd.s32 %s154, 1
    %s156 = scalar_select %p153, %s154, %s155
    %p159 = pneg %p153
    %p160 = scmp.eq.s32.totalorder %s19, 11
    %p161 = por %p159, %p160
    %p162 = scmp.ne.s32.totalorder %s154, %s157
    %p163 = scmp.eq.s32.totalorder %s19, 0
    %p164 = por %p162, %p163
    %p165 = scmp.ne.s32.totalorder %s154, %s157
    %p166 = scmp.eq.s32.totalorder %s24, 11
    %p167 = por %p165, %p166
    %p168 = scmp.ne.s32.totalorder %s157, %s158
    %p169 = scmp.eq.s32.totalorder %s24, 0
    %p170 = por %p168, %p169
    %p171 = scmp.ne.s32.totalorder %s157, %s158
    %p172 = scmp.eq.s32.totalorder %s25, 11
    %p173 = por %p171, %p172
    %p175 = scmp.ne.s32.totalorder %s158, %s174
    %p176 = scmp.eq.s32.totalorder %s25, 0
    %p177 = por %p175, %p176
    %s178 = ssub.s32 %s19, %s26
    %p179 = scmp.eq.s32.totalorder %s178, 0
    %s181 = sadd.s32 %s180, 1
    %s182 = scalar_select %p179, %s180, %s181
    %p185 = pneg %p179
    %p186 = scmp.eq.s32.totalorder %s19, 11
    %p187 = por %p185, %p186
    %p188 = scmp.ne.s32.totalorder %s180, %s183
    %p189 = scmp.eq.s32.totalorder %s19, 0
    %p190 = por %p188, %p189
    %p191 = scmp.ne.s32.totalorder %s180, %s183
    %p192 = scmp.eq.s32.totalorder %s24, 11
    %p193 = por %p191, %p192
    %p194 = scmp.ne.s32.totalorder %s183, %s184
    %p195 = scmp.eq.s32.totalorder %s24, 0
    %p196 = por %p194, %p195
    %p197 = scmp.ne.s32.totalorder %s183, %s184
    %p198 = scmp.eq.s32.totalorder %s25, 11
    %p199 = por %p197, %p198
    %p201 = scmp.ne.s32.totalorder %s184, %s200
    %p202 = scmp.eq.s32.totalorder %s25, 0
    %p203 = por %p201, %p202
    %s204 = ssub.s32 %s19, %s26
    %p205 = scmp.eq.s32.totalorder %s204, 0
    %s207 = sadd.s32 %s206, 1
    %s208 = scalar_select %p205, %s206, %s207
    %p211 = pneg %p205
    %p212 = scmp.eq.s32.totalorder %s19, 11
    %p213 = por %p211, %p212
    %p214 = scmp.ne.s32.totalorder %s206, %s209
    %p215 = scmp.eq.s32.totalorder %s19, 0
    %p216 = por %p214, %p215
    %p217 = scmp.ne.s32.totalorder %s206, %s209
    %p218 = scmp.eq.s32.totalorder %s24, 11
    %p219 = por %p217, %p218
    %p220 = scmp.ne.s32.totalorder %s209, %s210
    %p221 = scmp.eq.s32.totalorder %s24, 0
    %p222 = por %p220, %p221
    %p223 = scmp.ne.s32.totalorder %s209, %s210
    %p224 = scmp.eq.s32.totalorder %s25, 11
    %p225 = por %p223, %p224
    %p227 = scmp.ne.s32.totalorder %s210, %s226
    %p228 = scmp.eq.s32.totalorder %s25, 0
    %p229 = por %p227, %p228
    %s230 = ssub.s32 %s19, %s26
    %p231 = scmp.eq.s32.totalorder %s230, 0
    %s233 = sadd.s32 %s232, 1
    %s234 = scalar_select %p231, %s232, %s233
    %p237 = pneg %p231
    %p238 = scmp.eq.s32.totalorder %s19, 11
    %p239 = por %p237, %p238
    %p240 = scmp.ne.s32.totalorder %s232, %s235
    %p241 = scmp.eq.s32.totalorder %s19, 0
    %p242 = por %p240, %p241
    %p243 = scmp.ne.s32.totalorder %s232, %s235
    %p244 = scmp.eq.s32.totalorder %s24, 11
    %p245 = por %p243, %p244
    %p246 = scmp.ne.s32.totalorder %s235, %s236
    %p247 = scmp.eq.s32.totalorder %s24, 0
    %p248 = por %p246, %p247
    %p249 = scmp.ne.s32.totalorder %s235, %s236
    %p250 = scmp.eq.s32.totalorder %s25, 11
    %p251 = por %p249, %p250
    %p253 = scmp.ne.s32.totalorder %s236, %s252
    %p254 = scmp.eq.s32.totalorder %s25, 0
    %p255 = por %p253, %p254
    %s256 = ssub.s32 %s19, %s26
    %p257 = scmp.eq.s32.totalorder %s256, 0
    %s259 = sadd.s32 %s258, 1
    %s260 = scalar_select %p257, %s258, %s259
    %p263 = pneg %p257
    %p264 = scmp.eq.s32.totalorder %s19, 11
    %p265 = por %p263, %p264
    %p266 = scmp.ne.s32.totalorder %s258, %s261
    %p267 = scmp.eq.s32.totalorder %s19, 0
    %p268 = por %p266, %p267
    %p269 = scmp.ne.s32.totalorder %s258, %s261
    %p270 = scmp.eq.s32.totalorder %s24, 11
    %p271 = por %p269, %p270
    %p272 = scmp.ne.s32.totalorder %s261, %s262
    %p273 = scmp.eq.s32.totalorder %s24, 0
    %p274 = por %p272, %p273
    %p275 = scmp.ne.s32.totalorder %s261, %s262
    %p276 = scmp.eq.s32.totalorder %s25, 11
    %p277 = por %p275, %p276
    %p279 = scmp.ne.s32.totalorder %s262, %s278
    %p280 = scmp.eq.s32.totalorder %s25, 0
    %p281 = por %p279, %p280
    %s282 = ssub.s32 %s19, %s26
    %p283 = scmp.eq.s32.totalorder %s282, 0
    %s285 = sadd.s32 %s284, 1
    %s286 = scalar_select %p283, %s284, %s285
    %p289 = pneg %p283
    %p290 = scmp.eq.s32.totalorder %s19, 11
    %p291 = por %p289, %p290
    %p292 = scmp.ne.s32.totalorder %s284, %s287
    %p293 = scmp.eq.s32.totalorder %s19, 0
    %p294 = por %p292, %p293
    %p295 = scmp.ne.s32.totalorder %s284, %s287
    %p296 = scmp.eq.s32.totalorder %s24, 11
    %p297 = por %p295, %p296
    %p298 = scmp.ne.s32.totalorder %s287, %s288
    %p299 = scmp.eq.s32.totalorder %s24, 0
    %p300 = por %p298, %p299
    %p301 = scmp.ne.s32.totalorder %s287, %s288
    %p302 = scmp.eq.s32.totalorder %s25, 11
    %p303 = por %p301, %p302
    %p305 = scmp.ne.s32.totalorder %s288, %s304
    %p306 = scmp.eq.s32.totalorder %s25, 0
    %p307 = por %p305, %p306
    %s308 = ssub.s32 %s19, %s26
    %p309 = scmp.eq.s32.totalorder %s308, 0
    %s311 = sadd.s32 %s310, 1
    %s312 = scalar_select %p309, %s310, %s311
    %p315 = pneg %p309
    %p316 = scmp.eq.s32.totalorder %s19, 11
    %p317 = por %p315, %p316
    %p318 = scmp.ne.s32.totalorder %s310, %s313
    %p319 = scmp.eq.s32.totalorder %s19, 0
    %p320 = por %p318, %p319
    %p321 = scmp.ne.s32.totalorder %s310, %s313
    %p322 = scmp.eq.s32.totalorder %s24, 11
    %p323 = por %p321, %p322
    %p324 = scmp.ne.s32.totalorder %s313, %s314
    %p325 = scmp.eq.s32.totalorder %s24, 0
    %p326 = por %p324, %p325
    %p327 = scmp.ne.s32.totalorder %s313, %s314
    %p328 = scmp.eq.s32.totalorder %s25, 11
    %p329 = por %p327, %p328
    %p331 = scmp.ne.s32.totalorder %s314, %s330
    %p332 = scmp.eq.s32.totalorder %s25, 0
    %p333 = por %p331, %p332
    %s334 = ssub.s32 %s19, %s26
    %p335 = scmp.eq.s32.totalorder %s334, 0
    %s337 = sadd.s32 %s336, 1
    %s338 = scalar_select %p335, %s336, %s337
    %p341 = pneg %p335
    %p342 = scmp.eq.s32.totalorder %s19, 11
    %p343 = por %p341, %p342
    %p344 = scmp.ne.s32.totalorder %s336, %s339
    %p345 = scmp.eq.s32.totalorder %s19, 0
    %p346 = por %p344, %p345
    %p347 = scmp.ne.s32.totalorder %s336, %s339
    %p348 = scmp.eq.s32.totalorder %s24, 11
    %p349 = por %p347, %p348
    %p350 = scmp.ne.s32.totalorder %s339, %s340
    %p351 = scmp.eq.s32.totalorder %s24, 0
    %p352 = por %p350, %p351
    %p353 = scmp.ne.s32.totalorder %s339, %s340
    %p354 = scmp.eq.s32.totalorder %s25, 11
    %p355 = por %p353, %p354
    %p357 = scmp.ne.s32.totalorder %s340, %s356
    %p358 = scmp.eq.s32.totalorder %s25, 0
    %p359 = por %p357, %p358
    %s361 = sadd.s32 %s360, 1
    %p364 = scmp.eq.s32.totalorder %s19, 11
    %p365 = scmp.ne.s32.totalorder %s360, %s362
    %p366 = scmp.eq.s32.totalorder %s19, 0
    %p367 = por %p365, %p366
    %p368 = scmp.ne.s32.totalorder %s360, %s362
    %p369 = scmp.eq.s32.totalorder %s24, 11
    %p370 = por %p368, %p369
    %p371 = scmp.ne.s32.totalorder %s362, %s363
    %p372 = scmp.eq.s32.totalorder %s24, 0
    %p373 = por %p371, %p372
    %p374 = scmp.ne.s32.totalorder %s362, %s363
    %p375 = scmp.eq.s32.totalorder %s25, 11
    %p376 = por %p374, %p375
    %p378 = scmp.ne.s32.totalorder %s363, %s377
    %p379 = scmp.eq.s32.totalorder %s25, 0
    %p380 = por %p378, %p379
    %p381 = scmp.le.s32.totalorder 1, %s19
    %p382 = scmp.lt.s32.totalorder %s19, 13
    %p383 = pnand %p381, %p382
    %p384 = pneg %p383
    // Predicated region
    $region9: #{angle_classifier_forward.5} parent=5 // pred_check
      _
    $region10: #{angle_classifier_forward.5} parent=5 // pred_check_branch
      %386 = sbr.rel (%p383) target = $region12
    $region11: #{angle_classifier_forward.5} parent=5 // pred_region
      %s387 = ssub.s32 %s19, 1
      // Predicated region
      $region13: #{angle_classifier_forward.5} parent=11 // pred_check
        %p388 = pneg %p40
      $region14: #{angle_classifier_forward.5} parent=11 // pred_check_branch
        %390 = sbr.rel (%p388) target = $region16
      $region15: #{angle_classifier_forward.5} parent=11 // pred_region
        _
      $region16: #{angle_classifier_forward.5} parent=11 // pred_fallthru
        _
    $region12: #{angle_classifier_forward.5} parent=5 // pred_fallthru
      _
    %p391 = scmp.lt.s32.totalorder %s19, 12
    // Predicated region
    $region17: #{angle_classifier_forward.5} parent=5 // pred_check
      %p392 = pneg %p391
    $region18: #{angle_classifier_forward.5} parent=5 // pred_check_branch
      %394 = sbr.rel (%p392) target = $region20
    $region19: #{angle_classifier_forward.5} parent=5 // pred_region
      // Predicated region
      $region21: #{angle_classifier_forward.5} parent=19 // pred_check
        %p395 = pneg %p60
      $region22: #{angle_classifier_forward.5} parent=19 // pred_check_branch
        %397 = sbr.rel (%p395) target = $region24
      $region23: #{angle_classifier_forward.5} parent=19 // pred_region
        %p398 = scmp.lt.s32.totalorder %s19, 11
        %s399 = scalar_select %p398, %s19, 11
        %s400 = smul.addr %s399, 48
        %s401 = smul.addr %s400, 4
        %s402 = scalar_lea.vmem %s1, %s401
      $region24: #{angle_classifier_forward.5} parent=19 // pred_fallthru
        _
      // Predicated region
      $region25: #{angle_classifier_forward.5} parent=19 // pred_check
        %p403 = pneg %p86
      $region26: #{angle_classifier_forward.5} parent=19 // pred_check_branch
        %405 = sbr.rel (%p403) target = $region28
      $region27: #{angle_classifier_forward.5} parent=19 // pred_region
        %p406 = scmp.lt.s32.totalorder %s19, 11
        %s407 = scalar_select %p406, %s19, 11
        %s408 = smul.addr %s407, 3
        %s409 = scalar_lea.vmem %s2, %s408
      $region28: #{angle_classifier_forward.5} parent=19 // pred_fallthru
        _
      // Predicated region
      $region29: #{angle_classifier_forward.5} parent=19 // pred_check
        %p410 = pneg %p112
      $region30: #{angle_classifier_forward.5} parent=19 // pred_check_branch
        %412 = sbr.rel (%p410) target = $region32
      $region31: #{angle_classifier_forward.5} parent=19 // pred_region
        %p413 = scmp.lt.s32.totalorder %s19, 11
        %s414 = scalar_select %p413, %s19, 11
        %s415 = smul.addr %s414, 16
        %s416 = smul.addr %s415, 4
        %s417 = scalar_lea.vmem %s3, %s416
      $region32: #{angle_classifier_forward.5} parent=19 // pred_fallthru
        _
      // Predicated region
      $region33: #{angle_classifier_forward.5} parent=19 // pred_check
        %p418 = pneg %p138
      $region34: #{angle_classifier_forward.5} parent=19 // pred_check_branch
        %420 = sbr.rel (%p418) target = $region36
      $region35: #{angle_classifier_forward.5} parent=19 // pred_region
        %p421 = scmp.lt.s32.totalorder %s19, 11
        %s422 = scalar_select %p421, %s19, 11
        %s423 = scalar_lea.vmem %s4, %s422
      $region36: #{angle_classifier_forward.5} parent=19 // pred_fallthru
        _
      // Predicated region
      $region37: #{angle_classifier_forward.5} parent=19 // pred_check
        %p424 = pneg %p164
      $region38: #{angle_classifier_forward.5} parent=19 // pred_check_branch
        %426 = sbr.rel (%p424) target = $region40
      $region39: #{angle_classifier_forward.5} parent=19 // pred_region
        %p427 = scmp.lt.s32.totalorder %s19, 11
        %s428 = scalar_select %p427, %s19, 11
        %s429 = scalar_lea.vmem %s5, %s428
      $region40: #{angle_classifier_forward.5} parent=19 // pred_fallthru
        _
      // Predicated region
      $region41: #{angle_classifier_forward.5} parent=19 // pred_check
        %p430 = pneg %p190
      $region42: #{angle_classifier_forward.5} parent=19 // pred_check_branch
        %432 = sbr.rel (%p430) target = $region44
      $region43: #{angle_classifier_forward.5} parent=19 // pred_region
        %p433 = scmp.lt.s32.totalorder %s19, 11
        %s434 = scalar_select %p433, %s19, 11
        %s435 = scalar_lea.vmem %s6, %s434
      $region44: #{angle_classifier_forward.5} parent=19 // pred_fallthru
        _
      // Predicated region
      $region45: #{angle_classifier_forward.5} parent=19 // pred_check
        %p436 = pneg %p216
      $region46: #{angle_classifier_forward.5} parent=19 // pred_check_branch
        %438 = sbr.rel (%p436) target = $region48
      $region47: #{angle_classifier_forward.5} parent=19 // pred_region
        %p439 = scmp.lt.s32.totalorder %s19, 11
        %s440 = scalar_select %p439, %s19, 11
        %s441 = scalar_lea.vmem %s7, %s440
      $region48: #{angle_classifier_forward.5} parent=19 // pred_fallthru
        _
      // Predicated region
      $region49: #{angle_classifier_forward.5} parent=19 // pred_check
        %p442 = pneg %p242
      $region50: #{angle_classifier_forward.5} parent=19 // pred_check_branch
        %444 = sbr.rel (%p442) target = $region52
      $region51: #{angle_classifier_forward.5} parent=19 // pred_region
        %p445 = scmp.lt.s32.totalorder %s19, 11
        %s446 = scalar_select %p445, %s19, 11
        %s447 = scalar_lea.vmem %s8, %s446
      $region52: #{angle_classifier_forward.5} parent=19 // pred_fallthru
        _
      // Predicated region
      $region53: #{angle_classifier_forward.5} parent=19 // pred_check
        %p448 = pneg %p268
      $region54: #{angle_classifier_forward.5} parent=19 // pred_check_branch
        %450 = sbr.rel (%p448) target = $region56
      $region55: #{angle_classifier_forward.5} parent=19 // pred_region
        %p451 = scmp.lt.s32.totalorder %s19, 11
        %s452 = scalar_select %p451, %s19, 11
        %s453 = smul.addr %s452, 32
        %s454 = smul.addr %s453, 4
        %s455 = scalar_lea.vmem %s9, %s454
      $region56: #{angle_classifier_forward.5} parent=19 // pred_fallthru
        _
      // Predicated region
      $region57: #{angle_classifier_forward.5} parent=19 // pred_check
        %p456 = pneg %p294
      $region58: #{angle_classifier_forward.5} parent=19 // pred_check_branch
        %458 = sbr.rel (%p456) target = $region60
      $region59: #{angle_classifier_forward.5} parent=19 // pred_region
        %p459 = scmp.lt.s32.totalorder %s19, 11
        %s460 = scalar_select %p459, %s19, 11
        %s461 = smul.addr %s460, 2
        %s462 = scalar_lea.vmem %s10, %s461
      $region60: #{angle_classifier_forward.5} parent=19 // pred_fallthru
        _
      // Predicated region
      $region61: #{angle_classifier_forward.5} parent=19 // pred_check
        %p463 = pneg %p320
      $region62: #{angle_classifier_forward.5} parent=19 // pred_check_branch
        %465 = sbr.rel (%p463) target = $region64
      $region63: #{angle_classifier_forward.5} parent=19 // pred_region
        %p466 = scmp.lt.s32.totalorder %s19, 11
        %s467 = scalar_select %p466, %s19, 11
        %s468 = smul.addr %s467, 32
        %s469 = smul.addr %s468, 4
        %s470 = scalar_lea.vmem %s11, %s469
      $region64: #{angle_classifier_forward.5} parent=19 // pred_fallthru
        _
      // Predicated region
      $region65: #{angle_classifier_forward.5} parent=19 // pred_check
        %p471 = pneg %p346
      $region66: #{angle_classifier_forward.5} parent=19 // pred_check_branch
        %473 = sbr.rel (%p471) target = $region68
      $region67: #{angle_classifier_forward.5} parent=19 // pred_region
        %p474 = scmp.lt.s32.totalorder %s19, 11
        %s475 = scalar_select %p474, %s19, 11
        %s476 = scalar_lea.vmem %s12, %s475
      $region68: #{angle_classifier_forward.5} parent=19 // pred_fallthru
        _
    $region20: #{angle_classifier_forward.5} parent=5 // pred_fallthru
      _
    %p477 = scmp.le.s32.totalorder 1, %s19
    %p478 = scmp.lt.s32.totalorder %s19, 13
    %p479 = pnand %p477, %p478
    %p480 = pneg %p479
    // Predicated region
    $region69: #{angle_classifier_forward.5} parent=5 // pred_check
      _
    $region70: #{angle_classifier_forward.5} parent=5 // pred_check_branch
      %482 = sbr.rel (%p479) target = $region72
    $region71: #{angle_classifier_forward.5} parent=5 // pred_region
      %s483 = ssub.s32 %s19, 1
      %p484 = pneg %p40
      %p485 = pneg %p37
      %p486 = scmp.lt.s32.totalorder %s24, 11
      %s487 = scalar_select %p486, %s24, 11
      %s488 = smul.addr %s487, 48
      %s489 = smul.addr %s488, 4
      %s490 = scalar_lea.vmem %s1, %s489
      %p491 = pneg %p66
      %p492 = pneg %p63
      %p493 = scmp.lt.s32.totalorder %s24, 11
      %s494 = scalar_select %p493, %s24, 11
      %s495 = smul.addr %s494, 3
      %s496 = scalar_lea.vmem %s2, %s495
      %p497 = pneg %p92
      %p498 = pneg %p89
      %p499 = scmp.lt.s32.totalorder %s24, 11
      %s500 = scalar_select %p499, %s24, 11
      %s501 = smul.addr %s500, 16
      %s502 = smul.addr %s501, 4
      %s503 = scalar_lea.vmem %s3, %s502
      %p504 = pneg %p118
      %p505 = pneg %p115
      %p506 = scmp.lt.s32.totalorder %s24, 11
      %s507 = scalar_select %p506, %s24, 11
      %s508 = scalar_lea.vmem %s4, %s507
      %p509 = pneg %p144
      %p510 = pneg %p141
      %p511 = scmp.lt.s32.totalorder %s24, 11
      %s512 = scalar_select %p511, %s24, 11
      %s513 = scalar_lea.vmem %s5, %s512
      %p514 = pneg %p170
      %p515 = pneg %p167
      %p516 = scmp.lt.s32.totalorder %s24, 11
      %s517 = scalar_select %p516, %s24, 11
      %s518 = scalar_lea.vmem %s6, %s517
      %p519 = pneg %p196
      %p520 = pneg %p193
      %p521 = scmp.lt.s32.totalorder %s24, 11
      %s522 = scalar_select %p521, %s24, 11
      %s523 = scalar_lea.vmem %s7, %s522
      %p524 = pneg %p222
      %p525 = pneg %p219
      %p526 = scmp.lt.s32.totalorder %s24, 11
      %s527 = scalar_select %p526, %s24, 11
      %s528 = scalar_lea.vmem %s8, %s527
      %p529 = pneg %p248
      %p530 = pneg %p245
      %p531 = scmp.lt.s32.totalorder %s24, 11
      %s532 = scalar_select %p531, %s24, 11
      %s533 = smul.addr %s532, 32
      %s534 = smul.addr %s533, 4
      %s535 = scalar_lea.vmem %s9, %s534
      %p536 = pneg %p274
      %p537 = pneg %p271
      %p538 = scmp.lt.s32.totalorder %s24, 11
      %s539 = scalar_select %p538, %s24, 11
      %s540 = smul.addr %s539, 2
      %s541 = scalar_lea.vmem %s10, %s540
      %p542 = pneg %p300
      %p543 = pneg %p297
      %p544 = scmp.lt.s32.totalorder %s24, 11
      %s545 = scalar_select %p544, %s24, 11
      %s546 = smul.addr %s545, 32
      %s547 = smul.addr %s546, 4
      %s548 = scalar_lea.vmem %s11, %s547
      %p549 = pneg %p326
      %p550 = pneg %p323
      %p551 = scmp.lt.s32.totalorder %s24, 11
      %s552 = scalar_select %p551, %s24, 11
      %s553 = scalar_lea.vmem %s12, %s552
      %p554 = pneg %p352
      %p555 = pneg %p349
      %p556 = pneg %p373
      %p557 = pneg %p370
      %p558 = scmp.lt.s32.totalorder %s24, 11
      %s559 = scalar_select %p558, %s24, 11
      %s560 = smul.addr %s559, 48
      %s561 = smul.addr %s560, 4
      %s562 = scalar_lea.vmem %s1, %s561
      %p563 = scmp.lt.s32.totalorder %s24, 11
      %s564 = scalar_select %p563, %s24, 11
      %s565 = smul.addr %s564, 3
      %s566 = scalar_lea.vmem %s2, %s565
      %p567 = scmp.lt.s32.totalorder %s24, 11
      %s568 = scalar_select %p567, %s24, 11
      %s569 = smul.addr %s568, 16
      %s570 = smul.addr %s569, 4
      %s571 = scalar_lea.vmem %s3, %s570
      %p572 = scmp.lt.s32.totalorder %s24, 11
      %s573 = scalar_select %p572, %s24, 11
      %s574 = scalar_lea.vmem %s4, %s573
      %p575 = scmp.lt.s32.totalorder %s24, 11
      %s576 = scalar_select %p575, %s24, 11
      %s577 = scalar_lea.vmem %s5, %s576
      %p578 = scmp.lt.s32.totalorder %s24, 11
      %s579 = scalar_select %p578, %s24, 11
      %s580 = scalar_lea.vmem %s6, %s579
      %p581 = scmp.lt.s32.totalorder %s24, 11
      %s582 = scalar_select %p581, %s24, 11
      %s583 = scalar_lea.vmem %s7, %s582
      %p584 = scmp.lt.s32.totalorder %s24, 11
      %s585 = scalar_select %p584, %s24, 11
      %s586 = scalar_lea.vmem %s8, %s585
      %p587 = scmp.lt.s32.totalorder %s24, 11
      %s588 = scalar_select %p587, %s24, 11
      %s589 = smul.addr %s588, 32
      %s590 = smul.addr %s589, 4
      %s591 = scalar_lea.vmem %s9, %s590
      %p592 = scmp.lt.s32.totalorder %s24, 11
      %s593 = scalar_select %p592, %s24, 11
      %s594 = smul.addr %s593, 2
      %s595 = scalar_lea.vmem %s10, %s594
      %p596 = scmp.lt.s32.totalorder %s24, 11
      %s597 = scalar_select %p596, %s24, 11
      %s598 = smul.addr %s597, 32
      %s599 = smul.addr %s598, 4
      %s600 = scalar_lea.vmem %s11, %s599
      %p601 = scmp.lt.s32.totalorder %s24, 11
      %s602 = scalar_select %p601, %s24, 11
      %s603 = scalar_lea.vmem %s12, %s602
      %p605 = scmp.eq.s32.totalorder %s24, 0
      // Predicated region
      $region73: #{angle_classifier_forward.5} parent=71 // pred_check
        %p606 = pneg %p605
      $region74: #{angle_classifier_forward.5} parent=71 // pred_check_branch
        %608 = sbr.rel (%p606) target = $region76
      $region75: #{angle_classifier_forward.5} parent=71 // pred_region
        %v609 = vld [vmem:[%s0] sm:$0xff]
        %v610 = vld [vmem:[%s0 + $0x8] sm:$0xff]
        %611 = vst [vmem:[%s13] sm:$0xff] %v609
        %612 = vst [vmem:[%s13 + $0x8] sm:$0xff] %v610
      $region76: #{angle_classifier_forward.5} parent=71 // pred_fallthru
        _
      %v613 = vld [vmem:[%s13] sm:$0xff]
      %v614 = vld [vmem:[%s13 + $0x8] sm:$0xff]
      %v615 = vpack.c.bf16 %v614, %v613
      %v616 = vld [vmem:[%s562] sm:$0xff]
      %v617 = vld [vmem:[%s562 + $0x8] sm:$0xf]
      %v618 = vld [vmem:[%s562 + $0xc] sm:$0xff]
      %v619 = vld [vmem:[%s562 + $0x14] sm:$0xf]
      %v620 = vld [vmem:[%s562 + $0x18] sm:$0xff]
      %v621 = vld [vmem:[%s562 + $0x20] sm:$0xf]
      %v622 = vld [vmem:[%s562 + $0x24] sm:$0xff]
      %v623 = vld [vmem:[%s562 + $0x2c] sm:$0xf]
      %v624 = vld [vmem:[%s562 + $0x30] sm:$0xff]
      %v625 = vld [vmem:[%s562 + $0x38] sm:$0xf]
      %v626 = vld [vmem:[%s562 + $0x3c] sm:$0xff]
      %v627 = vld [vmem:[%s562 + $0x44] sm:$0xf]
      %v628 = vld [vmem:[%s562 + $0x48] sm:$0xff]
      %v629 = vld [vmem:[%s562 + $0x50] sm:$0xf]
      %v630 = vld [vmem:[%s562 + $0x54] sm:$0xff]
      %v631 = vld [vmem:[%s562 + $0x5c] sm:$0xf]
      %v632 = vld [vmem:[%s562 + $0x60] sm:$0xff]
      %v633 = vld [vmem:[%s562 + $0x68] sm:$0xf]
      %v634 = vld [vmem:[%s562 + $0x6c] sm:$0xff]
      %v635 = vld [vmem:[%s562 + $0x74] sm:$0xf]
      %v636 = vld [vmem:[%s562 + $0x78] sm:$0xff]
      %v637 = vld [vmem:[%s562 + $0x80] sm:$0xf]
      %v638 = vld [vmem:[%s562 + $0x84] sm:$0xff]
      %v639 = vld [vmem:[%s562 + $0x8c] sm:$0xf]
      %v640 = vld [vmem:[%s562 + $0x90] sm:$0xff]
      %v641 = vld [vmem:[%s562 + $0x98] sm:$0xf]
      %v642 = vld [vmem:[%s562 + $0x9c] sm:$0xff]
      %v643 = vld [vmem:[%s562 + $0xa4] sm:$0xf]
      %v644 = vld [vmem:[%s562 + $0xa8] sm:$0xff]
      %v645 = vld [vmem:[%s562 + $0xb0] sm:$0xf]
      %v646 = vld [vmem:[%s562 + $0xb4] sm:$0xff]
      %v647 = vld [vmem:[%s562 + $0xbc] sm:$0xf]
      %v648 = vld [vmem:[%s566] sm:$0x7]
      %v650 = vlaneseq
      %v651 = vshrl.u32 %v650, 7
      %v652 = vsub.s32 0, %v651
      %v653 = vrot.slane %v648, %v652
      %v654 = vlaneseq
      %v655 = vshrl.u32 %v654, 7
      %v656 = vsub.s32 1, %v655
      %v657 = vrot.slane %v648, %v656
      %v658 = vlaneseq
      %v659 = vshrl.u32 %v658, 7
      %v660 = vsub.s32 2, %v659
      %v661 = vrot.slane %v648, %v660
      %v697 = vunpack.c.l.b16 %v616
      %v698 = vunpack.c.h.b16 %v616
      %v699 = vunpack.c.l.b16 %v617
      %v700 = vunpack.c.l.b16 %v618
      %v701 = vunpack.c.h.b16 %v618
      %v702 = vunpack.c.l.b16 %v619
      %v703 = vunpack.c.l.b16 %v620
      %v704 = vunpack.c.h.b16 %v620
      %v705 = vunpack.c.l.b16 %v621
      %v706 = vunpack.c.l.b16 %v622
      %v707 = vunpack.c.h.b16 %v622
      %v708 = vunpack.c.l.b16 %v623
      %v709 = vunpack.c.l.b16 %v624
      %v710 = vunpack.c.h.b16 %v624
      %v711 = vunpack.c.l.b16 %v625
      %v712 = vunpack.c.l.b16 %v626
      %v713 = vunpack.c.h.b16 %v626
      %v714 = vunpack.c.l.b16 %v627
      %v715 = vunpack.c.l.b16 %v628
      %v716 = vunpack.c.h.b16 %v628
      %v717 = vunpack.c.l.b16 %v629
      %v718 = vunpack.c.l.b16 %v630
      %v719 = vunpack.c.h.b16 %v630
      %v720 = vunpack.c.l.b16 %v631
      %v721 = vunpack.c.l.b16 %v632
      %v722 = vunpack.c.h.b16 %v632
      %v723 = vunpack.c.l.b16 %v633
      %v724 = vunpack.c.l.b16 %v634
      %v725 = vunpack.c.h.b16 %v634
      %v726 = vunpack.c.l.b16 %v635
      %v727 = vunpack.c.l.b16 %v636
      %v728 = vunpack.c.h.b16 %v636
      %v729 = vunpack.c.l.b16 %v637
      %v730 = vunpack.c.l.b16 %v638
      %v731 = vunpack.c.h.b16 %v638
      %v732 = vunpack.c.l.b16 %v639
      %v733 = vunpack.c.l.b16 %v640
      %v734 = vunpack.c.h.b16 %v640
      %v735 = vunpack.c.l.b16 %v641
      %v736 = vunpack.c.l.b16 %v642
      %v737 = vunpack.c.h.b16 %v642
      %v738 = vunpack.c.l.b16 %v643
      %v739 = vunpack.c.l.b16 %v644
      %v740 = vunpack.c.h.b16 %v644
      %v741 = vunpack.c.l.b16 %v645
      %v742 = vunpack.c.l.b16 %v646
      %v743 = vunpack.c.h.b16 %v646
      %v744 = vunpack.c.l.b16 %v647
      %v745 = vpack.c.b16 %v700, %v697
      %v746 = vpack.c.b16 %v701, %v698
      %v747 = vpack.c.b16 %v702, %v699
      %v748 = vpack.c.b16 %v706, %v703
      %v749 = vpack.c.b16 %v707, %v704
      %v750 = vpack.c.b16 %v708, %v705
      %v751 = vpack.c.b16 %v712, %v709
      %v752 = vpack.c.b16 %v713, %v710
      %v753 = vpack.c.b16 %v714, %v711
      %v754 = vpack.c.b16 %v718, %v715
      %v755 = vpack.c.b16 %v719, %v716
      %v756 = vpack.c.b16 %v720, %v717
      %v757 = vpack.c.b16 %v724, %v721
      %v758 = vpack.c.b16 %v725, %v722
      %v759 = vpack.c.b16 %v726, %v723
      %v760 = vpack.c.b16 %v730, %v727
      %v761 = vpack.c.b16 %v731, %v728
      %v762 = vpack.c.b16 %v732, %v729
      %v763 = vpack.c.b16 %v736, %v733
      %v764 = vpack.c.b16 %v737, %v734
      %v765 = vpack.c.b16 %v738, %v735
      %v766 = vpack.c.b16 %v742, %v739
      %v767 = vpack.c.b16 %v743, %v740
      %v768 = vpack.c.b16 %v744, %v741
      %793 = vmatprep.subr.bf16.mxu0 %v746
      %794 = vmatpush1.bf16.msra.mxu0 %v745
      %795 = vmatprep.subr.bf16.mxu0 %v749
      %796 = vmatpush1.bf16.msra.mxu0 %v748
      %797 = vmatprep.subr.bf16.mxu0 %v752
      %798 = vmatpush1.bf16.msra.mxu0 %v751
      %799 = vmatprep.subr.bf16.mxu0 %v755
      %800 = vmatpush1.bf16.msra.mxu0 %v754
      %801 = vmatprep.subr.bf16.mxu0 %v758
      %802 = vmatpush1.bf16.msra.mxu0 %v757
      %803 = vmatprep.subr.bf16.mxu0 %v761
      %804 = vmatpush1.bf16.msra.mxu0 %v760
      %805 = vmatprep.subr.bf16.mxu0 %v764
      %806 = vmatpush1.bf16.msra.mxu0 %v763
      %807 = vmatprep.subr.bf16.mxu0 %v767
      %808 = vmatpush1.bf16.msra.mxu0 %v766
      %809 = vmatprep.subr.bf16.mxu0 0
      %810 = vmatpush1.bf16.msra.mxu0 0
      %811 = vmatprep.subr.bf16.mxu0 0
      %812 = vmatpush1.bf16.msra.mxu0 0
      %813 = vmatprep.subr.bf16.mxu0 0
      %814 = vmatpush1.bf16.msra.mxu0 0
      %815 = vmatprep.subr.bf16.mxu0 0
      %816 = vmatpush1.bf16.msra.mxu0 0
      %817 = vmatprep.subr.bf16.mxu0 0
      %818 = vmatpush1.bf16.msra.mxu0 0
      %819 = vmatprep.subr.bf16.mxu0 0
      %820 = vmatpush1.bf16.msra.mxu0 0
      %821 = vmatprep.subr.bf16.mxu0 0
      %822 = vmatpush1.bf16.msra.mxu0 0
      %823 = vmatprep.subr.bf16.mxu0 0
      %824 = vmatpush1.bf16.msra.mxu0 0
      %825 = vmatprep.mubr.bf16.mxu0 0
      %826 = vmatmul.mubr.bf16.gmra.mrb[0].mxu0 %v615
      %v827 = vpop.f32.mrb[0].mxu0
      %v828 = vadd.f32 %v653, %v827
      %v829 = vpop.f32.mrb[0].mxu0
      %v830 = vadd.f32 %v657, %v829
      %v831 = vpop.f32.mrb[0].mxu0
      %v832 = vadd.f32 %v653, %v831
      %v833 = vpop.f32.mrb[0].mxu0
      %v834 = vadd.f32 %v657, %v833
      %835 = vdwg.mxu0
      %836 = vmatprep.subr.bf16.mxu0 0
      %837 = vmatpush1.bf16.msra.mxu0 %v747
      %838 = vmatprep.subr.bf16.mxu0 0
      %839 = vmatpush1.bf16.msra.mxu0 %v750
      %840 = vmatprep.subr.bf16.mxu0 0
      %841 = vmatpush1.bf16.msra.mxu0 %v753
      %842 = vmatprep.subr.bf16.mxu0 0
      %843 = vmatpush1.bf16.msra.mxu0 %v756
      %844 = vmatprep.subr.bf16.mxu0 0
      %845 = vmatpush1.bf16.msra.mxu0 %v759
      %846 = vmatprep.subr.bf16.mxu0 0
      %847 = vmatpush1.bf16.msra.mxu0 %v762
      %848 = vmatprep.subr.bf16.mxu0 0
      %849 = vmatpush1.bf16.msra.mxu0 %v765
      %850 = vmatprep.subr.bf16.mxu0 0
      %851 = vmatpush1.bf16.msra.mxu0 %v768
      %852 = vmatprep.subr.bf16.mxu0 0
      %853 = vmatpush1.bf16.msra.mxu0 0
      %854 = vmatprep.subr.bf16.mxu0 0
      %855 = vmatpush1.bf16.msra.mxu0 0
      %856 = vmatprep.subr.bf16.mxu0 0
      %857 = vmatpush1.bf16.msra.mxu0 0
      %858 = vmatprep.subr.bf16.mxu0 0
      %859 = vmatpush1.bf16.msra.mxu0 0
      %860 = vmatprep.subr.bf16.mxu0 0
      %861 = vmatpush1.bf16.msra.mxu0 0
      %862 = vmatprep.subr.bf16.mxu0 0
      %863 = vmatpush1.bf16.msra.mxu0 0
      %864 = vmatprep.subr.bf16.mxu0 0
      %865 = vmatpush1.bf16.msra.mxu0 0
      %866 = vmatprep.subr.bf16.mxu0 0
      %867 = vmatpush1.bf16.msra.mxu0 0
      %868 = vmatprep.mubr.bf16.mxu0 0
      %869 = vmatmul.mubr.bf16.gmra.mrb[0].mxu0 %v615
      %v870 = vpop.f32.mrb[0].mxu0
      %v871 = vadd.f32 %v661, %v870
      %v872 = vpop.f32.mrb[0].mxu0
      %v873 = vpop.f32.mrb[0].mxu0
      %v874 = vadd.f32 %v661, %v873
      %v875 = vpop.f32.mrb[0].mxu0
      %876 = vdwg.mxu0
      %v877 = vmul.f32 %v828, 0.17677669
      %v878 = vmul.f32 %v832, 0.17677669
      %v879 = vlaneseq
      %v880 = vand.u32 %v879, 127
      %vm881 = vcmp.lt.s32.totalorder %v880, 5
      %v882 = vsel %vm881, 0.0, -1e+09
      %vm883 = vcmask 261120
      %v885 = vsel %vm883, %v877, 0
      %v888 = vsel %vm883, %v830, 0
      %890 = vmatprep.subr.mxu0 0.0
      %891 = vmatpush1.xpose.msra.mxu0 %v888
      %892 = vmatprep.subr.mxu0 0.0
      %893 = vmatpush1.xpose.msra.mxu0 0.0
      %894 = vmatprep.subr.mxu0 0.0
      %895 = vmatpush1.xpose.msra.mxu0 0.0
      %896 = vmatprep.subr.mxu0 0.0
      %897 = vmatpush1.xpose.msra.mxu0 0.0
      %898 = vmatprep.subr.mxu0 0.0
      %899 = vmatpush1.xpose.msra.mxu0 0.0
      %900 = vmatprep.subr.mxu0 0.0
      %901 = vmatpush1.xpose.msra.mxu0 0.0
      %902 = vmatprep.subr.mxu0 0.0
      %903 = vmatpush1.xpose.msra.mxu0 0.0
      %904 = vmatprep.subr.mxu0 0.0
      %905 = vmatpush1.xpose.msra.mxu0 0.0
      %906 = vmatprep.subr.mxu0 0.0
      %907 = vmatpush1.xpose.msra.mxu0 0.0
      %908 = vmatprep.subr.mxu0 0.0
      %909 = vmatpush1.xpose.msra.mxu0 0.0
      %910 = vmatprep.subr.mxu0 0.0
      %911 = vmatpush1.xpose.msra.mxu0 0.0
      %912 = vmatprep.subr.mxu0 0.0
      %913 = vmatpush1.xpose.msra.mxu0 0.0
      %914 = vmatprep.subr.mxu0 0.0
      %915 = vmatpush1.xpose.msra.mxu0 0.0
      %916 = vmatprep.subr.mxu0 0.0
      %917 = vmatpush1.xpose.msra.mxu0 0.0
      %918 = vmatprep.subr.mxu0 0.0
      %919 = vmatpush1.xpose.msra.mxu0 0.0
      %920 = vmatprep.subr.mxu0 0.0
      %921 = vmatpush1.xpose.msra.mxu0 0.0
      %922 = vmatprep.subr.mxu0 0.0
      %923 = vmatpush1.xpose.msra.mxu0 0.0
      %924 = vmatprep.subr.mxu0 0.0
      %925 = vmatpush1.xpose.msra.mxu0 0.0
      %926 = vmatprep.subr.mxu0 0.0
      %927 = vmatpush1.xpose.msra.mxu0 0.0
      %928 = vmatprep.subr.mxu0 0.0
      %929 = vmatpush1.xpose.msra.mxu0 0.0
      %930 = vmatprep.subr.mxu0 0.0
      %931 = vmatpush1.xpose.msra.mxu0 0.0
      %932 = vmatprep.subr.mxu0 0.0
      %933 = vmatpush1.xpose.msra.mxu0 0.0
      %934 = vmatprep.subr.mxu0 0.0
      %935 = vmatpush1.xpose.msra.mxu0 0.0
      %936 = vmatprep.subr.mxu0 0.0
      %937 = vmatpush1.xpose.msra.mxu0 0.0
      %938 = vmatprep.subr.mxu0 0.0
      %939 = vmatpush1.xpose.msra.mxu0 0.0
      %940 = vmatprep.subr.mxu0 0.0
      %941 = vmatpush1.xpose.msra.mxu0 0.0
      %942 = vmatprep.subr.mxu0 0.0
      %943 = vmatpush1.xpose.msra.mxu0 0.0
      %944 = vmatprep.subr.mxu0 0.0
      %945 = vmatpush1.xpose.msra.mxu0 0.0
      %946 = vmatprep.subr.mxu0 0.0
      %947 = vmatpush1.xpose.msra.mxu0 0.0
      %948 = vmatprep.subr.mxu0 0.0
      %949 = vmatpush1.xpose.msra.mxu0 0.0
      %950 = vmatprep.subr.mxu0 0.0
      %951 = vmatpush1.xpose.msra.mxu0 0.0
      %952 = vmatprep.subr.mxu0 0.0
      %953 = vmatpush1.xpose.msra.mxu0 0.0
      %954 = vmatprep.mubr.f32.mxu0 0.0
      %955 = vmatmul.mubr.f32.gmra.mrb[0].mxu0 %v885
      %v956 = vpop.f32.mrb[0].mxu0
      %v957 = vadd.f32 %v882, %v956
      %v958 = vpop.f32.mrb[0].mxu0
      %959 = vdwg.mxu0
      %v961 = vsel %vm883, %v878, 0
      %v964 = vsel %vm883, %v834, 0
      %966 = vmatprep.subr.mxu0 0.0
      %967 = vmatpush1.xpose.msra.mxu0 %v964
      %968 = vmatprep.subr.mxu0 0.0
      %969 = vmatpush1.xpose.msra.mxu0 0.0
      %970 = vmatprep.subr.mxu0 0.0
      %971 = vmatpush1.xpose.msra.mxu0 0.0
      %972 = vmatprep.subr.mxu0 0.0
      %973 = vmatpush1.xpose.msra.mxu0 0.0
      %974 = vmatprep.subr.mxu0 0.0
      %975 = vmatpush1.xpose.msra.mxu0 0.0
      %976 = vmatprep.subr.mxu0 0.0
      %977 = vmatpush1.xpose.msra.mxu0 0.0
      %978 = vmatprep.subr.mxu0 0.0
      %979 = vmatpush1.xpose.msra.mxu0 0.0
      %980 = vmatprep.subr.mxu0 0.0
      %981 = vmatpush1.xpose.msra.mxu0 0.0
      %982 = vmatprep.subr.mxu0 0.0
      %983 = vmatpush1.xpose.msra.mxu0 0.0
      %984 = vmatprep.subr.mxu0 0.0
      %985 = vmatpush1.xpose.msra.mxu0 0.0
      %986 = vmatprep.subr.mxu0 0.0
      %987 = vmatpush1.xpose.msra.mxu0 0.0
      %988 = vmatprep.subr.mxu0 0.0
      %989 = vmatpush1.xpose.msra.mxu0 0.0
      %990 = vmatprep.subr.mxu0 0.0
      %991 = vmatpush1.xpose.msra.mxu0 0.0
      %992 = vmatprep.subr.mxu0 0.0
      %993 = vmatpush1.xpose.msra.mxu0 0.0
      %994 = vmatprep.subr.mxu0 0.0
      %995 = vmatpush1.xpose.msra.mxu0 0.0
      %996 = vmatprep.subr.mxu0 0.0
      %997 = vmatpush1.xpose.msra.mxu0 0.0
      %998 = vmatprep.subr.mxu0 0.0
      %999 = vmatpush1.xpose.msra.mxu0 0.0
      %1000 = vmatprep.subr.mxu0 0.0
      %1001 = vmatpush1.xpose.msra.mxu0 0.0
      %1002 = vmatprep.subr.mxu0 0.0
      %1003 = vmatpush1.xpose.msra.mxu0 0.0
      %1004 = vmatprep.subr.mxu0 0.0
      %1005 = vmatpush1.xpose.msra.mxu0 0.0
      %1006 = vmatprep.subr.mxu0 0.0
      %1007 = vmatpush1.xpose.msra.mxu0 0.0
      %1008 = vmatprep.subr.mxu0 0.0
      %1009 = vmatpush1.xpose.msra.mxu0 0.0
      %1010 = vmatprep.subr.mxu0 0.0
      %1011 = vmatpush1.xpose.msra.mxu0 0.0
      %1012 = vmatprep.subr.mxu0 0.0
      %1013 = vmatpush1.xpose.msra.mxu0 0.0
      %1014 = vmatprep.subr.mxu0 0.0
      %1015 = vmatpush1.xpose.msra.mxu0 0.0
      %1016 = vmatprep.subr.mxu0 0.0
      %1017 = vmatpush1.xpose.msra.mxu0 0.0
      %1018 = vmatprep.subr.mxu0 0.0
      %1019 = vmatpush1.xpose.msra.mxu0 0.0
      %1020 = vmatprep.subr.mxu0 0.0
      %1021 = vmatpush1.xpose.msra.mxu0 0.0
      %1022 = vmatprep.subr.mxu0 0.0
      %1023 = vmatpush1.xpose.msra.mxu0 0.0
      %1024 = vmatprep.subr.mxu0 0.0
      %1025 = vmatpush1.xpose.msra.mxu0 0.0
      %1026 = vmatprep.subr.mxu0 0.0
      %1027 = vmatpush1.xpose.msra.mxu0 0.0
      %1028 = vmatprep.subr.mxu0 0.0
      %1029 = vmatpush1.xpose.msra.mxu0 0.0
      %1030 = vmatprep.mubr.f32.mxu0 0.0
      %1031 = vmatmul.mubr.f32.gmra.mrb[0].mxu0 %v961
      %v1032 = vpop.f32.mrb[0].mxu0
      %v1033 = vadd.f32 %v882, %v1032
      %v1034 = vpop.f32.mrb[0].mxu0
      %1035 = vdwg.mxu0
      %vm1036 = vcmask 64512
      %v1037 = vsel %vm1036, %v957, -inf
      %1038 = vmax.xlane.f32.xlu0 %v1037
      %v1039 = vpop.xlane.xlu0 %1038
      %v1040 = vsel %vm1036, %v1033, -inf
      %1041 = vmax.xlane.f32.xlu0 %v1040
      %v1042 = vpop.xlane.xlu0 %1041
      %v1043 = vsub.f32 %v957, %v1039
      %v1044 = vsub.f32 %v1033, %v1042
      %v1045 = vmul.f32 %v1043, 1.442695
      %v1046 = vpow.pop %v1045
      %v1047 = vmul.f32 %v1044, 1.442695
      %v1048 = vpow.pop %v1047
      %v1049 = vsel %vm1036, %v1046, 0.0
      %1050 = vadd.xlane.f32.xlu0 %v1049
      %v1051 = vpop.xlane.xlu0 %1050
      %v1052 = vsel %vm1036, %v1048, 0.0
      %1053 = vadd.xlane.f32.xlu0 %v1052
      %v1054 = vpop.xlane.xlu0 %1053
      %v1055 = vrcp.pop %v1051
      %v1056 = vrcp.pop %v1054
      %v1057 = vmul.f32 %v1046, %v1055
      %v1058 = vmul.f32 %v1048, %v1056
      %v1060 = vsel %vm1036, %v1057, 0
      %1062 = vmatprep.subr.mxu0 0.0
      %1063 = vmatpush1.msra.mxu0 %v871
      %1064 = vmatprep.subr.mxu0 0.0
      %1065 = vmatpush1.msra.mxu0 0.0
      %1066 = vmatprep.subr.mxu0 0.0
      %1067 = vmatpush1.msra.mxu0 0.0
      %1068 = vmatprep.subr.mxu0 0.0
      %1069 = vmatpush1.msra.mxu0 0.0
      %1070 = vmatprep.subr.mxu0 0.0
      %1071 = vmatpush1.msra.mxu0 0.0
      %1072 = vmatprep.subr.mxu0 0.0
      %1073 = vmatpush1.msra.mxu0 0.0
      %1074 = vmatprep.subr.mxu0 0.0
      %1075 = vmatpush1.msra.mxu0 0.0
      %1076 = vmatprep.subr.mxu0 0.0
      %1077 = vmatpush1.msra.mxu0 0.0
      %1078 = vmatprep.subr.mxu0 0.0
      %1079 = vmatpush1.msra.mxu0 0.0
      %1080 = vmatprep.subr.mxu0 0.0
      %1081 = vmatpush1.msra.mxu0 0.0
      %1082 = vmatprep.subr.mxu0 0.0
      %1083 = vmatpush1.msra.mxu0 0.0
      %1084 = vmatprep.subr.mxu0 0.0
      %1085 = vmatpush1.msra.mxu0 0.0
      %1086 = vmatprep.subr.mxu0 0.0
      %1087 = vmatpush1.msra.mxu0 0.0
      %1088 = vmatprep.subr.mxu0 0.0
      %1089 = vmatpush1.msra.mxu0 0.0
      %1090 = vmatprep.subr.mxu0 0.0
      %1091 = vmatpush1.msra.mxu0 0.0
      %1092 = vmatprep.subr.mxu0 0.0
      %1093 = vmatpush1.msra.mxu0 0.0
      %1094 = vmatprep.subr.mxu0 0.0
      %1095 = vmatpush1.msra.mxu0 0.0
      %1096 = vmatprep.subr.mxu0 0.0
      %1097 = vmatpush1.msra.mxu0 0.0
      %1098 = vmatprep.subr.mxu0 0.0
      %1099 = vmatpush1.msra.mxu0 0.0
      %1100 = vmatprep.subr.mxu0 0.0
      %1101 = vmatpush1.msra.mxu0 0.0
      %1102 = vmatprep.subr.mxu0 0.0
      %1103 = vmatpush1.msra.mxu0 0.0
      %1104 = vmatprep.subr.mxu0 0.0
      %1105 = vmatpush1.msra.mxu0 0.0
      %1106 = vmatprep.subr.mxu0 0.0
      %1107 = vmatpush1.msra.mxu0 0.0
      %1108 = vmatprep.subr.mxu0 0.0
      %1109 = vmatpush1.msra.mxu0 0.0
      %1110 = vmatprep.subr.mxu0 0.0
      %1111 = vmatpush1.msra.mxu0 0.0
      %1112 = vmatprep.subr.mxu0 0.0
      %1113 = vmatpush1.msra.mxu0 0.0
      %1114 = vmatprep.subr.mxu0 0.0
      %1115 = vmatpush1.msra.mxu0 0.0
      %1116 = vmatprep.subr.mxu0 0.0
      %1117 = vmatpush1.msra.mxu0 0.0
      %1118 = vmatprep.subr.mxu0 0.0
      %1119 = vmatpush1.msra.mxu0 0.0
      %1120 = vmatprep.subr.mxu0 0.0
      %1121 = vmatpush1.msra.mxu0 0.0
      %1122 = vmatprep.subr.mxu0 0.0
      %1123 = vmatpush1.msra.mxu0 0.0
      %1124 = vmatprep.subr.mxu0 0.0
      %1125 = vmatpush1.msra.mxu0 0.0
      %1126 = vmatprep.mubr.f32.mxu0 0.0
      %1127 = vmatmul.mubr.f32.gmra.mrb[0].mxu0 %v1060
      %v1128 = vpop.f32.mrb[0].mxu0
      %v1129 = vadd.f32 0.0, %v1128
      %v1130 = vpop.f32.mrb[0].mxu0
      %1131 = vdwg.mxu0
      %v1133 = vsel %vm1036, %v1058, 0
      %1135 = vmatprep.subr.mxu0 0.0
      %1136 = vmatpush1.msra.mxu0 %v874
      %1137 = vmatprep.subr.mxu0 0.0
      %1138 = vmatpush1.msra.mxu0 0.0
      %1139 = vmatprep.subr.mxu0 0.0
      %1140 = vmatpush1.msra.mxu0 0.0
      %1141 = vmatprep.subr.mxu0 0.0
      %1142 = vmatpush1.msra.mxu0 0.0
      %1143 = vmatprep.subr.mxu0 0.0
      %1144 = vmatpush1.msra.mxu0 0.0
      %1145 = vmatprep.subr.mxu0 0.0
      %1146 = vmatpush1.msra.mxu0 0.0
      %1147 = vmatprep.subr.mxu0 0.0
      %1148 = vmatpush1.msra.mxu0 0.0
      %1149 = vmatprep.subr.mxu0 0.0
      %1150 = vmatpush1.msra.mxu0 0.0
      %1151 = vmatprep.subr.mxu0 0.0
      %1152 = vmatpush1.msra.mxu0 0.0
      %1153 = vmatprep.subr.mxu0 0.0
      %1154 = vmatpush1.msra.mxu0 0.0
      %1155 = vmatprep.subr.mxu0 0.0
      %1156 = vmatpush1.msra.mxu0 0.0
      %1157 = vmatprep.subr.mxu0 0.0
      %1158 = vmatpush1.msra.mxu0 0.0
      %1159 = vmatprep.subr.mxu0 0.0
      %1160 = vmatpush1.msra.mxu0 0.0
      %1161 = vmatprep.subr.mxu0 0.0
      %1162 = vmatpush1.msra.mxu0 0.0
      %1163 = vmatprep.subr.mxu0 0.0
      %1164 = vmatpush1.msra.mxu0 0.0
      %1165 = vmatprep.subr.mxu0 0.0
      %1166 = vmatpush1.msra.mxu0 0.0
      %1167 = vmatprep.subr.mxu0 0.0
      %1168 = vmatpush1.msra.mxu0 0.0
      %1169 = vmatprep.subr.mxu0 0.0
      %1170 = vmatpush1.msra.mxu0 0.0
      %1171 = vmatprep.subr.mxu0 0.0
      %1172 = vmatpush1.msra.mxu0 0.0
      %1173 = vmatprep.subr.mxu0 0.0
      %1174 = vmatpush1.msra.mxu0 0.0
      %1175 = vmatprep.subr.mxu0 0.0
      %1176 = vmatpush1.msra.mxu0 0.0
      %1177 = vmatprep.subr.mxu0 0.0
      %1178 = vmatpush1.msra.mxu0 0.0
      %1179 = vmatprep.subr.mxu0 0.0
      %1180 = vmatpush1.msra.mxu0 0.0
      %1181 = vmatprep.subr.mxu0 0.0
      %1182 = vmatpush1.msra.mxu0 0.0
      %1183 = vmatprep.subr.mxu0 0.0
      %1184 = vmatpush1.msra.mxu0 0.0
      %1185 = vmatprep.subr.mxu0 0.0
      %1186 = vmatpush1.msra.mxu0 0.0
      %1187 = vmatprep.subr.mxu0 0.0
      %1188 = vmatpush1.msra.mxu0 0.0
      %1189 = vmatprep.subr.mxu0 0.0
      %1190 = vmatpush1.msra.mxu0 0.0
      %1191 = vmatprep.subr.mxu0 0.0
      %1192 = vmatpush1.msra.mxu0 0.0
      %1193 = vmatprep.subr.mxu0 0.0
      %1194 = vmatpush1.msra.mxu0 0.0
      %1195 = vmatprep.subr.mxu0 0.0
      %1196 = vmatpush1.msra.mxu0 0.0
      %1197 = vmatprep.subr.mxu0 0.0
      %1198 = vmatpush1.msra.mxu0 0.0
      %1199 = vmatprep.mubr.f32.mxu0 0.0
      %1200 = vmatmul.mubr.f32.gmra.mrb[0].mxu0 %v1133
      %v1201 = vpop.f32.mrb[0].mxu0
      %v1202 = vadd.f32 0.0, %v1201
      %v1203 = vpop.f32.mrb[0].mxu0
      %1204 = vdwg.mxu0
      %1205 = vrot.lane.b32.xlu0 %v877, 96
      %v1206 = vpop.permute.xlu0 %1205
      %1207 = vrot.lane.b32.xlu0 %v830, 96
      %v1208 = vpop.permute.xlu0 %1207
      %v1209 = vsel %vm883, %v1206, 0
      %v1211 = vsel %vm883, %v1208, 0
      %1213 = vmatprep.subr.mxu0 0.0
      %1214 = vmatpush1.xpose.msra.mxu0 %v1211
      %1215 = vmatprep.subr.mxu0 0.0
      %1216 = vmatpush1.xpose.msra.mxu0 0.0
      %1217 = vmatprep.subr.mxu0 0.0
      %1218 = vmatpush1.xpose.msra.mxu0 0.0
      %1219 = vmatprep.subr.mxu0 0.0
      %1220 = vmatpush1.xpose.msra.mxu0 0.0
      %1221 = vmatprep.subr.mxu0 0.0
      %1222 = vmatpush1.xpose.msra.mxu0 0.0
      %1223 = vmatprep.subr.mxu0 0.0
      %1224 = vmatpush1.xpose.msra.mxu0 0.0
      %1225 = vmatprep.subr.mxu0 0.0
      %1226 = vmatpush1.xpose.msra.mxu0 0.0
      %1227 = vmatprep.subr.mxu0 0.0
      %1228 = vmatpush1.xpose.msra.mxu0 0.0
      %1229 = vmatprep.subr.mxu0 0.0
      %1230 = vmatpush1.xpose.msra.mxu0 0.0
      %1231 = vmatprep.subr.mxu0 0.0
      %1232 = vmatpush1.xpose.msra.mxu0 0.0
      %1233 = vmatprep.subr.mxu0 0.0
      %1234 = vmatpush1.xpose.msra.mxu0 0.0
      %1235 = vmatprep.subr.mxu0 0.0
      %1236 = vmatpush1.xpose.msra.mxu0 0.0
      %1237 = vmatprep.subr.mxu0 0.0
      %1238 = vmatpush1.xpose.msra.mxu0 0.0
      %1239 = vmatprep.subr.mxu0 0.0
      %1240 = vmatpush1.xpose.msra.mxu0 0.0
      %1241 = vmatprep.subr.mxu0 0.0
      %1242 = vmatpush1.xpose.msra.mxu0 0.0
      %1243 = vmatprep.subr.mxu0 0.0
      %1244 = vmatpush1.xpose.msra.mxu0 0.0
      %1245 = vmatprep.subr.mxu0 0.0
      %1246 = vmatpush1.xpose.msra.mxu0 0.0
      %1247 = vmatprep.subr.mxu0 0.0
      %1248 = vmatpush1.xpose.msra.mxu0 0.0
      %1249 = vmatprep.subr.mxu0 0.0
      %1250 = vmatpush1.xpose.msra.mxu0 0.0
      %1251 = vmatprep.subr.mxu0 0.0
      %1252 = vmatpush1.xpose.msra.mxu0 0.0
      %1253 = vmatprep.subr.mxu0 0.0
      %1254 = vmatpush1.xpose.msra.mxu0 0.0
      %1255 = vmatprep.subr.mxu0 0.0
      %1256 = vmatpush1.xpose.msra.mxu0 0.0
      %1257 = vmatprep.subr.mxu0 0.0
      %1258 = vmatpush1.xpose.msra.mxu0 0.0
      %1259 = vmatprep.subr.mxu0 0.0
      %1260 = vmatpush1.xpose.msra.mxu0 0.0
      %1261 = vmatprep.subr.mxu0 0.0
      %1262 = vmatpush1.xpose.msra.mxu0 0.0
      %1263 = vmatprep.subr.mxu0 0.0
      %1264 = vmatpush1.xpose.msra.mxu0 0.0
      %1265 = vmatprep.subr.mxu0 0.0
      %1266 = vmatpush1.xpose.msra.mxu0 0.0
      %1267 = vmatprep.subr.mxu0 0.0
      %1268 = vmatpush1.xpose.msra.mxu0 0.0
      %1269 = vmatprep.subr.mxu0 0.0
      %1270 = vmatpush1.xpose.msra.mxu0 0.0
      %1271 = vmatprep.subr.mxu0 0.0
      %1272 = vmatpush1.xpose.msra.mxu0 0.0
      %1273 = vmatprep.subr.mxu0 0.0
      %1274 = vmatpush1.xpose.msra.mxu0 0.0
      %1275 = vmatprep.subr.mxu0 0.0
      %1276 = vmatpush1.xpose.msra.mxu0 0.0
      %1277 = vmatprep.mubr.f32.mxu0 0.0
      %1278 = vmatmul.mubr.f32.gmra.mrb[0].mxu0 %v1209
      %v1279 = vpop.f32.mrb[0].mxu0
      %v1280 = vadd.f32 %v882, %v1279
      %v1281 = vpop.f32.mrb[0].mxu0
      %1282 = vdwg.mxu0
      %1283 = vrot.lane.b32.xlu0 %v878, 96
      %v1284 = vpop.permute.xlu0 %1283
      %1285 = vrot.lane.b32.xlu0 %v834, 96
      %v1286 = vpop.permute.xlu0 %1285
      %v1287 = vsel %vm883, %v1284, 0
      %v1289 = vsel %vm883, %v1286, 0
      %1291 = vmatprep.subr.mxu0 0.0
      %1292 = vmatpush1.xpose.msra.mxu0 %v1289
      %1293 = vmatprep.subr.mxu0 0.0
      %1294 = vmatpush1.xpose.msra.mxu0 0.0
      %1295 = vmatprep.subr.mxu0 0.0
      %1296 = vmatpush1.xpose.msra.mxu0 0.0
      %1297 = vmatprep.subr.mxu0 0.0
      %1298 = vmatpush1.xpose.msra.mxu0 0.0
      %1299 = vmatprep.subr.mxu0 0.0
      %1300 = vmatpush1.xpose.msra.mxu0 0.0
      %1301 = vmatprep.subr.mxu0 0.0
      %1302 = vmatpush1.xpose.msra.mxu0 0.0
      %1303 = vmatprep.subr.mxu0 0.0
      %1304 = vmatpush1.xpose.msra.mxu0 0.0
      %1305 = vmatprep.subr.mxu0 0.0
      %1306 = vmatpush1.xpose.msra.mxu0 0.0
      %1307 = vmatprep.subr.mxu0 0.0
      %1308 = vmatpush1.xpose.msra.mxu0 0.0
      %1309 = vmatprep.subr.mxu0 0.0
      %1310 = vmatpush1.xpose.msra.mxu0 0.0
      %1311 = vmatprep.subr.mxu0 0.0
      %1312 = vmatpush1.xpose.msra.mxu0 0.0
      %1313 = vmatprep.subr.mxu0 0.0
      %1314 = vmatpush1.xpose.msra.mxu0 0.0
      %1315 = vmatprep.subr.mxu0 0.0
      %1316 = vmatpush1.xpose.msra.mxu0 0.0
      %1317 = vmatprep.subr.mxu0 0.0
      %1318 = vmatpush1.xpose.msra.mxu0 0.0
      %1319 = vmatprep.subr.mxu0 0.0
      %1320 = vmatpush1.xpose.msra.mxu0 0.0
      %1321 = vmatprep.subr.mxu0 0.0
      %1322 = vmatpush1.xpose.msra.mxu0 0.0
      %1323 = vmatprep.subr.mxu0 0.0
      %1324 = vmatpush1.xpose.msra.mxu0 0.0
      %1325 = vmatprep.subr.mxu0 0.0
      %1326 = vmatpush1.xpose.msra.mxu0 0.0
      %1327 = vmatprep.subr.mxu0 0.0
      %1328 = vmatpush1.xpose.msra.mxu0 0.0
      %1329 = vmatprep.subr.mxu0 0.0
      %1330 = vmatpush1.xpose.msra.mxu0 0.0
      %1331 = vmatprep.subr.mxu0 0.0
      %1332 = vmatpush1.xpose.msra.mxu0 0.0
      %1333 = vmatprep.subr.mxu0 0.0
      %1334 = vmatpush1.xpose.msra.mxu0 0.0
      %1335 = vmatprep.subr.mxu0 0.0
      %1336 = vmatpush1.xpose.msra.mxu0 0.0
      %1337 = vmatprep.subr.mxu0 0.0
      %1338 = vmatpush1.xpose.msra.mxu0 0.0
      %1339 = vmatprep.subr.mxu0 0.0
      %1340 = vmatpush1.xpose.msra.mxu0 0.0
      %1341 = vmatprep.subr.mxu0 0.0
      %1342 = vmatpush1.xpose.msra.mxu0 0.0
      %1343 = vmatprep.subr.mxu0 0.0
      %1344 = vmatpush1.xpose.msra.mxu0 0.0
      %1345 = vmatprep.subr.mxu0 0.0
      %1346 = vmatpush1.xpose.msra.mxu0 0.0
      %1347 = vmatprep.subr.mxu0 0.0
      %1348 = vmatpush1.xpose.msra.mxu0 0.0
      %1349 = vmatprep.subr.mxu0 0.0
      %1350 = vmatpush1.xpose.msra.mxu0 0.0
      %1351 = vmatprep.subr.mxu0 0.0
      %1352 = vmatpush1.xpose.msra.mxu0 0.0
      %1353 = vmatprep.subr.mxu0 0.0
      %1354 = vmatpush1.xpose.msra.mxu0 0.0
      %1355 = vmatprep.mubr.f32.mxu0 0.0
      %1356 = vmatmul.mubr.f32.gmra.mrb[0].mxu0 %v1287
      %v1357 = vpop.f32.mrb[0].mxu0
      %v1358 = vadd.f32 %v882, %v1357
      %v1359 = vpop.f32.mrb[0].mxu0
      %1360 = vdwg.mxu0
      %v1361 = vsel %vm1036, %v1280, -inf
      %1362 = vmax.xlane.f32.xlu0 %v1361
      %v1363 = vpop.xlane.xlu0 %1362
      %v1364 = vsel %vm1036, %v1358, -inf
      %1365 = vmax.xlane.f32.xlu0 %v1364
      %v1366 = vpop.xlane.xlu0 %1365
      %v1367 = vsub.f32 %v1280, %v1363
      %v1368 = vsub.f32 %v1358, %v1366
      %v1369 = vmul.f32 %v1367, 1.442695
      %v1370 = vpow.pop %v1369
      %v1371 = vmul.f32 %v1368, 1.442695
      %v1372 = vpow.pop %v1371
      %v1373 = vsel %vm1036, %v1370, 0.0
      %1374 = vadd.xlane.f32.xlu0 %v1373
      %v1375 = vpop.xlane.xlu0 %1374
      %v1376 = vsel %vm1036, %v1372, 0.0
      %1377 = vadd.xlane.f32.xlu0 %v1376
      %v1378 = vpop.xlane.xlu0 %1377
      %v1379 = vrcp.pop %v1375
      %v1380 = vrcp.pop %v1378
      %v1381 = vmul.f32 %v1370, %v1379
      %v1382 = vmul.f32 %v1372, %v1380
      %1384 = vrot.lane.b32.xlu0 %v871, 96
      %v1385 = vpop.permute.xlu0 %1384
      %v1388 = vsel %vm1036, %v1381, 0
      %1390 = vmatprep.subr.mxu0 0.0
      %1391 = vmatpush1.msra.mxu0 %v1385
      %1392 = vmatprep.subr.mxu0 0.0
      %1393 = vmatpush1.msra.mxu0 0.0
      %1394 = vmatprep.subr.mxu0 0.0
      %1395 = vmatpush1.msra.mxu0 0.0
      %1396 = vmatprep.subr.mxu0 0.0
      %1397 = vmatpush1.msra.mxu0 0.0
      %1398 = vmatprep.subr.mxu0 0.0
      %1399 = vmatpush1.msra.mxu0 0.0
      %1400 = vmatprep.subr.mxu0 0.0
      %1401 = vmatpush1.msra.mxu0 0.0
      %1402 = vmatprep.subr.mxu0 0.0
      %1403 = vmatpush1.msra.mxu0 0.0
      %1404 = vmatprep.subr.mxu0 0.0
      %1405 = vmatpush1.msra.mxu0 0.0
      %1406 = vmatprep.subr.mxu0 0.0
      %1407 = vmatpush1.msra.mxu0 0.0
      %1408 = vmatprep.subr.mxu0 0.0
      %1409 = vmatpush1.msra.mxu0 0.0
      %1410 = vmatprep.subr.mxu0 0.0
      %1411 = vmatpush1.msra.mxu0 0.0
      %1412 = vmatprep.subr.mxu0 0.0
      %1413 = vmatpush1.msra.mxu0 0.0
      %1414 = vmatprep.subr.mxu0 0.0
      %1415 = vmatpush1.msra.mxu0 0.0
      %1416 = vmatprep.subr.mxu0 0.0
      %1417 = vmatpush1.msra.mxu0 0.0
      %1418 = vmatprep.subr.mxu0 0.0
      %1419 = vmatpush1.msra.mxu0 0.0
      %1420 = vmatprep.subr.mxu0 0.0
      %1421 = vmatpush1.msra.mxu0 0.0
      %1422 = vmatprep.subr.mxu0 0.0
      %1423 = vmatpush1.msra.mxu0 0.0
      %1424 = vmatprep.subr.mxu0 0.0
      %1425 = vmatpush1.msra.mxu0 0.0
      %1426 = vmatprep.subr.mxu0 0.0
      %1427 = vmatpush1.msra.mxu0 0.0
      %1428 = vmatprep.subr.mxu0 0.0
      %1429 = vmatpush1.msra.mxu0 0.0
      %1430 = vmatprep.subr.mxu0 0.0
      %1431 = vmatpush1.msra.mxu0 0.0
      %1432 = vmatprep.subr.mxu0 0.0
      %1433 = vmatpush1.msra.mxu0 0.0
      %1434 = vmatprep.subr.mxu0 0.0
      %1435 = vmatpush1.msra.mxu0 0.0
      %1436 = vmatprep.subr.mxu0 0.0
      %1437 = vmatpush1.msra.mxu0 0.0
      %1438 = vmatprep.subr.mxu0 0.0
      %1439 = vmatpush1.msra.mxu0 0.0
      %1440 = vmatprep.subr.mxu0 0.0
      %1441 = vmatpush1.msra.mxu0 0.0
      %1442 = vmatprep.subr.mxu0 0.0
      %1443 = vmatpush1.msra.mxu0 0.0
      %1444 = vmatprep.subr.mxu0 0.0
      %1445 = vmatpush1.msra.mxu0 0.0
      %1446 = vmatprep.subr.mxu0 0.0
      %1447 = vmatpush1.msra.mxu0 0.0
      %1448 = vmatprep.subr.mxu0 0.0
      %1449 = vmatpush1.msra.mxu0 0.0
      %1450 = vmatprep.subr.mxu0 0.0
      %1451 = vmatpush1.msra.mxu0 0.0
      %1452 = vmatprep.subr.mxu0 0.0
      %1453 = vmatpush1.msra.mxu0 0.0
      %1454 = vmatprep.mubr.f32.mxu0 0.0
      %1455 = vmatmul.mubr.f32.gmra.mrb[0].mxu0 %v1388
      %v1456 = vpop.f32.mrb[0].mxu0
      %v1457 = vadd.f32 0.0, %v1456
      %v1458 = vpop.f32.mrb[0].mxu0
      %1459 = vdwg.mxu0
      %1461 = vrot.lane.b32.xlu0 %v874, 96
      %v1462 = vpop.permute.xlu0 %1461
      %v1465 = vsel %vm1036, %v1382, 0
      %1467 = vmatprep.subr.mxu0 0.0
      %1468 = vmatpush1.msra.mxu0 %v1462
      %1469 = vmatprep.subr.mxu0 0.0
      %1470 = vmatpush1.msra.mxu0 0.0
      %1471 = vmatprep.subr.mxu0 0.0
      %1472 = vmatpush1.msra.mxu0 0.0
      %1473 = vmatprep.subr.mxu0 0.0
      %1474 = vmatpush1.msra.mxu0 0.0
      %1475 = vmatprep.subr.mxu0 0.0
      %1476 = vmatpush1.msra.mxu0 0.0
      %1477 = vmatprep.subr.mxu0 0.0
      %1478 = vmatpush1.msra.mxu0 0.0
      %1479 = vmatprep.subr.mxu0 0.0
      %1480 = vmatpush1.msra.mxu0 0.0
      %1481 = vmatprep.subr.mxu0 0.0
      %1482 = vmatpush1.msra.mxu0 0.0
      %1483 = vmatprep.subr.mxu0 0.0
      %1484 = vmatpush1.msra.mxu0 0.0
      %1485 = vmatprep.subr.mxu0 0.0
      %1486 = vmatpush1.msra.mxu0 0.0
      %1487 = vmatprep.subr.mxu0 0.0
      %1488 = vmatpush1.msra.mxu0 0.0
      %1489 = vmatprep.subr.mxu0 0.0
      %1490 = vmatpush1.msra.mxu0 0.0
      %1491 = vmatprep.subr.mxu0 0.0
      %1492 = vmatpush1.msra.mxu0 0.0
      %1493 = vmatprep.subr.mxu0 0.0
      %1494 = vmatpush1.msra.mxu0 0.0
      %1495 = vmatprep.subr.mxu0 0.0
      %1496 = vmatpush1.msra.mxu0 0.0
      %1497 = vmatprep.subr.mxu0 0.0
      %1498 = vmatpush1.msra.mxu0 0.0
      %1499 = vmatprep.subr.mxu0 0.0
      %1500 = vmatpush1.msra.mxu0 0.0
      %1501 = vmatprep.subr.mxu0 0.0
      %1502 = vmatpush1.msra.mxu0 0.0
      %1503 = vmatprep.subr.mxu0 0.0
      %1504 = vmatpush1.msra.mxu0 0.0
      %1505 = vmatprep.subr.mxu0 0.0
      %1506 = vmatpush1.msra.mxu0 0.0
      %1507 = vmatprep.subr.mxu0 0.0
      %1508 = vmatpush1.msra.mxu0 0.0
      %1509 = vmatprep.subr.mxu0 0.0
      %1510 = vmatpush1.msra.mxu0 0.0
      %1511 = vmatprep.subr.mxu0 0.0
      %1512 = vmatpush1.msra.mxu0 0.0
      %1513 = vmatprep.subr.mxu0 0.0
      %1514 = vmatpush1.msra.mxu0 0.0
      %1515 = vmatprep.subr.mxu0 0.0
      %1516 = vmatpush1.msra.mxu0 0.0
      %1517 = vmatprep.subr.mxu0 0.0
      %1518 = vmatpush1.msra.mxu0 0.0
      %1519 = vmatprep.subr.mxu0 0.0
      %1520 = vmatpush1.msra.mxu0 0.0
      %1521 = vmatprep.subr.mxu0 0.0
      %1522 = vmatpush1.msra.mxu0 0.0
      %1523 = vmatprep.subr.mxu0 0.0
      %1524 = vmatpush1.msra.mxu0 0.0
      %1525 = vmatprep.subr.mxu0 0.0
      %1526 = vmatpush1.msra.mxu0 0.0
      %1527 = vmatprep.subr.mxu0 0.0
      %1528 = vmatpush1.msra.mxu0 0.0
      %1529 = vmatprep.subr.mxu0 0.0
      %1530 = vmatpush1.msra.mxu0 0.0
      %1531 = vmatprep.mubr.f32.mxu0 0.0
      %1532 = vmatmul.mubr.f32.gmra.mrb[0].mxu0 %v1465
      %v1533 = vpop.f32.mrb[0].mxu0
      %v1534 = vadd.f32 0.0, %v1533
      %v1535 = vpop.f32.mrb[0].mxu0
      %1536 = vdwg.mxu0
      %1537 = vrot.lane.b32.xlu0 %v877, 64
      %v1538 = vpop.permute.xlu0 %1537
      %1539 = vrot.lane.b32.xlu0 %v830, 64
      %v1540 = vpop.permute.xlu0 %1539
      %v1541 = vsel %vm883, %v1538, 0
      %v1543 = vsel %vm883, %v1540, 0
      %1545 = vmatprep.subr.mxu0 0.0
      %1546 = vmatpush1.xpose.msra.mxu0 %v1543
      %1547 = vmatprep.subr.mxu0 0.0
      %1548 = vmatpush1.xpose.msra.mxu0 0.0
      %1549 = vmatprep.subr.mxu0 0.0
      %1550 = vmatpush1.xpose.msra.mxu0 0.0
      %1551 = vmatprep.subr.mxu0 0.0
      %1552 = vmatpush1.xpose.msra.mxu0 0.0
      %1553 = vmatprep.subr.mxu0 0.0
      %1554 = vmatpush1.xpose.msra.mxu0 0.0
      %1555 = vmatprep.subr.mxu0 0.0
      %1556 = vmatpush1.xpose.msra.mxu0 0.0
      %1557 = vmatprep.subr.mxu0 0.0
      %1558 = vmatpush1.xpose.msra.mxu0 0.0
      %1559 = vmatprep.subr.mxu0 0.0
      %1560 = vmatpush1.xpose.msra.mxu0 0.0
      %1561 = vmatprep.subr.mxu0 0.0
      %1562 = vmatpush1.xpose.msra.mxu0 0.0
      %1563 = vmatprep.subr.mxu0 0.0
      %1564 = vmatpush1.xpose.msra.mxu0 0.0
      %1565 = vmatprep.subr.mxu0 0.0
      %1566 = vmatpush1.xpose.msra.mxu0 0.0
      %1567 = vmatprep.subr.mxu0 0.0
      %1568 = vmatpush1.xpose.msra.mxu0 0.0
      %1569 = vmatprep.subr.mxu0 0.0
      %1570 = vmatpush1.xpose.msra.mxu0 0.0
      %1571 = vmatprep.subr.mxu0 0.0
      %1572 = vmatpush1.xpose.msra.mxu0 0.0
      %1573 = vmatprep.subr.mxu0 0.0
      %1574 = vmatpush1.xpose.msra.mxu0 0.0
      %1575 = vmatprep.subr.mxu0 0.0
      %1576 = vmatpush1.xpose.msra.mxu0 0.0
      %1577 = vmatprep.subr.mxu0 0.0
      %1578 = vmatpush1.xpose.msra.mxu0 0.0
      %1579 = vmatprep.subr.mxu0 0.0
      %1580 = vmatpush1.xpose.msra.mxu0 0.0
      %1581 = vmatprep.subr.mxu0 0.0
      %1582 = vmatpush1.xpose.msra.mxu0 0.0
      %1583 = vmatprep.subr.mxu0 0.0
      %1584 = vmatpush1.xpose.msra.mxu0 0.0
      %1585 = vmatprep.subr.mxu0 0.0
      %1586 = vmatpush1.xpose.msra.mxu0 0.0
      %1587 = vmatprep.subr.mxu0 0.0
      %1588 = vmatpush1.xpose.msra.mxu0 0.0
      %1589 = vmatprep.subr.mxu0 0.0
      %1590 = vmatpush1.xpose.msra.mxu0 0.0
      %1591 = vmatprep.subr.mxu0 0.0
      %1592 = vmatpush1.xpose.msra.mxu0 0.0
      %1593 = vmatprep.subr.mxu0 0.0
      %1594 = vmatpush1.xpose.msra.mxu0 0.0
      %1595 = vmatprep.subr.mxu0 0.0
      %1596 = vmatpush1.xpose.msra.mxu0 0.0
      %1597 = vmatprep.subr.mxu0 0.0
      %1598 = vmatpush1.xpose.msra.mxu0 0.0
      %1599 = vmatprep.subr.mxu0 0.0
      %1600 = vmatpush1.xpose.msra.mxu0 0.0
      %1601 = vmatprep.subr.mxu0 0.0
      %1602 = vmatpush1.xpose.msra.mxu0 0.0
      %1603 = vmatprep.subr.mxu0 0.0
      %1604 = vmatpush1.xpose.msra.mxu0 0.0
      %1605 = vmatprep.subr.mxu0 0.0
      %1606 = vmatpush1.xpose.msra.mxu0 0.0
      %1607 = vmatprep.subr.mxu0 0.0
      %1608 = vmatpush1.xpose.msra.mxu0 0.0
      %1609 = vmatprep.mubr.f32.mxu0 0.0
      %1610 = vmatmul.mubr.f32.gmra.mrb[0].mxu0 %v1541
      %v1611 = vpop.f32.mrb[0].mxu0
      %v1612 = vadd.f32 %v882, %v1611
      %v1613 = vpop.f32.mrb[0].mxu0
      %1614 = vdwg.mxu0
      %1615 = vrot.lane.b32.xlu0 %v878, 64
      %v1616 = vpop.permute.xlu0 %1615
      %1617 = vrot.lane.b32.xlu0 %v834, 64
      %v1618 = vpop.permute.xlu0 %1617
      %v1619 = vsel %vm883, %v1616, 0
      %v1621 = vsel %vm883, %v1618, 0
      %1623 = vmatprep.subr.mxu0 0.0
      %1624 = vmatpush1.xpose.msra.mxu0 %v1621
      %1625 = vmatprep.subr.mxu0 0.0
      %1626 = vmatpush1.xpose.msra.mxu0 0.0
      %1627 = vmatprep.subr.mxu0 0.0
      %1628 = vmatpush1.xpose.msra.mxu0 0.0
      %1629 = vmatprep.subr.mxu0 0.0
      %1630 = vmatpush1.xpose.msra.mxu0 0.0
      %1631 = vmatprep.subr.mxu0 0.0
      %1632 = vmatpush1.xpose.msra.mxu0 0.0
      %1633 = vmatprep.subr.mxu0 0.0
      %1634 = vmatpush1.xpose.msra.mxu0 0.0
      %1635 = vmatprep.subr.mxu0 0.0
      %1636 = vmatpush1.xpose.msra.mxu0 0.0
      %1637 = vmatprep.subr.mxu0 0.0
      %1638 = vmatpush1.xpose.msra.mxu0 0.0
      %1639 = vmatprep.subr.mxu0 0.0
      %1640 = vmatpush1.xpose.msra.mxu0 0.0
      %1641 = vmatprep.subr.mxu0 0.0
      %1642 = vmatpush1.xpose.msra.mxu0 0.0
      %1643 = vmatprep.subr.mxu0 0.0
      %1644 = vmatpush1.xpose.msra.mxu0 0.0
      %1645 = vmatprep.subr.mxu0 0.0
      %1646 = vmatpush1.xpose.msra.mxu0 0.0
      %1647 = vmatprep.subr.mxu0 0.0
      %1648 = vmatpush1.xpose.msra.mxu0 0.0
      %1649 = vmatprep.subr.mxu0 0.0
      %1650 = vmatpush1.xpose.msra.mxu0 0.0
      %1651 = vmatprep.subr.mxu0 0.0
      %1652 = vmatpush1.xpose.msra.mxu0 0.0
      %1653 = vmatprep.subr.mxu0 0.0
      %1654 = vmatpush1.xpose.msra.mxu0 0.0
      %1655 = vmatprep.subr.mxu0 0.0
      %1656 = vmatpush1.xpose.msra.mxu0 0.0
      %1657 = vmatprep.subr.mxu0 0.0
      %1658 = vmatpush1.xpose.msra.mxu0 0.0
      %1659 = vmatprep.subr.mxu0 0.0
      %1660 = vmatpush1.xpose.msra.mxu0 0.0
      %1661 = vmatprep.subr.mxu0 0.0
      %1662 = vmatpush1.xpose.msra.mxu0 0.0
      %1663 = vmatprep.subr.mxu0 0.0
      %1664 = vmatpush1.xpose.msra.mxu0 0.0
      %1665 = vmatprep.subr.mxu0 0.0
      %1666 = vmatpush1.xpose.msra.mxu0 0.0
      %1667 = vmatprep.subr.mxu0 0.0
      %1668 = vmatpush1.xpose.msra.mxu0 0.0
      %1669 = vmatprep.subr.mxu0 0.0
      %1670 = vmatpush1.xpose.msra.mxu0 0.0
      %1671 = vmatprep.subr.mxu0 0.0
      %1672 = vmatpush1.xpose.msra.mxu0 0.0
      %1673 = vmatprep.subr.mxu0 0.0
      %1674 = vmatpush1.xpose.msra.mxu0 0.0
      %1675 = vmatprep.subr.mxu0 0.0
      %1676 = vmatpush1.xpose.msra.mxu0 0.0
      %1677 = vmatprep.subr.mxu0 0.0
      %1678 = vmatpush1.xpose.msra.mxu0 0.0
      %1679 = vmatprep.subr.mxu0 0.0
      %1680 = vmatpush1.xpose.msra.mxu0 0.0
      %1681 = vmatprep.subr.mxu0 0.0
      %1682 = vmatpush1.xpose.msra.mxu0 0.0
      %1683 = vmatprep.subr.mxu0 0.0
      %1684 = vmatpush1.xpose.msra.mxu0 0.0
      %1685 = vmatprep.subr.mxu0 0.0
      %1686 = vmatpush1.xpose.msra.mxu0 0.0
      %1687 = vmatprep.mubr.f32.mxu0 0.0
      %1688 = vmatmul.mubr.f32.gmra.mrb[0].mxu0 %v1619
      %v1689 = vpop.f32.mrb[0].mxu0
      %v1690 = vadd.f32 %v882, %v1689
      %v1691 = vpop.f32.mrb[0].mxu0
      %1692 = vdwg.mxu0
      %v1693 = vsel %vm1036, %v1612, -inf
      %1694 = vmax.xlane.f32.xlu0 %v1693
      %v1695 = vpop.xlane.xlu0 %1694
      %v1696 = vsel %vm1036, %v1690, -inf
      %1697 = vmax.xlane.f32.xlu0 %v1696
      %v1698 = vpop.xlane.xlu0 %1697
      %v1699 = vsub.f32 %v1612, %v1695
      %v1700 = vsub.f32 %v1690, %v1698
      %v1701 = vmul.f32 %v1699, 1.442695
      %v1702 = vpow.pop %v1701
      %v1703 = vmul.f32 %v1700, 1.442695
      %v1704 = vpow.pop %v1703
      %v1705 = vsel %vm1036, %v1702, 0.0
      %1706 = vadd.xlane.f32.xlu0 %v1705
      %v1707 = vpop.xlane.xlu0 %1706
      %v1708 = vsel %vm1036, %v1704, 0.0
      %1709 = vadd.xlane.f32.xlu0 %v1708
      %v1710 = vpop.xlane.xlu0 %1709
      %v1711 = vrcp.pop %v1707
      %v1712 = vrcp.pop %v1710
      %v1713 = vmul.f32 %v1702, %v1711
      %v1714 = vmul.f32 %v1704, %v1712
      %1715 = vrot.lane.b32.xlu0 %v871, 64
      %v1716 = vpop.permute.xlu0 %1715
      %v1719 = vsel %vm1036, %v1713, 0
      %1721 = vmatprep.subr.mxu0 0.0
      %1722 = vmatpush1.msra.mxu0 %v1716
      %1723 = vmatprep.subr.mxu0 0.0
      %1724 = vmatpush1.msra.mxu0 0.0
      %1725 = vmatprep.subr.mxu0 0.0
      %1726 = vmatpush1.msra.mxu0 0.0
      %1727 = vmatprep.subr.mxu0 0.0
      %1728 = vmatpush1.msra.mxu0 0.0
      %1729 = vmatprep.subr.mxu0 0.0
      %1730 = vmatpush1.msra.mxu0 0.0
      %1731 = vmatprep.subr.mxu0 0.0
      %1732 = vmatpush1.msra.mxu0 0.0
      %1733 = vmatprep.subr.mxu0 0.0
      %1734 = vmatpush1.msra.mxu0 0.0
      %1735 = vmatprep.subr.mxu0 0.0
      %1736 = vmatpush1.msra.mxu0 0.0
      %1737 = vmatprep.subr.mxu0 0.0
      %1738 = vmatpush1.msra.mxu0 0.0
      %1739 = vmatprep.subr.mxu0 0.0
      %1740 = vmatpush1.msra.mxu0 0.0
      %1741 = vmatprep.subr.mxu0 0.0
      %1742 = vmatpush1.msra.mxu0 0.0
      %1743 = vmatprep.subr.mxu0 0.0
      %1744 = vmatpush1.msra.mxu0 0.0
      %1745 = vmatprep.subr.mxu0 0.0
      %1746 = vmatpush1.msra.mxu0 0.0
      %1747 = vmatprep.subr.mxu0 0.0
      %1748 = vmatpush1.msra.mxu0 0.0
      %1749 = vmatprep.subr.mxu0 0.0
      %1750 = vmatpush1.msra.mxu0 0.0
      %1751 = vmatprep.subr.mxu0 0.0
      %1752 = vmatpush1.msra.mxu0 0.0
      %1753 = vmatprep.subr.mxu0 0.0
      %1754 = vmatpush1.msra.mxu0 0.0
      %1755 = vmatprep.subr.mxu0 0.0
      %1756 = vmatpush1.msra.mxu0 0.0
      %1757 = vmatprep.subr.mxu0 0.0
      %1758 = vmatpush1.msra.mxu0 0.0
      %1759 = vmatprep.subr.mxu0 0.0
      %1760 = vmatpush1.msra.mxu0 0.0
      %1761 = vmatprep.subr.mxu0 0.0
      %1762 = vmatpush1.msra.mxu0 0.0
      %1763 = vmatprep.subr.mxu0 0.0
      %1764 = vmatpush1.msra.mxu0 0.0
      %1765 = vmatprep.subr.mxu0 0.0
      %1766 = vmatpush1.msra.mxu0 0.0
      %1767 = vmatprep.subr.mxu0 0.0
      %1768 = vmatpush1.msra.mxu0 0.0
      %1769 = vmatprep.subr.mxu0 0.0
      %1770 = vmatpush1.msra.mxu0 0.0
      %1771 = vmatprep.subr.mxu0 0.0
      %1772 = vmatpush1.msra.mxu0 0.0
      %1773 = vmatprep.subr.mxu0 0.0
      %1774 = vmatpush1.msra.mxu0 0.0
      %1775 = vmatprep.subr.mxu0 0.0
      %1776 = vmatpush1.msra.mxu0 0.0
      %1777 = vmatprep.subr.mxu0 0.0
      %1778 = vmatpush1.msra.mxu0 0.0
      %1779 = vmatprep.subr.mxu0 0.0
      %1780 = vmatpush1.msra.mxu0 0.0
      %1781 = vmatprep.subr.mxu0 0.0
      %1782 = vmatpush1.msra.mxu0 0.0
      %1783 = vmatprep.subr.mxu0 0.0
      %1784 = vmatpush1.msra.mxu0 0.0
      %1785 = vmatprep.mubr.f32.mxu0 0.0
      %1786 = vmatmul.mubr.f32.gmra.mrb[0].mxu0 %v1719
      %v1787 = vpop.f32.mrb[0].mxu0
      %v1788 = vadd.f32 0.0, %v1787
      %v1789 = vpop.f32.mrb[0].mxu0
      %1790 = vdwg.mxu0
      %1791 = vrot.lane.b32.xlu0 %v874, 64
      %v1792 = vpop.permute.xlu0 %1791
      %v1795 = vsel %vm1036, %v1714, 0
      %1797 = vmatprep.subr.mxu0 0.0
      %1798 = vmatpush1.msra.mxu0 %v1792
      %1799 = vmatprep.subr.mxu0 0.0
      %1800 = vmatpush1.msra.mxu0 0.0
      %1801 = vmatprep.subr.mxu0 0.0
      %1802 = vmatpush1.msra.mxu0 0.0
      %1803 = vmatprep.subr.mxu0 0.0
      %1804 = vmatpush1.msra.mxu0 0.0
      %1805 = vmatprep.subr.mxu0 0.0
      %1806 = vmatpush1.msra.mxu0 0.0
      %1807 = vmatprep.subr.mxu0 0.0
      %1808 = vmatpush1.msra.mxu0 0.0
      %1809 = vmatprep.subr.mxu0 0.0
      %1810 = vmatpush1.msra.mxu0 0.0
      %1811 = vmatprep.subr.mxu0 0.0
      %1812 = vmatpush1.msra.mxu0 0.0
      %1813 = vmatprep.subr.mxu0 0.0
      %1814 = vmatpush1.msra.mxu0 0.0
      %1815 = vmatprep.subr.mxu0 0.0
      %1816 = vmatpush1.msra.mxu0 0.0
      %1817 = vmatprep.subr.mxu0 0.0
      %1818 = vmatpush1.msra.mxu0 0.0
      %1819 = vmatprep.subr.mxu0 0.0
      %1820 = vmatpush1.msra.mxu0 0.0
      %1821 = vmatprep.subr.mxu0 0.0
      %1822 = vmatpush1.msra.mxu0 0.0
      %1823 = vmatprep.subr.mxu0 0.0
      %1824 = vmatpush1.msra.mxu0 0.0
      %1825 = vmatprep.subr.mxu0 0.0
      %1826 = vmatpush1.msra.mxu0 0.0
      %1827 = vmatprep.subr.mxu0 0.0
      %1828 = vmatpush1.msra.mxu0 0.0
      %1829 = vmatprep.subr.mxu0 0.0
      %1830 = vmatpush1.msra.mxu0 0.0
      %1831 = vmatprep.subr.mxu0 0.0
      %1832 = vmatpush1.msra.mxu0 0.0
      %1833 = vmatprep.subr.mxu0 0.0
      %1834 = vmatpush1.msra.mxu0 0.0
      %1835 = vmatprep.subr.mxu0 0.0
      %1836 = vmatpush1.msra.mxu0 0.0
      %1837 = vmatprep.subr.mxu0 0.0
      %1838 = vmatpush1.msra.mxu0 0.0
      %1839 = vmatprep.subr.mxu0 0.0
      %1840 = vmatpush1.msra.mxu0 0.0
      %1841 = vmatprep.subr.mxu0 0.0
      %1842 = vmatpush1.msra.mxu0 0.0
      %1843 = vmatprep.subr.mxu0 0.0
      %1844 = vmatpush1.msra.mxu0 0.0
      %1845 = vmatprep.subr.mxu0 0.0
      %1846 = vmatpush1.msra.mxu0 0.0
      %1847 = vmatprep.subr.mxu0 0.0
      %1848 = vmatpush1.msra.mxu0 0.0
      %1849 = vmatprep.subr.mxu0 0.0
      %1850 = vmatpush1.msra.mxu0 0.0
      %1851 = vmatprep.subr.mxu0 0.0
      %1852 = vmatpush1.msra.mxu0 0.0
      %1853 = vmatprep.subr.mxu0 0.0
      %1854 = vmatpush1.msra.mxu0 0.0
      %1855 = vmatprep.subr.mxu0 0.0
      %1856 = vmatpush1.msra.mxu0 0.0
      %1857 = vmatprep.subr.mxu0 0.0
      %1858 = vmatpush1.msra.mxu0 0.0
      %1859 = vmatprep.subr.mxu0 0.0
      %1860 = vmatpush1.msra.mxu0 0.0
      %1861 = vmatprep.mubr.f32.mxu0 0.0
      %1862 = vmatmul.mubr.f32.gmra.mrb[0].mxu0 %v1795
      %v1863 = vpop.f32.mrb[0].mxu0
      %v1864 = vadd.f32 0.0, %v1863
      %v1865 = vpop.f32.mrb[0].mxu0
      %1866 = vdwg.mxu0
      %1867 = vrot.lane.b32.xlu0 %v877, 32
      %v1868 = vpop.permute.xlu0 %1867
      %1869 = vrot.lane.b32.xlu0 %v830, 32
      %v1870 = vpop.permute.xlu0 %1869
      %v1871 = vsel %vm883, %v1868, 0
      %v1873 = vsel %vm883, %v1870, 0
      %1875 = vmatprep.subr.mxu0 0.0
      %1876 = vmatpush1.xpose.msra.mxu0 %v1873
      %1877 = vmatprep.subr.mxu0 0.0
      %1878 = vmatpush1.xpose.msra.mxu0 0.0
      %1879 = vmatprep.subr.mxu0 0.0
      %1880 = vmatpush1.xpose.msra.mxu0 0.0
      %1881 = vmatprep.subr.mxu0 0.0
      %1882 = vmatpush1.xpose.msra.mxu0 0.0
      %1883 = vmatprep.subr.mxu0 0.0
      %1884 = vmatpush1.xpose.msra.mxu0 0.0
      %1885 = vmatprep.subr.mxu0 0.0
      %1886 = vmatpush1.xpose.msra.mxu0 0.0
      %1887 = vmatprep.subr.mxu0 0.0
      %1888 = vmatpush1.xpose.msra.mxu0 0.0
      %1889 = vmatprep.subr.mxu0 0.0
      %1890 = vmatpush1.xpose.msra.mxu0 0.0
      %1891 = vmatprep.subr.mxu0 0.0
      %1892 = vmatpush1.xpose.msra.mxu0 0.0
      %1893 = vmatprep.subr.mxu0 0.0
      %1894 = vmatpush1.xpose.msra.mxu0 0.0
      %1895 = vmatprep.subr.mxu0 0.0
      %1896 = vmatpush1.xpose.msra.mxu0 0.0
      %1897 = vmatprep.subr.mxu0 0.0
      %1898 = vmatpush1.xpose.msra.mxu0 0.0
      %1899 = vmatprep.subr.mxu0 0.0
      %1900 = vmatpush1.xpose.msra.mxu0 0.0
      %1901 = vmatprep.subr.mxu0 0.0
      %1902 = vmatpush1.xpose.msra.mxu0 0.0
      %1903 = vmatprep.subr.mxu0 0.0
      %1904 = vmatpush1.xpose.msra.mxu0 0.0
      %1905 = vmatprep.subr.mxu0 0.0
      %1906 = vmatpush1.xpose.msra.mxu0 0.0
      %1907 = vmatprep.subr.mxu0 0.0
      %1908 = vmatpush1.xpose.msra.mxu0 0.0
      %1909 = vmatprep.subr.mxu0 0.0
      %1910 = vmatpush1.xpose.msra.mxu0 0.0
      %1911 = vmatprep.subr.mxu0 0.0
      %1912 = vmatpush1.xpose.msra.mxu0 0.0
      %1913 = vmatprep.subr.mxu0 0.0
      %1914 = vmatpush1.xpose.msra.mxu0 0.0
      %1915 = vmatprep.subr.mxu0 0.0
      %1916 = vmatpush1.xpose.msra.mxu0 0.0
      %1917 = vmatprep.subr.mxu0 0.0
      %1918 = vmatpush1.xpose.msra.mxu0 0.0
      %1919 = vmatprep.subr.mxu0 0.0
      %1920 = vmatpush1.xpose.msra.mxu0 0.0
      %1921 = vmatprep.subr.mxu0 0.0
      %1922 = vmatpush1.xpose.msra.mxu0 0.0
      %1923 = vmatprep.subr.mxu0 0.0
      %1924 = vmatpush1.xpose.msra.mxu0 0.0
      %1925 = vmatprep.subr.mxu0 0.0
      %1926 = vmatpush1.xpose.msra.mxu0 0.0
      %1927 = vmatprep.subr.mxu0 0.0
      %1928 = vmatpush1.xpose.msra.mxu0 0.0
      %1929 = vmatprep.subr.mxu0 0.0
      %1930 = vmatpush1.xpose.msra.mxu0 0.0
      %1931 = vmatprep.subr.mxu0 0.0
      %1932 = vmatpush1.xpose.msra.mxu0 0.0
      %1933 = vmatprep.subr.mxu0 0.0
      %1934 = vmatpush1.xpose.msra.mxu0 0.0
      %1935 = vmatprep.subr.mxu0 0.0
      %1936 = vmatpush1.xpose.msra.mxu0 0.0
      %1937 = vmatprep.subr.mxu0 0.0
      %1938 = vmatpush1.xpose.msra.mxu0 0.0
      %1939 = vmatprep.mubr.f32.mxu0 0.0
      %1940 = vmatmul.mubr.f32.gmra.mrb[0].mxu0 %v1871
      %v1941 = vpop.f32.mrb[0].mxu0
      %v1942 = vadd.f32 %v882, %v1941
      %v1943 = vpop.f32.mrb[0].mxu0
      %1944 = vdwg.mxu0
      %1945 = vrot.lane.b32.xlu0 %v878, 32
      %v1946 = vpop.permute.xlu0 %1945
      %1947 = vrot.lane.b32.xlu0 %v834, 32
      %v1948 = vpop.permute.xlu0 %1947
      %v1949 = vsel %vm883, %v1946, 0
      %v1951 = vsel %vm883, %v1948, 0
      %1953 = vmatprep.subr.mxu0 0.0
      %1954 = vmatpush1.xpose.msra.mxu0 %v1951
      %1955 = vmatprep.subr.mxu0 0.0
      %1956 = vmatpush1.xpose.msra.mxu0 0.0
      %1957 = vmatprep.subr.mxu0 0.0
      %1958 = vmatpush1.xpose.msra.mxu0 0.0
      %1959 = vmatprep.subr.mxu0 0.0
      %1960 = vmatpush1.xpose.msra.mxu0 0.0
      %1961 = vmatprep.subr.mxu0 0.0
      %1962 = vmatpush1.xpose.msra.mxu0 0.0
      %1963 = vmatprep.subr.mxu0 0.0
      %1964 = vmatpush1.xpose.msra.mxu0 0.0
      %1965 = vmatprep.subr.mxu0 0.0
      %1966 = vmatpush1.xpose.msra.mxu0 0.0
      %1967 = vmatprep.subr.mxu0 0.0
      %1968 = vmatpush1.xpose.msra.mxu0 0.0
      %1969 = vmatprep.subr.mxu0 0.0
      %1970 = vmatpush1.xpose.msra.mxu0 0.0
      %1971 = vmatprep.subr.mxu0 0.0
      %1972 = vmatpush1.xpose.msra.mxu0 0.0
      %1973 = vmatprep.subr.mxu0 0.0
      %1974 = vmatpush1.xpose.msra.mxu0 0.0
      %1975 = vmatprep.subr.mxu0 0.0
      %1976 = vmatpush1.xpose.msra.mxu0 0.0
      %1977 = vmatprep.subr.mxu0 0.0
      %1978 = vmatpush1.xpose.msra.mxu0 0.0
      %1979 = vmatprep.subr.mxu0 0.0
      %1980 = vmatpush1.xpose.msra.mxu0 0.0
      %1981 = vmatprep.subr.mxu0 0.0
      %1982 = vmatpush1.xpose.msra.mxu0 0.0
      %1983 = vmatprep.subr.mxu0 0.0
      %1984 = vmatpush1.xpose.msra.mxu0 0.0
      %1985 = vmatprep.subr.mxu0 0.0
      %1986 = vmatpush1.xpose.msra.mxu0 0.0
      %1987 = vmatprep.subr.mxu0 0.0
      %1988 = vmatpush1.xpose.msra.mxu0 0.0
      %1989 = vmatprep.subr.mxu0 0.0
      %1990 = vmatpush1.xpose.msra.mxu0 0.0
      %1991 = vmatprep.subr.mxu0 0.0
      %1992 = vmatpush1.xpose.msra.mxu0 0.0
      %1993 = vmatprep.subr.mxu0 0.0
      %1994 = vmatpush1.xpose.msra.mxu0 0.0
      %1995 = vmatprep.subr.mxu0 0.0
      %1996 = vmatpush1.xpose.msra.mxu0 0.0
      %1997 = vmatprep.subr.mxu0 0.0
      %1998 = vmatpush1.xpose.msra.mxu0 0.0
      %1999 = vmatprep.subr.mxu0 0.0
      %2000 = vmatpush1.xpose.msra.mxu0 0.0
      %2001 = vmatprep.subr.mxu0 0.0
      %2002 = vmatpush1.xpose.msra.mxu0 0.0
      %2003 = vmatprep.subr.mxu0 0.0
      %2004 = vmatpush1.xpose.msra.mxu0 0.0
      %2005 = vmatprep.subr.mxu0 0.0
      %2006 = vmatpush1.xpose.msra.mxu0 0.0
      %2007 = vmatprep.subr.mxu0 0.0
      %2008 = vmatpush1.xpose.msra.mxu0 0.0
      %2009 = vmatprep.subr.mxu0 0.0
      %2010 = vmatpush1.xpose.msra.mxu0 0.0
      %2011 = vmatprep.subr.mxu0 0.0
      %2012 = vmatpush1.xpose.msra.mxu0 0.0
      %2013 = vmatprep.subr.mxu0 0.0
      %2014 = vmatpush1.xpose.msra.mxu0 0.0
      %2015 = vmatprep.subr.mxu0 0.0
      %2016 = vmatpush1.xpose.msra.mxu0 0.0
      %2017 = vmatprep.mubr.f32.mxu0 0.0
      %2018 = vmatmul.mubr.f32.gmra.mrb[0].mxu0 %v1949
      %v2019 = vpop.f32.mrb[0].mxu0
      %v2020 = vadd.f32 %v882, %v2019
      %v2021 = vpop.f32.mrb[0].mxu0
      %2022 = vdwg.mxu0
      %v2023 = vsel %vm1036, %v1942, -inf
      %2024 = vmax.xlane.f32.xlu0 %v2023
      %v2025 = vpop.xlane.xlu0 %2024
      %v2026 = vsel %vm1036, %v2020, -inf
      %2027 = vmax.xlane.f32.xlu0 %v2026
      %v2028 = vpop.xlane.xlu0 %2027
      %v2029 = vsub.f32 %v1942, %v2025
      %v2030 = vsub.f32 %v2020, %v2028
      %v2031 = vmul.f32 %v2029, 1.442695
      %v2032 = vpow.pop %v2031
      %v2033 = vmul.f32 %v2030, 1.442695
      %v2034 = vpow.pop %v2033
      %v2035 = vsel %vm1036, %v2032, 0.0
      %2036 = vadd.xlane.f32.xlu0 %v2035
      %v2037 = vpop.xlane.xlu0 %2036
      %v2038 = vsel %vm1036, %v2034, 0.0
      %2039 = vadd.xlane.f32.xlu0 %v2038
      %v2040 = vpop.xlane.xlu0 %2039
      %v2041 = vrcp.pop %v2037
      %v2042 = vrcp.pop %v2040
      %v2043 = vmul.f32 %v2032, %v2041
      %v2044 = vmul.f32 %v2034, %v2042
      %2045 = vrot.lane.b32.xlu0 %v871, 32
      %v2046 = vpop.permute.xlu0 %2045
      %v2049 = vsel %vm1036, %v2043, 0
      %2051 = vmatprep.subr.mxu0 0.0
      %2052 = vmatpush1.msra.mxu0 %v2046
      %2053 = vmatprep.subr.mxu0 0.0
      %2054 = vmatpush1.msra.mxu0 0.0
      %2055 = vmatprep.subr.mxu0 0.0
      %2056 = vmatpush1.msra.mxu0 0.0
      %2057 = vmatprep.subr.mxu0 0.0
      %2058 = vmatpush1.msra.mxu0 0.0
      %2059 = vmatprep.subr.mxu0 0.0
      %2060 = vmatpush1.msra.mxu0 0.0
      %2061 = vmatprep.subr.mxu0 0.0
      %2062 = vmatpush1.msra.mxu0 0.0
      %2063 = vmatprep.subr.mxu0 0.0
      %2064 = vmatpush1.msra.mxu0 0.0
      %2065 = vmatprep.subr.mxu0 0.0
      %2066 = vmatpush1.msra.mxu0 0.0
      %2067 = vmatprep.subr.mxu0 0.0
      %2068 = vmatpush1.msra.mxu0 0.0
      %2069 = vmatprep.subr.mxu0 0.0
      %2070 = vmatpush1.msra.mxu0 0.0
      %2071 = vmatprep.subr.mxu0 0.0
      %2072 = vmatpush1.msra.mxu0 0.0
      %2073 = vmatprep.subr.mxu0 0.0
      %2074 = vmatpush1.msra.mxu0 0.0
      %2075 = vmatprep.subr.mxu0 0.0
      %2076 = vmatpush1.msra.mxu0 0.0
      %2077 = vmatprep.subr.mxu0 0.0
      %2078 = vmatpush1.msra.mxu0 0.0
      %2079 = vmatprep.subr.mxu0 0.0
      %2080 = vmatpush1.msra.mxu0 0.0
      %2081 = vmatprep.subr.mxu0 0.0
      %2082 = vmatpush1.msra.mxu0 0.0
      %2083 = vmatprep.subr.mxu0 0.0
      %2084 = vmatpush1.msra.mxu0 0.0
      %2085 = vmatprep.subr.mxu0 0.0
      %2086 = vmatpush1.msra.mxu0 0.0
      %2087 = vmatprep.subr.mxu0 0.0
      %2088 = vmatpush1.msra.mxu0 0.0
      %2089 = vmatprep.subr.mxu0 0.0
      %2090 = vmatpush1.msra.mxu0 0.0
      %2091 = vmatprep.subr.mxu0 0.0
      %2092 = vmatpush1.msra.mxu0 0.0
      %2093 = vmatprep.subr.mxu0 0.0
      %2094 = vmatpush1.msra.mxu0 0.0
      %2095 = vmatprep.subr.mxu0 0.0
      %2096 = vmatpush1.msra.mxu0 0.0
      %2097 = vmatprep.subr.mxu0 0.0
      %2098 = vmatpush1.msra.mxu0 0.0
      %2099 = vmatprep.subr.mxu0 0.0
      %2100 = vmatpush1.msra.mxu0 0.0
      %2101 = vmatprep.subr.mxu0 0.0
      %2102 = vmatpush1.msra.mxu0 0.0
      %2103 = vmatprep.subr.mxu0 0.0
      %2104 = vmatpush1.msra.mxu0 0.0
      %2105 = vmatprep.subr.mxu0 0.0
      %2106 = vmatpush1.msra.mxu0 0.0
      %2107 = vmatprep.subr.mxu0 0.0
      %2108 = vmatpush1.msra.mxu0 0.0
      %2109 = vmatprep.subr.mxu0 0.0
      %2110 = vmatpush1.msra.mxu0 0.0
      %2111 = vmatprep.subr.mxu0 0.0
      %2112 = vmatpush1.msra.mxu0 0.0
      %2113 = vmatprep.subr.mxu0 0.0
      %2114 = vmatpush1.msra.mxu0 0.0
      %2115 = vmatprep.mubr.f32.mxu0 0.0
      %2116 = vmatmul.mubr.f32.gmra.mrb[0].mxu0 %v2049
      %v2117 = vpop.f32.mrb[0].mxu0
      %v2118 = vadd.f32 0.0, %v2117
      %v2119 = vpop.f32.mrb[0].mxu0
      %2120 = vdwg.mxu0
      %2121 = vrot.lane.b32.xlu0 %v874, 32
      %v2122 = vpop.permute.xlu0 %2121
      %v2125 = vsel %vm1036, %v2044, 0
      %2127 = vmatprep.subr.mxu0 0.0
      %2128 = vmatpush1.msra.mxu0 %v2122
      %2129 = vmatprep.subr.mxu0 0.0
      %2130 = vmatpush1.msra.mxu0 0.0
      %2131 = vmatprep.subr.mxu0 0.0
      %2132 = vmatpush1.msra.mxu0 0.0
      %2133 = vmatprep.subr.mxu0 0.0
      %2134 = vmatpush1.msra.mxu0 0.0
      %2135 = vmatprep.subr.mxu0 0.0
      %2136 = vmatpush1.msra.mxu0 0.0
      %2137 = vmatprep.subr.mxu0 0.0
      %2138 = vmatpush1.msra.mxu0 0.0
      %2139 = vmatprep.subr.mxu0 0.0
      %2140 = vmatpush1.msra.mxu0 0.0
      %2141 = vmatprep.subr.mxu0 0.0
      %2142 = vmatpush1.msra.mxu0 0.0
      %2143 = vmatprep.subr.mxu0 0.0
      %2144 = vmatpush1.msra.mxu0 0.0
      %2145 = vmatprep.subr.mxu0 0.0
      %2146 = vmatpush1.msra.mxu0 0.0
      %2147 = vmatprep.subr.mxu0 0.0
      %2148 = vmatpush1.msra.mxu0 0.0
      %2149 = vmatprep.subr.mxu0 0.0
      %2150 = vmatpush1.msra.mxu0 0.0
      %2151 = vmatprep.subr.mxu0 0.0
      %2152 = vmatpush1.msra.mxu0 0.0
      %2153 = vmatprep.subr.mxu0 0.0
      %2154 = vmatpush1.msra.mxu0 0.0
      %2155 = vmatprep.subr.mxu0 0.0
      %2156 = vmatpush1.msra.mxu0 0.0
      %2157 = vmatprep.subr.mxu0 0.0
      %2158 = vmatpush1.msra.mxu0 0.0
      %2159 = vmatprep.subr.mxu0 0.0
      %2160 = vmatpush1.msra.mxu0 0.0
      %2161 = vmatprep.subr.mxu0 0.0
      %2162 = vmatpush1.msra.mxu0 0.0
      %2163 = vmatprep.subr.mxu0 0.0
      %2164 = vmatpush1.msra.mxu0 0.0
      %2165 = vmatprep.subr.mxu0 0.0
      %2166 = vmatpush1.msra.mxu0 0.0
      %2167 = vmatprep.subr.mxu0 0.0
      %2168 = vmatpush1.msra.mxu0 0.0
      %2169 = vmatprep.subr.mxu0 0.0
      %2170 = vmatpush1.msra.mxu0 0.0
      %2171 = vmatprep.subr.mxu0 0.0
      %2172 = vmatpush1.msra.mxu0 0.0
      %2173 = vmatprep.subr.mxu0 0.0
      %2174 = vmatpush1.msra.mxu0 0.0
      %2175 = vmatprep.subr.mxu0 0.0
      %2176 = vmatpush1.msra.mxu0 0.0
      %2177 = vmatprep.subr.mxu0 0.0
      %2178 = vmatpush1.msra.mxu0 0.0
      %2179 = vmatprep.subr.mxu0 0.0
      %2180 = vmatpush1.msra.mxu0 0.0
      %2181 = vmatprep.subr.mxu0 0.0
      %2182 = vmatpush1.msra.mxu0 0.0
      %2183 = vmatprep.subr.mxu0 0.0
      %2184 = vmatpush1.msra.mxu0 0.0
      %2185 = vmatprep.subr.mxu0 0.0
      %2186 = vmatpush1.msra.mxu0 0.0
      %2187 = vmatprep.subr.mxu0 0.0
      %2188 = vmatpush1.msra.mxu0 0.0
      %2189 = vmatprep.subr.mxu0 0.0
      %2190 = vmatpush1.msra.mxu0 0.0
      %2191 = vmatprep.mubr.f32.mxu0 0.0
      %2192 = vmatmul.mubr.f32.gmra.mrb[0].mxu0 %v2125
      %v2193 = vpop.f32.mrb[0].mxu0
      %v2194 = vadd.f32 0.0, %v2193
      %v2195 = vpop.f32.mrb[0].mxu0
      %2196 = vdwg.mxu0
      %2199 = vrot.lane.b32.xlu0 %v1457, 32
      %v2200 = vpop.permute.xlu0 %2199
      %2201 = vrot.lane.b32.xlu0 %v1534, 32
      %v2202 = vpop.permute.xlu0 %2201
      %2207 = vrot.lane.b32.xlu0 %v1788, 64
      %v2208 = vpop.permute.xlu0 %2207
      %2209 = vrot.lane.b32.xlu0 %v1864, 64
      %v2210 = vpop.permute.xlu0 %2209
      %2215 = vrot.lane.b32.xlu0 %v2118, 96
      %v2216 = vpop.permute.xlu0 %2215
      %2217 = vrot.lane.b32.xlu0 %v2194, 96
      %v2218 = vpop.permute.xlu0 %2217
      %v2221 = vsel %vm883, %v1129, %v2200
      %v2222 = vsel %vm883, %v1202, %v2202
      %vm2223 = vcmask 523264
      %v2224 = vsel %vm2223, %v2221, %v2208
      %v2225 = vsel %vm2223, %v2222, %v2210
      %vm2226 = vcmask 785408
      %v2227 = vsel %vm2226, %v2224, %v2216
      %v2228 = vsel %vm2226, %v2225, %v2218
      %v2229 = vpack.c.bf16 %v2228, %v2227
      %v2230 = vld [vmem:[%s571] sm:$0xf]
      %v2231 = vld [vmem:[%s571 + $0x4] sm:$0xf]
      %v2232 = vld [vmem:[%s571 + $0x8] sm:$0xf]
      %v2233 = vld [vmem:[%s571 + $0xc] sm:$0xf]
      %v2234 = vld [vmem:[%s571 + $0x10] sm:$0xf]
      %v2235 = vld [vmem:[%s571 + $0x14] sm:$0xf]
      %v2236 = vld [vmem:[%s571 + $0x18] sm:$0xf]
      %v2237 = vld [vmem:[%s571 + $0x1c] sm:$0xf]
      %v2238 = vld [vmem:[%s571 + $0x20] sm:$0xf]
      %v2239 = vld [vmem:[%s571 + $0x24] sm:$0xf]
      %v2240 = vld [vmem:[%s571 + $0x28] sm:$0xf]
      %v2241 = vld [vmem:[%s571 + $0x2c] sm:$0xf]
      %v2242 = vld [vmem:[%s571 + $0x30] sm:$0xf]
      %v2243 = vld [vmem:[%s571 + $0x34] sm:$0xf]
      %v2244 = vld [vmem:[%s571 + $0x38] sm:$0xf]
      %v2245 = vld [vmem:[%s571 + $0x3c] sm:$0xf]
      %v2246 = vld [vmem:[%s574] sm:$0x1]
      %v2248 = vlaneseq
      %v2249 = vshrl.u32 %v2248, 7
      %v2250 = vsub.s32 0, %v2249
      %v2251 = vrot.slane %v2246, %v2250
      %v2269 = vunpack.c.l.b16 %v2230
      %v2270 = vunpack.c.l.b16 %v2231
      %v2271 = vunpack.c.l.b16 %v2232
      %v2272 = vunpack.c.l.b16 %v2233
      %v2273 = vunpack.c.l.b16 %v2234
      %v2274 = vunpack.c.l.b16 %v2235
      %v2275 = vunpack.c.l.b16 %v2236
      %v2276 = vunpack.c.l.b16 %v2237
      %v2277 = vunpack.c.l.b16 %v2238
      %v2278 = vunpack.c.l.b16 %v2239
      %v2279 = vunpack.c.l.b16 %v2240
      %v2280 = vunpack.c.l.b16 %v2241
      %v2281 = vunpack.c.l.b16 %v2242
      %v2282 = vunpack.c.l.b16 %v2243
      %v2283 = vunpack.c.l.b16 %v2244
      %v2284 = vunpack.c.l.b16 %v2245
      %v2285 = vpack.c.b16 %v2270, %v2269
      %v2286 = vpack.c.b16 %v2272, %v2271
      %v2287 = vpack.c.b16 %v2274, %v2273
      %v2288 = vpack.c.b16 %v2276, %v2275
      %v2289 = vpack.c.b16 %v2278, %v2277
      %v2290 = vpack.c.b16 %v2280, %v2279
      %v2291 = vpack.c.b16 %v2282, %v2281
      %v2292 = vpack.c.b16 %v2284, %v2283
      %2301 = vmatprep.subr.bf16.mxu0 0
      %2302 = vmatpush1.bf16.msra.mxu0 %v2285
      %2303 = vmatprep.subr.bf16.mxu0 0
      %2304 = vmatpush1.bf16.msra.mxu0 %v2286
      %2305 = vmatprep.subr.bf16.mxu0 0
      %2306 = vmatpush1.bf16.msra.mxu0 %v2287
      %2307 = vmatprep.subr.bf16.mxu0 0
      %2308 = vmatpush1.bf16.msra.mxu0 %v2288
      %2309 = vmatprep.subr.bf16.mxu0 0
      %2310 = vmatpush1.bf16.msra.mxu0 %v2289
      %2311 = vmatprep.subr.bf16.mxu0 0
      %2312 = vmatpush1.bf16.msra.mxu0 %v2290
      %2313 = vmatprep.subr.bf16.mxu0 0
      %2314 = vmatpush1.bf16.msra.mxu0 %v2291
      %2315 = vmatprep.subr.bf16.mxu0 0
      %2316 = vmatpush1.bf16.msra.mxu0 %v2292
      %2317 = vmatprep.subr.bf16.mxu0 0
      %2318 = vmatpush1.bf16.msra.mxu0 0
      %2319 = vmatprep.subr.bf16.mxu0 0
      %2320 = vmatpush1.bf16.msra.mxu0 0
      %2321 = vmatprep.subr.bf16.mxu0 0
      %2322 = vmatpush1.bf16.msra.mxu0 0
      %2323 = vmatprep.subr.bf16.mxu0 0
      %2324 = vmatpush1.bf16.msra.mxu0 0
      %2325 = vmatprep.subr.bf16.mxu0 0
      %2326 = vmatpush1.bf16.msra.mxu0 0
      %2327 = vmatprep.subr.bf16.mxu0 0
      %2328 = vmatpush1.bf16.msra.mxu0 0
      %2329 = vmatprep.subr.bf16.mxu0 0
      %2330 = vmatpush1.bf16.msra.mxu0 0
      %2331 = vmatprep.subr.bf16.mxu0 0
      %2332 = vmatpush1.bf16.msra.mxu0 0
      %2333 = vmatprep.mubr.bf16.mxu0 0
      %2334 = vmatmul.mubr.bf16.gmra.mrb[0].mxu0 %v2229
      %v2335 = vpop.f32.mrb[0].mxu0
      %v2336 = vadd.f32 %v2251, %v2335
      %v2337 = vpop.f32.mrb[0].mxu0
      %v2338 = vpop.f32.mrb[0].mxu0
      %v2339 = vadd.f32 %v2251, %v2338
      %v2340 = vpop.f32.mrb[0].mxu0
      %2341 = vdwg.mxu0
      %v2342 = vadd.f32 %v613, %v2336
      %v2343 = vadd.f32 %v614, %v2339
      %v2344 = vld [vmem:[%s577] sm:$0x1]
      %v2345 = vld [vmem:[%s580] sm:$0x1]
      %2346 = vadd.xlane.f32.xlu0 %v2342
      %v2347 = vpop.xlane.xlu0 %2346
      %2348 = vadd.xlane.f32.xlu0 %v2343
      %v2349 = vpop.xlane.xlu0 %2348
      %v2350 = vrcp.pop 128.0
      %v2351 = vmul.f32 %v2347, %v2350
      %v2352 = vmul.f32 %v2349, %v2350
      %v2353 = vsub.f32 %v2342, %v2351
      %v2354 = vsub.f32 %v2343, %v2352
      %v2355 = vmul.f32 %v2353, %v2353
      %v2356 = vmul.f32 %v2354, %v2354
      %2357 = vadd.xlane.f32.xlu0 %v2355
      %v2358 = vpop.xlane.xlu0 %2357
      %2359 = vadd.xlane.f32.xlu0 %v2356
      %v2360 = vpop.xlane.xlu0 %2359
      %v2361 = vmul.f32 %v2358, %v2350
      %v2362 = vmul.f32 %v2360, %v2350
      %v2363 = vadd.f32 %v2361, 1e-05
      %v2364 = vadd.f32 %v2362, 1e-05
      %v2365 = vrsqrt.pop %v2363
      %v2366 = vrsqrt.pop %v2364
      %v2367 = vmul.f32 %v2353, %v2365
      %v2368 = vmul.f32 %v2354, %v2366
      %v2370 = vlaneseq
      %v2371 = vshrl.u32 %v2370, 7
      %v2372 = vsub.s32 0, %v2371
      %v2373 = vrot.slane %v2344, %v2372
      %v2375 = vmul.f32 %v2367, %v2373
      %v2376 = vmul.f32 %v2368, %v2373
      %v2378 = vlaneseq
      %v2379 = vshrl.u32 %v2378, 7
      %v2380 = vsub.s32 0, %v2379
      %v2381 = vrot.slane %v2345, %v2380
      %v2383 = vadd.f32 %v2375, %v2381
      %v2384 = vadd.f32 %v2376, %v2381
      %v2385 = vpack.c.bf16 %v2384, %v2383
      %v2386 = vld [vmem:[%s591] sm:$0xff]
      %v2387 = vld [vmem:[%s591 + $0x8] sm:$0xff]
      %v2388 = vld [vmem:[%s591 + $0x10] sm:$0xff]
      %v2389 = vld [vmem:[%s591 + $0x18] sm:$0xff]
      %v2390 = vld [vmem:[%s591 + $0x20] sm:$0xff]
      %v2391 = vld [vmem:[%s591 + $0x28] sm:$0xff]
      %v2392 = vld [vmem:[%s591 + $0x30] sm:$0xff]
      %v2393 = vld [vmem:[%s591 + $0x38] sm:$0xff]
      %v2394 = vld [vmem:[%s591 + $0x40] sm:$0xff]
      %v2395 = vld [vmem:[%s591 + $0x48] sm:$0xff]
      %v2396 = vld [vmem:[%s591 + $0x50] sm:$0xff]
      %v2397 = vld [vmem:[%s591 + $0x58] sm:$0xff]
      %v2398 = vld [vmem:[%s591 + $0x60] sm:$0xff]
      %v2399 = vld [vmem:[%s591 + $0x68] sm:$0xff]
      %v2400 = vld [vmem:[%s591 + $0x70] sm:$0xff]
      %v2401 = vld [vmem:[%s591 + $0x78] sm:$0xff]
      %v2402 = vld [vmem:[%s595] sm:$0x3]
      %v2404 = vlaneseq
      %v2405 = vshrl.u32 %v2404, 7
      %v2406 = vsub.s32 0, %v2405
      %v2407 = vrot.slane %v2402, %v2406
      %v2408 = vlaneseq
      %v2409 = vshrl.u32 %v2408, 7
      %v2410 = vsub.s32 1, %v2409
      %v2411 = vrot.slane %v2402, %v2410
      %v2430 = vunpack.c.l.b16 %v2386
      %v2431 = vunpack.c.h.b16 %v2386
      %v2432 = vunpack.c.l.b16 %v2387
      %v2433 = vunpack.c.h.b16 %v2387
      %v2434 = vunpack.c.l.b16 %v2388
      %v2435 = vunpack.c.h.b16 %v2388
      %v2436 = vunpack.c.l.b16 %v2389
      %v2437 = vunpack.c.h.b16 %v2389
      %v2438 = vunpack.c.l.b16 %v2390
      %v2439 = vunpack.c.h.b16 %v2390
      %v2440 = vunpack.c.l.b16 %v2391
      %v2441 = vunpack.c.h.b16 %v2391
      %v2442 = vunpack.c.l.b16 %v2392
      %v2443 = vunpack.c.h.b16 %v2392
      %v2444 = vunpack.c.l.b16 %v2393
      %v2445 = vunpack.c.h.b16 %v2393
      %v2446 = vunpack.c.l.b16 %v2394
      %v2447 = vunpack.c.h.b16 %v2394
      %v2448 = vunpack.c.l.b16 %v2395
      %v2449 = vunpack.c.h.b16 %v2395
      %v2450 = vunpack.c.l.b16 %v2396
      %v2451 = vunpack.c.h.b16 %v2396
      %v2452 = vunpack.c.l.b16 %v2397
      %v2453 = vunpack.c.h.b16 %v2397
      %v2454 = vunpack.c.l.b16 %v2398
      %v2455 = vunpack.c.h.b16 %v2398
      %v2456 = vunpack.c.l.b16 %v2399
      %v2457 = vunpack.c.h.b16 %v2399
      %v2458 = vunpack.c.l.b16 %v2400
      %v2459 = vunpack.c.h.b16 %v2400
      %v2460 = vunpack.c.l.b16 %v2401
      %v2461 = vunpack.c.h.b16 %v2401
      %v2462 = vpack.c.b16 %v2432, %v2430
      %v2463 = vpack.c.b16 %v2433, %v2431
      %v2464 = vpack.c.b16 %v2436, %v2434
      %v2465 = vpack.c.b16 %v2437, %v2435
      %v2466 = vpack.c.b16 %v2440, %v2438
      %v2467 = vpack.c.b16 %v2441, %v2439
      %v2468 = vpack.c.b16 %v2444, %v2442
      %v2469 = vpack.c.b16 %v2445, %v2443
      %v2470 = vpack.c.b16 %v2448, %v2446
      %v2471 = vpack.c.b16 %v2449, %v2447
      %v2472 = vpack.c.b16 %v2452, %v2450
      %v2473 = vpack.c.b16 %v2453, %v2451
      %v2474 = vpack.c.b16 %v2456, %v2454
      %v2475 = vpack.c.b16 %v2457, %v2455
      %v2476 = vpack.c.b16 %v2460, %v2458
      %v2477 = vpack.c.b16 %v2461, %v2459
      %2494 = vmatprep.subr.bf16.mxu0 %v2463
      %2495 = vmatpush1.bf16.msra.mxu0 %v2462
      %2496 = vmatprep.subr.bf16.mxu0 %v2465
      %2497 = vmatpush1.bf16.msra.mxu0 %v2464
      %2498 = vmatprep.subr.bf16.mxu0 %v2467
      %2499 = vmatpush1.bf16.msra.mxu0 %v2466
      %2500 = vmatprep.subr.bf16.mxu0 %v2469
      %2501 = vmatpush1.bf16.msra.mxu0 %v2468
      %2502 = vmatprep.subr.bf16.mxu0 %v2471
      %2503 = vmatpush1.bf16.msra.mxu0 %v2470
      %2504 = vmatprep.subr.bf16.mxu0 %v2473
      %2505 = vmatpush1.bf16.msra.mxu0 %v2472
      %2506 = vmatprep.subr.bf16.mxu0 %v2475
      %2507 = vmatpush1.bf16.msra.mxu0 %v2474
      %2508 = vmatprep.subr.bf16.mxu0 %v2477
      %2509 = vmatpush1.bf16.msra.mxu0 %v2476
      %2510 = vmatprep.subr.bf16.mxu0 0
      %2511 = vmatpush1.bf16.msra.mxu0 0
      %2512 = vmatprep.subr.bf16.mxu0 0
      %2513 = vmatpush1.bf16.msra.mxu0 0
      %2514 = vmatprep.subr.bf16.mxu0 0
      %2515 = vmatpush1.bf16.msra.mxu0 0
      %2516 = vmatprep.subr.bf16.mxu0 0
      %2517 = vmatpush1.bf16.msra.mxu0 0
      %2518 = vmatprep.subr.bf16.mxu0 0
      %2519 = vmatpush1.bf16.msra.mxu0 0
      %2520 = vmatprep.subr.bf16.mxu0 0
      %2521 = vmatpush1.bf16.msra.mxu0 0
      %2522 = vmatprep.subr.bf16.mxu0 0
      %2523 = vmatpush1.bf16.msra.mxu0 0
      %2524 = vmatprep.subr.bf16.mxu0 0
      %2525 = vmatpush1.bf16.msra.mxu0 0
      %2526 = vmatprep.mubr.bf16.mxu0 0
      %2527 = vmatmul.mubr.bf16.gmra.mrb[0].mxu0 %v2385
      %v2528 = vpop.f32.mrb[0].mxu0
      %v2529 = vadd.f32 %v2407, %v2528
      %v2530 = vpop.f32.mrb[0].mxu0
      %v2531 = vadd.f32 %v2411, %v2530
      %v2532 = vpop.f32.mrb[0].mxu0
      %v2533 = vadd.f32 %v2407, %v2532
      %v2534 = vpop.f32.mrb[0].mxu0
      %v2535 = vadd.f32 %v2411, %v2534
      %2536 = vdwg.mxu0
      %v2537 = vmax.f32 %v2529, 0.0
      %v2538 = vmax.f32 %v2531, 0.0
      %v2539 = vmax.f32 %v2533, 0.0
      %v2540 = vmax.f32 %v2535, 0.0
      %v2541 = vpack.c.bf16 %v2539, %v2537
      %v2542 = vpack.c.bf16 %v2540, %v2538
      %v2543 = vld [vmem:[%s600] sm:$0xf]
      %v2544 = vld [vmem:[%s600 + $0x4] sm:$0xf]
      %v2545 = vld [vmem:[%s600 + $0x8] sm:$0xf]
      %v2546 = vld [vmem:[%s600 + $0xc] sm:$0xf]
      %v2547 = vld [vmem:[%s600 + $0x10] sm:$0xf]
      %v2548 = vld [vmem:[%s600 + $0x14] sm:$0xf]
      %v2549 = vld [vmem:[%s600 + $0x18] sm:$0xf]
      %v2550 = vld [vmem:[%s600 + $0x1c] sm:$0xf]
      %v2551 = vld [vmem:[%s600 + $0x20] sm:$0xf]
      %v2552 = vld [vmem:[%s600 + $0x24] sm:$0xf]
      %v2553 = vld [vmem:[%s600 + $0x28] sm:$0xf]
      %v2554 = vld [vmem:[%s600 + $0x2c] sm:$0xf]
      %v2555 = vld [vmem:[%s600 + $0x30] sm:$0xf]
      %v2556 = vld [vmem:[%s600 + $0x34] sm:$0xf]
      %v2557 = vld [vmem:[%s600 + $0x38] sm:$0xf]
      %v2558 = vld [vmem:[%s600 + $0x3c] sm:$0xf]
      %v2559 = vld [vmem:[%s600 + $0x40] sm:$0xf]
      %v2560 = vld [vmem:[%s600 + $0x44] sm:$0xf]
      %v2561 = vld [vmem:[%s600 + $0x48] sm:$0xf]
      %v2562 = vld [vmem:[%s600 + $0x4c] sm:$0xf]
      %v2563 = vld [vmem:[%s600 + $0x50] sm:$0xf]
      %v2564 = vld [vmem:[%s600 + $0x54] sm:$0xf]
      %v2565 = vld [vmem:[%s600 + $0x58] sm:$0xf]
      %v2566 = vld [vmem:[%s600 + $0x5c] sm:$0xf]
      %v2567 = vld [vmem:[%s600 + $0x60] sm:$0xf]
      %v2568 = vld [vmem:[%s600 + $0x64] sm:$0xf]
      %v2569 = vld [vmem:[%s600 + $0x68] sm:$0xf]
      %v2570 = vld [vmem:[%s600 + $0x6c] sm:$0xf]
      %v2571 = vld [vmem:[%s600 + $0x70] sm:$0xf]
      %v2572 = vld [vmem:[%s600 + $0x74] sm:$0xf]
      %v2573 = vld [vmem:[%s600 + $0x78] sm:$0xf]
      %v2574 = vld [vmem:[%s600 + $0x7c] sm:$0xf]
      %v2575 = vld [vmem:[%s603] sm:$0x1]
      %v2577 = vlaneseq
      %v2578 = vshrl.u32 %v2577, 7
      %v2579 = vsub.s32 0, %v2578
      %v2580 = vrot.slane %v2575, %v2579
      %v2614 = vunpack.c.l.b16 %v2543
      %v2615 = vunpack.c.l.b16 %v2544
      %v2616 = vunpack.c.l.b16 %v2545
      %v2617 = vunpack.c.l.b16 %v2546
      %v2618 = vunpack.c.l.b16 %v2547
      %v2619 = vunpack.c.l.b16 %v2548
      %v2620 = vunpack.c.l.b16 %v2549
      %v2621 = vunpack.c.l.b16 %v2550
      %v2622 = vunpack.c.l.b16 %v2551
      %v2623 = vunpack.c.l.b16 %v2552
      %v2624 = vunpack.c.l.b16 %v2553
      %v2625 = vunpack.c.l.b16 %v2554
      %v2626 = vunpack.c.l.b16 %v2555
      %v2627 = vunpack.c.l.b16 %v2556
      %v2628 = vunpack.c.l.b16 %v2557
      %v2629 = vunpack.c.l.b16 %v2558
      %v2630 = vunpack.c.l.b16 %v2559
      %v2631 = vunpack.c.l.b16 %v2560
      %v2632 = vunpack.c.l.b16 %v2561
      %v2633 = vunpack.c.l.b16 %v2562
      %v2634 = vunpack.c.l.b16 %v2563
      %v2635 = vunpack.c.l.b16 %v2564
      %v2636 = vunpack.c.l.b16 %v2565
      %v2637 = vunpack.c.l.b16 %v2566
      %v2638 = vunpack.c.l.b16 %v2567
      %v2639 = vunpack.c.l.b16 %v2568
      %v2640 = vunpack.c.l.b16 %v2569
      %v2641 = vunpack.c.l.b16 %v2570
      %v2642 = vunpack.c.l.b16 %v2571
      %v2643 = vunpack.c.l.b16 %v2572
      %v2644 = vunpack.c.l.b16 %v2573
      %v2645 = vunpack.c.l.b16 %v2574
      %v2646 = vpack.c.b16 %v2615, %v2614
      %v2647 = vpack.c.b16 %v2617, %v2616
      %v2648 = vpack.c.b16 %v2619, %v2618
      %v2649 = vpack.c.b16 %v2621, %v2620
      %v2650 = vpack.c.b16 %v2623, %v2622
      %v2651 = vpack.c.b16 %v2625, %v2624
      %v2652 = vpack.c.b16 %v2627, %v2626
      %v2653 = vpack.c.b16 %v2629, %v2628
      %v2654 = vpack.c.b16 %v2631, %v2630
      %v2655 = vpack.c.b16 %v2633, %v2632
      %v2656 = vpack.c.b16 %v2635, %v2634
      %v2657 = vpack.c.b16 %v2637, %v2636
      %v2658 = vpack.c.b16 %v2639, %v2638
      %v2659 = vpack.c.b16 %v2641, %v2640
      %v2660 = vpack.c.b16 %v2643, %v2642
      %v2661 = vpack.c.b16 %v2645, %v2644
      %2678 = vmatprep.subr.bf16.mxu0 0
      %2679 = vmatpush1.bf16.msra.mxu0 %v2646
      %2680 = vmatprep.subr.bf16.mxu0 0
      %2681 = vmatpush1.bf16.msra.mxu0 %v2647
      %2682 = vmatprep.subr.bf16.mxu0 0
      %2683 = vmatpush1.bf16.msra.mxu0 %v2648
      %2684 = vmatprep.subr.bf16.mxu0 0
      %2685 = vmatpush1.bf16.msra.mxu0 %v2649
      %2686 = vmatprep.subr.bf16.mxu0 0
      %2687 = vmatpush1.bf16.msra.mxu0 %v2650
      %2688 = vmatprep.subr.bf16.mxu0 0
      %2689 = vmatpush1.bf16.msra.mxu0 %v2651
      %2690 = vmatprep.subr.bf16.mxu0 0
      %2691 = vmatpush1.bf16.msra.mxu0 %v2652
      %2692 = vmatprep.subr.bf16.mxu0 0
      %2693 = vmatpush1.bf16.msra.mxu0 %v2653
      %2694 = vmatprep.subr.bf16.mxu0 0
      %2695 = vmatpush1.bf16.msra.mxu0 %v2654
      %2696 = vmatprep.subr.bf16.mxu0 0
      %2697 = vmatpush1.bf16.msra.mxu0 %v2655
      %2698 = vmatprep.subr.bf16.mxu0 0
      %2699 = vmatpush1.bf16.msra.mxu0 %v2656
      %2700 = vmatprep.subr.bf16.mxu0 0
      %2701 = vmatpush1.bf16.msra.mxu0 %v2657
      %2702 = vmatprep.subr.bf16.mxu0 0
      %2703 = vmatpush1.bf16.msra.mxu0 %v2658
      %2704 = vmatprep.subr.bf16.mxu0 0
      %2705 = vmatpush1.bf16.msra.mxu0 %v2659
      %2706 = vmatprep.subr.bf16.mxu0 0
      %2707 = vmatpush1.bf16.msra.mxu0 %v2660
      %2708 = vmatprep.subr.bf16.mxu0 0
      %2709 = vmatpush1.bf16.msra.mxu0 %v2661
      %2710 = vmatprep.mubr.bf16.mxu0 %v2542
      %2711 = vmatmul.mubr.bf16.gmra.mrb[0].mxu0 %v2541
      %v2712 = vpop.f32.mrb[0].mxu0
      %v2713 = vadd.f32 %v2580, %v2712
      %v2714 = vpop.f32.mrb[0].mxu0
      %v2715 = vpop.f32.mrb[0].mxu0
      %v2716 = vadd.f32 %v2580, %v2715
      %v2717 = vpop.f32.mrb[0].mxu0
      %2718 = vdwg.mxu0
      %v2719 = vadd.f32 %v2383, %v2713
      %v2720 = vadd.f32 %v2384, %v2716
      %v2721 = vld [vmem:[%s583] sm:$0x1]
      %v2722 = vld [vmem:[%s586] sm:$0x1]
      %2723 = vadd.xlane.f32.xlu0 %v2719
      %v2724 = vpop.xlane.xlu0 %2723
      %2725 = vadd.xlane.f32.xlu0 %v2720
      %v2726 = vpop.xlane.xlu0 %2725
      %v2727 = vmul.f32 %v2724, %v2350
      %v2728 = vmul.f32 %v2726, %v2350
      %v2729 = vsub.f32 %v2719, %v2727
      %v2730 = vsub.f32 %v2720, %v2728
      %v2731 = vmul.f32 %v2729, %v2729
      %v2732 = vmul.f32 %v2730, %v2730
      %2733 = vadd.xlane.f32.xlu0 %v2731
      %v2734 = vpop.xlane.xlu0 %2733
      %2735 = vadd.xlane.f32.xlu0 %v2732
      %v2736 = vpop.xlane.xlu0 %2735
      %v2737 = vmul.f32 %v2734, %v2350
      %v2738 = vmul.f32 %v2736, %v2350
      %v2739 = vadd.f32 %v2737, 1e-05
      %v2740 = vadd.f32 %v2738, 1e-05
      %v2741 = vrsqrt.pop %v2739
      %v2742 = vrsqrt.pop %v2740
      %v2743 = vmul.f32 %v2729, %v2741
      %v2744 = vmul.f32 %v2730, %v2742
      %v2746 = vlaneseq
      %v2747 = vshrl.u32 %v2746, 7
      %v2748 = vsub.s32 0, %v2747
      %v2749 = vrot.slane %v2721, %v2748
      %v2751 = vmul.f32 %v2743, %v2749
      %v2752 = vmul.f32 %v2744, %v2749
      %v2754 = vlaneseq
      %v2755 = vshrl.u32 %v2754, 7
      %v2756 = vsub.s32 0, %v2755
      %v2757 = vrot.slane %v2722, %v2756
      %v2759 = vadd.f32 %v2751, %v2757
      %v2760 = vadd.f32 %v2752, %v2757
      %2761 = vst [vmem:[%s13] sm:$0xff] %v2759
      %2762 = vst [vmem:[%s13 + $0x8] sm:$0xff] %v2760
      // Predicated region
      $region77: #{angle_classifier_forward.5} parent=71 // pred_check
        %p2763 = pneg %p370
      $region78: #{angle_classifier_forward.5} parent=71 // pred_check_branch
        %2765 = sbr.rel (%p2763) target = $region80
      $region79: #{angle_classifier_forward.5} parent=71 // pred_region
        _
      $region80: #{angle_classifier_forward.5} parent=71 // pred_fallthru
        _
      // Predicated region
      $region81: #{angle_classifier_forward.5} parent=71 // pred_check
        %p2766 = pneg %p370
      $region82: #{angle_classifier_forward.5} parent=71 // pred_check_branch
        %2768 = sbr.rel (%p2766) target = $region84
      $region83: #{angle_classifier_forward.5} parent=71 // pred_region
        _
      $region84: #{angle_classifier_forward.5} parent=71 // pred_fallthru
        _
    $region72: #{angle_classifier_forward.5} parent=5 // pred_fallthru
      _
    %p2769 = scmp.le.s32.totalorder 2, %s19
    // Predicated region
    $region85: #{angle_classifier_forward.5} parent=5 // pred_check
      %p2770 = pneg %p2769
    $region86: #{angle_classifier_forward.5} parent=5 // pred_check_branch
      %2772 = sbr.rel (%p2770) target = $region88
    $region87: #{angle_classifier_forward.5} parent=5 // pred_region
      %s2773 = ssub.s32 %s19, 2
    $region88: #{angle_classifier_forward.5} parent=5 // pred_fallthru
      _
  $region6: #{angle_classifier_forward.5} parent=0 // loop_footer
    %s23 = sadd.s32 1, %s19
  $region7: #{angle_classifier_forward.5} parent=0 // loop_footer_branch
    %18 = sbr.rel target = $region3
  $region8: #{angle_classifier_forward.5} parent=0 // loop_exit
    _

</llo_original>
